<compile_context>
chip_gen: v6e
topology: v6e:2x2x1
jax: 0.10.0
libtpu: 0.0.40
codegen_flags: <defaults>
</compile_context>

<pallas_src>
import jax
import jax.numpy as jnp
from jax.experimental import pallas as pl
from jax.experimental.pallas import tpu as pltpu

EPS = 1e-5
GROUPS = 2
CP = 128  # per-group channel width padded to one full lane tile


def _fused_kernel(xpad_ref, w1_ref, w2_ref, g1_ref, b1_ref, g2_ref, b2_ref,
                  out_ref, col_ref):
    """Single-program fused block.

    xpad_ref : (G, N, H+2, W+2, CP) bf16  group-split, spatially padded input
    w1_ref   : (G, 9*CP, CP)        bf16  grouped 3x3 weights, K order (ky,kx,cin)
    w2_ref   : (G, CP, C)           bf16  1x1 weights, rows = group's input chans
    g1,b1    : (G, 1, CP)           f32   BN1 affine (padded lanes: gamma=1, beta=0)
    g2,b2    : (1, C)               f32   BN2 affine
    out_ref  : (N, H, W, C)         f32
    col_ref  : (M, 9*CP)            bf16  im2col scratch (reused per group)
    """
    G, N, Hp, Wp, cp = xpad_ref.shape
    H, W = Hp - 2, Wp - 2
    C = out_ref.shape[-1]
    M = N * H * W
    inv_m = 1.0 / M

    z = None
    for g in range(G):
        # --- im2col: 9 shifted HxW windows, lane-aligned along the K axis ---
        t = 0
        for ky in range(3):
            for kx in range(3):
                col_ref[:, t * cp:(t + 1) * cp] = (
                    xpad_ref[g, :, ky:ky + H, kx:kx + W, :].reshape(M, cp))
                t += 1

        # --- grouped 3x3 conv: one deep-K bf16 matmul on the MXU ---
        acc = jnp.dot(col_ref[...], w1_ref[g],
                      preferred_element_type=jnp.float32)          # (M, cp) f32

        # --- BatchNorm1 (training-mode batch stats, single pass) + ReLU ---
        mean = jnp.sum(acc, axis=0, keepdims=True) * inv_m
        ex2 = jnp.sum(acc * acc, axis=0, keepdims=True) * inv_m
        var = jnp.maximum(ex2 - mean * mean, 0.0)
        y = (acc - mean) * jax.lax.rsqrt(var + EPS) * g1_ref[g] + b1_ref[g]
        y = jnp.maximum(y, 0.0).astype(jnp.bfloat16)

        # --- this group's share of the 1x1 conv (padded rows of w2 are zero) ---
        zg = jnp.dot(y, w2_ref[g], preferred_element_type=jnp.float32)  # (M, C)
        z = zg if z is None else z + zg

    # --- BatchNorm2 (training-mode batch stats, single pass) ---
    mean2 = jnp.sum(z, axis=0, keepdims=True) * inv_m
    ex22 = jnp.sum(z * z, axis=0, keepdims=True) * inv_m
    var2 = jnp.maximum(ex22 - mean2 * mean2, 0.0)
    o = (z - mean2) * jax.lax.rsqrt(var2 + EPS) * g2_ref[...] + b2_ref[...]

    out_ref[...] = o.reshape(N, H, W, C)


def pack_params(w1_oihw, g1, b1, w2_oihw, g2, b2, groups=GROUPS, cp=CP):
    """Module-init-time packing (hoisted out of the per-call hot path)."""
    Cout, Cin_g, KH, KW = w1_oihw.shape
    C = Cout
    Cg = C // groups

    # grouped 3x3 weight -> (groups, KH*KW*cp, cp), K ordered (ky, kx, cin)
    w1 = w1_oihw.reshape(groups, Cg, Cin_g, KH, KW)
    w1 = jnp.transpose(w1, (0, 3, 4, 2, 1))                 # (g, ky, kx, cin, cout)
    w1 = jnp.pad(w1, ((0, 0), (0, 0), (0, 0),
                      (0, cp - Cin_g), (0, cp - Cg)))
    w1 = w1.reshape(groups, KH * KW * cp, cp).astype(jnp.bfloat16)

    # 1x1 weight -> (groups, cp, C): rows = this group's (padded) input channels
    w2 = jnp.transpose(w2_oihw[:, :, 0, 0], (1, 0)).reshape(groups, Cg, C)
    w2 = jnp.pad(w2, ((0, 0), (0, cp - Cg), (0, 0))).astype(jnp.bfloat16)

    # BN affine params (BN1 per group, padded lanes are inert: acts there are 0)
    g1p = jnp.pad(g1.reshape(groups, 1, Cg).astype(jnp.float32),
                  ((0, 0), (0, 0), (0, cp - Cg)), constant_values=1.0)
    b1p = jnp.pad(b1.reshape(groups, 1, Cg).astype(jnp.float32),
                  ((0, 0), (0, 0), (0, cp - Cg)))
    g2p = g2.reshape(1, C).astype(jnp.float32)
    b2p = b2.reshape(1, C).astype(jnp.float32)
    return w1, w2, g1p, b1p, g2p, b2p


@jax.jit
def fused_forward(x_nchw, w1p, w2p, g1p, b1p, g2p, b2p):
    """Per-call path: one fused layout prologue + one pallas_call + epilogue."""
    N, C, H, W = x_nchw.shape
    groups, kc, cp = w1p.shape
    Cg = C // groups
    M = N * H * W

    # NCHW -> group-split NHWC, spatial pad=1, channel pad Cg->cp, bf16 cast
    # (single fused XLA prologue; no separate f32 padded tensor round-trip).
    xg = jnp.transpose(x_nchw.reshape(N, groups, Cg, H, W), (1, 0, 3, 4, 2))
    xg = jnp.pad(xg, ((0, 0), (0, 0), (1, 1), (1, 1), (0, cp - Cg)))
    xg = xg.astype(jnp.bfloat16)

    out_nhwc = pl.pallas_call(
        _fused_kernel,
        out_shape=jax.ShapeDtypeStruct((N, H, W, C), jnp.float32),
        in_specs=[pl.BlockSpec(memory_space=pltpu.MemorySpace.VMEM)] * 7,
        out_specs=pl.BlockSpec(memory_space=pltpu.MemorySpace.VMEM),
        scratch_shapes=[pltpu.VMEM((M, kc), jnp.bfloat16)],   # im2col buffer
    )(xg, w1p, w2p, g1p, b1p, g2p, b2p)

    return jnp.transpose(out_nhwc, (0, 3, 1, 2))              # back to NCHW


def reference(x, w1, g1, b1, w2, g2, b2):
    """Pure-JAX f32 reference of the PyTorch forward (training-mode BN)."""
    def bn(t, g, b):
        m = jnp.mean(t, axis=(0, 2, 3), keepdims=True)
        v = jnp.mean((t - m) ** 2, axis=(0, 2, 3), keepdims=True)
        return ((t - m) * jax.lax.rsqrt(v + EPS) * g.reshape(1, -1, 1, 1)
                + b.reshape(1, -1, 1, 1))

    y = jax.lax.conv_general_dilated(
        x, w1, (1, 1), ((1, 1), (1, 1)),
        dimension_numbers=("NCHW", "OIHW", "NCHW"), feature_group_count=GROUPS)
    y = jnp.maximum(bn(y, g1, b1), 0.0)
    z = jax.lax.conv_general_dilated(
        y, w2, (1, 1), ((0, 0), (0, 0)),
        dimension_numbers=("NCHW", "OIHW", "NCHW"))
    return bn(z, g2, b2)


if __name__ == "__main__":
    key = jax.random.PRNGKey(0)
    k_x, k_w1, k_w2, k_g1, k_b1, k_g2, k_b2 = jax.random.split(key, 7)

    # Channels fixed by the module (240, groups=2); small batch/spatial dims.
    N, C, H, W = 1, 240, 16, 16
    x = jax.random.normal(k_x, (N, C, H, W), jnp.float32)

    w1 = jax.random.normal(k_w1, (240, 120, 3, 3), jnp.float32) * (1.0 / 33.0)
    w2 = jax.random.normal(k_w2, (240, 240, 1, 1), jnp.float32) * (1.0 / 16.0)
    g1 = 1.0 + 0.1 * jax.random.normal(k_g1, (240,), jnp.float32)
    b1 = 0.1 * jax.random.normal(k_b1, (240,), jnp.float32)
    g2 = 1.0 + 0.1 * jax.random.normal(k_g2, (240,), jnp.float32)
    b2 = 0.1 * jax.random.normal(k_b2, (240,), jnp.float32)

    # Module-init-time packing (NOT in the per-call path).
    packed = pack_params(w1, g1, b1, w2, g2, b2)

    out = fused_forward(x, *packed)
    jax.block_until_ready(out)

    ref = reference(x, w1, g1, b1, w2, g2, b2)
    assert out.shape == (N, C, H, W)
    err = float(jnp.max(jnp.abs(out - ref)))
    assert jnp.allclose(out, ref, rtol=2e-2, atol=2e-2), err

    print("KERNEL_OK")
</pallas_src>

<mosaic_0001>
module attributes {stable_mosaic.version = 11 : i64} {
  func.func @_fused_kernel(%arg0: memref<2x1x18x18x128xbf16, #tpu.memory_space<vmem>>, %arg1: memref<2x1152x128xbf16, #tpu.memory_space<vmem>>, %arg2: memref<2x128x240xbf16, #tpu.memory_space<vmem>>, %arg3: memref<2x1x128xf32, #tpu.memory_space<vmem>>, %arg4: memref<2x1x128xf32, #tpu.memory_space<vmem>>, %arg5: memref<1x240xf32, #tpu.memory_space<vmem>>, %arg6: memref<1x240xf32, #tpu.memory_space<vmem>>, %arg7: memref<1x16x16x240xf32, #tpu.memory_space<vmem>>, %arg8: memref<256x1152xbf16, #tpu.memory_space<vmem>>) attributes {dimension_semantics = [], scalar_prefetch = 0 : i64, scratch_operands = 1 : i64, tpu.core_type = #tpu.core_type<tc>} {
    %c0 = arith.constant 0 : index
    %c0_0 = arith.constant 0 : index
    %c0_1 = arith.constant 0 : index
    %c0_2 = arith.constant 0 : index
    %c0_3 = arith.constant 0 : index
    %0 = vector.load %arg0[%c0, %c0_0, %c0_1, %c0_2, %c0_3] : memref<2x1x18x18x128xbf16, #tpu.memory_space<vmem>>, vector<1x1x16x16x128xbf16>
    %1 = vector.shape_cast %0 : vector<1x1x16x16x128xbf16> to vector<1x16x16x128xbf16>
    %2 = vector.shape_cast %1 : vector<1x16x16x128xbf16> to vector<256x128xbf16>
    %c0_4 = arith.constant 0 : index
    %c0_5 = arith.constant 0 : index
    %3 = vector.load %arg8[%c0_4, %c0_5] : memref<256x1152xbf16, #tpu.memory_space<vmem>>, vector<256x128xbf16>
    tpu.vector_store %arg8[%c0_4, %c0_5], %2 {strides = array<i32>} : memref<256x1152xbf16, #tpu.memory_space<vmem>>, vector<256x128xbf16>,
    %c0_6 = arith.constant 0 : index
    %c0_7 = arith.constant 0 : index
    %c0_8 = arith.constant 0 : index
    %c1 = arith.constant 1 : index
    %c0_9 = arith.constant 0 : index
    %4 = vector.load %arg0[%c0_6, %c0_7, %c0_8, %c1, %c0_9] : memref<2x1x18x18x128xbf16, #tpu.memory_space<vmem>>, vector<1x1x16x16x128xbf16>
    %5 = vector.shape_cast %4 : vector<1x1x16x16x128xbf16> to vector<1x16x16x128xbf16>
    %6 = vector.shape_cast %5 : vector<1x16x16x128xbf16> to vector<256x128xbf16>
    %c0_10 = arith.constant 0 : index
    %c128 = arith.constant 128 : index
    %7 = vector.load %arg8[%c0_10, %c128] : memref<256x1152xbf16, #tpu.memory_space<vmem>>, vector<256x128xbf16>
    tpu.vector_store %arg8[%c0_10, %c128], %6 {strides = array<i32>} : memref<256x1152xbf16, #tpu.memory_space<vmem>>, vector<256x128xbf16>,
    %c0_11 = arith.constant 0 : index
    %c0_12 = arith.constant 0 : index
    %c0_13 = arith.constant 0 : index
    %c2 = arith.constant 2 : index
    %c0_14 = arith.constant 0 : index
    %8 = vector.load %arg0[%c0_11, %c0_12, %c0_13, %c2, %c0_14] : memref<2x1x18x18x128xbf16, #tpu.memory_space<vmem>>, vector<1x1x16x16x128xbf16>
    %9 = vector.shape_cast %8 : vector<1x1x16x16x128xbf16> to vector<1x16x16x128xbf16>
    %10 = vector.shape_cast %9 : vector<1x16x16x128xbf16> to vector<256x128xbf16>
    %c0_15 = arith.constant 0 : index
    %c256 = arith.constant 256 : index
    %11 = vector.load %arg8[%c0_15, %c256] : memref<256x1152xbf16, #tpu.memory_space<vmem>>, vector<256x128xbf16>
    tpu.vector_store %arg8[%c0_15, %c256], %10 {strides = array<i32>} : memref<256x1152xbf16, #tpu.memory_space<vmem>>, vector<256x128xbf16>,
    %c0_16 = arith.constant 0 : index
    %c0_17 = arith.constant 0 : index
    %c1_18 = arith.constant 1 : index
    %c0_19 = arith.constant 0 : index
    %c0_20 = arith.constant 0 : index
    %12 = vector.load %arg0[%c0_16, %c0_17, %c1_18, %c0_19, %c0_20] : memref<2x1x18x18x128xbf16, #tpu.memory_space<vmem>>, vector<1x1x16x16x128xbf16>
    %13 = vector.shape_cast %12 : vector<1x1x16x16x128xbf16> to vector<1x16x16x128xbf16>
    %14 = vector.shape_cast %13 : vector<1x16x16x128xbf16> to vector<256x128xbf16>
    %c0_21 = arith.constant 0 : index
    %c384 = arith.constant 384 : index
    %15 = vector.load %arg8[%c0_21, %c384] : memref<256x1152xbf16, #tpu.memory_space<vmem>>, vector<256x128xbf16>
    tpu.vector_store %arg8[%c0_21, %c384], %14 {strides = array<i32>} : memref<256x1152xbf16, #tpu.memory_space<vmem>>, vector<256x128xbf16>,
    %c0_22 = arith.constant 0 : index
    %c0_23 = arith.constant 0 : index
    %c1_24 = arith.constant 1 : index
    %c1_25 = arith.constant 1 : index
    %c0_26 = arith.constant 0 : index
    %16 = vector.load %arg0[%c0_22, %c0_23, %c1_24, %c1_25, %c0_26] : memref<2x1x18x18x128xbf16, #tpu.memory_space<vmem>>, vector<1x1x16x16x128xbf16>
    %17 = vector.shape_cast %16 : vector<1x1x16x16x128xbf16> to vector<1x16x16x128xbf16>
    %18 = vector.shape_cast %17 : vector<1x16x16x128xbf16> to vector<256x128xbf16>
    %c0_27 = arith.constant 0 : index
    %c512 = arith.constant 512 : index
    %19 = vector.load %arg8[%c0_27, %c512] : memref<256x1152xbf16, #tpu.memory_space<vmem>>, vector<256x128xbf16>
    tpu.vector_store %arg8[%c0_27, %c512], %18 {strides = array<i32>} : memref<256x1152xbf16, #tpu.memory_space<vmem>>, vector<256x128xbf16>,
    %c0_28 = arith.constant 0 : index
    %c0_29 = arith.constant 0 : index
    %c1_30 = arith.constant 1 : index
    %c2_31 = arith.constant 2 : index
    %c0_32 = arith.constant 0 : index
    %20 = vector.load %arg0[%c0_28, %c0_29, %c1_30, %c2_31, %c0_32] : memref<2x1x18x18x128xbf16, #tpu.memory_space<vmem>>, vector<1x1x16x16x128xbf16>
    %21 = vector.shape_cast %20 : vector<1x1x16x16x128xbf16> to vector<1x16x16x128xbf16>
    %22 = vector.shape_cast %21 : vector<1x16x16x128xbf16> to vector<256x128xbf16>
    %c0_33 = arith.constant 0 : index
    %c640 = arith.constant 640 : index
    %23 = vector.load %arg8[%c0_33, %c640] : memref<256x1152xbf16, #tpu.memory_space<vmem>>, vector<256x128xbf16>
    tpu.vector_store %arg8[%c0_33, %c640], %22 {strides = array<i32>} : memref<256x1152xbf16, #tpu.memory_space<vmem>>, vector<256x128xbf16>,
    %c0_34 = arith.constant 0 : index
    %c0_35 = arith.constant 0 : index
    %c2_36 = arith.constant 2 : index
    %c0_37 = arith.constant 0 : index
    %c0_38 = arith.constant 0 : index
    %24 = vector.load %arg0[%c0_34, %c0_35, %c2_36, %c0_37, %c0_38] : memref<2x1x18x18x128xbf16, #tpu.memory_space<vmem>>, vector<1x1x16x16x128xbf16>
    %25 = vector.shape_cast %24 : vector<1x1x16x16x128xbf16> to vector<1x16x16x128xbf16>
    %26 = vector.shape_cast %25 : vector<1x16x16x128xbf16> to vector<256x128xbf16>
    %c0_39 = arith.constant 0 : index
    %c768 = arith.constant 768 : index
    %27 = vector.load %arg8[%c0_39, %c768] : memref<256x1152xbf16, #tpu.memory_space<vmem>>, vector<256x128xbf16>
    tpu.vector_store %arg8[%c0_39, %c768], %26 {strides = array<i32>} : memref<256x1152xbf16, #tpu.memory_space<vmem>>, vector<256x128xbf16>,
    %c0_40 = arith.constant 0 : index
    %c0_41 = arith.constant 0 : index
    %c2_42 = arith.constant 2 : index
    %c1_43 = arith.constant 1 : index
    %c0_44 = arith.constant 0 : index
    %28 = vector.load %arg0[%c0_40, %c0_41, %c2_42, %c1_43, %c0_44] : memref<2x1x18x18x128xbf16, #tpu.memory_space<vmem>>, vector<1x1x16x16x128xbf16>
    %29 = vector.shape_cast %28 : vector<1x1x16x16x128xbf16> to vector<1x16x16x128xbf16>
    %30 = vector.shape_cast %29 : vector<1x16x16x128xbf16> to vector<256x128xbf16>
    %c0_45 = arith.constant 0 : index
    %c896 = arith.constant 896 : index
    %31 = vector.load %arg8[%c0_45, %c896] : memref<256x1152xbf16, #tpu.memory_space<vmem>>, vector<256x128xbf16>
    tpu.vector_store %arg8[%c0_45, %c896], %30 {strides = array<i32>} : memref<256x1152xbf16, #tpu.memory_space<vmem>>, vector<256x128xbf16>,
    %c0_46 = arith.constant 0 : index
    %c0_47 = arith.constant 0 : index
    %c2_48 = arith.constant 2 : index
    %c2_49 = arith.constant 2 : index
    %c0_50 = arith.constant 0 : index
    %32 = vector.load %arg0[%c0_46, %c0_47, %c2_48, %c2_49, %c0_50] : memref<2x1x18x18x128xbf16, #tpu.memory_space<vmem>>, vector<1x1x16x16x128xbf16>
    %33 = vector.shape_cast %32 : vector<1x1x16x16x128xbf16> to vector<1x16x16x128xbf16>
    %34 = vector.shape_cast %33 : vector<1x16x16x128xbf16> to vector<256x128xbf16>
    %c0_51 = arith.constant 0 : index
    %c1024 = arith.constant 1024 : index
    %35 = vector.load %arg8[%c0_51, %c1024] : memref<256x1152xbf16, #tpu.memory_space<vmem>>, vector<256x128xbf16>
    tpu.vector_store %arg8[%c0_51, %c1024], %34 {strides = array<i32>} : memref<256x1152xbf16, #tpu.memory_space<vmem>>, vector<256x128xbf16>,
    %c0_52 = arith.constant 0 : index
    %c0_53 = arith.constant 0 : index
    %36 = vector.load %arg8[%c0_52, %c0_53] : memref<256x1152xbf16, #tpu.memory_space<vmem>>, vector<256x1152xbf16>
    %c0_54 = arith.constant 0 : index
    %c0_55 = arith.constant 0 : index
    %c0_56 = arith.constant 0 : index
    %37 = vector.load %arg1[%c0_54, %c0_55, %c0_56] : memref<2x1152x128xbf16, #tpu.memory_space<vmem>>, vector<1x1152x128xbf16>
    %38 = vector.shape_cast %37 : vector<1x1152x128xbf16> to vector<1152x128xbf16>
    %cst = arith.constant dense<0.000000e+00> : vector<256x128xf32>
    %39 = tpu.matmul %36, %38, %cst {dimension_numbers = #tpu.dot_dimension_numbers<[1], [0], [0], [1], [0, 0, 1, 1], [], []>} : vector<256x1152xbf16>, vector<1152x128xbf16>, vector<256x128xf32> -> vector<256x128xf32>
    %cst_57 = arith.constant dense<0.000000e+00> : vector<128xf32>
    %40 = vector.multi_reduction <add>, %39, %cst_57 [0] : vector<256x128xf32> to vector<128xf32>
    %41 = vector.shape_cast %40 : vector<128xf32> to vector<1x128xf32>
    %cst_58 = arith.constant 3.906250e-03 : f32
    %42 = vector.broadcast %cst_58 : f32 to vector<1x128xf32>
    %43 = arith.mulf %41, %42 : vector<1x128xf32>
    %44 = arith.mulf %39, %39 : vector<256x128xf32>
    %cst_59 = arith.constant dense<0.000000e+00> : vector<128xf32>
    %45 = vector.multi_reduction <add>, %44, %cst_59 [0] : vector<256x128xf32> to vector<128xf32>
    %46 = vector.shape_cast %45 : vector<128xf32> to vector<1x128xf32>
    %cst_60 = arith.constant 3.906250e-03 : f32
    %47 = vector.broadcast %cst_60 : f32 to vector<1x128xf32>
    %48 = arith.mulf %46, %47 : vector<1x128xf32>
    %49 = arith.mulf %43, %43 : vector<1x128xf32>
    %50 = arith.subf %48, %49 : vector<1x128xf32>
    %cst_61 = arith.constant 0.000000e+00 : f32
    %51 = vector.broadcast %cst_61 : f32 to vector<1x128xf32>
    %52 = arith.maximumf %50, %51 : vector<1x128xf32>
    %53 = vector.broadcast %43 : vector<1x128xf32> to vector<256x128xf32>
    %54 = arith.subf %39, %53 : vector<256x128xf32>
    %cst_62 = arith.constant 9.99999974E-6 : f32
    %55 = vector.broadcast %cst_62 : f32 to vector<1x128xf32>
    %56 = arith.addf %52, %55 : vector<1x128xf32>
    %57 = math.rsqrt %56 : vector<1x128xf32>
    %58 = vector.broadcast %57 : vector<1x128xf32> to vector<256x128xf32>
    %59 = arith.mulf %54, %58 : vector<256x128xf32>
    %c0_63 = arith.constant 0 : index
    %c0_64 = arith.constant 0 : index
    %c0_65 = arith.constant 0 : index
    %60 = vector.load %arg3[%c0_63, %c0_64, %c0_65] : memref<2x1x128xf32, #tpu.memory_space<vmem>>, vector<1x1x128xf32>
    %61 = vector.shape_cast %60 : vector<1x1x128xf32> to vector<1x128xf32>
    %62 = vector.broadcast %61 : vector<1x128xf32> to vector<256x128xf32>
    %63 = arith.mulf %59, %62 : vector<256x128xf32>
    %c0_66 = arith.constant 0 : index
    %c0_67 = arith.constant 0 : index
    %c0_68 = arith.constant 0 : index
    %64 = vector.load %arg4[%c0_66, %c0_67, %c0_68] : memref<2x1x128xf32, #tpu.memory_space<vmem>>, vector<1x1x128xf32>
    %65 = vector.shape_cast %64 : vector<1x1x128xf32> to vector<1x128xf32>
    %66 = vector.broadcast %65 : vector<1x128xf32> to vector<256x128xf32>
    %67 = arith.addf %63, %66 : vector<256x128xf32>
    %cst_69 = arith.constant 0.000000e+00 : f32
    %68 = vector.broadcast %cst_69 : f32 to vector<256x128xf32>
    %69 = arith.maximumf %67, %68 : vector<256x128xf32>
    %70 = arith.truncf %69 : vector<256x128xf32> to vector<256x128xbf16>
    %c0_70 = arith.constant 0 : index
    %c0_71 = arith.constant 0 : index
    %c0_72 = arith.constant 0 : index
    %71 = vector.load %arg2[%c0_70, %c0_71, %c0_72] : memref<2x128x240xbf16, #tpu.memory_space<vmem>>, vector<1x128x240xbf16>
    %72 = vector.shape_cast %71 : vector<1x128x240xbf16> to vector<128x240xbf16>
    %cst_73 = arith.constant dense<0.000000e+00> : vector<256x240xf32>
    %73 = tpu.matmul %70, %72, %cst_73 {dimension_numbers = #tpu.dot_dimension_numbers<[1], [0], [0], [1], [0, 0, 1, 1], [], []>} : vector<256x128xbf16>, vector<128x240xbf16>, vector<256x240xf32> -> vector<256x240xf32>
    %c1_74 = arith.constant 1 : index
    %c0_75 = arith.constant 0 : index
    %c0_76 = arith.constant 0 : index
    %c0_77 = arith.constant 0 : index
    %c0_78 = arith.constant 0 : index
    %74 = vector.load %arg0[%c1_74, %c0_75, %c0_76, %c0_77, %c0_78] : memref<2x1x18x18x128xbf16, #tpu.memory_space<vmem>>, vector<1x1x16x16x128xbf16>
    %75 = vector.shape_cast %74 : vector<1x1x16x16x128xbf16> to vector<1x16x16x128xbf16>
    %76 = vector.shape_cast %75 : vector<1x16x16x128xbf16> to vector<256x128xbf16>
    %c0_79 = arith.constant 0 : index
    %c0_80 = arith.constant 0 : index
    %77 = vector.load %arg8[%c0_79, %c0_80] : memref<256x1152xbf16, #tpu.memory_space<vmem>>, vector<256x128xbf16>
    tpu.vector_store %arg8[%c0_79, %c0_80], %76 {strides = array<i32>} : memref<256x1152xbf16, #tpu.memory_space<vmem>>, vector<256x128xbf16>,
    %c1_81 = arith.constant 1 : index
    %c0_82 = arith.constant 0 : index
    %c0_83 = arith.constant 0 : index
    %c1_84 = arith.constant 1 : index
    %c0_85 = arith.constant 0 : index
    %78 = vector.load %arg0[%c1_81, %c0_82, %c0_83, %c1_84, %c0_85] : memref<2x1x18x18x128xbf16, #tpu.memory_space<vmem>>, vector<1x1x16x16x128xbf16>
    %79 = vector.shape_cast %78 : vector<1x1x16x16x128xbf16> to vector<1x16x16x128xbf16>
    %80 = vector.shape_cast %79 : vector<1x16x16x128xbf16> to vector<256x128xbf16>
    %c0_86 = arith.constant 0 : index
    %c128_87 = arith.constant 128 : index
    %81 = vector.load %arg8[%c0_86, %c128_87] : memref<256x1152xbf16, #tpu.memory_space<vmem>>, vector<256x128xbf16>
    tpu.vector_store %arg8[%c0_86, %c128_87], %80 {strides = array<i32>} : memref<256x1152xbf16, #tpu.memory_space<vmem>>, vector<256x128xbf16>,
    %c1_88 = arith.constant 1 : index
    %c0_89 = arith.constant 0 : index
    %c0_90 = arith.constant 0 : index
    %c2_91 = arith.constant 2 : index
    %c0_92 = arith.constant 0 : index
    %82 = vector.load %arg0[%c1_88, %c0_89, %c0_90, %c2_91, %c0_92] : memref<2x1x18x18x128xbf16, #tpu.memory_space<vmem>>, vector<1x1x16x16x128xbf16>
    %83 = vector.shape_cast %82 : vector<1x1x16x16x128xbf16> to vector<1x16x16x128xbf16>
    %84 = vector.shape_cast %83 : vector<1x16x16x128xbf16> to vector<256x128xbf16>
    %c0_93 = arith.constant 0 : index
    %c256_94 = arith.constant 256 : index
    %85 = vector.load %arg8[%c0_93, %c256_94] : memref<256x1152xbf16, #tpu.memory_space<vmem>>, vector<256x128xbf16>
    tpu.vector_store %arg8[%c0_93, %c256_94], %84 {strides = array<i32>} : memref<256x1152xbf16, #tpu.memory_space<vmem>>, vector<256x128xbf16>,
    %c1_95 = arith.constant 1 : index
    %c0_96 = arith.constant 0 : index
    %c1_97 = arith.constant 1 : index
    %c0_98 = arith.constant 0 : index
    %c0_99 = arith.constant 0 : index
    %86 = vector.load %arg0[%c1_95, %c0_96, %c1_97, %c0_98, %c0_99] : memref<2x1x18x18x128xbf16, #tpu.memory_space<vmem>>, vector<1x1x16x16x128xbf16>
    %87 = vector.shape_cast %86 : vector<1x1x16x16x128xbf16> to vector<1x16x16x128xbf16>
    %88 = vector.shape_cast %87 : vector<1x16x16x128xbf16> to vector<256x128xbf16>
    %c0_100 = arith.constant 0 : index
    %c384_101 = arith.constant 384 : index
    %89 = vector.load %arg8[%c0_100, %c384_101] : memref<256x1152xbf16, #tpu.memory_space<vmem>>, vector<256x128xbf16>
    tpu.vector_store %arg8[%c0_100, %c384_101], %88 {strides = array<i32>} : memref<256x1152xbf16, #tpu.memory_space<vmem>>, vector<256x128xbf16>,
    %c1_102 = arith.constant 1 : index
    %c0_103 = arith.constant 0 : index
    %c1_104 = arith.constant 1 : index
    %c1_105 = arith.constant 1 : index
    %c0_106 = arith.constant 0 : index
    %90 = vector.load %arg0[%c1_102, %c0_103, %c1_104, %c1_105, %c0_106] : memref<2x1x18x18x128xbf16, #tpu.memory_space<vmem>>, vector<1x1x16x16x128xbf16>
    %91 = vector.shape_cast %90 : vector<1x1x16x16x128xbf16> to vector<1x16x16x128xbf16>
    %92 = vector.shape_cast %91 : vector<1x16x16x128xbf16> to vector<256x128xbf16>
    %c0_107 = arith.constant 0 : index
    %c512_108 = arith.constant 512 : index
    %93 = vector.load %arg8[%c0_107, %c512_108] : memref<256x1152xbf16, #tpu.memory_space<vmem>>, vector<256x128xbf16>
    tpu.vector_store %arg8[%c0_107, %c512_108], %92 {strides = array<i32>} : memref<256x1152xbf16, #tpu.memory_space<vmem>>, vector<256x128xbf16>,
    %c1_109 = arith.constant 1 : index
    %c0_110 = arith.constant 0 : index
    %c1_111 = arith.constant 1 : index
    %c2_112 = arith.constant 2 : index
    %c0_113 = arith.constant 0 : index
    %94 = vector.load %arg0[%c1_109, %c0_110, %c1_111, %c2_112, %c0_113] : memref<2x1x18x18x128xbf16, #tpu.memory_space<vmem>>, vector<1x1x16x16x128xbf16>
    %95 = vector.shape_cast %94 : vector<1x1x16x16x128xbf16> to vector<1x16x16x128xbf16>
    %96 = vector.shape_cast %95 : vector<1x16x16x128xbf16> to vector<256x128xbf16>
    %c0_114 = arith.constant 0 : index
    %c640_115 = arith.constant 640 : index
    %97 = vector.load %arg8[%c0_114, %c640_115] : memref<256x1152xbf16, #tpu.memory_space<vmem>>, vector<256x128xbf16>
    tpu.vector_store %arg8[%c0_114, %c640_115], %96 {strides = array<i32>} : memref<256x1152xbf16, #tpu.memory_space<vmem>>, vector<256x128xbf16>,
    %c1_116 = arith.constant 1 : index
    %c0_117 = arith.constant 0 : index
    %c2_118 = arith.constant 2 : index
    %c0_119 = arith.constant 0 : index
    %c0_120 = arith.constant 0 : index
    %98 = vector.load %arg0[%c1_116, %c0_117, %c2_118, %c0_119, %c0_120] : memref<2x1x18x18x128xbf16, #tpu.memory_space<vmem>>, vector<1x1x16x16x128xbf16>
    %99 = vector.shape_cast %98 : vector<1x1x16x16x128xbf16> to vector<1x16x16x128xbf16>
    %100 = vector.shape_cast %99 : vector<1x16x16x128xbf16> to vector<256x128xbf16>
    %c0_121 = arith.constant 0 : index
    %c768_122 = arith.constant 768 : index
    %101 = vector.load %arg8[%c0_121, %c768_122] : memref<256x1152xbf16, #tpu.memory_space<vmem>>, vector<256x128xbf16>
    tpu.vector_store %arg8[%c0_121, %c768_122], %100 {strides = array<i32>} : memref<256x1152xbf16, #tpu.memory_space<vmem>>, vector<256x128xbf16>,
    %c1_123 = arith.constant 1 : index
    %c0_124 = arith.constant 0 : index
    %c2_125 = arith.constant 2 : index
    %c1_126 = arith.constant 1 : index
    %c0_127 = arith.constant 0 : index
    %102 = vector.load %arg0[%c1_123, %c0_124, %c2_125, %c1_126, %c0_127] : memref<2x1x18x18x128xbf16, #tpu.memory_space<vmem>>, vector<1x1x16x16x128xbf16>
    %103 = vector.shape_cast %102 : vector<1x1x16x16x128xbf16> to vector<1x16x16x128xbf16>
    %104 = vector.shape_cast %103 : vector<1x16x16x128xbf16> to vector<256x128xbf16>
    %c0_128 = arith.constant 0 : index
    %c896_129 = arith.constant 896 : index
    %105 = vector.load %arg8[%c0_128, %c896_129] : memref<256x1152xbf16, #tpu.memory_space<vmem>>, vector<256x128xbf16>
    tpu.vector_store %arg8[%c0_128, %c896_129], %104 {strides = array<i32>} : memref<256x1152xbf16, #tpu.memory_space<vmem>>, vector<256x128xbf16>,
    %c1_130 = arith.constant 1 : index
    %c0_131 = arith.constant 0 : index
    %c2_132 = arith.constant 2 : index
    %c2_133 = arith.constant 2 : index
    %c0_134 = arith.constant 0 : index
    %106 = vector.load %arg0[%c1_130, %c0_131, %c2_132, %c2_133, %c0_134] : memref<2x1x18x18x128xbf16, #tpu.memory_space<vmem>>, vector<1x1x16x16x128xbf16>
    %107 = vector.shape_cast %106 : vector<1x1x16x16x128xbf16> to vector<1x16x16x128xbf16>
    %108 = vector.shape_cast %107 : vector<1x16x16x128xbf16> to vector<256x128xbf16>
    %c0_135 = arith.constant 0 : index
    %c1024_136 = arith.constant 1024 : index
    %109 = vector.load %arg8[%c0_135, %c1024_136] : memref<256x1152xbf16, #tpu.memory_space<vmem>>, vector<256x128xbf16>
    tpu.vector_store %arg8[%c0_135, %c1024_136], %108 {strides = array<i32>} : memref<256x1152xbf16, #tpu.memory_space<vmem>>, vector<256x128xbf16>,
    %c0_137 = arith.constant 0 : index
    %c0_138 = arith.constant 0 : index
    %110 = vector.load %arg8[%c0_137, %c0_138] : memref<256x1152xbf16, #tpu.memory_space<vmem>>, vector<256x1152xbf16>
    %c1_139 = arith.constant 1 : index
    %c0_140 = arith.constant 0 : index
    %c0_141 = arith.constant 0 : index
    %111 = vector.load %arg1[%c1_139, %c0_140, %c0_141] : memref<2x1152x128xbf16, #tpu.memory_space<vmem>>, vector<1x1152x128xbf16>
    %112 = vector.shape_cast %111 : vector<1x1152x128xbf16> to vector<1152x128xbf16>
    %cst_142 = arith.constant dense<0.000000e+00> : vector<256x128xf32>
    %113 = tpu.matmul %110, %112, %cst_142 {dimension_numbers = #tpu.dot_dimension_numbers<[1], [0], [0], [1], [0, 0, 1, 1], [], []>} : vector<256x1152xbf16>, vector<1152x128xbf16>, vector<256x128xf32> -> vector<256x128xf32>
    %cst_143 = arith.constant dense<0.000000e+00> : vector<128xf32>
    %114 = vector.multi_reduction <add>, %113, %cst_143 [0] : vector<256x128xf32> to vector<128xf32>
    %115 = vector.shape_cast %114 : vector<128xf32> to vector<1x128xf32>
    %cst_144 = arith.constant 3.906250e-03 : f32
    %116 = vector.broadcast %cst_144 : f32 to vector<1x128xf32>
    %117 = arith.mulf %115, %116 : vector<1x128xf32>
    %118 = arith.mulf %113, %113 : vector<256x128xf32>
    %cst_145 = arith.constant dense<0.000000e+00> : vector<128xf32>
    %119 = vector.multi_reduction <add>, %118, %cst_145 [0] : vector<256x128xf32> to vector<128xf32>
    %120 = vector.shape_cast %119 : vector<128xf32> to vector<1x128xf32>
    %cst_146 = arith.constant 3.906250e-03 : f32
    %121 = vector.broadcast %cst_146 : f32 to vector<1x128xf32>
    %122 = arith.mulf %120, %121 : vector<1x128xf32>
    %123 = arith.mulf %117, %117 : vector<1x128xf32>
    %124 = arith.subf %122, %123 : vector<1x128xf32>
    %cst_147 = arith.constant 0.000000e+00 : f32
    %125 = vector.broadcast %cst_147 : f32 to vector<1x128xf32>
    %126 = arith.maximumf %124, %125 : vector<1x128xf32>
    %127 = vector.broadcast %117 : vector<1x128xf32> to vector<256x128xf32>
    %128 = arith.subf %113, %127 : vector<256x128xf32>
    %cst_148 = arith.constant 9.99999974E-6 : f32
    %129 = vector.broadcast %cst_148 : f32 to vector<1x128xf32>
    %130 = arith.addf %126, %129 : vector<1x128xf32>
    %131 = math.rsqrt %130 : vector<1x128xf32>
    %132 = vector.broadcast %131 : vector<1x128xf32> to vector<256x128xf32>
    %133 = arith.mulf %128, %132 : vector<256x128xf32>
    %c1_149 = arith.constant 1 : index
    %c0_150 = arith.constant 0 : index
    %c0_151 = arith.constant 0 : index
    %134 = vector.load %arg3[%c1_149, %c0_150, %c0_151] : memref<2x1x128xf32, #tpu.memory_space<vmem>>, vector<1x1x128xf32>
    %135 = vector.shape_cast %134 : vector<1x1x128xf32> to vector<1x128xf32>
    %136 = vector.broadcast %135 : vector<1x128xf32> to vector<256x128xf32>
    %137 = arith.mulf %133, %136 : vector<256x128xf32>
    %c1_152 = arith.constant 1 : index
    %c0_153 = arith.constant 0 : index
    %c0_154 = arith.constant 0 : index
    %138 = vector.load %arg4[%c1_152, %c0_153, %c0_154] : memref<2x1x128xf32, #tpu.memory_space<vmem>>, vector<1x1x128xf32>
    %139 = vector.shape_cast %138 : vector<1x1x128xf32> to vector<1x128xf32>
    %140 = vector.broadcast %139 : vector<1x128xf32> to vector<256x128xf32>
    %141 = arith.addf %137, %140 : vector<256x128xf32>
    %cst_155 = arith.constant 0.000000e+00 : f32
    %142 = vector.broadcast %cst_155 : f32 to vector<256x128xf32>
    %143 = arith.maximumf %141, %142 : vector<256x128xf32>
    %144 = arith.truncf %143 : vector<256x128xf32> to vector<256x128xbf16>
    %c1_156 = arith.constant 1 : index
    %c0_157 = arith.constant 0 : index
    %c0_158 = arith.constant 0 : index
    %145 = vector.load %arg2[%c1_156, %c0_157, %c0_158] : memref<2x128x240xbf16, #tpu.memory_space<vmem>>, vector<1x128x240xbf16>
    %146 = vector.shape_cast %145 : vector<1x128x240xbf16> to vector<128x240xbf16>
    %cst_159 = arith.constant dense<0.000000e+00> : vector<256x240xf32>
    %147 = tpu.matmul %144, %146, %cst_159 {dimension_numbers = #tpu.dot_dimension_numbers<[1], [0], [0], [1], [0, 0, 1, 1], [], []>} : vector<256x128xbf16>, vector<128x240xbf16>, vector<256x240xf32> -> vector<256x240xf32>
    %148 = arith.addf %73, %147 : vector<256x240xf32>
    %cst_160 = arith.constant dense<0.000000e+00> : vector<240xf32>
    %149 = vector.multi_reduction <add>, %148, %cst_160 [0] : vector<256x240xf32> to vector<240xf32>
    %150 = vector.shape_cast %149 : vector<240xf32> to vector<1x240xf32>
    %cst_161 = arith.constant 3.906250e-03 : f32
    %151 = vector.broadcast %cst_161 : f32 to vector<1x240xf32>
    %152 = arith.mulf %150, %151 : vector<1x240xf32>
    %153 = arith.mulf %148, %148 : vector<256x240xf32>
    %cst_162 = arith.constant dense<0.000000e+00> : vector<240xf32>
    %154 = vector.multi_reduction <add>, %153, %cst_162 [0] : vector<256x240xf32> to vector<240xf32>
    %155 = vector.shape_cast %154 : vector<240xf32> to vector<1x240xf32>
    %cst_163 = arith.constant 3.906250e-03 : f32
    %156 = vector.broadcast %cst_163 : f32 to vector<1x240xf32>
    %157 = arith.mulf %155, %156 : vector<1x240xf32>
    %158 = arith.mulf %152, %152 : vector<1x240xf32>
    %159 = arith.subf %157, %158 : vector<1x240xf32>
    %cst_164 = arith.constant 0.000000e+00 : f32
    %160 = vector.broadcast %cst_164 : f32 to vector<1x240xf32>
    %161 = arith.maximumf %159, %160 : vector<1x240xf32>
    %162 = vector.broadcast %152 : vector<1x240xf32> to vector<256x240xf32>
    %163 = arith.subf %148, %162 : vector<256x240xf32>
    %cst_165 = arith.constant 9.99999974E-6 : f32
    %164 = vector.broadcast %cst_165 : f32 to vector<1x240xf32>
    %165 = arith.addf %161, %164 : vector<1x240xf32>
    %166 = math.rsqrt %165 : vector<1x240xf32>
    %167 = vector.broadcast %166 : vector<1x240xf32> to vector<256x240xf32>
    %168 = arith.mulf %163, %167 : vector<256x240xf32>
    %c0_166 = arith.constant 0 : index
    %c0_167 = arith.constant 0 : index
    %169 = vector.load %arg5[%c0_166, %c0_167] : memref<1x240xf32, #tpu.memory_space<vmem>>, vector<1x240xf32>
    %170 = vector.broadcast %169 : vector<1x240xf32> to vector<256x240xf32>
    %171 = arith.mulf %168, %170 : vector<256x240xf32>
    %c0_168 = arith.constant 0 : index
    %c0_169 = arith.constant 0 : index
    %172 = vector.load %arg6[%c0_168, %c0_169] : memref<1x240xf32, #tpu.memory_space<vmem>>, vector<1x240xf32>
    %173 = vector.broadcast %172 : vector<1x240xf32> to vector<256x240xf32>
    %174 = arith.addf %171, %173 : vector<256x240xf32>
    %175 = vector.shape_cast %174 : vector<256x240xf32> to vector<1x16x16x240xf32>
    %c0_170 = arith.constant 0 : index
    %c0_171 = arith.constant 0 : index
    %c0_172 = arith.constant 0 : index
    %c0_173 = arith.constant 0 : index
    %176 = vector.load %arg7[%c0_170, %c0_171, %c0_172, %c0_173] : memref<1x16x16x240xf32, #tpu.memory_space<vmem>>, vector<1x16x16x240xf32>
    tpu.vector_store %arg7[%c0_170, %c0_171, %c0_172, %c0_173], %175 {strides = array<i32>} : memref<1x16x16x240xf32, #tpu.memory_space<vmem>>, vector<1x16x16x240xf32>,
    return
  }
}

</mosaic_0001>

<llo_original>
// kernel: fused_forward.1
$region0: #{fused_forward.1}
  #allocation0 [shape = 'u32[]', space=smem, size = 0x4, offset = 0x4, fixed_abs, tag = 'smem constant byte address 0x4 - core index']
  #allocation1 [shape = 'u32[144,128]{1,0:T(1,128)}', space=vmem, size = 0x12000, scoped, tag = 'internal scratch']
  #allocation2 [shape = 'bf16[256,1152]{1,0:T(8,128)(2,1)}', space=vmem, size = 0x90000, scoped, tag = 'scratch operand']
  %s0 = inlined_call_operand.vmem [shape: bf16[2,1,18,18,128], index: 0, kind: input, shape index: {}]
  %s1 = inlined_call_operand.vmem [shape: bf16[2,1152,128], index: 1, kind: input, shape index: {}]
  %s2 = inlined_call_operand.vmem [shape: bf16[2,128,240], index: 2, kind: input, shape index: {}]
  %s3 = inlined_call_operand.vmem [shape: f32[2,1,128], index: 3, kind: input, shape index: {}]
  %s4 = inlined_call_operand.vmem [shape: f32[2,1,128], index: 4, kind: input, shape index: {}]
  %s5 = inlined_call_operand.vmem [shape: f32[1,240], index: 5, kind: input, shape index: {}]
  %s6 = inlined_call_operand.vmem [shape: f32[1,240], index: 6, kind: input, shape index: {}]
  %s7 = inlined_call_operand.hbm [shape: f32[1,16,16,240], index: 7, kind: output, shape index: {}]
  %s8 = sld [smem:[#allocation0]]
  $region38: #{fused_forward.1} parent=0
    _
  %s10 = ssub.s32 1, %s8
  %s11 = scalar_select 0, %s10, %s8
  $region1: #{fused_forward.1} parent=0
    #allocation3 [shape = 'u8[262144]{0}', space=vmem, size = 0x40000, scoped, tag = 'output window, operand 0, single buffered']
    #allocation4 [shape = 's32[1]{0}', space=sflag, size = 0x4, scoped, tag = 'scoped memory for fused_forward.1']
    %12 = vsyncpa [#allocation4], 0
    // Predicated region
    $region2: #{fused_forward.1} parent=1 // pred_check
      _
    $region3: #{fused_forward.1} parent=1 // pred_check_branch
      %14 = sbr.rel (0) target = $region5
    $region4: #{fused_forward.1} parent=1 // pred_region
      _
    $region5: #{fused_forward.1} parent=1 // pred_fallthru
      _
    // Predicated region
    $region6: #{fused_forward.1} parent=1 // pred_check
      _
    $region7: #{fused_forward.1} parent=1 // pred_check_branch
      %16 = sbr.rel (0) target = $region9
    $region8: #{fused_forward.1} parent=1 // pred_region
      _
    $region9: #{fused_forward.1} parent=1 // pred_fallthru
      _
    // Predicated region
    $region10: #{fused_forward.1} parent=1 // pred_check
      _
    $region11: #{fused_forward.1} parent=1 // pred_check_branch
      %18 = sbr.rel (0) target = $region13
    $region12: #{fused_forward.1} parent=1 // pred_region
      _
    $region13: #{fused_forward.1} parent=1 // pred_fallthru
      _
    // Predicated region
    $region14: #{fused_forward.1} parent=1 // pred_check
      _
    $region15: #{fused_forward.1} parent=1 // pred_check_branch
      %20 = sbr.rel (0) target = $region17
    $region16: #{fused_forward.1} parent=1 // pred_region
      _
    $region17: #{fused_forward.1} parent=1 // pred_fallthru
      _
    // Predicated region
    $region18: #{fused_forward.1} parent=1 // pred_check
      _
    $region19: #{fused_forward.1} parent=1 // pred_check_branch
      %22 = sbr.rel (0) target = $region21
    $region20: #{fused_forward.1} parent=1 // pred_region
      _
    $region21: #{fused_forward.1} parent=1 // pred_fallthru
      _
    // Predicated region
    $region22: #{fused_forward.1} parent=1 // pred_check
      _
    $region23: #{fused_forward.1} parent=1 // pred_check_branch
      %24 = sbr.rel (0) target = $region25
    $region24: #{fused_forward.1} parent=1 // pred_region
      _
    $region25: #{fused_forward.1} parent=1 // pred_fallthru
      _
    // Predicated region
    $region26: #{fused_forward.1} parent=1 // pred_check
      _
    $region27: #{fused_forward.1} parent=1 // pred_check_branch
      %26 = sbr.rel (0) target = $region29
    $region28: #{fused_forward.1} parent=1 // pred_region
      _
    $region29: #{fused_forward.1} parent=1 // pred_fallthru
      _
    %v28 = vld [vmem:[%s0] sm:$0xf]
    %v29 = vld [vmem:[%s0 + $0x4] sm:$0xf]
    %v30 = vld [vmem:[%s0 + $0xc] sm:$0xf]
    %v31 = vld [vmem:[%s0 + $0x10] sm:$0xf]
    %v32 = vld [vmem:[%s0 + $0x18] sm:$0xf]
    %v33 = vld [vmem:[%s0 + $0x1c] sm:$0xf]
    %v34 = vld [vmem:[%s0 + $0x24] sm:$0xf]
    %v35 = vld [vmem:[%s0 + $0x28] sm:$0xf]
    %v36 = vld [vmem:[%s0 + $0x30] sm:$0xf]
    %v37 = vld [vmem:[%s0 + $0x34] sm:$0xf]
    %v38 = vld [vmem:[%s0 + $0x3c] sm:$0xf]
    %v39 = vld [vmem:[%s0 + $0x40] sm:$0xf]
    %v40 = vld [vmem:[%s0 + $0x48] sm:$0xf]
    %v41 = vld [vmem:[%s0 + $0x4c] sm:$0xf]
    %v42 = vld [vmem:[%s0 + $0x54] sm:$0xf]
    %v43 = vld [vmem:[%s0 + $0x58] sm:$0xf]
    %v44 = vld [vmem:[%s0 + $0x60] sm:$0xf]
    %v45 = vld [vmem:[%s0 + $0x64] sm:$0xf]
    %v46 = vld [vmem:[%s0 + $0x6c] sm:$0xf]
    %v47 = vld [vmem:[%s0 + $0x70] sm:$0xf]
    %v48 = vld [vmem:[%s0 + $0x78] sm:$0xf]
    %v49 = vld [vmem:[%s0 + $0x7c] sm:$0xf]
    %v50 = vld [vmem:[%s0 + $0x84] sm:$0xf]
    %v51 = vld [vmem:[%s0 + $0x88] sm:$0xf]
    %v52 = vld [vmem:[%s0 + $0x90] sm:$0xf]
    %v53 = vld [vmem:[%s0 + $0x94] sm:$0xf]
    %v54 = vld [vmem:[%s0 + $0x9c] sm:$0xf]
    %v55 = vld [vmem:[%s0 + $0xa0] sm:$0xf]
    %v56 = vld [vmem:[%s0 + $0xa8] sm:$0xf]
    %v57 = vld [vmem:[%s0 + $0xac] sm:$0xf]
    %v58 = vld [vmem:[%s0 + $0xb4] sm:$0xf]
    %v59 = vld [vmem:[%s0 + $0xb8] sm:$0xf]
    %60 = vst [vmem:[#allocation2] sm:$0xf] %v28
    %61 = vst [vmem:[#allocation2 + $0x24] sm:$0xf] %v29
    %62 = vst [vmem:[#allocation2 + $0x48] sm:$0xf] %v30
    %63 = vst [vmem:[#allocation2 + $0x6c] sm:$0xf] %v31
    %64 = vst [vmem:[#allocation2 + $0x90] sm:$0xf] %v32
    %65 = vst [vmem:[#allocation2 + $0xb4] sm:$0xf] %v33
    %66 = vst [vmem:[#allocation2 + $0xd8] sm:$0xf] %v34
    %67 = vst [vmem:[#allocation2 + $0xfc] sm:$0xf] %v35
    %68 = vst [vmem:[#allocation2 + $0x120] sm:$0xf] %v36
    %69 = vst [vmem:[#allocation2 + $0x144] sm:$0xf] %v37
    %70 = vst [vmem:[#allocation2 + $0x168] sm:$0xf] %v38
    %71 = vst [vmem:[#allocation2 + $0x18c] sm:$0xf] %v39
    %72 = vst [vmem:[#allocation2 + $0x1b0] sm:$0xf] %v40
    %73 = vst [vmem:[#allocation2 + $0x1d4] sm:$0xf] %v41
    %74 = vst [vmem:[#allocation2 + $0x1f8] sm:$0xf] %v42
    %75 = vst [vmem:[#allocation2 + $0x21c] sm:$0xf] %v43
    %76 = vst [vmem:[#allocation2 + $0x240] sm:$0xf] %v44
    %77 = vst [vmem:[#allocation2 + $0x264] sm:$0xf] %v45
    %78 = vst [vmem:[#allocation2 + $0x288] sm:$0xf] %v46
    %79 = vst [vmem:[#allocation2 + $0x2ac] sm:$0xf] %v47
    %80 = vst [vmem:[#allocation2 + $0x2d0] sm:$0xf] %v48
    %81 = vst [vmem:[#allocation2 + $0x2f4] sm:$0xf] %v49
    %82 = vst [vmem:[#allocation2 + $0x318] sm:$0xf] %v50
    %83 = vst [vmem:[#allocation2 + $0x33c] sm:$0xf] %v51
    %84 = vst [vmem:[#allocation2 + $0x360] sm:$0xf] %v52
    %85 = vst [vmem:[#allocation2 + $0x384] sm:$0xf] %v53
    %86 = vst [vmem:[#allocation2 + $0x3a8] sm:$0xf] %v54
    %87 = vst [vmem:[#allocation2 + $0x3cc] sm:$0xf] %v55
    %88 = vst [vmem:[#allocation2 + $0x3f0] sm:$0xf] %v56
    %89 = vst [vmem:[#allocation2 + $0x414] sm:$0xf] %v57
    %90 = vst [vmem:[#allocation2 + $0x438] sm:$0xf] %v58
    %91 = vst [vmem:[#allocation2 + $0x45c] sm:$0xf] %v59
    %v92 = vld [vmem:[%s0] sm:$0xf]
    %v93 = vld [vmem:[%s0 + $0x4] sm:$0xf]
    %v94 = vld [vmem:[%s0 + $0x8] sm:$0x1]
    %v95 = vld [vmem:[%s0 + $0xc] sm:$0xf]
    %v96 = vld [vmem:[%s0 + $0x10] sm:$0xf]
    %v97 = vld [vmem:[%s0 + $0x14] sm:$0x1]
    %v98 = vld [vmem:[%s0 + $0x18] sm:$0xf]
    %v99 = vld [vmem:[%s0 + $0x1c] sm:$0xf]
    %v100 = vld [vmem:[%s0 + $0x20] sm:$0x1]
    %v101 = vld [vmem:[%s0 + $0x24] sm:$0xf]
    %v102 = vld [vmem:[%s0 + $0x28] sm:$0xf]
    %v103 = vld [vmem:[%s0 + $0x2c] sm:$0x1]
    %v104 = vld [vmem:[%s0 + $0x30] sm:$0xf]
    %v105 = vld [vmem:[%s0 + $0x34] sm:$0xf]
    %v106 = vld [vmem:[%s0 + $0x38] sm:$0x1]
    %v107 = vld [vmem:[%s0 + $0x3c] sm:$0xf]
    %v108 = vld [vmem:[%s0 + $0x40] sm:$0xf]
    %v109 = vld [vmem:[%s0 + $0x44] sm:$0x1]
    %v110 = vld [vmem:[%s0 + $0x48] sm:$0xf]
    %v111 = vld [vmem:[%s0 + $0x4c] sm:$0xf]
    %v112 = vld [vmem:[%s0 + $0x50] sm:$0x1]
    %v113 = vld [vmem:[%s0 + $0x54] sm:$0xf]
    %v114 = vld [vmem:[%s0 + $0x58] sm:$0xf]
    %v115 = vld [vmem:[%s0 + $0x5c] sm:$0x1]
    %v116 = vld [vmem:[%s0 + $0x60] sm:$0xf]
    %v117 = vld [vmem:[%s0 + $0x64] sm:$0xf]
    %v118 = vld [vmem:[%s0 + $0x68] sm:$0x1]
    %v119 = vld [vmem:[%s0 + $0x6c] sm:$0xf]
    %v120 = vld [vmem:[%s0 + $0x70] sm:$0xf]
    %v121 = vld [vmem:[%s0 + $0x74] sm:$0x1]
    %v122 = vld [vmem:[%s0 + $0x78] sm:$0xf]
    %v123 = vld [vmem:[%s0 + $0x7c] sm:$0xf]
    %v124 = vld [vmem:[%s0 + $0x80] sm:$0x1]
    %v125 = vld [vmem:[%s0 + $0x84] sm:$0xf]
    %v126 = vld [vmem:[%s0 + $0x88] sm:$0xf]
    %v127 = vld [vmem:[%s0 + $0x8c] sm:$0x1]
    %v128 = vld [vmem:[%s0 + $0x90] sm:$0xf]
    %v129 = vld [vmem:[%s0 + $0x94] sm:$0xf]
    %v130 = vld [vmem:[%s0 + $0x98] sm:$0x1]
    %v131 = vld [vmem:[%s0 + $0x9c] sm:$0xf]
    %v132 = vld [vmem:[%s0 + $0xa0] sm:$0xf]
    %v133 = vld [vmem:[%s0 + $0xa4] sm:$0x1]
    %v134 = vld [vmem:[%s0 + $0xa8] sm:$0xf]
    %v135 = vld [vmem:[%s0 + $0xac] sm:$0xf]
    %v136 = vld [vmem:[%s0 + $0xb0] sm:$0x1]
    %v137 = vld [vmem:[%s0 + $0xb4] sm:$0xf]
    %v138 = vld [vmem:[%s0 + $0xb8] sm:$0xf]
    %v139 = vld [vmem:[%s0 + $0xbc] sm:$0x1]
    %vm140 = vsmask.f32 3328
    %vm141 = vsmask.f32 7440
    %vm142 = vmor %vm140, %vm141
    %v144 = vshrl.u32 %v92, 16
    %v146 = vrot.slane %v144, 4
    %v147 = vshll.u32 %v92, 16
    %v149 = vrot.slane %v147, 5
    %v150 = vor.u32 %v146, %v149
    %v151 = vrot.slane %v150, 4
    %v153 = vshll.u32 %v93, 16
    %v155 = vrot.slane %v153, 5
    %v156 = vsel %vm142, %v151, %v155
    %v157 = vshrl.u32 %v93, 16
    %v159 = vrot.slane %v157, 4
    %v160 = vor.u32 %v159, %v155
    %v161 = vrot.slane %v160, 4
    %v163 = vshll.u32 %v94, 16
    %v165 = vrot.slane %v163, 5
    %v166 = vsel %vm142, %v161, %v165
    %v168 = vshrl.u32 %v95, 16
    %v170 = vrot.slane %v168, 4
    %v171 = vshll.u32 %v95, 16
    %v173 = vrot.slane %v171, 5
    %v174 = vor.u32 %v170, %v173
    %v175 = vrot.slane %v174, 4
    %v177 = vshll.u32 %v96, 16
    %v179 = vrot.slane %v177, 5
    %v180 = vsel %vm142, %v175, %v179
    %v181 = vshrl.u32 %v96, 16
    %v183 = vrot.slane %v181, 4
    %v184 = vor.u32 %v183, %v179
    %v185 = vrot.slane %v184, 4
    %v187 = vshll.u32 %v97, 16
    %v189 = vrot.slane %v187, 5
    %v190 = vsel %vm142, %v185, %v189
    %v192 = vshrl.u32 %v98, 16
    %v194 = vrot.slane %v192, 4
    %v195 = vshll.u32 %v98, 16
    %v197 = vrot.slane %v195, 5
    %v198 = vor.u32 %v194, %v197
    %v199 = vrot.slane %v198, 4
    %v201 = vshll.u32 %v99, 16
    %v203 = vrot.slane %v201, 5
    %v204 = vsel %vm142, %v199, %v203
    %v205 = vshrl.u32 %v99, 16
    %v207 = vrot.slane %v205, 4
    %v208 = vor.u32 %v207, %v203
    %v209 = vrot.slane %v208, 4
    %v211 = vshll.u32 %v100, 16
    %v213 = vrot.slane %v211, 5
    %v214 = vsel %vm142, %v209, %v213
    %v216 = vshrl.u32 %v101, 16
    %v218 = vrot.slane %v216, 4
    %v219 = vshll.u32 %v101, 16
    %v221 = vrot.slane %v219, 5
    %v222 = vor.u32 %v218, %v221
    %v223 = vrot.slane %v222, 4
    %v225 = vshll.u32 %v102, 16
    %v227 = vrot.slane %v225, 5
    %v228 = vsel %vm142, %v223, %v227
    %v229 = vshrl.u32 %v102, 16
    %v231 = vrot.slane %v229, 4
    %v232 = vor.u32 %v231, %v227
    %v233 = vrot.slane %v232, 4
    %v235 = vshll.u32 %v103, 16
    %v237 = vrot.slane %v235, 5
    %v238 = vsel %vm142, %v233, %v237
    %v240 = vshrl.u32 %v104, 16
    %v242 = vrot.slane %v240, 4
    %v243 = vshll.u32 %v104, 16
    %v245 = vrot.slane %v243, 5
    %v246 = vor.u32 %v242, %v245
    %v247 = vrot.slane %v246, 4
    %v249 = vshll.u32 %v105, 16
    %v251 = vrot.slane %v249, 5
    %v252 = vsel %vm142, %v247, %v251
    %v253 = vshrl.u32 %v105, 16
    %v255 = vrot.slane %v253, 4
    %v256 = vor.u32 %v255, %v251
    %v257 = vrot.slane %v256, 4
    %v259 = vshll.u32 %v106, 16
    %v261 = vrot.slane %v259, 5
    %v262 = vsel %vm142, %v257, %v261
    %v264 = vshrl.u32 %v107, 16
    %v266 = vrot.slane %v264, 4
    %v267 = vshll.u32 %v107, 16
    %v269 = vrot.slane %v267, 5
    %v270 = vor.u32 %v266, %v269
    %v271 = vrot.slane %v270, 4
    %v273 = vshll.u32 %v108, 16
    %v275 = vrot.slane %v273, 5
    %v276 = vsel %vm142, %v271, %v275
    %v277 = vshrl.u32 %v108, 16
    %v279 = vrot.slane %v277, 4
    %v280 = vor.u32 %v279, %v275
    %v281 = vrot.slane %v280, 4
    %v283 = vshll.u32 %v109, 16
    %v285 = vrot.slane %v283, 5
    %v286 = vsel %vm142, %v281, %v285
    %v288 = vshrl.u32 %v110, 16
    %v290 = vrot.slane %v288, 4
    %v291 = vshll.u32 %v110, 16
    %v293 = vrot.slane %v291, 5
    %v294 = vor.u32 %v290, %v293
    %v295 = vrot.slane %v294, 4
    %v297 = vshll.u32 %v111, 16
    %v299 = vrot.slane %v297, 5
    %v300 = vsel %vm142, %v295, %v299
    %v301 = vshrl.u32 %v111, 16
    %v303 = vrot.slane %v301, 4
    %v304 = vor.u32 %v303, %v299
    %v305 = vrot.slane %v304, 4
    %v307 = vshll.u32 %v112, 16
    %v309 = vrot.slane %v307, 5
    %v310 = vsel %vm142, %v305, %v309
    %v312 = vshrl.u32 %v113, 16
    %v314 = vrot.slane %v312, 4
    %v315 = vshll.u32 %v113, 16
    %v317 = vrot.slane %v315, 5
    %v318 = vor.u32 %v314, %v317
    %v319 = vrot.slane %v318, 4
    %v321 = vshll.u32 %v114, 16
    %v323 = vrot.slane %v321, 5
    %v324 = vsel %vm142, %v319, %v323
    %v325 = vshrl.u32 %v114, 16
    %v327 = vrot.slane %v325, 4
    %v328 = vor.u32 %v327, %v323
    %v329 = vrot.slane %v328, 4
    %v331 = vshll.u32 %v115, 16
    %v333 = vrot.slane %v331, 5
    %v334 = vsel %vm142, %v329, %v333
    %v336 = vshrl.u32 %v116, 16
    %v338 = vrot.slane %v336, 4
    %v339 = vshll.u32 %v116, 16
    %v341 = vrot.slane %v339, 5
    %v342 = vor.u32 %v338, %v341
    %v343 = vrot.slane %v342, 4
    %v345 = vshll.u32 %v117, 16
    %v347 = vrot.slane %v345, 5
    %v348 = vsel %vm142, %v343, %v347
    %v349 = vshrl.u32 %v117, 16
    %v351 = vrot.slane %v349, 4
    %v352 = vor.u32 %v351, %v347
    %v353 = vrot.slane %v352, 4
    %v355 = vshll.u32 %v118, 16
    %v357 = vrot.slane %v355, 5
    %v358 = vsel %vm142, %v353, %v357
    %v360 = vshrl.u32 %v119, 16
    %v362 = vrot.slane %v360, 4
    %v363 = vshll.u32 %v119, 16
    %v365 = vrot.slane %v363, 5
    %v366 = vor.u32 %v362, %v365
    %v367 = vrot.slane %v366, 4
    %v369 = vshll.u32 %v120, 16
    %v371 = vrot.slane %v369, 5
    %v372 = vsel %vm142, %v367, %v371
    %v373 = vshrl.u32 %v120, 16
    %v375 = vrot.slane %v373, 4
    %v376 = vor.u32 %v375, %v371
    %v377 = vrot.slane %v376, 4
    %v379 = vshll.u32 %v121, 16
    %v381 = vrot.slane %v379, 5
    %v382 = vsel %vm142, %v377, %v381
    %v384 = vshrl.u32 %v122, 16
    %v386 = vrot.slane %v384, 4
    %v387 = vshll.u32 %v122, 16
    %v389 = vrot.slane %v387, 5
    %v390 = vor.u32 %v386, %v389
    %v391 = vrot.slane %v390, 4
    %v393 = vshll.u32 %v123, 16
    %v395 = vrot.slane %v393, 5
    %v396 = vsel %vm142, %v391, %v395
    %v397 = vshrl.u32 %v123, 16
    %v399 = vrot.slane %v397, 4
    %v400 = vor.u32 %v399, %v395
    %v401 = vrot.slane %v400, 4
    %v403 = vshll.u32 %v124, 16
    %v405 = vrot.slane %v403, 5
    %v406 = vsel %vm142, %v401, %v405
    %v408 = vshrl.u32 %v125, 16
    %v410 = vrot.slane %v408, 4
    %v411 = vshll.u32 %v125, 16
    %v413 = vrot.slane %v411, 5
    %v414 = vor.u32 %v410, %v413
    %v415 = vrot.slane %v414, 4
    %v417 = vshll.u32 %v126, 16
    %v419 = vrot.slane %v417, 5
    %v420 = vsel %vm142, %v415, %v419
    %v421 = vshrl.u32 %v126, 16
    %v423 = vrot.slane %v421, 4
    %v424 = vor.u32 %v423, %v419
    %v425 = vrot.slane %v424, 4
    %v427 = vshll.u32 %v127, 16
    %v429 = vrot.slane %v427, 5
    %v430 = vsel %vm142, %v425, %v429
    %v432 = vshrl.u32 %v128, 16
    %v434 = vrot.slane %v432, 4
    %v435 = vshll.u32 %v128, 16
    %v437 = vrot.slane %v435, 5
    %v438 = vor.u32 %v434, %v437
    %v439 = vrot.slane %v438, 4
    %v441 = vshll.u32 %v129, 16
    %v443 = vrot.slane %v441, 5
    %v444 = vsel %vm142, %v439, %v443
    %v445 = vshrl.u32 %v129, 16
    %v447 = vrot.slane %v445, 4
    %v448 = vor.u32 %v447, %v443
    %v449 = vrot.slane %v448, 4
    %v451 = vshll.u32 %v130, 16
    %v453 = vrot.slane %v451, 5
    %v454 = vsel %vm142, %v449, %v453
    %v456 = vshrl.u32 %v131, 16
    %v458 = vrot.slane %v456, 4
    %v459 = vshll.u32 %v131, 16
    %v461 = vrot.slane %v459, 5
    %v462 = vor.u32 %v458, %v461
    %v463 = vrot.slane %v462, 4
    %v465 = vshll.u32 %v132, 16
    %v467 = vrot.slane %v465, 5
    %v468 = vsel %vm142, %v463, %v467
    %v469 = vshrl.u32 %v132, 16
    %v471 = vrot.slane %v469, 4
    %v472 = vor.u32 %v471, %v467
    %v473 = vrot.slane %v472, 4
    %v475 = vshll.u32 %v133, 16
    %v477 = vrot.slane %v475, 5
    %v478 = vsel %vm142, %v473, %v477
    %v480 = vshrl.u32 %v134, 16
    %v482 = vrot.slane %v480, 4
    %v483 = vshll.u32 %v134, 16
    %v485 = vrot.slane %v483, 5
    %v486 = vor.u32 %v482, %v485
    %v487 = vrot.slane %v486, 4
    %v489 = vshll.u32 %v135, 16
    %v491 = vrot.slane %v489, 5
    %v492 = vsel %vm142, %v487, %v491
    %v493 = vshrl.u32 %v135, 16
    %v495 = vrot.slane %v493, 4
    %v496 = vor.u32 %v495, %v491
    %v497 = vrot.slane %v496, 4
    %v499 = vshll.u32 %v136, 16
    %v501 = vrot.slane %v499, 5
    %v502 = vsel %vm142, %v497, %v501
    %v504 = vshrl.u32 %v137, 16
    %v506 = vrot.slane %v504, 4
    %v507 = vshll.u32 %v137, 16
    %v509 = vrot.slane %v507, 5
    %v510 = vor.u32 %v506, %v509
    %v511 = vrot.slane %v510, 4
    %v513 = vshll.u32 %v138, 16
    %v515 = vrot.slane %v513, 5
    %v516 = vsel %vm142, %v511, %v515
    %v517 = vshrl.u32 %v138, 16
    %v519 = vrot.slane %v517, 4
    %v520 = vor.u32 %v519, %v515
    %v521 = vrot.slane %v520, 4
    %v523 = vshll.u32 %v139, 16
    %v525 = vrot.slane %v523, 5
    %v526 = vsel %vm142, %v521, %v525
    %559 = vst [vmem:[#allocation2 + $0x4] sm:$0xf] %v156
    %560 = vst [vmem:[#allocation2 + $0x28] sm:$0xf] %v166
    %561 = vst [vmem:[#allocation2 + $0x4c] sm:$0xf] %v180
    %562 = vst [vmem:[#allocation2 + $0x70] sm:$0xf] %v190
    %563 = vst [vmem:[#allocation2 + $0x94] sm:$0xf] %v204
    %564 = vst [vmem:[#allocation2 + $0xb8] sm:$0xf] %v214
    %565 = vst [vmem:[#allocation2 + $0xdc] sm:$0xf] %v228
    %566 = vst [vmem:[#allocation2 + $0x100] sm:$0xf] %v238
    %567 = vst [vmem:[#allocation2 + $0x124] sm:$0xf] %v252
    %568 = vst [vmem:[#allocation2 + $0x148] sm:$0xf] %v262
    %569 = vst [vmem:[#allocation2 + $0x16c] sm:$0xf] %v276
    %570 = vst [vmem:[#allocation2 + $0x190] sm:$0xf] %v286
    %571 = vst [vmem:[#allocation2 + $0x1b4] sm:$0xf] %v300
    %572 = vst [vmem:[#allocation2 + $0x1d8] sm:$0xf] %v310
    %573 = vst [vmem:[#allocation2 + $0x1fc] sm:$0xf] %v324
    %574 = vst [vmem:[#allocation2 + $0x220] sm:$0xf] %v334
    %575 = vst [vmem:[#allocation2 + $0x244] sm:$0xf] %v348
    %576 = vst [vmem:[#allocation2 + $0x268] sm:$0xf] %v358
    %577 = vst [vmem:[#allocation2 + $0x28c] sm:$0xf] %v372
    %578 = vst [vmem:[#allocation2 + $0x2b0] sm:$0xf] %v382
    %579 = vst [vmem:[#allocation2 + $0x2d4] sm:$0xf] %v396
    %580 = vst [vmem:[#allocation2 + $0x2f8] sm:$0xf] %v406
    %581 = vst [vmem:[#allocation2 + $0x31c] sm:$0xf] %v420
    %582 = vst [vmem:[#allocation2 + $0x340] sm:$0xf] %v430
    %583 = vst [vmem:[#allocation2 + $0x364] sm:$0xf] %v444
    %584 = vst [vmem:[#allocation2 + $0x388] sm:$0xf] %v454
    %585 = vst [vmem:[#allocation2 + $0x3ac] sm:$0xf] %v468
    %586 = vst [vmem:[#allocation2 + $0x3d0] sm:$0xf] %v478
    %587 = vst [vmem:[#allocation2 + $0x3f4] sm:$0xf] %v492
    %588 = vst [vmem:[#allocation2 + $0x418] sm:$0xf] %v502
    %589 = vst [vmem:[#allocation2 + $0x43c] sm:$0xf] %v516
    %590 = vst [vmem:[#allocation2 + $0x460] sm:$0xf] %v526
    %v591 = vld [vmem:[%s0] sm:$0xe]
    %v592 = vld [vmem:[%s0 + $0x4] sm:$0xf]
    %v593 = vld [vmem:[%s0 + $0x8] sm:$0x1]
    %v594 = vld [vmem:[%s0 + $0xc] sm:$0xe]
    %v595 = vld [vmem:[%s0 + $0x10] sm:$0xf]
    %v596 = vld [vmem:[%s0 + $0x14] sm:$0x1]
    %v597 = vld [vmem:[%s0 + $0x18] sm:$0xe]
    %v598 = vld [vmem:[%s0 + $0x1c] sm:$0xf]
    %v599 = vld [vmem:[%s0 + $0x20] sm:$0x1]
    %v600 = vld [vmem:[%s0 + $0x24] sm:$0xe]
    %v601 = vld [vmem:[%s0 + $0x28] sm:$0xf]
    %v602 = vld [vmem:[%s0 + $0x2c] sm:$0x1]
    %v603 = vld [vmem:[%s0 + $0x30] sm:$0xe]
    %v604 = vld [vmem:[%s0 + $0x34] sm:$0xf]
    %v605 = vld [vmem:[%s0 + $0x38] sm:$0x1]
    %v606 = vld [vmem:[%s0 + $0x3c] sm:$0xe]
    %v607 = vld [vmem:[%s0 + $0x40] sm:$0xf]
    %v608 = vld [vmem:[%s0 + $0x44] sm:$0x1]
    %v609 = vld [vmem:[%s0 + $0x48] sm:$0xe]
    %v610 = vld [vmem:[%s0 + $0x4c] sm:$0xf]
    %v611 = vld [vmem:[%s0 + $0x50] sm:$0x1]
    %v612 = vld [vmem:[%s0 + $0x54] sm:$0xe]
    %v613 = vld [vmem:[%s0 + $0x58] sm:$0xf]
    %v614 = vld [vmem:[%s0 + $0x5c] sm:$0x1]
    %v615 = vld [vmem:[%s0 + $0x60] sm:$0xe]
    %v616 = vld [vmem:[%s0 + $0x64] sm:$0xf]
    %v617 = vld [vmem:[%s0 + $0x68] sm:$0x1]
    %v618 = vld [vmem:[%s0 + $0x6c] sm:$0xe]
    %v619 = vld [vmem:[%s0 + $0x70] sm:$0xf]
    %v620 = vld [vmem:[%s0 + $0x74] sm:$0x1]
    %v621 = vld [vmem:[%s0 + $0x78] sm:$0xe]
    %v622 = vld [vmem:[%s0 + $0x7c] sm:$0xf]
    %v623 = vld [vmem:[%s0 + $0x80] sm:$0x1]
    %v624 = vld [vmem:[%s0 + $0x84] sm:$0xe]
    %v625 = vld [vmem:[%s0 + $0x88] sm:$0xf]
    %v626 = vld [vmem:[%s0 + $0x8c] sm:$0x1]
    %v627 = vld [vmem:[%s0 + $0x90] sm:$0xe]
    %v628 = vld [vmem:[%s0 + $0x94] sm:$0xf]
    %v629 = vld [vmem:[%s0 + $0x98] sm:$0x1]
    %v630 = vld [vmem:[%s0 + $0x9c] sm:$0xe]
    %v631 = vld [vmem:[%s0 + $0xa0] sm:$0xf]
    %v632 = vld [vmem:[%s0 + $0xa4] sm:$0x1]
    %v633 = vld [vmem:[%s0 + $0xa8] sm:$0xe]
    %v634 = vld [vmem:[%s0 + $0xac] sm:$0xf]
    %v635 = vld [vmem:[%s0 + $0xb0] sm:$0x1]
    %v636 = vld [vmem:[%s0 + $0xb4] sm:$0xe]
    %v637 = vld [vmem:[%s0 + $0xb8] sm:$0xf]
    %v638 = vld [vmem:[%s0 + $0xbc] sm:$0x1]
    %vm687 = vcmask 1042432
    %vm688 = vcmask 1046532
    %vm689 = vmor %vm687, %vm688
    %v690 = vrot.slane %v591, 5
    %v691 = vrot.slane %v690, 4
    %v692 = vrot.slane %v592, 5
    %v693 = vsel %vm689, %v691, %v692
    %v694 = vrot.slane %v692, 4
    %v695 = vrot.slane %v593, 5
    %v696 = vsel %vm689, %v694, %v695
    %v697 = vrot.slane %v594, 5
    %v698 = vrot.slane %v697, 4
    %v699 = vrot.slane %v595, 5
    %v700 = vsel %vm689, %v698, %v699
    %v701 = vrot.slane %v699, 4
    %v702 = vrot.slane %v596, 5
    %v703 = vsel %vm689, %v701, %v702
    %v704 = vrot.slane %v597, 5
    %v705 = vrot.slane %v704, 4
    %v706 = vrot.slane %v598, 5
    %v707 = vsel %vm689, %v705, %v706
    %v708 = vrot.slane %v706, 4
    %v709 = vrot.slane %v599, 5
    %v710 = vsel %vm689, %v708, %v709
    %v711 = vrot.slane %v600, 5
    %v712 = vrot.slane %v711, 4
    %v713 = vrot.slane %v601, 5
    %v714 = vsel %vm689, %v712, %v713
    %v715 = vrot.slane %v713, 4
    %v716 = vrot.slane %v602, 5
    %v717 = vsel %vm689, %v715, %v716
    %v718 = vrot.slane %v603, 5
    %v719 = vrot.slane %v718, 4
    %v720 = vrot.slane %v604, 5
    %v721 = vsel %vm689, %v719, %v720
    %v722 = vrot.slane %v720, 4
    %v723 = vrot.slane %v605, 5
    %v724 = vsel %vm689, %v722, %v723
    %v725 = vrot.slane %v606, 5
    %v726 = vrot.slane %v725, 4
    %v727 = vrot.slane %v607, 5
    %v728 = vsel %vm689, %v726, %v727
    %v729 = vrot.slane %v727, 4
    %v730 = vrot.slane %v608, 5
    %v731 = vsel %vm689, %v729, %v730
    %v732 = vrot.slane %v609, 5
    %v733 = vrot.slane %v732, 4
    %v734 = vrot.slane %v610, 5
    %v735 = vsel %vm689, %v733, %v734
    %v736 = vrot.slane %v734, 4
    %v737 = vrot.slane %v611, 5
    %v738 = vsel %vm689, %v736, %v737
    %v739 = vrot.slane %v612, 5
    %v740 = vrot.slane %v739, 4
    %v741 = vrot.slane %v613, 5
    %v742 = vsel %vm689, %v740, %v741
    %v743 = vrot.slane %v741, 4
    %v744 = vrot.slane %v614, 5
    %v745 = vsel %vm689, %v743, %v744
    %v746 = vrot.slane %v615, 5
    %v747 = vrot.slane %v746, 4
    %v748 = vrot.slane %v616, 5
    %v749 = vsel %vm689, %v747, %v748
    %v750 = vrot.slane %v748, 4
    %v751 = vrot.slane %v617, 5
    %v752 = vsel %vm689, %v750, %v751
    %v753 = vrot.slane %v618, 5
    %v754 = vrot.slane %v753, 4
    %v755 = vrot.slane %v619, 5
    %v756 = vsel %vm689, %v754, %v755
    %v757 = vrot.slane %v755, 4
    %v758 = vrot.slane %v620, 5
    %v759 = vsel %vm689, %v757, %v758
    %v760 = vrot.slane %v621, 5
    %v761 = vrot.slane %v760, 4
    %v762 = vrot.slane %v622, 5
    %v763 = vsel %vm689, %v761, %v762
    %v764 = vrot.slane %v762, 4
    %v765 = vrot.slane %v623, 5
    %v766 = vsel %vm689, %v764, %v765
    %v767 = vrot.slane %v624, 5
    %v768 = vrot.slane %v767, 4
    %v769 = vrot.slane %v625, 5
    %v770 = vsel %vm689, %v768, %v769
    %v771 = vrot.slane %v769, 4
    %v772 = vrot.slane %v626, 5
    %v773 = vsel %vm689, %v771, %v772
    %v774 = vrot.slane %v627, 5
    %v775 = vrot.slane %v774, 4
    %v776 = vrot.slane %v628, 5
    %v777 = vsel %vm689, %v775, %v776
    %v778 = vrot.slane %v776, 4
    %v779 = vrot.slane %v629, 5
    %v780 = vsel %vm689, %v778, %v779
    %v781 = vrot.slane %v630, 5
    %v782 = vrot.slane %v781, 4
    %v783 = vrot.slane %v631, 5
    %v784 = vsel %vm689, %v782, %v783
    %v785 = vrot.slane %v783, 4
    %v786 = vrot.slane %v632, 5
    %v787 = vsel %vm689, %v785, %v786
    %v788 = vrot.slane %v633, 5
    %v789 = vrot.slane %v788, 4
    %v790 = vrot.slane %v634, 5
    %v791 = vsel %vm689, %v789, %v790
    %v792 = vrot.slane %v790, 4
    %v793 = vrot.slane %v635, 5
    %v794 = vsel %vm689, %v792, %v793
    %v795 = vrot.slane %v636, 5
    %v796 = vrot.slane %v795, 4
    %v797 = vrot.slane %v637, 5
    %v798 = vsel %vm689, %v796, %v797
    %v799 = vrot.slane %v797, 4
    %v800 = vrot.slane %v638, 5
    %v801 = vsel %vm689, %v799, %v800
    %834 = vst [vmem:[#allocation2 + $0x8] sm:$0xf] %v693
    %835 = vst [vmem:[#allocation2 + $0x2c] sm:$0xf] %v696
    %836 = vst [vmem:[#allocation2 + $0x50] sm:$0xf] %v700
    %837 = vst [vmem:[#allocation2 + $0x74] sm:$0xf] %v703
    %838 = vst [vmem:[#allocation2 + $0x98] sm:$0xf] %v707
    %839 = vst [vmem:[#allocation2 + $0xbc] sm:$0xf] %v710
    %840 = vst [vmem:[#allocation2 + $0xe0] sm:$0xf] %v714
    %841 = vst [vmem:[#allocation2 + $0x104] sm:$0xf] %v717
    %842 = vst [vmem:[#allocation2 + $0x128] sm:$0xf] %v721
    %843 = vst [vmem:[#allocation2 + $0x14c] sm:$0xf] %v724
    %844 = vst [vmem:[#allocation2 + $0x170] sm:$0xf] %v728
    %845 = vst [vmem:[#allocation2 + $0x194] sm:$0xf] %v731
    %846 = vst [vmem:[#allocation2 + $0x1b8] sm:$0xf] %v735
    %847 = vst [vmem:[#allocation2 + $0x1dc] sm:$0xf] %v738
    %848 = vst [vmem:[#allocation2 + $0x200] sm:$0xf] %v742
    %849 = vst [vmem:[#allocation2 + $0x224] sm:$0xf] %v745
    %850 = vst [vmem:[#allocation2 + $0x248] sm:$0xf] %v749
    %851 = vst [vmem:[#allocation2 + $0x26c] sm:$0xf] %v752
    %852 = vst [vmem:[#allocation2 + $0x290] sm:$0xf] %v756
    %853 = vst [vmem:[#allocation2 + $0x2b4] sm:$0xf] %v759
    %854 = vst [vmem:[#allocation2 + $0x2d8] sm:$0xf] %v763
    %855 = vst [vmem:[#allocation2 + $0x2fc] sm:$0xf] %v766
    %856 = vst [vmem:[#allocation2 + $0x320] sm:$0xf] %v770
    %857 = vst [vmem:[#allocation2 + $0x344] sm:$0xf] %v773
    %858 = vst [vmem:[#allocation2 + $0x368] sm:$0xf] %v777
    %859 = vst [vmem:[#allocation2 + $0x38c] sm:$0xf] %v780
    %860 = vst [vmem:[#allocation2 + $0x3b0] sm:$0xf] %v784
    %861 = vst [vmem:[#allocation2 + $0x3d4] sm:$0xf] %v787
    %862 = vst [vmem:[#allocation2 + $0x3f8] sm:$0xf] %v791
    %863 = vst [vmem:[#allocation2 + $0x41c] sm:$0xf] %v794
    %864 = vst [vmem:[#allocation2 + $0x440] sm:$0xf] %v798
    %865 = vst [vmem:[#allocation2 + $0x464] sm:$0xf] %v801
    %s866 = scalar_lea.vmem %s0, 12
    %v867 = vld [vmem:[%s866] sm:$0xf]
    %v868 = vld [vmem:[%s866 + $0x4] sm:$0xf]
    %v869 = vld [vmem:[%s866 + $0xc] sm:$0xf]
    %v870 = vld [vmem:[%s866 + $0x10] sm:$0xf]
    %v871 = vld [vmem:[%s866 + $0x18] sm:$0xf]
    %v872 = vld [vmem:[%s866 + $0x1c] sm:$0xf]
    %v873 = vld [vmem:[%s866 + $0x24] sm:$0xf]
    %v874 = vld [vmem:[%s866 + $0x28] sm:$0xf]
    %v875 = vld [vmem:[%s866 + $0x30] sm:$0xf]
    %v876 = vld [vmem:[%s866 + $0x34] sm:$0xf]
    %v877 = vld [vmem:[%s866 + $0x3c] sm:$0xf]
    %v878 = vld [vmem:[%s866 + $0x40] sm:$0xf]
    %v879 = vld [vmem:[%s866 + $0x48] sm:$0xf]
    %v880 = vld [vmem:[%s866 + $0x4c] sm:$0xf]
    %v881 = vld [vmem:[%s866 + $0x54] sm:$0xf]
    %v882 = vld [vmem:[%s866 + $0x58] sm:$0xf]
    %v883 = vld [vmem:[%s866 + $0x60] sm:$0xf]
    %v884 = vld [vmem:[%s866 + $0x64] sm:$0xf]
    %v885 = vld [vmem:[%s866 + $0x6c] sm:$0xf]
    %v886 = vld [vmem:[%s866 + $0x70] sm:$0xf]
    %v887 = vld [vmem:[%s866 + $0x78] sm:$0xf]
    %v888 = vld [vmem:[%s866 + $0x7c] sm:$0xf]
    %v889 = vld [vmem:[%s866 + $0x84] sm:$0xf]
    %v890 = vld [vmem:[%s866 + $0x88] sm:$0xf]
    %v891 = vld [vmem:[%s866 + $0x90] sm:$0xf]
    %v892 = vld [vmem:[%s866 + $0x94] sm:$0xf]
    %v893 = vld [vmem:[%s866 + $0x9c] sm:$0xf]
    %v894 = vld [vmem:[%s866 + $0xa0] sm:$0xf]
    %v895 = vld [vmem:[%s866 + $0xa8] sm:$0xf]
    %v896 = vld [vmem:[%s866 + $0xac] sm:$0xf]
    %v897 = vld [vmem:[%s866 + $0xb4] sm:$0xf]
    %v898 = vld [vmem:[%s866 + $0xb8] sm:$0xf]
    %899 = vst [vmem:[#allocation2 + $0xc] sm:$0xf] %v867
    %900 = vst [vmem:[#allocation2 + $0x30] sm:$0xf] %v868
    %901 = vst [vmem:[#allocation2 + $0x54] sm:$0xf] %v869
    %902 = vst [vmem:[#allocation2 + $0x78] sm:$0xf] %v870
    %903 = vst [vmem:[#allocation2 + $0x9c] sm:$0xf] %v871
    %904 = vst [vmem:[#allocation2 + $0xc0] sm:$0xf] %v872
    %905 = vst [vmem:[#allocation2 + $0xe4] sm:$0xf] %v873
    %906 = vst [vmem:[#allocation2 + $0x108] sm:$0xf] %v874
    %907 = vst [vmem:[#allocation2 + $0x12c] sm:$0xf] %v875
    %908 = vst [vmem:[#allocation2 + $0x150] sm:$0xf] %v876
    %909 = vst [vmem:[#allocation2 + $0x174] sm:$0xf] %v877
    %910 = vst [vmem:[#allocation2 + $0x198] sm:$0xf] %v878
    %911 = vst [vmem:[#allocation2 + $0x1bc] sm:$0xf] %v879
    %912 = vst [vmem:[#allocation2 + $0x1e0] sm:$0xf] %v880
    %913 = vst [vmem:[#allocation2 + $0x204] sm:$0xf] %v881
    %914 = vst [vmem:[#allocation2 + $0x228] sm:$0xf] %v882
    %915 = vst [vmem:[#allocation2 + $0x24c] sm:$0xf] %v883
    %916 = vst [vmem:[#allocation2 + $0x270] sm:$0xf] %v884
    %917 = vst [vmem:[#allocation2 + $0x294] sm:$0xf] %v885
    %918 = vst [vmem:[#allocation2 + $0x2b8] sm:$0xf] %v886
    %919 = vst [vmem:[#allocation2 + $0x2dc] sm:$0xf] %v887
    %920 = vst [vmem:[#allocation2 + $0x300] sm:$0xf] %v888
    %921 = vst [vmem:[#allocation2 + $0x324] sm:$0xf] %v889
    %922 = vst [vmem:[#allocation2 + $0x348] sm:$0xf] %v890
    %923 = vst [vmem:[#allocation2 + $0x36c] sm:$0xf] %v891
    %924 = vst [vmem:[#allocation2 + $0x390] sm:$0xf] %v892
    %925 = vst [vmem:[#allocation2 + $0x3b4] sm:$0xf] %v893
    %926 = vst [vmem:[#allocation2 + $0x3d8] sm:$0xf] %v894
    %927 = vst [vmem:[#allocation2 + $0x3fc] sm:$0xf] %v895
    %928 = vst [vmem:[#allocation2 + $0x420] sm:$0xf] %v896
    %929 = vst [vmem:[#allocation2 + $0x444] sm:$0xf] %v897
    %930 = vst [vmem:[#allocation2 + $0x468] sm:$0xf] %v898
    %v931 = vld [vmem:[%s866] sm:$0xf]
    %v932 = vld [vmem:[%s866 + $0x4] sm:$0xf]
    %v933 = vld [vmem:[%s866 + $0x8] sm:$0x1]
    %v934 = vld [vmem:[%s866 + $0xc] sm:$0xf]
    %v935 = vld [vmem:[%s866 + $0x10] sm:$0xf]
    %v936 = vld [vmem:[%s866 + $0x14] sm:$0x1]
    %v937 = vld [vmem:[%s866 + $0x18] sm:$0xf]
    %v938 = vld [vmem:[%s866 + $0x1c] sm:$0xf]
    %v939 = vld [vmem:[%s866 + $0x20] sm:$0x1]
    %v940 = vld [vmem:[%s866 + $0x24] sm:$0xf]
    %v941 = vld [vmem:[%s866 + $0x28] sm:$0xf]
    %v942 = vld [vmem:[%s866 + $0x2c] sm:$0x1]
    %v943 = vld [vmem:[%s866 + $0x30] sm:$0xf]
    %v944 = vld [vmem:[%s866 + $0x34] sm:$0xf]
    %v945 = vld [vmem:[%s866 + $0x38] sm:$0x1]
    %v946 = vld [vmem:[%s866 + $0x3c] sm:$0xf]
    %v947 = vld [vmem:[%s866 + $0x40] sm:$0xf]
    %v948 = vld [vmem:[%s866 + $0x44] sm:$0x1]
    %v949 = vld [vmem:[%s866 + $0x48] sm:$0xf]
    %v950 = vld [vmem:[%s866 + $0x4c] sm:$0xf]
    %v951 = vld [vmem:[%s866 + $0x50] sm:$0x1]
    %v952 = vld [vmem:[%s866 + $0x54] sm:$0xf]
    %v953 = vld [vmem:[%s866 + $0x58] sm:$0xf]
    %v954 = vld [vmem:[%s866 + $0x5c] sm:$0x1]
    %v955 = vld [vmem:[%s866 + $0x60] sm:$0xf]
    %v956 = vld [vmem:[%s866 + $0x64] sm:$0xf]
    %v957 = vld [vmem:[%s866 + $0x68] sm:$0x1]
    %v958 = vld [vmem:[%s866 + $0x6c] sm:$0xf]
    %v959 = vld [vmem:[%s866 + $0x70] sm:$0xf]
    %v960 = vld [vmem:[%s866 + $0x74] sm:$0x1]
    %v961 = vld [vmem:[%s866 + $0x78] sm:$0xf]
    %v962 = vld [vmem:[%s866 + $0x7c] sm:$0xf]
    %v963 = vld [vmem:[%s866 + $0x80] sm:$0x1]
    %v964 = vld [vmem:[%s866 + $0x84] sm:$0xf]
    %v965 = vld [vmem:[%s866 + $0x88] sm:$0xf]
    %v966 = vld [vmem:[%s866 + $0x8c] sm:$0x1]
    %v967 = vld [vmem:[%s866 + $0x90] sm:$0xf]
    %v968 = vld [vmem:[%s866 + $0x94] sm:$0xf]
    %v969 = vld [vmem:[%s866 + $0x98] sm:$0x1]
    %v970 = vld [vmem:[%s866 + $0x9c] sm:$0xf]
    %v971 = vld [vmem:[%s866 + $0xa0] sm:$0xf]
    %v972 = vld [vmem:[%s866 + $0xa4] sm:$0x1]
    %v973 = vld [vmem:[%s866 + $0xa8] sm:$0xf]
    %v974 = vld [vmem:[%s866 + $0xac] sm:$0xf]
    %v975 = vld [vmem:[%s866 + $0xb0] sm:$0x1]
    %v976 = vld [vmem:[%s866 + $0xb4] sm:$0xf]
    %v977 = vld [vmem:[%s866 + $0xb8] sm:$0xf]
    %v978 = vld [vmem:[%s866 + $0xbc] sm:$0x1]
    %v980 = vshrl.u32 %v931, 16
    %v982 = vrot.slane %v980, 4
    %v983 = vshll.u32 %v931, 16
    %v985 = vrot.slane %v983, 5
    %v986 = vor.u32 %v982, %v985
    %v987 = vrot.slane %v986, 4
    %v989 = vshll.u32 %v932, 16
    %v991 = vrot.slane %v989, 5
    %v992 = vsel %vm142, %v987, %v991
    %v993 = vshrl.u32 %v932, 16
    %v995 = vrot.slane %v993, 4
    %v996 = vor.u32 %v995, %v991
    %v997 = vrot.slane %v996, 4
    %v999 = vshll.u32 %v933, 16
    %v1001 = vrot.slane %v999, 5
    %v1002 = vsel %vm142, %v997, %v1001
    %v1004 = vshrl.u32 %v934, 16
    %v1006 = vrot.slane %v1004, 4
    %v1007 = vshll.u32 %v934, 16
    %v1009 = vrot.slane %v1007, 5
    %v1010 = vor.u32 %v1006, %v1009
    %v1011 = vrot.slane %v1010, 4
    %v1013 = vshll.u32 %v935, 16
    %v1015 = vrot.slane %v1013, 5
    %v1016 = vsel %vm142, %v1011, %v1015
    %v1017 = vshrl.u32 %v935, 16
    %v1019 = vrot.slane %v1017, 4
    %v1020 = vor.u32 %v1019, %v1015
    %v1021 = vrot.slane %v1020, 4
    %v1023 = vshll.u32 %v936, 16
    %v1025 = vrot.slane %v1023, 5
    %v1026 = vsel %vm142, %v1021, %v1025
    %v1028 = vshrl.u32 %v937, 16
    %v1030 = vrot.slane %v1028, 4
    %v1031 = vshll.u32 %v937, 16
    %v1033 = vrot.slane %v1031, 5
    %v1034 = vor.u32 %v1030, %v1033
    %v1035 = vrot.slane %v1034, 4
    %v1037 = vshll.u32 %v938, 16
    %v1039 = vrot.slane %v1037, 5
    %v1040 = vsel %vm142, %v1035, %v1039
    %v1041 = vshrl.u32 %v938, 16
    %v1043 = vrot.slane %v1041, 4
    %v1044 = vor.u32 %v1043, %v1039
    %v1045 = vrot.slane %v1044, 4
    %v1047 = vshll.u32 %v939, 16
    %v1049 = vrot.slane %v1047, 5
    %v1050 = vsel %vm142, %v1045, %v1049
    %v1052 = vshrl.u32 %v940, 16
    %v1054 = vrot.slane %v1052, 4
    %v1055 = vshll.u32 %v940, 16
    %v1057 = vrot.slane %v1055, 5
    %v1058 = vor.u32 %v1054, %v1057
    %v1059 = vrot.slane %v1058, 4
    %v1061 = vshll.u32 %v941, 16
    %v1063 = vrot.slane %v1061, 5
    %v1064 = vsel %vm142, %v1059, %v1063
    %v1065 = vshrl.u32 %v941, 16
    %v1067 = vrot.slane %v1065, 4
    %v1068 = vor.u32 %v1067, %v1063
    %v1069 = vrot.slane %v1068, 4
    %v1071 = vshll.u32 %v942, 16
    %v1073 = vrot.slane %v1071, 5
    %v1074 = vsel %vm142, %v1069, %v1073
    %v1076 = vshrl.u32 %v943, 16
    %v1078 = vrot.slane %v1076, 4
    %v1079 = vshll.u32 %v943, 16
    %v1081 = vrot.slane %v1079, 5
    %v1082 = vor.u32 %v1078, %v1081
    %v1083 = vrot.slane %v1082, 4
    %v1085 = vshll.u32 %v944, 16
    %v1087 = vrot.slane %v1085, 5
    %v1088 = vsel %vm142, %v1083, %v1087
    %v1089 = vshrl.u32 %v944, 16
    %v1091 = vrot.slane %v1089, 4
    %v1092 = vor.u32 %v1091, %v1087
    %v1093 = vrot.slane %v1092, 4
    %v1095 = vshll.u32 %v945, 16
    %v1097 = vrot.slane %v1095, 5
    %v1098 = vsel %vm142, %v1093, %v1097
    %v1100 = vshrl.u32 %v946, 16
    %v1102 = vrot.slane %v1100, 4
    %v1103 = vshll.u32 %v946, 16
    %v1105 = vrot.slane %v1103, 5
    %v1106 = vor.u32 %v1102, %v1105
    %v1107 = vrot.slane %v1106, 4
    %v1109 = vshll.u32 %v947, 16
    %v1111 = vrot.slane %v1109, 5
    %v1112 = vsel %vm142, %v1107, %v1111
    %v1113 = vshrl.u32 %v947, 16
    %v1115 = vrot.slane %v1113, 4
    %v1116 = vor.u32 %v1115, %v1111
    %v1117 = vrot.slane %v1116, 4
    %v1119 = vshll.u32 %v948, 16
    %v1121 = vrot.slane %v1119, 5
    %v1122 = vsel %vm142, %v1117, %v1121
    %v1124 = vshrl.u32 %v949, 16
    %v1126 = vrot.slane %v1124, 4
    %v1127 = vshll.u32 %v949, 16
    %v1129 = vrot.slane %v1127, 5
    %v1130 = vor.u32 %v1126, %v1129
    %v1131 = vrot.slane %v1130, 4
    %v1133 = vshll.u32 %v950, 16
    %v1135 = vrot.slane %v1133, 5
    %v1136 = vsel %vm142, %v1131, %v1135
    %v1137 = vshrl.u32 %v950, 16
    %v1139 = vrot.slane %v1137, 4
    %v1140 = vor.u32 %v1139, %v1135
    %v1141 = vrot.slane %v1140, 4
    %v1143 = vshll.u32 %v951, 16
    %v1145 = vrot.slane %v1143, 5
    %v1146 = vsel %vm142, %v1141, %v1145
    %v1148 = vshrl.u32 %v952, 16
    %v1150 = vrot.slane %v1148, 4
    %v1151 = vshll.u32 %v952, 16
    %v1153 = vrot.slane %v1151, 5
    %v1154 = vor.u32 %v1150, %v1153
    %v1155 = vrot.slane %v1154, 4
    %v1157 = vshll.u32 %v953, 16
    %v1159 = vrot.slane %v1157, 5
    %v1160 = vsel %vm142, %v1155, %v1159
    %v1161 = vshrl.u32 %v953, 16
    %v1163 = vrot.slane %v1161, 4
    %v1164 = vor.u32 %v1163, %v1159
    %v1165 = vrot.slane %v1164, 4
    %v1167 = vshll.u32 %v954, 16
    %v1169 = vrot.slane %v1167, 5
    %v1170 = vsel %vm142, %v1165, %v1169
    %v1172 = vshrl.u32 %v955, 16
    %v1174 = vrot.slane %v1172, 4
    %v1175 = vshll.u32 %v955, 16
    %v1177 = vrot.slane %v1175, 5
    %v1178 = vor.u32 %v1174, %v1177
    %v1179 = vrot.slane %v1178, 4
    %v1181 = vshll.u32 %v956, 16
    %v1183 = vrot.slane %v1181, 5
    %v1184 = vsel %vm142, %v1179, %v1183
    %v1185 = vshrl.u32 %v956, 16
    %v1187 = vrot.slane %v1185, 4
    %v1188 = vor.u32 %v1187, %v1183
    %v1189 = vrot.slane %v1188, 4
    %v1191 = vshll.u32 %v957, 16
    %v1193 = vrot.slane %v1191, 5
    %v1194 = vsel %vm142, %v1189, %v1193
    %v1196 = vshrl.u32 %v958, 16
    %v1198 = vrot.slane %v1196, 4
    %v1199 = vshll.u32 %v958, 16
    %v1201 = vrot.slane %v1199, 5
    %v1202 = vor.u32 %v1198, %v1201
    %v1203 = vrot.slane %v1202, 4
    %v1205 = vshll.u32 %v959, 16
    %v1207 = vrot.slane %v1205, 5
    %v1208 = vsel %vm142, %v1203, %v1207
    %v1209 = vshrl.u32 %v959, 16
    %v1211 = vrot.slane %v1209, 4
    %v1212 = vor.u32 %v1211, %v1207
    %v1213 = vrot.slane %v1212, 4
    %v1215 = vshll.u32 %v960, 16
    %v1217 = vrot.slane %v1215, 5
    %v1218 = vsel %vm142, %v1213, %v1217
    %v1220 = vshrl.u32 %v961, 16
    %v1222 = vrot.slane %v1220, 4
    %v1223 = vshll.u32 %v961, 16
    %v1225 = vrot.slane %v1223, 5
    %v1226 = vor.u32 %v1222, %v1225
    %v1227 = vrot.slane %v1226, 4
    %v1229 = vshll.u32 %v962, 16
    %v1231 = vrot.slane %v1229, 5
    %v1232 = vsel %vm142, %v1227, %v1231
    %v1233 = vshrl.u32 %v962, 16
    %v1235 = vrot.slane %v1233, 4
    %v1236 = vor.u32 %v1235, %v1231
    %v1237 = vrot.slane %v1236, 4
    %v1239 = vshll.u32 %v963, 16
    %v1241 = vrot.slane %v1239, 5
    %v1242 = vsel %vm142, %v1237, %v1241
    %v1244 = vshrl.u32 %v964, 16
    %v1246 = vrot.slane %v1244, 4
    %v1247 = vshll.u32 %v964, 16
    %v1249 = vrot.slane %v1247, 5
    %v1250 = vor.u32 %v1246, %v1249
    %v1251 = vrot.slane %v1250, 4
    %v1253 = vshll.u32 %v965, 16
    %v1255 = vrot.slane %v1253, 5
    %v1256 = vsel %vm142, %v1251, %v1255
    %v1257 = vshrl.u32 %v965, 16
    %v1259 = vrot.slane %v1257, 4
    %v1260 = vor.u32 %v1259, %v1255
    %v1261 = vrot.slane %v1260, 4
    %v1263 = vshll.u32 %v966, 16
    %v1265 = vrot.slane %v1263, 5
    %v1266 = vsel %vm142, %v1261, %v1265
    %v1268 = vshrl.u32 %v967, 16
    %v1270 = vrot.slane %v1268, 4
    %v1271 = vshll.u32 %v967, 16
    %v1273 = vrot.slane %v1271, 5
    %v1274 = vor.u32 %v1270, %v1273
    %v1275 = vrot.slane %v1274, 4
    %v1277 = vshll.u32 %v968, 16
    %v1279 = vrot.slane %v1277, 5
    %v1280 = vsel %vm142, %v1275, %v1279
    %v1281 = vshrl.u32 %v968, 16
    %v1283 = vrot.slane %v1281, 4
    %v1284 = vor.u32 %v1283, %v1279
    %v1285 = vrot.slane %v1284, 4
    %v1287 = vshll.u32 %v969, 16
    %v1289 = vrot.slane %v1287, 5
    %v1290 = vsel %vm142, %v1285, %v1289
    %v1292 = vshrl.u32 %v970, 16
    %v1294 = vrot.slane %v1292, 4
    %v1295 = vshll.u32 %v970, 16
    %v1297 = vrot.slane %v1295, 5
    %v1298 = vor.u32 %v1294, %v1297
    %v1299 = vrot.slane %v1298, 4
    %v1301 = vshll.u32 %v971, 16
    %v1303 = vrot.slane %v1301, 5
    %v1304 = vsel %vm142, %v1299, %v1303
    %v1305 = vshrl.u32 %v971, 16
    %v1307 = vrot.slane %v1305, 4
    %v1308 = vor.u32 %v1307, %v1303
    %v1309 = vrot.slane %v1308, 4
    %v1311 = vshll.u32 %v972, 16
    %v1313 = vrot.slane %v1311, 5
    %v1314 = vsel %vm142, %v1309, %v1313
    %v1316 = vshrl.u32 %v973, 16
    %v1318 = vrot.slane %v1316, 4
    %v1319 = vshll.u32 %v973, 16
    %v1321 = vrot.slane %v1319, 5
    %v1322 = vor.u32 %v1318, %v1321
    %v1323 = vrot.slane %v1322, 4
    %v1325 = vshll.u32 %v974, 16
    %v1327 = vrot.slane %v1325, 5
    %v1328 = vsel %vm142, %v1323, %v1327
    %v1329 = vshrl.u32 %v974, 16
    %v1331 = vrot.slane %v1329, 4
    %v1332 = vor.u32 %v1331, %v1327
    %v1333 = vrot.slane %v1332, 4
    %v1335 = vshll.u32 %v975, 16
    %v1337 = vrot.slane %v1335, 5
    %v1338 = vsel %vm142, %v1333, %v1337
    %v1340 = vshrl.u32 %v976, 16
    %v1342 = vrot.slane %v1340, 4
    %v1343 = vshll.u32 %v976, 16
    %v1345 = vrot.slane %v1343, 5
    %v1346 = vor.u32 %v1342, %v1345
    %v1347 = vrot.slane %v1346, 4
    %v1349 = vshll.u32 %v977, 16
    %v1351 = vrot.slane %v1349, 5
    %v1352 = vsel %vm142, %v1347, %v1351
    %v1353 = vshrl.u32 %v977, 16
    %v1355 = vrot.slane %v1353, 4
    %v1356 = vor.u32 %v1355, %v1351
    %v1357 = vrot.slane %v1356, 4
    %v1359 = vshll.u32 %v978, 16
    %v1361 = vrot.slane %v1359, 5
    %v1362 = vsel %vm142, %v1357, %v1361
    %1395 = vst [vmem:[#allocation2 + $0x10] sm:$0xf] %v992
    %1396 = vst [vmem:[#allocation2 + $0x34] sm:$0xf] %v1002
    %1397 = vst [vmem:[#allocation2 + $0x58] sm:$0xf] %v1016
    %1398 = vst [vmem:[#allocation2 + $0x7c] sm:$0xf] %v1026
    %1399 = vst [vmem:[#allocation2 + $0xa0] sm:$0xf] %v1040
    %1400 = vst [vmem:[#allocation2 + $0xc4] sm:$0xf] %v1050
    %1401 = vst [vmem:[#allocation2 + $0xe8] sm:$0xf] %v1064
    %1402 = vst [vmem:[#allocation2 + $0x10c] sm:$0xf] %v1074
    %1403 = vst [vmem:[#allocation2 + $0x130] sm:$0xf] %v1088
    %1404 = vst [vmem:[#allocation2 + $0x154] sm:$0xf] %v1098
    %1405 = vst [vmem:[#allocation2 + $0x178] sm:$0xf] %v1112
    %1406 = vst [vmem:[#allocation2 + $0x19c] sm:$0xf] %v1122
    %1407 = vst [vmem:[#allocation2 + $0x1c0] sm:$0xf] %v1136
    %1408 = vst [vmem:[#allocation2 + $0x1e4] sm:$0xf] %v1146
    %1409 = vst [vmem:[#allocation2 + $0x208] sm:$0xf] %v1160
    %1410 = vst [vmem:[#allocation2 + $0x22c] sm:$0xf] %v1170
    %1411 = vst [vmem:[#allocation2 + $0x250] sm:$0xf] %v1184
    %1412 = vst [vmem:[#allocation2 + $0x274] sm:$0xf] %v1194
    %1413 = vst [vmem:[#allocation2 + $0x298] sm:$0xf] %v1208
    %1414 = vst [vmem:[#allocation2 + $0x2bc] sm:$0xf] %v1218
    %1415 = vst [vmem:[#allocation2 + $0x2e0] sm:$0xf] %v1232
    %1416 = vst [vmem:[#allocation2 + $0x304] sm:$0xf] %v1242
    %1417 = vst [vmem:[#allocation2 + $0x328] sm:$0xf] %v1256
    %1418 = vst [vmem:[#allocation2 + $0x34c] sm:$0xf] %v1266
    %1419 = vst [vmem:[#allocation2 + $0x370] sm:$0xf] %v1280
    %1420 = vst [vmem:[#allocation2 + $0x394] sm:$0xf] %v1290
    %1421 = vst [vmem:[#allocation2 + $0x3b8] sm:$0xf] %v1304
    %1422 = vst [vmem:[#allocation2 + $0x3dc] sm:$0xf] %v1314
    %1423 = vst [vmem:[#allocation2 + $0x400] sm:$0xf] %v1328
    %1424 = vst [vmem:[#allocation2 + $0x424] sm:$0xf] %v1338
    %1425 = vst [vmem:[#allocation2 + $0x448] sm:$0xf] %v1352
    %1426 = vst [vmem:[#allocation2 + $0x46c] sm:$0xf] %v1362
    %v1427 = vld [vmem:[%s866] sm:$0xe]
    %v1428 = vld [vmem:[%s866 + $0x4] sm:$0xf]
    %v1429 = vld [vmem:[%s866 + $0x8] sm:$0x1]
    %v1430 = vld [vmem:[%s866 + $0xc] sm:$0xe]
    %v1431 = vld [vmem:[%s866 + $0x10] sm:$0xf]
    %v1432 = vld [vmem:[%s866 + $0x14] sm:$0x1]
    %v1433 = vld [vmem:[%s866 + $0x18] sm:$0xe]
    %v1434 = vld [vmem:[%s866 + $0x1c] sm:$0xf]
    %v1435 = vld [vmem:[%s866 + $0x20] sm:$0x1]
    %v1436 = vld [vmem:[%s866 + $0x24] sm:$0xe]
    %v1437 = vld [vmem:[%s866 + $0x28] sm:$0xf]
    %v1438 = vld [vmem:[%s866 + $0x2c] sm:$0x1]
    %v1439 = vld [vmem:[%s866 + $0x30] sm:$0xe]
    %v1440 = vld [vmem:[%s866 + $0x34] sm:$0xf]
    %v1441 = vld [vmem:[%s866 + $0x38] sm:$0x1]
    %v1442 = vld [vmem:[%s866 + $0x3c] sm:$0xe]
    %v1443 = vld [vmem:[%s866 + $0x40] sm:$0xf]
    %v1444 = vld [vmem:[%s866 + $0x44] sm:$0x1]
    %v1445 = vld [vmem:[%s866 + $0x48] sm:$0xe]
    %v1446 = vld [vmem:[%s866 + $0x4c] sm:$0xf]
    %v1447 = vld [vmem:[%s866 + $0x50] sm:$0x1]
    %v1448 = vld [vmem:[%s866 + $0x54] sm:$0xe]
    %v1449 = vld [vmem:[%s866 + $0x58] sm:$0xf]
    %v1450 = vld [vmem:[%s866 + $0x5c] sm:$0x1]
    %v1451 = vld [vmem:[%s866 + $0x60] sm:$0xe]
    %v1452 = vld [vmem:[%s866 + $0x64] sm:$0xf]
    %v1453 = vld [vmem:[%s866 + $0x68] sm:$0x1]
    %v1454 = vld [vmem:[%s866 + $0x6c] sm:$0xe]
    %v1455 = vld [vmem:[%s866 + $0x70] sm:$0xf]
    %v1456 = vld [vmem:[%s866 + $0x74] sm:$0x1]
    %v1457 = vld [vmem:[%s866 + $0x78] sm:$0xe]
    %v1458 = vld [vmem:[%s866 + $0x7c] sm:$0xf]
    %v1459 = vld [vmem:[%s866 + $0x80] sm:$0x1]
    %v1460 = vld [vmem:[%s866 + $0x84] sm:$0xe]
    %v1461 = vld [vmem:[%s866 + $0x88] sm:$0xf]
    %v1462 = vld [vmem:[%s866 + $0x8c] sm:$0x1]
    %v1463 = vld [vmem:[%s866 + $0x90] sm:$0xe]
    %v1464 = vld [vmem:[%s866 + $0x94] sm:$0xf]
    %v1465 = vld [vmem:[%s866 + $0x98] sm:$0x1]
    %v1466 = vld [vmem:[%s866 + $0x9c] sm:$0xe]
    %v1467 = vld [vmem:[%s866 + $0xa0] sm:$0xf]
    %v1468 = vld [vmem:[%s866 + $0xa4] sm:$0x1]
    %v1469 = vld [vmem:[%s866 + $0xa8] sm:$0xe]
    %v1470 = vld [vmem:[%s866 + $0xac] sm:$0xf]
    %v1471 = vld [vmem:[%s866 + $0xb0] sm:$0x1]
    %v1472 = vld [vmem:[%s866 + $0xb4] sm:$0xe]
    %v1473 = vld [vmem:[%s866 + $0xb8] sm:$0xf]
    %v1474 = vld [vmem:[%s866 + $0xbc] sm:$0x1]
    %v1523 = vrot.slane %v1427, 5
    %v1524 = vrot.slane %v1523, 4
    %v1525 = vrot.slane %v1428, 5
    %v1526 = vsel %vm689, %v1524, %v1525
    %v1527 = vrot.slane %v1525, 4
    %v1528 = vrot.slane %v1429, 5
    %v1529 = vsel %vm689, %v1527, %v1528
    %v1530 = vrot.slane %v1430, 5
    %v1531 = vrot.slane %v1530, 4
    %v1532 = vrot.slane %v1431, 5
    %v1533 = vsel %vm689, %v1531, %v1532
    %v1534 = vrot.slane %v1532, 4
    %v1535 = vrot.slane %v1432, 5
    %v1536 = vsel %vm689, %v1534, %v1535
    %v1537 = vrot.slane %v1433, 5
    %v1538 = vrot.slane %v1537, 4
    %v1539 = vrot.slane %v1434, 5
    %v1540 = vsel %vm689, %v1538, %v1539
    %v1541 = vrot.slane %v1539, 4
    %v1542 = vrot.slane %v1435, 5
    %v1543 = vsel %vm689, %v1541, %v1542
    %v1544 = vrot.slane %v1436, 5
    %v1545 = vrot.slane %v1544, 4
    %v1546 = vrot.slane %v1437, 5
    %v1547 = vsel %vm689, %v1545, %v1546
    %v1548 = vrot.slane %v1546, 4
    %v1549 = vrot.slane %v1438, 5
    %v1550 = vsel %vm689, %v1548, %v1549
    %v1551 = vrot.slane %v1439, 5
    %v1552 = vrot.slane %v1551, 4
    %v1553 = vrot.slane %v1440, 5
    %v1554 = vsel %vm689, %v1552, %v1553
    %v1555 = vrot.slane %v1553, 4
    %v1556 = vrot.slane %v1441, 5
    %v1557 = vsel %vm689, %v1555, %v1556
    %v1558 = vrot.slane %v1442, 5
    %v1559 = vrot.slane %v1558, 4
    %v1560 = vrot.slane %v1443, 5
    %v1561 = vsel %vm689, %v1559, %v1560
    %v1562 = vrot.slane %v1560, 4
    %v1563 = vrot.slane %v1444, 5
    %v1564 = vsel %vm689, %v1562, %v1563
    %v1565 = vrot.slane %v1445, 5
    %v1566 = vrot.slane %v1565, 4
    %v1567 = vrot.slane %v1446, 5
    %v1568 = vsel %vm689, %v1566, %v1567
    %v1569 = vrot.slane %v1567, 4
    %v1570 = vrot.slane %v1447, 5
    %v1571 = vsel %vm689, %v1569, %v1570
    %v1572 = vrot.slane %v1448, 5
    %v1573 = vrot.slane %v1572, 4
    %v1574 = vrot.slane %v1449, 5
    %v1575 = vsel %vm689, %v1573, %v1574
    %v1576 = vrot.slane %v1574, 4
    %v1577 = vrot.slane %v1450, 5
    %v1578 = vsel %vm689, %v1576, %v1577
    %v1579 = vrot.slane %v1451, 5
    %v1580 = vrot.slane %v1579, 4
    %v1581 = vrot.slane %v1452, 5
    %v1582 = vsel %vm689, %v1580, %v1581
    %v1583 = vrot.slane %v1581, 4
    %v1584 = vrot.slane %v1453, 5
    %v1585 = vsel %vm689, %v1583, %v1584
    %v1586 = vrot.slane %v1454, 5
    %v1587 = vrot.slane %v1586, 4
    %v1588 = vrot.slane %v1455, 5
    %v1589 = vsel %vm689, %v1587, %v1588
    %v1590 = vrot.slane %v1588, 4
    %v1591 = vrot.slane %v1456, 5
    %v1592 = vsel %vm689, %v1590, %v1591
    %v1593 = vrot.slane %v1457, 5
    %v1594 = vrot.slane %v1593, 4
    %v1595 = vrot.slane %v1458, 5
    %v1596 = vsel %vm689, %v1594, %v1595
    %v1597 = vrot.slane %v1595, 4
    %v1598 = vrot.slane %v1459, 5
    %v1599 = vsel %vm689, %v1597, %v1598
    %v1600 = vrot.slane %v1460, 5
    %v1601 = vrot.slane %v1600, 4
    %v1602 = vrot.slane %v1461, 5
    %v1603 = vsel %vm689, %v1601, %v1602
    %v1604 = vrot.slane %v1602, 4
    %v1605 = vrot.slane %v1462, 5
    %v1606 = vsel %vm689, %v1604, %v1605
    %v1607 = vrot.slane %v1463, 5
    %v1608 = vrot.slane %v1607, 4
    %v1609 = vrot.slane %v1464, 5
    %v1610 = vsel %vm689, %v1608, %v1609
    %v1611 = vrot.slane %v1609, 4
    %v1612 = vrot.slane %v1465, 5
    %v1613 = vsel %vm689, %v1611, %v1612
    %v1614 = vrot.slane %v1466, 5
    %v1615 = vrot.slane %v1614, 4
    %v1616 = vrot.slane %v1467, 5
    %v1617 = vsel %vm689, %v1615, %v1616
    %v1618 = vrot.slane %v1616, 4
    %v1619 = vrot.slane %v1468, 5
    %v1620 = vsel %vm689, %v1618, %v1619
    %v1621 = vrot.slane %v1469, 5
    %v1622 = vrot.slane %v1621, 4
    %v1623 = vrot.slane %v1470, 5
    %v1624 = vsel %vm689, %v1622, %v1623
    %v1625 = vrot.slane %v1623, 4
    %v1626 = vrot.slane %v1471, 5
    %v1627 = vsel %vm689, %v1625, %v1626
    %v1628 = vrot.slane %v1472, 5
    %v1629 = vrot.slane %v1628, 4
    %v1630 = vrot.slane %v1473, 5
    %v1631 = vsel %vm689, %v1629, %v1630
    %v1632 = vrot.slane %v1630, 4
    %v1633 = vrot.slane %v1474, 5
    %v1634 = vsel %vm689, %v1632, %v1633
    %1667 = vst [vmem:[#allocation2 + $0x14] sm:$0xf] %v1526
    %1668 = vst [vmem:[#allocation2 + $0x38] sm:$0xf] %v1529
    %1669 = vst [vmem:[#allocation2 + $0x5c] sm:$0xf] %v1533
    %1670 = vst [vmem:[#allocation2 + $0x80] sm:$0xf] %v1536
    %1671 = vst [vmem:[#allocation2 + $0xa4] sm:$0xf] %v1540
    %1672 = vst [vmem:[#allocation2 + $0xc8] sm:$0xf] %v1543
    %1673 = vst [vmem:[#allocation2 + $0xec] sm:$0xf] %v1547
    %1674 = vst [vmem:[#allocation2 + $0x110] sm:$0xf] %v1550
    %1675 = vst [vmem:[#allocation2 + $0x134] sm:$0xf] %v1554
    %1676 = vst [vmem:[#allocation2 + $0x158] sm:$0xf] %v1557
    %1677 = vst [vmem:[#allocation2 + $0x17c] sm:$0xf] %v1561
    %1678 = vst [vmem:[#allocation2 + $0x1a0] sm:$0xf] %v1564
    %1679 = vst [vmem:[#allocation2 + $0x1c4] sm:$0xf] %v1568
    %1680 = vst [vmem:[#allocation2 + $0x1e8] sm:$0xf] %v1571
    %1681 = vst [vmem:[#allocation2 + $0x20c] sm:$0xf] %v1575
    %1682 = vst [vmem:[#allocation2 + $0x230] sm:$0xf] %v1578
    %1683 = vst [vmem:[#allocation2 + $0x254] sm:$0xf] %v1582
    %1684 = vst [vmem:[#allocation2 + $0x278] sm:$0xf] %v1585
    %1685 = vst [vmem:[#allocation2 + $0x29c] sm:$0xf] %v1589
    %1686 = vst [vmem:[#allocation2 + $0x2c0] sm:$0xf] %v1592
    %1687 = vst [vmem:[#allocation2 + $0x2e4] sm:$0xf] %v1596
    %1688 = vst [vmem:[#allocation2 + $0x308] sm:$0xf] %v1599
    %1689 = vst [vmem:[#allocation2 + $0x32c] sm:$0xf] %v1603
    %1690 = vst [vmem:[#allocation2 + $0x350] sm:$0xf] %v1606
    %1691 = vst [vmem:[#allocation2 + $0x374] sm:$0xf] %v1610
    %1692 = vst [vmem:[#allocation2 + $0x398] sm:$0xf] %v1613
    %1693 = vst [vmem:[#allocation2 + $0x3bc] sm:$0xf] %v1617
    %1694 = vst [vmem:[#allocation2 + $0x3e0] sm:$0xf] %v1620
    %1695 = vst [vmem:[#allocation2 + $0x404] sm:$0xf] %v1624
    %1696 = vst [vmem:[#allocation2 + $0x428] sm:$0xf] %v1627
    %1697 = vst [vmem:[#allocation2 + $0x44c] sm:$0xf] %v1631
    %1698 = vst [vmem:[#allocation2 + $0x470] sm:$0xf] %v1634
    %s1699 = scalar_lea.vmem %s0, 24
    %v1700 = vld [vmem:[%s1699] sm:$0xf]
    %v1701 = vld [vmem:[%s1699 + $0x4] sm:$0xf]
    %v1702 = vld [vmem:[%s1699 + $0xc] sm:$0xf]
    %v1703 = vld [vmem:[%s1699 + $0x10] sm:$0xf]
    %v1704 = vld [vmem:[%s1699 + $0x18] sm:$0xf]
    %v1705 = vld [vmem:[%s1699 + $0x1c] sm:$0xf]
    %v1706 = vld [vmem:[%s1699 + $0x24] sm:$0xf]
    %v1707 = vld [vmem:[%s1699 + $0x28] sm:$0xf]
    %v1708 = vld [vmem:[%s1699 + $0x30] sm:$0xf]
    %v1709 = vld [vmem:[%s1699 + $0x34] sm:$0xf]
    %v1710 = vld [vmem:[%s1699 + $0x3c] sm:$0xf]
    %v1711 = vld [vmem:[%s1699 + $0x40] sm:$0xf]
    %v1712 = vld [vmem:[%s1699 + $0x48] sm:$0xf]
    %v1713 = vld [vmem:[%s1699 + $0x4c] sm:$0xf]
    %v1714 = vld [vmem:[%s1699 + $0x54] sm:$0xf]
    %v1715 = vld [vmem:[%s1699 + $0x58] sm:$0xf]
    %v1716 = vld [vmem:[%s1699 + $0x60] sm:$0xf]
    %v1717 = vld [vmem:[%s1699 + $0x64] sm:$0xf]
    %v1718 = vld [vmem:[%s1699 + $0x6c] sm:$0xf]
    %v1719 = vld [vmem:[%s1699 + $0x70] sm:$0xf]
    %v1720 = vld [vmem:[%s1699 + $0x78] sm:$0xf]
    %v1721 = vld [vmem:[%s1699 + $0x7c] sm:$0xf]
    %v1722 = vld [vmem:[%s1699 + $0x84] sm:$0xf]
    %v1723 = vld [vmem:[%s1699 + $0x88] sm:$0xf]
    %v1724 = vld [vmem:[%s1699 + $0x90] sm:$0xf]
    %v1725 = vld [vmem:[%s1699 + $0x94] sm:$0xf]
    %v1726 = vld [vmem:[%s1699 + $0x9c] sm:$0xf]
    %v1727 = vld [vmem:[%s1699 + $0xa0] sm:$0xf]
    %v1728 = vld [vmem:[%s1699 + $0xa8] sm:$0xf]
    %v1729 = vld [vmem:[%s1699 + $0xac] sm:$0xf]
    %v1730 = vld [vmem:[%s1699 + $0xb4] sm:$0xf]
    %v1731 = vld [vmem:[%s1699 + $0xb8] sm:$0xf]
    %1732 = vst [vmem:[#allocation2 + $0x18] sm:$0xf] %v1700
    %1733 = vst [vmem:[#allocation2 + $0x3c] sm:$0xf] %v1701
    %1734 = vst [vmem:[#allocation2 + $0x60] sm:$0xf] %v1702
    %1735 = vst [vmem:[#allocation2 + $0x84] sm:$0xf] %v1703
    %1736 = vst [vmem:[#allocation2 + $0xa8] sm:$0xf] %v1704
    %1737 = vst [vmem:[#allocation2 + $0xcc] sm:$0xf] %v1705
    %1738 = vst [vmem:[#allocation2 + $0xf0] sm:$0xf] %v1706
    %1739 = vst [vmem:[#allocation2 + $0x114] sm:$0xf] %v1707
    %1740 = vst [vmem:[#allocation2 + $0x138] sm:$0xf] %v1708
    %1741 = vst [vmem:[#allocation2 + $0x15c] sm:$0xf] %v1709
    %1742 = vst [vmem:[#allocation2 + $0x180] sm:$0xf] %v1710
    %1743 = vst [vmem:[#allocation2 + $0x1a4] sm:$0xf] %v1711
    %1744 = vst [vmem:[#allocation2 + $0x1c8] sm:$0xf] %v1712
    %1745 = vst [vmem:[#allocation2 + $0x1ec] sm:$0xf] %v1713
    %1746 = vst [vmem:[#allocation2 + $0x210] sm:$0xf] %v1714
    %1747 = vst [vmem:[#allocation2 + $0x234] sm:$0xf] %v1715
    %1748 = vst [vmem:[#allocation2 + $0x258] sm:$0xf] %v1716
    %1749 = vst [vmem:[#allocation2 + $0x27c] sm:$0xf] %v1717
    %1750 = vst [vmem:[#allocation2 + $0x2a0] sm:$0xf] %v1718
    %1751 = vst [vmem:[#allocation2 + $0x2c4] sm:$0xf] %v1719
    %1752 = vst [vmem:[#allocation2 + $0x2e8] sm:$0xf] %v1720
    %1753 = vst [vmem:[#allocation2 + $0x30c] sm:$0xf] %v1721
    %1754 = vst [vmem:[#allocation2 + $0x330] sm:$0xf] %v1722
    %1755 = vst [vmem:[#allocation2 + $0x354] sm:$0xf] %v1723
    %1756 = vst [vmem:[#allocation2 + $0x378] sm:$0xf] %v1724
    %1757 = vst [vmem:[#allocation2 + $0x39c] sm:$0xf] %v1725
    %1758 = vst [vmem:[#allocation2 + $0x3c0] sm:$0xf] %v1726
    %1759 = vst [vmem:[#allocation2 + $0x3e4] sm:$0xf] %v1727
    %1760 = vst [vmem:[#allocation2 + $0x408] sm:$0xf] %v1728
    %1761 = vst [vmem:[#allocation2 + $0x42c] sm:$0xf] %v1729
    %1762 = vst [vmem:[#allocation2 + $0x450] sm:$0xf] %v1730
    %1763 = vst [vmem:[#allocation2 + $0x474] sm:$0xf] %v1731
    %v1764 = vld [vmem:[%s1699] sm:$0xf]
    %v1765 = vld [vmem:[%s1699 + $0x4] sm:$0xf]
    %v1766 = vld [vmem:[%s1699 + $0x8] sm:$0x1]
    %v1767 = vld [vmem:[%s1699 + $0xc] sm:$0xf]
    %v1768 = vld [vmem:[%s1699 + $0x10] sm:$0xf]
    %v1769 = vld [vmem:[%s1699 + $0x14] sm:$0x1]
    %v1770 = vld [vmem:[%s1699 + $0x18] sm:$0xf]
    %v1771 = vld [vmem:[%s1699 + $0x1c] sm:$0xf]
    %v1772 = vld [vmem:[%s1699 + $0x20] sm:$0x1]
    %v1773 = vld [vmem:[%s1699 + $0x24] sm:$0xf]
    %v1774 = vld [vmem:[%s1699 + $0x28] sm:$0xf]
    %v1775 = vld [vmem:[%s1699 + $0x2c] sm:$0x1]
    %v1776 = vld [vmem:[%s1699 + $0x30] sm:$0xf]
    %v1777 = vld [vmem:[%s1699 + $0x34] sm:$0xf]
    %v1778 = vld [vmem:[%s1699 + $0x38] sm:$0x1]
    %v1779 = vld [vmem:[%s1699 + $0x3c] sm:$0xf]
    %v1780 = vld [vmem:[%s1699 + $0x40] sm:$0xf]
    %v1781 = vld [vmem:[%s1699 + $0x44] sm:$0x1]
    %v1782 = vld [vmem:[%s1699 + $0x48] sm:$0xf]
    %v1783 = vld [vmem:[%s1699 + $0x4c] sm:$0xf]
    %v1784 = vld [vmem:[%s1699 + $0x50] sm:$0x1]
    %v1785 = vld [vmem:[%s1699 + $0x54] sm:$0xf]
    %v1786 = vld [vmem:[%s1699 + $0x58] sm:$0xf]
    %v1787 = vld [vmem:[%s1699 + $0x5c] sm:$0x1]
    %v1788 = vld [vmem:[%s1699 + $0x60] sm:$0xf]
    %v1789 = vld [vmem:[%s1699 + $0x64] sm:$0xf]
    %v1790 = vld [vmem:[%s1699 + $0x68] sm:$0x1]
    %v1791 = vld [vmem:[%s1699 + $0x6c] sm:$0xf]
    %v1792 = vld [vmem:[%s1699 + $0x70] sm:$0xf]
    %v1793 = vld [vmem:[%s1699 + $0x74] sm:$0x1]
    %v1794 = vld [vmem:[%s1699 + $0x78] sm:$0xf]
    %v1795 = vld [vmem:[%s1699 + $0x7c] sm:$0xf]
    %v1796 = vld [vmem:[%s1699 + $0x80] sm:$0x1]
    %v1797 = vld [vmem:[%s1699 + $0x84] sm:$0xf]
    %v1798 = vld [vmem:[%s1699 + $0x88] sm:$0xf]
    %v1799 = vld [vmem:[%s1699 + $0x8c] sm:$0x1]
    %v1800 = vld [vmem:[%s1699 + $0x90] sm:$0xf]
    %v1801 = vld [vmem:[%s1699 + $0x94] sm:$0xf]
    %v1802 = vld [vmem:[%s1699 + $0x98] sm:$0x1]
    %v1803 = vld [vmem:[%s1699 + $0x9c] sm:$0xf]
    %v1804 = vld [vmem:[%s1699 + $0xa0] sm:$0xf]
    %v1805 = vld [vmem:[%s1699 + $0xa4] sm:$0x1]
    %v1806 = vld [vmem:[%s1699 + $0xa8] sm:$0xf]
    %v1807 = vld [vmem:[%s1699 + $0xac] sm:$0xf]
    %v1808 = vld [vmem:[%s1699 + $0xb0] sm:$0x1]
    %v1809 = vld [vmem:[%s1699 + $0xb4] sm:$0xf]
    %v1810 = vld [vmem:[%s1699 + $0xb8] sm:$0xf]
    %v1811 = vld [vmem:[%s1699 + $0xbc] sm:$0x1]
    %v1813 = vshrl.u32 %v1764, 16
    %v1815 = vrot.slane %v1813, 4
    %v1816 = vshll.u32 %v1764, 16
    %v1818 = vrot.slane %v1816, 5
    %v1819 = vor.u32 %v1815, %v1818
    %v1820 = vrot.slane %v1819, 4
    %v1822 = vshll.u32 %v1765, 16
    %v1824 = vrot.slane %v1822, 5
    %v1825 = vsel %vm142, %v1820, %v1824
    %v1826 = vshrl.u32 %v1765, 16
    %v1828 = vrot.slane %v1826, 4
    %v1829 = vor.u32 %v1828, %v1824
    %v1830 = vrot.slane %v1829, 4
    %v1832 = vshll.u32 %v1766, 16
    %v1834 = vrot.slane %v1832, 5
    %v1835 = vsel %vm142, %v1830, %v1834
    %v1837 = vshrl.u32 %v1767, 16
    %v1839 = vrot.slane %v1837, 4
    %v1840 = vshll.u32 %v1767, 16
    %v1842 = vrot.slane %v1840, 5
    %v1843 = vor.u32 %v1839, %v1842
    %v1844 = vrot.slane %v1843, 4
    %v1846 = vshll.u32 %v1768, 16
    %v1848 = vrot.slane %v1846, 5
    %v1849 = vsel %vm142, %v1844, %v1848
    %v1850 = vshrl.u32 %v1768, 16
    %v1852 = vrot.slane %v1850, 4
    %v1853 = vor.u32 %v1852, %v1848
    %v1854 = vrot.slane %v1853, 4
    %v1856 = vshll.u32 %v1769, 16
    %v1858 = vrot.slane %v1856, 5
    %v1859 = vsel %vm142, %v1854, %v1858
    %v1861 = vshrl.u32 %v1770, 16
    %v1863 = vrot.slane %v1861, 4
    %v1864 = vshll.u32 %v1770, 16
    %v1866 = vrot.slane %v1864, 5
    %v1867 = vor.u32 %v1863, %v1866
    %v1868 = vrot.slane %v1867, 4
    %v1870 = vshll.u32 %v1771, 16
    %v1872 = vrot.slane %v1870, 5
    %v1873 = vsel %vm142, %v1868, %v1872
    %v1874 = vshrl.u32 %v1771, 16
    %v1876 = vrot.slane %v1874, 4
    %v1877 = vor.u32 %v1876, %v1872
    %v1878 = vrot.slane %v1877, 4
    %v1880 = vshll.u32 %v1772, 16
    %v1882 = vrot.slane %v1880, 5
    %v1883 = vsel %vm142, %v1878, %v1882
    %v1885 = vshrl.u32 %v1773, 16
    %v1887 = vrot.slane %v1885, 4
    %v1888 = vshll.u32 %v1773, 16
    %v1890 = vrot.slane %v1888, 5
    %v1891 = vor.u32 %v1887, %v1890
    %v1892 = vrot.slane %v1891, 4
    %v1894 = vshll.u32 %v1774, 16
    %v1896 = vrot.slane %v1894, 5
    %v1897 = vsel %vm142, %v1892, %v1896
    %v1898 = vshrl.u32 %v1774, 16
    %v1900 = vrot.slane %v1898, 4
    %v1901 = vor.u32 %v1900, %v1896
    %v1902 = vrot.slane %v1901, 4
    %v1904 = vshll.u32 %v1775, 16
    %v1906 = vrot.slane %v1904, 5
    %v1907 = vsel %vm142, %v1902, %v1906
    %v1909 = vshrl.u32 %v1776, 16
    %v1911 = vrot.slane %v1909, 4
    %v1912 = vshll.u32 %v1776, 16
    %v1914 = vrot.slane %v1912, 5
    %v1915 = vor.u32 %v1911, %v1914
    %v1916 = vrot.slane %v1915, 4
    %v1918 = vshll.u32 %v1777, 16
    %v1920 = vrot.slane %v1918, 5
    %v1921 = vsel %vm142, %v1916, %v1920
    %v1922 = vshrl.u32 %v1777, 16
    %v1924 = vrot.slane %v1922, 4
    %v1925 = vor.u32 %v1924, %v1920
    %v1926 = vrot.slane %v1925, 4
    %v1928 = vshll.u32 %v1778, 16
    %v1930 = vrot.slane %v1928, 5
    %v1931 = vsel %vm142, %v1926, %v1930
    %v1933 = vshrl.u32 %v1779, 16
    %v1935 = vrot.slane %v1933, 4
    %v1936 = vshll.u32 %v1779, 16
    %v1938 = vrot.slane %v1936, 5
    %v1939 = vor.u32 %v1935, %v1938
    %v1940 = vrot.slane %v1939, 4
    %v1942 = vshll.u32 %v1780, 16
    %v1944 = vrot.slane %v1942, 5
    %v1945 = vsel %vm142, %v1940, %v1944
    %v1946 = vshrl.u32 %v1780, 16
    %v1948 = vrot.slane %v1946, 4
    %v1949 = vor.u32 %v1948, %v1944
    %v1950 = vrot.slane %v1949, 4
    %v1952 = vshll.u32 %v1781, 16
    %v1954 = vrot.slane %v1952, 5
    %v1955 = vsel %vm142, %v1950, %v1954
    %v1957 = vshrl.u32 %v1782, 16
    %v1959 = vrot.slane %v1957, 4
    %v1960 = vshll.u32 %v1782, 16
    %v1962 = vrot.slane %v1960, 5
    %v1963 = vor.u32 %v1959, %v1962
    %v1964 = vrot.slane %v1963, 4
    %v1966 = vshll.u32 %v1783, 16
    %v1968 = vrot.slane %v1966, 5
    %v1969 = vsel %vm142, %v1964, %v1968
    %v1970 = vshrl.u32 %v1783, 16
    %v1972 = vrot.slane %v1970, 4
    %v1973 = vor.u32 %v1972, %v1968
    %v1974 = vrot.slane %v1973, 4
    %v1976 = vshll.u32 %v1784, 16
    %v1978 = vrot.slane %v1976, 5
    %v1979 = vsel %vm142, %v1974, %v1978
    %v1981 = vshrl.u32 %v1785, 16
    %v1983 = vrot.slane %v1981, 4
    %v1984 = vshll.u32 %v1785, 16
    %v1986 = vrot.slane %v1984, 5
    %v1987 = vor.u32 %v1983, %v1986
    %v1988 = vrot.slane %v1987, 4
    %v1990 = vshll.u32 %v1786, 16
    %v1992 = vrot.slane %v1990, 5
    %v1993 = vsel %vm142, %v1988, %v1992
    %v1994 = vshrl.u32 %v1786, 16
    %v1996 = vrot.slane %v1994, 4
    %v1997 = vor.u32 %v1996, %v1992
    %v1998 = vrot.slane %v1997, 4
    %v2000 = vshll.u32 %v1787, 16
    %v2002 = vrot.slane %v2000, 5
    %v2003 = vsel %vm142, %v1998, %v2002
    %v2005 = vshrl.u32 %v1788, 16
    %v2007 = vrot.slane %v2005, 4
    %v2008 = vshll.u32 %v1788, 16
    %v2010 = vrot.slane %v2008, 5
    %v2011 = vor.u32 %v2007, %v2010
    %v2012 = vrot.slane %v2011, 4
    %v2014 = vshll.u32 %v1789, 16
    %v2016 = vrot.slane %v2014, 5
    %v2017 = vsel %vm142, %v2012, %v2016
    %v2018 = vshrl.u32 %v1789, 16
    %v2020 = vrot.slane %v2018, 4
    %v2021 = vor.u32 %v2020, %v2016
    %v2022 = vrot.slane %v2021, 4
    %v2024 = vshll.u32 %v1790, 16
    %v2026 = vrot.slane %v2024, 5
    %v2027 = vsel %vm142, %v2022, %v2026
    %v2029 = vshrl.u32 %v1791, 16
    %v2031 = vrot.slane %v2029, 4
    %v2032 = vshll.u32 %v1791, 16
    %v2034 = vrot.slane %v2032, 5
    %v2035 = vor.u32 %v2031, %v2034
    %v2036 = vrot.slane %v2035, 4
    %v2038 = vshll.u32 %v1792, 16
    %v2040 = vrot.slane %v2038, 5
    %v2041 = vsel %vm142, %v2036, %v2040
    %v2042 = vshrl.u32 %v1792, 16
    %v2044 = vrot.slane %v2042, 4
    %v2045 = vor.u32 %v2044, %v2040
    %v2046 = vrot.slane %v2045, 4
    %v2048 = vshll.u32 %v1793, 16
    %v2050 = vrot.slane %v2048, 5
    %v2051 = vsel %vm142, %v2046, %v2050
    %v2053 = vshrl.u32 %v1794, 16
    %v2055 = vrot.slane %v2053, 4
    %v2056 = vshll.u32 %v1794, 16
    %v2058 = vrot.slane %v2056, 5
    %v2059 = vor.u32 %v2055, %v2058
    %v2060 = vrot.slane %v2059, 4
    %v2062 = vshll.u32 %v1795, 16
    %v2064 = vrot.slane %v2062, 5
    %v2065 = vsel %vm142, %v2060, %v2064
    %v2066 = vshrl.u32 %v1795, 16
    %v2068 = vrot.slane %v2066, 4
    %v2069 = vor.u32 %v2068, %v2064
    %v2070 = vrot.slane %v2069, 4
    %v2072 = vshll.u32 %v1796, 16
    %v2074 = vrot.slane %v2072, 5
    %v2075 = vsel %vm142, %v2070, %v2074
    %v2077 = vshrl.u32 %v1797, 16
    %v2079 = vrot.slane %v2077, 4
    %v2080 = vshll.u32 %v1797, 16
    %v2082 = vrot.slane %v2080, 5
    %v2083 = vor.u32 %v2079, %v2082
    %v2084 = vrot.slane %v2083, 4
    %v2086 = vshll.u32 %v1798, 16
    %v2088 = vrot.slane %v2086, 5
    %v2089 = vsel %vm142, %v2084, %v2088
    %v2090 = vshrl.u32 %v1798, 16
    %v2092 = vrot.slane %v2090, 4
    %v2093 = vor.u32 %v2092, %v2088
    %v2094 = vrot.slane %v2093, 4
    %v2096 = vshll.u32 %v1799, 16
    %v2098 = vrot.slane %v2096, 5
    %v2099 = vsel %vm142, %v2094, %v2098
    %v2101 = vshrl.u32 %v1800, 16
    %v2103 = vrot.slane %v2101, 4
    %v2104 = vshll.u32 %v1800, 16
    %v2106 = vrot.slane %v2104, 5
    %v2107 = vor.u32 %v2103, %v2106
    %v2108 = vrot.slane %v2107, 4
    %v2110 = vshll.u32 %v1801, 16
    %v2112 = vrot.slane %v2110, 5
    %v2113 = vsel %vm142, %v2108, %v2112
    %v2114 = vshrl.u32 %v1801, 16
    %v2116 = vrot.slane %v2114, 4
    %v2117 = vor.u32 %v2116, %v2112
    %v2118 = vrot.slane %v2117, 4
    %v2120 = vshll.u32 %v1802, 16
    %v2122 = vrot.slane %v2120, 5
    %v2123 = vsel %vm142, %v2118, %v2122
    %v2125 = vshrl.u32 %v1803, 16
    %v2127 = vrot.slane %v2125, 4
    %v2128 = vshll.u32 %v1803, 16
    %v2130 = vrot.slane %v2128, 5
    %v2131 = vor.u32 %v2127, %v2130
    %v2132 = vrot.slane %v2131, 4
    %v2134 = vshll.u32 %v1804, 16
    %v2136 = vrot.slane %v2134, 5
    %v2137 = vsel %vm142, %v2132, %v2136
    %v2138 = vshrl.u32 %v1804, 16
    %v2140 = vrot.slane %v2138, 4
    %v2141 = vor.u32 %v2140, %v2136
    %v2142 = vrot.slane %v2141, 4
    %v2144 = vshll.u32 %v1805, 16
    %v2146 = vrot.slane %v2144, 5
    %v2147 = vsel %vm142, %v2142, %v2146
    %v2149 = vshrl.u32 %v1806, 16
    %v2151 = vrot.slane %v2149, 4
    %v2152 = vshll.u32 %v1806, 16
    %v2154 = vrot.slane %v2152, 5
    %v2155 = vor.u32 %v2151, %v2154
    %v2156 = vrot.slane %v2155, 4
    %v2158 = vshll.u32 %v1807, 16
    %v2160 = vrot.slane %v2158, 5
    %v2161 = vsel %vm142, %v2156, %v2160
    %v2162 = vshrl.u32 %v1807, 16
    %v2164 = vrot.slane %v2162, 4
    %v2165 = vor.u32 %v2164, %v2160
    %v2166 = vrot.slane %v2165, 4
    %v2168 = vshll.u32 %v1808, 16
    %v2170 = vrot.slane %v2168, 5
    %v2171 = vsel %vm142, %v2166, %v2170
    %v2173 = vshrl.u32 %v1809, 16
    %v2175 = vrot.slane %v2173, 4
    %v2176 = vshll.u32 %v1809, 16
    %v2178 = vrot.slane %v2176, 5
    %v2179 = vor.u32 %v2175, %v2178
    %v2180 = vrot.slane %v2179, 4
    %v2182 = vshll.u32 %v1810, 16
    %v2184 = vrot.slane %v2182, 5
    %v2185 = vsel %vm142, %v2180, %v2184
    %v2186 = vshrl.u32 %v1810, 16
    %v2188 = vrot.slane %v2186, 4
    %v2189 = vor.u32 %v2188, %v2184
    %v2190 = vrot.slane %v2189, 4
    %v2192 = vshll.u32 %v1811, 16
    %v2194 = vrot.slane %v2192, 5
    %v2195 = vsel %vm142, %v2190, %v2194
    %2228 = vst [vmem:[#allocation2 + $0x1c] sm:$0xf] %v1825
    %2229 = vst [vmem:[#allocation2 + $0x40] sm:$0xf] %v1835
    %2230 = vst [vmem:[#allocation2 + $0x64] sm:$0xf] %v1849
    %2231 = vst [vmem:[#allocation2 + $0x88] sm:$0xf] %v1859
    %2232 = vst [vmem:[#allocation2 + $0xac] sm:$0xf] %v1873
    %2233 = vst [vmem:[#allocation2 + $0xd0] sm:$0xf] %v1883
    %2234 = vst [vmem:[#allocation2 + $0xf4] sm:$0xf] %v1897
    %2235 = vst [vmem:[#allocation2 + $0x118] sm:$0xf] %v1907
    %2236 = vst [vmem:[#allocation2 + $0x13c] sm:$0xf] %v1921
    %2237 = vst [vmem:[#allocation2 + $0x160] sm:$0xf] %v1931
    %2238 = vst [vmem:[#allocation2 + $0x184] sm:$0xf] %v1945
    %2239 = vst [vmem:[#allocation2 + $0x1a8] sm:$0xf] %v1955
    %2240 = vst [vmem:[#allocation2 + $0x1cc] sm:$0xf] %v1969
    %2241 = vst [vmem:[#allocation2 + $0x1f0] sm:$0xf] %v1979
    %2242 = vst [vmem:[#allocation2 + $0x214] sm:$0xf] %v1993
    %2243 = vst [vmem:[#allocation2 + $0x238] sm:$0xf] %v2003
    %2244 = vst [vmem:[#allocation2 + $0x25c] sm:$0xf] %v2017
    %2245 = vst [vmem:[#allocation2 + $0x280] sm:$0xf] %v2027
    %2246 = vst [vmem:[#allocation2 + $0x2a4] sm:$0xf] %v2041
    %2247 = vst [vmem:[#allocation2 + $0x2c8] sm:$0xf] %v2051
    %2248 = vst [vmem:[#allocation2 + $0x2ec] sm:$0xf] %v2065
    %2249 = vst [vmem:[#allocation2 + $0x310] sm:$0xf] %v2075
    %2250 = vst [vmem:[#allocation2 + $0x334] sm:$0xf] %v2089
    %2251 = vst [vmem:[#allocation2 + $0x358] sm:$0xf] %v2099
    %2252 = vst [vmem:[#allocation2 + $0x37c] sm:$0xf] %v2113
    %2253 = vst [vmem:[#allocation2 + $0x3a0] sm:$0xf] %v2123
    %2254 = vst [vmem:[#allocation2 + $0x3c4] sm:$0xf] %v2137
    %2255 = vst [vmem:[#allocation2 + $0x3e8] sm:$0xf] %v2147
    %2256 = vst [vmem:[#allocation2 + $0x40c] sm:$0xf] %v2161
    %2257 = vst [vmem:[#allocation2 + $0x430] sm:$0xf] %v2171
    %2258 = vst [vmem:[#allocation2 + $0x454] sm:$0xf] %v2185
    %2259 = vst [vmem:[#allocation2 + $0x478] sm:$0xf] %v2195
    %v2260 = vld [vmem:[%s1699] sm:$0xe]
    %v2261 = vld [vmem:[%s1699 + $0x4] sm:$0xf]
    %v2262 = vld [vmem:[%s1699 + $0x8] sm:$0x1]
    %v2263 = vld [vmem:[%s1699 + $0xc] sm:$0xe]
    %v2264 = vld [vmem:[%s1699 + $0x10] sm:$0xf]
    %v2265 = vld [vmem:[%s1699 + $0x14] sm:$0x1]
    %v2266 = vld [vmem:[%s1699 + $0x18] sm:$0xe]
    %v2267 = vld [vmem:[%s1699 + $0x1c] sm:$0xf]
    %v2268 = vld [vmem:[%s1699 + $0x20] sm:$0x1]
    %v2269 = vld [vmem:[%s1699 + $0x24] sm:$0xe]
    %v2270 = vld [vmem:[%s1699 + $0x28] sm:$0xf]
    %v2271 = vld [vmem:[%s1699 + $0x2c] sm:$0x1]
    %v2272 = vld [vmem:[%s1699 + $0x30] sm:$0xe]
    %v2273 = vld [vmem:[%s1699 + $0x34] sm:$0xf]
    %v2274 = vld [vmem:[%s1699 + $0x38] sm:$0x1]
    %v2275 = vld [vmem:[%s1699 + $0x3c] sm:$0xe]
    %v2276 = vld [vmem:[%s1699 + $0x40] sm:$0xf]
    %v2277 = vld [vmem:[%s1699 + $0x44] sm:$0x1]
    %v2278 = vld [vmem:[%s1699 + $0x48] sm:$0xe]
    %v2279 = vld [vmem:[%s1699 + $0x4c] sm:$0xf]
    %v2280 = vld [vmem:[%s1699 + $0x50] sm:$0x1]
    %v2281 = vld [vmem:[%s1699 + $0x54] sm:$0xe]
    %v2282 = vld [vmem:[%s1699 + $0x58] sm:$0xf]
    %v2283 = vld [vmem:[%s1699 + $0x5c] sm:$0x1]
    %v2284 = vld [vmem:[%s1699 + $0x60] sm:$0xe]
    %v2285 = vld [vmem:[%s1699 + $0x64] sm:$0xf]
    %v2286 = vld [vmem:[%s1699 + $0x68] sm:$0x1]
    %v2287 = vld [vmem:[%s1699 + $0x6c] sm:$0xe]
    %v2288 = vld [vmem:[%s1699 + $0x70] sm:$0xf]
    %v2289 = vld [vmem:[%s1699 + $0x74] sm:$0x1]
    %v2290 = vld [vmem:[%s1699 + $0x78] sm:$0xe]
    %v2291 = vld [vmem:[%s1699 + $0x7c] sm:$0xf]
    %v2292 = vld [vmem:[%s1699 + $0x80] sm:$0x1]
    %v2293 = vld [vmem:[%s1699 + $0x84] sm:$0xe]
    %v2294 = vld [vmem:[%s1699 + $0x88] sm:$0xf]
    %v2295 = vld [vmem:[%s1699 + $0x8c] sm:$0x1]
    %v2296 = vld [vmem:[%s1699 + $0x90] sm:$0xe]
    %v2297 = vld [vmem:[%s1699 + $0x94] sm:$0xf]
    %v2298 = vld [vmem:[%s1699 + $0x98] sm:$0x1]
    %v2299 = vld [vmem:[%s1699 + $0x9c] sm:$0xe]
    %v2300 = vld [vmem:[%s1699 + $0xa0] sm:$0xf]
    %v2301 = vld [vmem:[%s1699 + $0xa4] sm:$0x1]
    %v2302 = vld [vmem:[%s1699 + $0xa8] sm:$0xe]
    %v2303 = vld [vmem:[%s1699 + $0xac] sm:$0xf]
    %v2304 = vld [vmem:[%s1699 + $0xb0] sm:$0x1]
    %v2305 = vld [vmem:[%s1699 + $0xb4] sm:$0xe]
    %v2306 = vld [vmem:[%s1699 + $0xb8] sm:$0xf]
    %v2307 = vld [vmem:[%s1699 + $0xbc] sm:$0x1]
    %v2356 = vrot.slane %v2260, 5
    %v2357 = vrot.slane %v2356, 4
    %v2358 = vrot.slane %v2261, 5
    %v2359 = vsel %vm689, %v2357, %v2358
    %v2360 = vrot.slane %v2358, 4
    %v2361 = vrot.slane %v2262, 5
    %v2362 = vsel %vm689, %v2360, %v2361
    %v2363 = vrot.slane %v2263, 5
    %v2364 = vrot.slane %v2363, 4
    %v2365 = vrot.slane %v2264, 5
    %v2366 = vsel %vm689, %v2364, %v2365
    %v2367 = vrot.slane %v2365, 4
    %v2368 = vrot.slane %v2265, 5
    %v2369 = vsel %vm689, %v2367, %v2368
    %v2370 = vrot.slane %v2266, 5
    %v2371 = vrot.slane %v2370, 4
    %v2372 = vrot.slane %v2267, 5
    %v2373 = vsel %vm689, %v2371, %v2372
    %v2374 = vrot.slane %v2372, 4
    %v2375 = vrot.slane %v2268, 5
    %v2376 = vsel %vm689, %v2374, %v2375
    %v2377 = vrot.slane %v2269, 5
    %v2378 = vrot.slane %v2377, 4
    %v2379 = vrot.slane %v2270, 5
    %v2380 = vsel %vm689, %v2378, %v2379
    %v2381 = vrot.slane %v2379, 4
    %v2382 = vrot.slane %v2271, 5
    %v2383 = vsel %vm689, %v2381, %v2382
    %v2384 = vrot.slane %v2272, 5
    %v2385 = vrot.slane %v2384, 4
    %v2386 = vrot.slane %v2273, 5
    %v2387 = vsel %vm689, %v2385, %v2386
    %v2388 = vrot.slane %v2386, 4
    %v2389 = vrot.slane %v2274, 5
    %v2390 = vsel %vm689, %v2388, %v2389
    %v2391 = vrot.slane %v2275, 5
    %v2392 = vrot.slane %v2391, 4
    %v2393 = vrot.slane %v2276, 5
    %v2394 = vsel %vm689, %v2392, %v2393
    %v2395 = vrot.slane %v2393, 4
    %v2396 = vrot.slane %v2277, 5
    %v2397 = vsel %vm689, %v2395, %v2396
    %v2398 = vrot.slane %v2278, 5
    %v2399 = vrot.slane %v2398, 4
    %v2400 = vrot.slane %v2279, 5
    %v2401 = vsel %vm689, %v2399, %v2400
    %v2402 = vrot.slane %v2400, 4
    %v2403 = vrot.slane %v2280, 5
    %v2404 = vsel %vm689, %v2402, %v2403
    %v2405 = vrot.slane %v2281, 5
    %v2406 = vrot.slane %v2405, 4
    %v2407 = vrot.slane %v2282, 5
    %v2408 = vsel %vm689, %v2406, %v2407
    %v2409 = vrot.slane %v2407, 4
    %v2410 = vrot.slane %v2283, 5
    %v2411 = vsel %vm689, %v2409, %v2410
    %v2412 = vrot.slane %v2284, 5
    %v2413 = vrot.slane %v2412, 4
    %v2414 = vrot.slane %v2285, 5
    %v2415 = vsel %vm689, %v2413, %v2414
    %v2416 = vrot.slane %v2414, 4
    %v2417 = vrot.slane %v2286, 5
    %v2418 = vsel %vm689, %v2416, %v2417
    %v2419 = vrot.slane %v2287, 5
    %v2420 = vrot.slane %v2419, 4
    %v2421 = vrot.slane %v2288, 5
    %v2422 = vsel %vm689, %v2420, %v2421
    %v2423 = vrot.slane %v2421, 4
    %v2424 = vrot.slane %v2289, 5
    %v2425 = vsel %vm689, %v2423, %v2424
    %v2426 = vrot.slane %v2290, 5
    %v2427 = vrot.slane %v2426, 4
    %v2428 = vrot.slane %v2291, 5
    %v2429 = vsel %vm689, %v2427, %v2428
    %v2430 = vrot.slane %v2428, 4
    %v2431 = vrot.slane %v2292, 5
    %v2432 = vsel %vm689, %v2430, %v2431
    %v2433 = vrot.slane %v2293, 5
    %v2434 = vrot.slane %v2433, 4
    %v2435 = vrot.slane %v2294, 5
    %v2436 = vsel %vm689, %v2434, %v2435
    %v2437 = vrot.slane %v2435, 4
    %v2438 = vrot.slane %v2295, 5
    %v2439 = vsel %vm689, %v2437, %v2438
    %v2440 = vrot.slane %v2296, 5
    %v2441 = vrot.slane %v2440, 4
    %v2442 = vrot.slane %v2297, 5
    %v2443 = vsel %vm689, %v2441, %v2442
    %v2444 = vrot.slane %v2442, 4
    %v2445 = vrot.slane %v2298, 5
    %v2446 = vsel %vm689, %v2444, %v2445
    %v2447 = vrot.slane %v2299, 5
    %v2448 = vrot.slane %v2447, 4
    %v2449 = vrot.slane %v2300, 5
    %v2450 = vsel %vm689, %v2448, %v2449
    %v2451 = vrot.slane %v2449, 4
    %v2452 = vrot.slane %v2301, 5
    %v2453 = vsel %vm689, %v2451, %v2452
    %v2454 = vrot.slane %v2302, 5
    %v2455 = vrot.slane %v2454, 4
    %v2456 = vrot.slane %v2303, 5
    %v2457 = vsel %vm689, %v2455, %v2456
    %v2458 = vrot.slane %v2456, 4
    %v2459 = vrot.slane %v2304, 5
    %v2460 = vsel %vm689, %v2458, %v2459
    %v2461 = vrot.slane %v2305, 5
    %v2462 = vrot.slane %v2461, 4
    %v2463 = vrot.slane %v2306, 5
    %v2464 = vsel %vm689, %v2462, %v2463
    %v2465 = vrot.slane %v2463, 4
    %v2466 = vrot.slane %v2307, 5
    %v2467 = vsel %vm689, %v2465, %v2466
    %2500 = vst [vmem:[#allocation2 + $0x20] sm:$0xf] %v2359
    %2501 = vst [vmem:[#allocation2 + $0x44] sm:$0xf] %v2362
    %2502 = vst [vmem:[#allocation2 + $0x68] sm:$0xf] %v2366
    %2503 = vst [vmem:[#allocation2 + $0x8c] sm:$0xf] %v2369
    %2504 = vst [vmem:[#allocation2 + $0xb0] sm:$0xf] %v2373
    %2505 = vst [vmem:[#allocation2 + $0xd4] sm:$0xf] %v2376
    %2506 = vst [vmem:[#allocation2 + $0xf8] sm:$0xf] %v2380
    %2507 = vst [vmem:[#allocation2 + $0x11c] sm:$0xf] %v2383
    %2508 = vst [vmem:[#allocation2 + $0x140] sm:$0xf] %v2387
    %2509 = vst [vmem:[#allocation2 + $0x164] sm:$0xf] %v2390
    %2510 = vst [vmem:[#allocation2 + $0x188] sm:$0xf] %v2394
    %2511 = vst [vmem:[#allocation2 + $0x1ac] sm:$0xf] %v2397
    %2512 = vst [vmem:[#allocation2 + $0x1d0] sm:$0xf] %v2401
    %2513 = vst [vmem:[#allocation2 + $0x1f4] sm:$0xf] %v2404
    %2514 = vst [vmem:[#allocation2 + $0x218] sm:$0xf] %v2408
    %2515 = vst [vmem:[#allocation2 + $0x23c] sm:$0xf] %v2411
    %2516 = vst [vmem:[#allocation2 + $0x260] sm:$0xf] %v2415
    %2517 = vst [vmem:[#allocation2 + $0x284] sm:$0xf] %v2418
    %2518 = vst [vmem:[#allocation2 + $0x2a8] sm:$0xf] %v2422
    %2519 = vst [vmem:[#allocation2 + $0x2cc] sm:$0xf] %v2425
    %2520 = vst [vmem:[#allocation2 + $0x2f0] sm:$0xf] %v2429
    %2521 = vst [vmem:[#allocation2 + $0x314] sm:$0xf] %v2432
    %2522 = vst [vmem:[#allocation2 + $0x338] sm:$0xf] %v2436
    %2523 = vst [vmem:[#allocation2 + $0x35c] sm:$0xf] %v2439
    %2524 = vst [vmem:[#allocation2 + $0x380] sm:$0xf] %v2443
    %2525 = vst [vmem:[#allocation2 + $0x3a4] sm:$0xf] %v2446
    %2526 = vst [vmem:[#allocation2 + $0x3c8] sm:$0xf] %v2450
    %2527 = vst [vmem:[#allocation2 + $0x3ec] sm:$0xf] %v2453
    %2528 = vst [vmem:[#allocation2 + $0x410] sm:$0xf] %v2457
    %2529 = vst [vmem:[#allocation2 + $0x434] sm:$0xf] %v2460
    %2530 = vst [vmem:[#allocation2 + $0x458] sm:$0xf] %v2464
    %2531 = vst [vmem:[#allocation2 + $0x47c] sm:$0xf] %v2467
    %v2532 = vld [vmem:[#allocation2] sm:$0xff]
    %v2533 = vld [vmem:[#allocation2 + $0x8] sm:$0xff]
    %v2534 = vld [vmem:[#allocation2 + $0x10] sm:$0xff]
    %v2535 = vld [vmem:[#allocation2 + $0x18] sm:$0xff]
    %v2536 = vld [vmem:[#allocation2 + $0x20] sm:$0xf]
    %v2537 = vld [vmem:[#allocation2 + $0x24] sm:$0xff]
    %v2538 = vld [vmem:[#allocation2 + $0x2c] sm:$0xff]
    %v2539 = vld [vmem:[#allocation2 + $0x34] sm:$0xff]
    %v2540 = vld [vmem:[#allocation2 + $0x3c] sm:$0xff]
    %v2541 = vld [vmem:[#allocation2 + $0x44] sm:$0xf]
    %v2542 = vld [vmem:[#allocation2 + $0x48] sm:$0xff]
    %v2543 = vld [vmem:[#allocation2 + $0x50] sm:$0xff]
    %v2544 = vld [vmem:[#allocation2 + $0x58] sm:$0xff]
    %v2545 = vld [vmem:[#allocation2 + $0x60] sm:$0xff]
    %v2546 = vld [vmem:[#allocation2 + $0x68] sm:$0xf]
    %v2547 = vld [vmem:[#allocation2 + $0x6c] sm:$0xff]
    %v2548 = vld [vmem:[#allocation2 + $0x74] sm:$0xff]
    %v2549 = vld [vmem:[#allocation2 + $0x7c] sm:$0xff]
    %v2550 = vld [vmem:[#allocation2 + $0x84] sm:$0xff]
    %v2551 = vld [vmem:[#allocation2 + $0x8c] sm:$0xf]
    %v2552 = vld [vmem:[#allocation2 + $0x90] sm:$0xff]
    %v2553 = vld [vmem:[#allocation2 + $0x98] sm:$0xff]
    %v2554 = vld [vmem:[#allocation2 + $0xa0] sm:$0xff]
    %v2555 = vld [vmem:[#allocation2 + $0xa8] sm:$0xff]
    %v2556 = vld [vmem:[#allocation2 + $0xb0] sm:$0xf]
    %v2557 = vld [vmem:[#allocation2 + $0xb4] sm:$0xff]
    %v2558 = vld [vmem:[#allocation2 + $0xbc] sm:$0xff]
    %v2559 = vld [vmem:[#allocation2 + $0xc4] sm:$0xff]
    %v2560 = vld [vmem:[#allocation2 + $0xcc] sm:$0xff]
    %v2561 = vld [vmem:[#allocation2 + $0xd4] sm:$0xf]
    %v2562 = vld [vmem:[#allocation2 + $0xd8] sm:$0xff]
    %v2563 = vld [vmem:[#allocation2 + $0xe0] sm:$0xff]
    %v2564 = vld [vmem:[#allocation2 + $0xe8] sm:$0xff]
    %v2565 = vld [vmem:[#allocation2 + $0xf0] sm:$0xff]
    %v2566 = vld [vmem:[#allocation2 + $0xf8] sm:$0xf]
    %v2567 = vld [vmem:[#allocation2 + $0xfc] sm:$0xff]
    %v2568 = vld [vmem:[#allocation2 + $0x104] sm:$0xff]
    %v2569 = vld [vmem:[#allocation2 + $0x10c] sm:$0xff]
    %v2570 = vld [vmem:[#allocation2 + $0x114] sm:$0xff]
    %v2571 = vld [vmem:[#allocation2 + $0x11c] sm:$0xf]
    %v2572 = vld [vmem:[#allocation2 + $0x120] sm:$0xff]
    %v2573 = vld [vmem:[#allocation2 + $0x128] sm:$0xff]
    %v2574 = vld [vmem:[#allocation2 + $0x130] sm:$0xff]
    %v2575 = vld [vmem:[#allocation2 + $0x138] sm:$0xff]
    %v2576 = vld [vmem:[#allocation2 + $0x140] sm:$0xf]
    %v2577 = vld [vmem:[#allocation2 + $0x144] sm:$0xff]
    %v2578 = vld [vmem:[#allocation2 + $0x14c] sm:$0xff]
    %v2579 = vld [vmem:[#allocation2 + $0x154] sm:$0xff]
    %v2580 = vld [vmem:[#allocation2 + $0x15c] sm:$0xff]
    %v2581 = vld [vmem:[#allocation2 + $0x164] sm:$0xf]
    %v2582 = vld [vmem:[#allocation2 + $0x168] sm:$0xff]
    %v2583 = vld [vmem:[#allocation2 + $0x170] sm:$0xff]
    %v2584 = vld [vmem:[#allocation2 + $0x178] sm:$0xff]
    %v2585 = vld [vmem:[#allocation2 + $0x180] sm:$0xff]
    %v2586 = vld [vmem:[#allocation2 + $0x188] sm:$0xf]
    %v2587 = vld [vmem:[#allocation2 + $0x18c] sm:$0xff]
    %v2588 = vld [vmem:[#allocation2 + $0x194] sm:$0xff]
    %v2589 = vld [vmem:[#allocation2 + $0x19c] sm:$0xff]
    %v2590 = vld [vmem:[#allocation2 + $0x1a4] sm:$0xff]
    %v2591 = vld [vmem:[#allocation2 + $0x1ac] sm:$0xf]
    %v2592 = vld [vmem:[#allocation2 + $0x1b0] sm:$0xff]
    %v2593 = vld [vmem:[#allocation2 + $0x1b8] sm:$0xff]
    %v2594 = vld [vmem:[#allocation2 + $0x1c0] sm:$0xff]
    %v2595 = vld [vmem:[#allocation2 + $0x1c8] sm:$0xff]
    %v2596 = vld [vmem:[#allocation2 + $0x1d0] sm:$0xf]
    %v2597 = vld [vmem:[#allocation2 + $0x1d4] sm:$0xff]
    %v2598 = vld [vmem:[#allocation2 + $0x1dc] sm:$0xff]
    %v2599 = vld [vmem:[#allocation2 + $0x1e4] sm:$0xff]
    %v2600 = vld [vmem:[#allocation2 + $0x1ec] sm:$0xff]
    %v2601 = vld [vmem:[#allocation2 + $0x1f4] sm:$0xf]
    %v2602 = vld [vmem:[#allocation2 + $0x1f8] sm:$0xff]
    %v2603 = vld [vmem:[#allocation2 + $0x200] sm:$0xff]
    %v2604 = vld [vmem:[#allocation2 + $0x208] sm:$0xff]
    %v2605 = vld [vmem:[#allocation2 + $0x210] sm:$0xff]
    %v2606 = vld [vmem:[#allocation2 + $0x218] sm:$0xf]
    %v2607 = vld [vmem:[#allocation2 + $0x21c] sm:$0xff]
    %v2608 = vld [vmem:[#allocation2 + $0x224] sm:$0xff]
    %v2609 = vld [vmem:[#allocation2 + $0x22c] sm:$0xff]
    %v2610 = vld [vmem:[#allocation2 + $0x234] sm:$0xff]
    %v2611 = vld [vmem:[#allocation2 + $0x23c] sm:$0xf]
    %v2612 = vld [vmem:[#allocation2 + $0x240] sm:$0xff]
    %v2613 = vld [vmem:[#allocation2 + $0x248] sm:$0xff]
    %v2614 = vld [vmem:[#allocation2 + $0x250] sm:$0xff]
    %v2615 = vld [vmem:[#allocation2 + $0x258] sm:$0xff]
    %v2616 = vld [vmem:[#allocation2 + $0x260] sm:$0xf]
    %v2617 = vld [vmem:[#allocation2 + $0x264] sm:$0xff]
    %v2618 = vld [vmem:[#allocation2 + $0x26c] sm:$0xff]
    %v2619 = vld [vmem:[#allocation2 + $0x274] sm:$0xff]
    %v2620 = vld [vmem:[#allocation2 + $0x27c] sm:$0xff]
    %v2621 = vld [vmem:[#allocation2 + $0x284] sm:$0xf]
    %v2622 = vld [vmem:[#allocation2 + $0x288] sm:$0xff]
    %v2623 = vld [vmem:[#allocation2 + $0x290] sm:$0xff]
    %v2624 = vld [vmem:[#allocation2 + $0x298] sm:$0xff]
    %v2625 = vld [vmem:[#allocation2 + $0x2a0] sm:$0xff]
    %v2626 = vld [vmem:[#allocation2 + $0x2a8] sm:$0xf]
    %v2627 = vld [vmem:[#allocation2 + $0x2ac] sm:$0xff]
    %v2628 = vld [vmem:[#allocation2 + $0x2b4] sm:$0xff]
    %v2629 = vld [vmem:[#allocation2 + $0x2bc] sm:$0xff]
    %v2630 = vld [vmem:[#allocation2 + $0x2c4] sm:$0xff]
    %v2631 = vld [vmem:[#allocation2 + $0x2cc] sm:$0xf]
    %v2632 = vld [vmem:[#allocation2 + $0x2d0] sm:$0xff]
    %v2633 = vld [vmem:[#allocation2 + $0x2d8] sm:$0xff]
    %v2634 = vld [vmem:[#allocation2 + $0x2e0] sm:$0xff]
    %v2635 = vld [vmem:[#allocation2 + $0x2e8] sm:$0xff]
    %v2636 = vld [vmem:[#allocation2 + $0x2f0] sm:$0xf]
    %v2637 = vld [vmem:[#allocation2 + $0x2f4] sm:$0xff]
    %v2638 = vld [vmem:[#allocation2 + $0x2fc] sm:$0xff]
    %v2639 = vld [vmem:[#allocation2 + $0x304] sm:$0xff]
    %v2640 = vld [vmem:[#allocation2 + $0x30c] sm:$0xff]
    %v2641 = vld [vmem:[#allocation2 + $0x314] sm:$0xf]
    %v2642 = vld [vmem:[#allocation2 + $0x318] sm:$0xff]
    %v2643 = vld [vmem:[#allocation2 + $0x320] sm:$0xff]
    %v2644 = vld [vmem:[#allocation2 + $0x328] sm:$0xff]
    %v2645 = vld [vmem:[#allocation2 + $0x330] sm:$0xff]
    %v2646 = vld [vmem:[#allocation2 + $0x338] sm:$0xf]
    %v2647 = vld [vmem:[#allocation2 + $0x33c] sm:$0xff]
    %v2648 = vld [vmem:[#allocation2 + $0x344] sm:$0xff]
    %v2649 = vld [vmem:[#allocation2 + $0x34c] sm:$0xff]
    %v2650 = vld [vmem:[#allocation2 + $0x354] sm:$0xff]
    %v2651 = vld [vmem:[#allocation2 + $0x35c] sm:$0xf]
    %v2652 = vld [vmem:[#allocation2 + $0x360] sm:$0xff]
    %v2653 = vld [vmem:[#allocation2 + $0x368] sm:$0xff]
    %v2654 = vld [vmem:[#allocation2 + $0x370] sm:$0xff]
    %v2655 = vld [vmem:[#allocation2 + $0x378] sm:$0xff]
    %v2656 = vld [vmem:[#allocation2 + $0x380] sm:$0xf]
    %v2657 = vld [vmem:[#allocation2 + $0x384] sm:$0xff]
    %v2658 = vld [vmem:[#allocation2 + $0x38c] sm:$0xff]
    %v2659 = vld [vmem:[#allocation2 + $0x394] sm:$0xff]
    %v2660 = vld [vmem:[#allocation2 + $0x39c] sm:$0xff]
    %v2661 = vld [vmem:[#allocation2 + $0x3a4] sm:$0xf]
    %v2662 = vld [vmem:[#allocation2 + $0x3a8] sm:$0xff]
    %v2663 = vld [vmem:[#allocation2 + $0x3b0] sm:$0xff]
    %v2664 = vld [vmem:[#allocation2 + $0x3b8] sm:$0xff]
    %v2665 = vld [vmem:[#allocation2 + $0x3c0] sm:$0xff]
    %v2666 = vld [vmem:[#allocation2 + $0x3c8] sm:$0xf]
    %v2667 = vld [vmem:[#allocation2 + $0x3cc] sm:$0xff]
    %v2668 = vld [vmem:[#allocation2 + $0x3d4] sm:$0xff]
    %v2669 = vld [vmem:[#allocation2 + $0x3dc] sm:$0xff]
    %v2670 = vld [vmem:[#allocation2 + $0x3e4] sm:$0xff]
    %v2671 = vld [vmem:[#allocation2 + $0x3ec] sm:$0xf]
    %v2672 = vld [vmem:[#allocation2 + $0x3f0] sm:$0xff]
    %v2673 = vld [vmem:[#allocation2 + $0x3f8] sm:$0xff]
    %v2674 = vld [vmem:[#allocation2 + $0x400] sm:$0xff]
    %v2675 = vld [vmem:[#allocation2 + $0x408] sm:$0xff]
    %v2676 = vld [vmem:[#allocation2 + $0x410] sm:$0xf]
    %v2677 = vld [vmem:[#allocation2 + $0x414] sm:$0xff]
    %v2678 = vld [vmem:[#allocation2 + $0x41c] sm:$0xff]
    %v2679 = vld [vmem:[#allocation2 + $0x424] sm:$0xff]
    %v2680 = vld [vmem:[#allocation2 + $0x42c] sm:$0xff]
    %v2681 = vld [vmem:[#allocation2 + $0x434] sm:$0xf]
    %v2682 = vld [vmem:[#allocation2 + $0x438] sm:$0xff]
    %v2683 = vld [vmem:[#allocation2 + $0x440] sm:$0xff]
    %v2684 = vld [vmem:[#allocation2 + $0x448] sm:$0xff]
    %v2685 = vld [vmem:[#allocation2 + $0x450] sm:$0xff]
    %v2686 = vld [vmem:[#allocation2 + $0x458] sm:$0xf]
    %v2687 = vld [vmem:[#allocation2 + $0x45c] sm:$0xff]
    %v2688 = vld [vmem:[#allocation2 + $0x464] sm:$0xff]
    %v2689 = vld [vmem:[#allocation2 + $0x46c] sm:$0xff]
    %v2690 = vld [vmem:[#allocation2 + $0x474] sm:$0xff]
    %v2691 = vld [vmem:[#allocation2 + $0x47c] sm:$0xf]
    %v2692 = vld [vmem:[%s1] sm:$0xf]
    %v2693 = vld [vmem:[%s1 + $0x4] sm:$0xf]
    %v2694 = vld [vmem:[%s1 + $0x8] sm:$0xf]
    %v2695 = vld [vmem:[%s1 + $0xc] sm:$0xf]
    %v2696 = vld [vmem:[%s1 + $0x10] sm:$0xf]
    %v2697 = vld [vmem:[%s1 + $0x14] sm:$0xf]
    %v2698 = vld [vmem:[%s1 + $0x18] sm:$0xf]
    %v2699 = vld [vmem:[%s1 + $0x1c] sm:$0xf]
    %v2700 = vld [vmem:[%s1 + $0x20] sm:$0xf]
    %v2701 = vld [vmem:[%s1 + $0x24] sm:$0xf]
    %v2702 = vld [vmem:[%s1 + $0x28] sm:$0xf]
    %v2703 = vld [vmem:[%s1 + $0x2c] sm:$0xf]
    %v2704 = vld [vmem:[%s1 + $0x30] sm:$0xf]
    %v2705 = vld [vmem:[%s1 + $0x34] sm:$0xf]
    %v2706 = vld [vmem:[%s1 + $0x38] sm:$0xf]
    %v2707 = vld [vmem:[%s1 + $0x3c] sm:$0xf]
    %v2708 = vld [vmem:[%s1 + $0x40] sm:$0xf]
    %v2709 = vld [vmem:[%s1 + $0x44] sm:$0xf]
    %v2710 = vld [vmem:[%s1 + $0x48] sm:$0xf]
    %v2711 = vld [vmem:[%s1 + $0x4c] sm:$0xf]
    %v2712 = vld [vmem:[%s1 + $0x50] sm:$0xf]
    %v2713 = vld [vmem:[%s1 + $0x54] sm:$0xf]
    %v2714 = vld [vmem:[%s1 + $0x58] sm:$0xf]
    %v2715 = vld [vmem:[%s1 + $0x5c] sm:$0xf]
    %v2716 = vld [vmem:[%s1 + $0x60] sm:$0xf]
    %v2717 = vld [vmem:[%s1 + $0x64] sm:$0xf]
    %v2718 = vld [vmem:[%s1 + $0x68] sm:$0xf]
    %v2719 = vld [vmem:[%s1 + $0x6c] sm:$0xf]
    %v2720 = vld [vmem:[%s1 + $0x70] sm:$0xf]
    %v2721 = vld [vmem:[%s1 + $0x74] sm:$0xf]
    %v2722 = vld [vmem:[%s1 + $0x78] sm:$0xf]
    %v2723 = vld [vmem:[%s1 + $0x7c] sm:$0xf]
    %v2724 = vld [vmem:[%s1 + $0x80] sm:$0xf]
    %v2725 = vld [vmem:[%s1 + $0x84] sm:$0xf]
    %v2726 = vld [vmem:[%s1 + $0x88] sm:$0xf]
    %v2727 = vld [vmem:[%s1 + $0x8c] sm:$0xf]
    %v2728 = vld [vmem:[%s1 + $0x90] sm:$0xf]
    %v2729 = vld [vmem:[%s1 + $0x94] sm:$0xf]
    %v2730 = vld [vmem:[%s1 + $0x98] sm:$0xf]
    %v2731 = vld [vmem:[%s1 + $0x9c] sm:$0xf]
    %v2732 = vld [vmem:[%s1 + $0xa0] sm:$0xf]
    %v2733 = vld [vmem:[%s1 + $0xa4] sm:$0xf]
    %v2734 = vld [vmem:[%s1 + $0xa8] sm:$0xf]
    %v2735 = vld [vmem:[%s1 + $0xac] sm:$0xf]
    %v2736 = vld [vmem:[%s1 + $0xb0] sm:$0xf]
    %v2737 = vld [vmem:[%s1 + $0xb4] sm:$0xf]
    %v2738 = vld [vmem:[%s1 + $0xb8] sm:$0xf]
    %v2739 = vld [vmem:[%s1 + $0xbc] sm:$0xf]
    %v2740 = vld [vmem:[%s1 + $0xc0] sm:$0xf]
    %v2741 = vld [vmem:[%s1 + $0xc4] sm:$0xf]
    %v2742 = vld [vmem:[%s1 + $0xc8] sm:$0xf]
    %v2743 = vld [vmem:[%s1 + $0xcc] sm:$0xf]
    %v2744 = vld [vmem:[%s1 + $0xd0] sm:$0xf]
    %v2745 = vld [vmem:[%s1 + $0xd4] sm:$0xf]
    %v2746 = vld [vmem:[%s1 + $0xd8] sm:$0xf]
    %v2747 = vld [vmem:[%s1 + $0xdc] sm:$0xf]
    %v2748 = vld [vmem:[%s1 + $0xe0] sm:$0xf]
    %v2749 = vld [vmem:[%s1 + $0xe4] sm:$0xf]
    %v2750 = vld [vmem:[%s1 + $0xe8] sm:$0xf]
    %v2751 = vld [vmem:[%s1 + $0xec] sm:$0xf]
    %v2752 = vld [vmem:[%s1 + $0xf0] sm:$0xf]
    %v2753 = vld [vmem:[%s1 + $0xf4] sm:$0xf]
    %v2754 = vld [vmem:[%s1 + $0xf8] sm:$0xf]
    %v2755 = vld [vmem:[%s1 + $0xfc] sm:$0xf]
    %v2756 = vld [vmem:[%s1 + $0x100] sm:$0xf]
    %v2757 = vld [vmem:[%s1 + $0x104] sm:$0xf]
    %v2758 = vld [vmem:[%s1 + $0x108] sm:$0xf]
    %v2759 = vld [vmem:[%s1 + $0x10c] sm:$0xf]
    %v2760 = vld [vmem:[%s1 + $0x110] sm:$0xf]
    %v2761 = vld [vmem:[%s1 + $0x114] sm:$0xf]
    %v2762 = vld [vmem:[%s1 + $0x118] sm:$0xf]
    %v2763 = vld [vmem:[%s1 + $0x11c] sm:$0xf]
    %v2764 = vld [vmem:[%s1 + $0x120] sm:$0xf]
    %v2765 = vld [vmem:[%s1 + $0x124] sm:$0xf]
    %v2766 = vld [vmem:[%s1 + $0x128] sm:$0xf]
    %v2767 = vld [vmem:[%s1 + $0x12c] sm:$0xf]
    %v2768 = vld [vmem:[%s1 + $0x130] sm:$0xf]
    %v2769 = vld [vmem:[%s1 + $0x134] sm:$0xf]
    %v2770 = vld [vmem:[%s1 + $0x138] sm:$0xf]
    %v2771 = vld [vmem:[%s1 + $0x13c] sm:$0xf]
    %v2772 = vld [vmem:[%s1 + $0x140] sm:$0xf]
    %v2773 = vld [vmem:[%s1 + $0x144] sm:$0xf]
    %v2774 = vld [vmem:[%s1 + $0x148] sm:$0xf]
    %v2775 = vld [vmem:[%s1 + $0x14c] sm:$0xf]
    %v2776 = vld [vmem:[%s1 + $0x150] sm:$0xf]
    %v2777 = vld [vmem:[%s1 + $0x154] sm:$0xf]
    %v2778 = vld [vmem:[%s1 + $0x158] sm:$0xf]
    %v2779 = vld [vmem:[%s1 + $0x15c] sm:$0xf]
    %v2780 = vld [vmem:[%s1 + $0x160] sm:$0xf]
    %v2781 = vld [vmem:[%s1 + $0x164] sm:$0xf]
    %v2782 = vld [vmem:[%s1 + $0x168] sm:$0xf]
    %v2783 = vld [vmem:[%s1 + $0x16c] sm:$0xf]
    %v2784 = vld [vmem:[%s1 + $0x170] sm:$0xf]
    %v2785 = vld [vmem:[%s1 + $0x174] sm:$0xf]
    %v2786 = vld [vmem:[%s1 + $0x178] sm:$0xf]
    %v2787 = vld [vmem:[%s1 + $0x17c] sm:$0xf]
    %v2788 = vld [vmem:[%s1 + $0x180] sm:$0xf]
    %v2789 = vld [vmem:[%s1 + $0x184] sm:$0xf]
    %v2790 = vld [vmem:[%s1 + $0x188] sm:$0xf]
    %v2791 = vld [vmem:[%s1 + $0x18c] sm:$0xf]
    %v2792 = vld [vmem:[%s1 + $0x190] sm:$0xf]
    %v2793 = vld [vmem:[%s1 + $0x194] sm:$0xf]
    %v2794 = vld [vmem:[%s1 + $0x198] sm:$0xf]
    %v2795 = vld [vmem:[%s1 + $0x19c] sm:$0xf]
    %v2796 = vld [vmem:[%s1 + $0x1a0] sm:$0xf]
    %v2797 = vld [vmem:[%s1 + $0x1a4] sm:$0xf]
    %v2798 = vld [vmem:[%s1 + $0x1a8] sm:$0xf]
    %v2799 = vld [vmem:[%s1 + $0x1ac] sm:$0xf]
    %v2800 = vld [vmem:[%s1 + $0x1b0] sm:$0xf]
    %v2801 = vld [vmem:[%s1 + $0x1b4] sm:$0xf]
    %v2802 = vld [vmem:[%s1 + $0x1b8] sm:$0xf]
    %v2803 = vld [vmem:[%s1 + $0x1bc] sm:$0xf]
    %v2804 = vld [vmem:[%s1 + $0x1c0] sm:$0xf]
    %v2805 = vld [vmem:[%s1 + $0x1c4] sm:$0xf]
    %v2806 = vld [vmem:[%s1 + $0x1c8] sm:$0xf]
    %v2807 = vld [vmem:[%s1 + $0x1cc] sm:$0xf]
    %v2808 = vld [vmem:[%s1 + $0x1d0] sm:$0xf]
    %v2809 = vld [vmem:[%s1 + $0x1d4] sm:$0xf]
    %v2810 = vld [vmem:[%s1 + $0x1d8] sm:$0xf]
    %v2811 = vld [vmem:[%s1 + $0x1dc] sm:$0xf]
    %v2812 = vld [vmem:[%s1 + $0x1e0] sm:$0xf]
    %v2813 = vld [vmem:[%s1 + $0x1e4] sm:$0xf]
    %v2814 = vld [vmem:[%s1 + $0x1e8] sm:$0xf]
    %v2815 = vld [vmem:[%s1 + $0x1ec] sm:$0xf]
    %v2816 = vld [vmem:[%s1 + $0x1f0] sm:$0xf]
    %v2817 = vld [vmem:[%s1 + $0x1f4] sm:$0xf]
    %v2818 = vld [vmem:[%s1 + $0x1f8] sm:$0xf]
    %v2819 = vld [vmem:[%s1 + $0x1fc] sm:$0xf]
    %v2820 = vld [vmem:[%s1 + $0x200] sm:$0xf]
    %v2821 = vld [vmem:[%s1 + $0x204] sm:$0xf]
    %v2822 = vld [vmem:[%s1 + $0x208] sm:$0xf]
    %v2823 = vld [vmem:[%s1 + $0x20c] sm:$0xf]
    %v2824 = vld [vmem:[%s1 + $0x210] sm:$0xf]
    %v2825 = vld [vmem:[%s1 + $0x214] sm:$0xf]
    %v2826 = vld [vmem:[%s1 + $0x218] sm:$0xf]
    %v2827 = vld [vmem:[%s1 + $0x21c] sm:$0xf]
    %v2828 = vld [vmem:[%s1 + $0x220] sm:$0xf]
    %v2829 = vld [vmem:[%s1 + $0x224] sm:$0xf]
    %v2830 = vld [vmem:[%s1 + $0x228] sm:$0xf]
    %v2831 = vld [vmem:[%s1 + $0x22c] sm:$0xf]
    %v2832 = vld [vmem:[%s1 + $0x230] sm:$0xf]
    %v2833 = vld [vmem:[%s1 + $0x234] sm:$0xf]
    %v2834 = vld [vmem:[%s1 + $0x238] sm:$0xf]
    %v2835 = vld [vmem:[%s1 + $0x23c] sm:$0xf]
    %v2996 = vunpack.c.l.b16 %v2532
    %v2997 = vunpack.c.h.b16 %v2532
    %v2998 = vunpack.c.l.b16 %v2533
    %v2999 = vunpack.c.h.b16 %v2533
    %v3000 = vunpack.c.l.b16 %v2534
    %v3001 = vunpack.c.h.b16 %v2534
    %v3002 = vunpack.c.l.b16 %v2535
    %v3003 = vunpack.c.h.b16 %v2535
    %v3004 = vunpack.c.l.b16 %v2536
    %v3005 = vunpack.c.l.b16 %v2537
    %v3006 = vunpack.c.h.b16 %v2537
    %v3007 = vunpack.c.l.b16 %v2538
    %v3008 = vunpack.c.h.b16 %v2538
    %v3009 = vunpack.c.l.b16 %v2539
    %v3010 = vunpack.c.h.b16 %v2539
    %v3011 = vunpack.c.l.b16 %v2540
    %v3012 = vunpack.c.h.b16 %v2540
    %v3013 = vunpack.c.l.b16 %v2541
    %v3014 = vunpack.c.l.b16 %v2542
    %v3015 = vunpack.c.h.b16 %v2542
    %v3016 = vunpack.c.l.b16 %v2543
    %v3017 = vunpack.c.h.b16 %v2543
    %v3018 = vunpack.c.l.b16 %v2544
    %v3019 = vunpack.c.h.b16 %v2544
    %v3020 = vunpack.c.l.b16 %v2545
    %v3021 = vunpack.c.h.b16 %v2545
    %v3022 = vunpack.c.l.b16 %v2546
    %v3023 = vunpack.c.l.b16 %v2547
    %v3024 = vunpack.c.h.b16 %v2547
    %v3025 = vunpack.c.l.b16 %v2548
    %v3026 = vunpack.c.h.b16 %v2548
    %v3027 = vunpack.c.l.b16 %v2549
    %v3028 = vunpack.c.h.b16 %v2549
    %v3029 = vunpack.c.l.b16 %v2550
    %v3030 = vunpack.c.h.b16 %v2550
    %v3031 = vunpack.c.l.b16 %v2551
    %v3032 = vunpack.c.l.b16 %v2552
    %v3033 = vunpack.c.h.b16 %v2552
    %v3034 = vunpack.c.l.b16 %v2553
    %v3035 = vunpack.c.h.b16 %v2553
    %v3036 = vunpack.c.l.b16 %v2554
    %v3037 = vunpack.c.h.b16 %v2554
    %v3038 = vunpack.c.l.b16 %v2555
    %v3039 = vunpack.c.h.b16 %v2555
    %v3040 = vunpack.c.l.b16 %v2556
    %v3041 = vunpack.c.l.b16 %v2557
    %v3042 = vunpack.c.h.b16 %v2557
    %v3043 = vunpack.c.l.b16 %v2558
    %v3044 = vunpack.c.h.b16 %v2558
    %v3045 = vunpack.c.l.b16 %v2559
    %v3046 = vunpack.c.h.b16 %v2559
    %v3047 = vunpack.c.l.b16 %v2560
    %v3048 = vunpack.c.h.b16 %v2560
    %v3049 = vunpack.c.l.b16 %v2561
    %v3050 = vunpack.c.l.b16 %v2562
    %v3051 = vunpack.c.h.b16 %v2562
    %v3052 = vunpack.c.l.b16 %v2563
    %v3053 = vunpack.c.h.b16 %v2563
    %v3054 = vunpack.c.l.b16 %v2564
    %v3055 = vunpack.c.h.b16 %v2564
    %v3056 = vunpack.c.l.b16 %v2565
    %v3057 = vunpack.c.h.b16 %v2565
    %v3058 = vunpack.c.l.b16 %v2566
    %v3059 = vunpack.c.l.b16 %v2567
    %v3060 = vunpack.c.h.b16 %v2567
    %v3061 = vunpack.c.l.b16 %v2568
    %v3062 = vunpack.c.h.b16 %v2568
    %v3063 = vunpack.c.l.b16 %v2569
    %v3064 = vunpack.c.h.b16 %v2569
    %v3065 = vunpack.c.l.b16 %v2570
    %v3066 = vunpack.c.h.b16 %v2570
    %v3067 = vunpack.c.l.b16 %v2571
    %v3068 = vunpack.c.l.b16 %v2572
    %v3069 = vunpack.c.h.b16 %v2572
    %v3070 = vunpack.c.l.b16 %v2573
    %v3071 = vunpack.c.h.b16 %v2573
    %v3072 = vunpack.c.l.b16 %v2574
    %v3073 = vunpack.c.h.b16 %v2574
    %v3074 = vunpack.c.l.b16 %v2575
    %v3075 = vunpack.c.h.b16 %v2575
    %v3076 = vunpack.c.l.b16 %v2576
    %v3077 = vunpack.c.l.b16 %v2577
    %v3078 = vunpack.c.h.b16 %v2577
    %v3079 = vunpack.c.l.b16 %v2578
    %v3080 = vunpack.c.h.b16 %v2578
    %v3081 = vunpack.c.l.b16 %v2579
    %v3082 = vunpack.c.h.b16 %v2579
    %v3083 = vunpack.c.l.b16 %v2580
    %v3084 = vunpack.c.h.b16 %v2580
    %v3085 = vunpack.c.l.b16 %v2581
    %v3086 = vunpack.c.l.b16 %v2582
    %v3087 = vunpack.c.h.b16 %v2582
    %v3088 = vunpack.c.l.b16 %v2583
    %v3089 = vunpack.c.h.b16 %v2583
    %v3090 = vunpack.c.l.b16 %v2584
    %v3091 = vunpack.c.h.b16 %v2584
    %v3092 = vunpack.c.l.b16 %v2585
    %v3093 = vunpack.c.h.b16 %v2585
    %v3094 = vunpack.c.l.b16 %v2586
    %v3095 = vunpack.c.l.b16 %v2587
    %v3096 = vunpack.c.h.b16 %v2587
    %v3097 = vunpack.c.l.b16 %v2588
    %v3098 = vunpack.c.h.b16 %v2588
    %v3099 = vunpack.c.l.b16 %v2589
    %v3100 = vunpack.c.h.b16 %v2589
    %v3101 = vunpack.c.l.b16 %v2590
    %v3102 = vunpack.c.h.b16 %v2590
    %v3103 = vunpack.c.l.b16 %v2591
    %v3104 = vunpack.c.l.b16 %v2592
    %v3105 = vunpack.c.h.b16 %v2592
    %v3106 = vunpack.c.l.b16 %v2593
    %v3107 = vunpack.c.h.b16 %v2593
    %v3108 = vunpack.c.l.b16 %v2594
    %v3109 = vunpack.c.h.b16 %v2594
    %v3110 = vunpack.c.l.b16 %v2595
    %v3111 = vunpack.c.h.b16 %v2595
    %v3112 = vunpack.c.l.b16 %v2596
    %v3113 = vunpack.c.l.b16 %v2597
    %v3114 = vunpack.c.h.b16 %v2597
    %v3115 = vunpack.c.l.b16 %v2598
    %v3116 = vunpack.c.h.b16 %v2598
    %v3117 = vunpack.c.l.b16 %v2599
    %v3118 = vunpack.c.h.b16 %v2599
    %v3119 = vunpack.c.l.b16 %v2600
    %v3120 = vunpack.c.h.b16 %v2600
    %v3121 = vunpack.c.l.b16 %v2601
    %v3122 = vunpack.c.l.b16 %v2602
    %v3123 = vunpack.c.h.b16 %v2602
    %v3124 = vunpack.c.l.b16 %v2603
    %v3125 = vunpack.c.h.b16 %v2603
    %v3126 = vunpack.c.l.b16 %v2604
    %v3127 = vunpack.c.h.b16 %v2604
    %v3128 = vunpack.c.l.b16 %v2605
    %v3129 = vunpack.c.h.b16 %v2605
    %v3130 = vunpack.c.l.b16 %v2606
    %v3131 = vunpack.c.l.b16 %v2607
    %v3132 = vunpack.c.h.b16 %v2607
    %v3133 = vunpack.c.l.b16 %v2608
    %v3134 = vunpack.c.h.b16 %v2608
    %v3135 = vunpack.c.l.b16 %v2609
    %v3136 = vunpack.c.h.b16 %v2609
    %v3137 = vunpack.c.l.b16 %v2610
    %v3138 = vunpack.c.h.b16 %v2610
    %v3139 = vunpack.c.l.b16 %v2611
    %v3140 = vunpack.c.l.b16 %v2612
    %v3141 = vunpack.c.h.b16 %v2612
    %v3142 = vunpack.c.l.b16 %v2613
    %v3143 = vunpack.c.h.b16 %v2613
    %v3144 = vunpack.c.l.b16 %v2614
    %v3145 = vunpack.c.h.b16 %v2614
    %v3146 = vunpack.c.l.b16 %v2615
    %v3147 = vunpack.c.h.b16 %v2615
    %v3148 = vunpack.c.l.b16 %v2616
    %v3149 = vunpack.c.l.b16 %v2617
    %v3150 = vunpack.c.h.b16 %v2617
    %v3151 = vunpack.c.l.b16 %v2618
    %v3152 = vunpack.c.h.b16 %v2618
    %v3153 = vunpack.c.l.b16 %v2619
    %v3154 = vunpack.c.h.b16 %v2619
    %v3155 = vunpack.c.l.b16 %v2620
    %v3156 = vunpack.c.h.b16 %v2620
    %v3157 = vunpack.c.l.b16 %v2621
    %v3158 = vunpack.c.l.b16 %v2622
    %v3159 = vunpack.c.h.b16 %v2622
    %v3160 = vunpack.c.l.b16 %v2623
    %v3161 = vunpack.c.h.b16 %v2623
    %v3162 = vunpack.c.l.b16 %v2624
    %v3163 = vunpack.c.h.b16 %v2624
    %v3164 = vunpack.c.l.b16 %v2625
    %v3165 = vunpack.c.h.b16 %v2625
    %v3166 = vunpack.c.l.b16 %v2626
    %v3167 = vunpack.c.l.b16 %v2627
    %v3168 = vunpack.c.h.b16 %v2627
    %v3169 = vunpack.c.l.b16 %v2628
    %v3170 = vunpack.c.h.b16 %v2628
    %v3171 = vunpack.c.l.b16 %v2629
    %v3172 = vunpack.c.h.b16 %v2629
    %v3173 = vunpack.c.l.b16 %v2630
    %v3174 = vunpack.c.h.b16 %v2630
    %v3175 = vunpack.c.l.b16 %v2631
    %v3176 = vunpack.c.l.b16 %v2632
    %v3177 = vunpack.c.h.b16 %v2632
    %v3178 = vunpack.c.l.b16 %v2633
    %v3179 = vunpack.c.h.b16 %v2633
    %v3180 = vunpack.c.l.b16 %v2634
    %v3181 = vunpack.c.h.b16 %v2634
    %v3182 = vunpack.c.l.b16 %v2635
    %v3183 = vunpack.c.h.b16 %v2635
    %v3184 = vunpack.c.l.b16 %v2636
    %v3185 = vunpack.c.l.b16 %v2637
    %v3186 = vunpack.c.h.b16 %v2637
    %v3187 = vunpack.c.l.b16 %v2638
    %v3188 = vunpack.c.h.b16 %v2638
    %v3189 = vunpack.c.l.b16 %v2639
    %v3190 = vunpack.c.h.b16 %v2639
    %v3191 = vunpack.c.l.b16 %v2640
    %v3192 = vunpack.c.h.b16 %v2640
    %v3193 = vunpack.c.l.b16 %v2641
    %v3194 = vunpack.c.l.b16 %v2642
    %v3195 = vunpack.c.h.b16 %v2642
    %v3196 = vunpack.c.l.b16 %v2643
    %v3197 = vunpack.c.h.b16 %v2643
    %v3198 = vunpack.c.l.b16 %v2644
    %v3199 = vunpack.c.h.b16 %v2644
    %v3200 = vunpack.c.l.b16 %v2645
    %v3201 = vunpack.c.h.b16 %v2645
    %v3202 = vunpack.c.l.b16 %v2646
    %v3203 = vunpack.c.l.b16 %v2647
    %v3204 = vunpack.c.h.b16 %v2647
    %v3205 = vunpack.c.l.b16 %v2648
    %v3206 = vunpack.c.h.b16 %v2648
    %v3207 = vunpack.c.l.b16 %v2649
    %v3208 = vunpack.c.h.b16 %v2649
    %v3209 = vunpack.c.l.b16 %v2650
    %v3210 = vunpack.c.h.b16 %v2650
    %v3211 = vunpack.c.l.b16 %v2651
    %v3212 = vunpack.c.l.b16 %v2652
    %v3213 = vunpack.c.h.b16 %v2652
    %v3214 = vunpack.c.l.b16 %v2653
    %v3215 = vunpack.c.h.b16 %v2653
    %v3216 = vunpack.c.l.b16 %v2654
    %v3217 = vunpack.c.h.b16 %v2654
    %v3218 = vunpack.c.l.b16 %v2655
    %v3219 = vunpack.c.h.b16 %v2655
    %v3220 = vunpack.c.l.b16 %v2656
    %v3221 = vunpack.c.l.b16 %v2657
    %v3222 = vunpack.c.h.b16 %v2657
    %v3223 = vunpack.c.l.b16 %v2658
    %v3224 = vunpack.c.h.b16 %v2658
    %v3225 = vunpack.c.l.b16 %v2659
    %v3226 = vunpack.c.h.b16 %v2659
    %v3227 = vunpack.c.l.b16 %v2660
    %v3228 = vunpack.c.h.b16 %v2660
    %v3229 = vunpack.c.l.b16 %v2661
    %v3230 = vunpack.c.l.b16 %v2662
    %v3231 = vunpack.c.h.b16 %v2662
    %v3232 = vunpack.c.l.b16 %v2663
    %v3233 = vunpack.c.h.b16 %v2663
    %v3234 = vunpack.c.l.b16 %v2664
    %v3235 = vunpack.c.h.b16 %v2664
    %v3236 = vunpack.c.l.b16 %v2665
    %v3237 = vunpack.c.h.b16 %v2665
    %v3238 = vunpack.c.l.b16 %v2666
    %v3239 = vunpack.c.l.b16 %v2667
    %v3240 = vunpack.c.h.b16 %v2667
    %v3241 = vunpack.c.l.b16 %v2668
    %v3242 = vunpack.c.h.b16 %v2668
    %v3243 = vunpack.c.l.b16 %v2669
    %v3244 = vunpack.c.h.b16 %v2669
    %v3245 = vunpack.c.l.b16 %v2670
    %v3246 = vunpack.c.h.b16 %v2670
    %v3247 = vunpack.c.l.b16 %v2671
    %v3248 = vunpack.c.l.b16 %v2672
    %v3249 = vunpack.c.h.b16 %v2672
    %v3250 = vunpack.c.l.b16 %v2673
    %v3251 = vunpack.c.h.b16 %v2673
    %v3252 = vunpack.c.l.b16 %v2674
    %v3253 = vunpack.c.h.b16 %v2674
    %v3254 = vunpack.c.l.b16 %v2675
    %v3255 = vunpack.c.h.b16 %v2675
    %v3256 = vunpack.c.l.b16 %v2676
    %v3257 = vunpack.c.l.b16 %v2677
    %v3258 = vunpack.c.h.b16 %v2677
    %v3259 = vunpack.c.l.b16 %v2678
    %v3260 = vunpack.c.h.b16 %v2678
    %v3261 = vunpack.c.l.b16 %v2679
    %v3262 = vunpack.c.h.b16 %v2679
    %v3263 = vunpack.c.l.b16 %v2680
    %v3264 = vunpack.c.h.b16 %v2680
    %v3265 = vunpack.c.l.b16 %v2681
    %v3266 = vunpack.c.l.b16 %v2682
    %v3267 = vunpack.c.h.b16 %v2682
    %v3268 = vunpack.c.l.b16 %v2683
    %v3269 = vunpack.c.h.b16 %v2683
    %v3270 = vunpack.c.l.b16 %v2684
    %v3271 = vunpack.c.h.b16 %v2684
    %v3272 = vunpack.c.l.b16 %v2685
    %v3273 = vunpack.c.h.b16 %v2685
    %v3274 = vunpack.c.l.b16 %v2686
    %v3275 = vunpack.c.l.b16 %v2687
    %v3276 = vunpack.c.h.b16 %v2687
    %v3277 = vunpack.c.l.b16 %v2688
    %v3278 = vunpack.c.h.b16 %v2688
    %v3279 = vunpack.c.l.b16 %v2689
    %v3280 = vunpack.c.h.b16 %v2689
    %v3281 = vunpack.c.l.b16 %v2690
    %v3282 = vunpack.c.h.b16 %v2690
    %v3283 = vunpack.c.l.b16 %v2691
    %v3284 = vpack.c.b16 %v3005, %v2996
    %v3285 = vpack.c.b16 %v3006, %v2997
    %v3286 = vpack.c.b16 %v3007, %v2998
    %v3287 = vpack.c.b16 %v3008, %v2999
    %v3288 = vpack.c.b16 %v3009, %v3000
    %v3289 = vpack.c.b16 %v3010, %v3001
    %v3290 = vpack.c.b16 %v3011, %v3002
    %v3291 = vpack.c.b16 %v3012, %v3003
    %v3292 = vpack.c.b16 %v3013, %v3004
    %v3293 = vpack.c.b16 %v3023, %v3014
    %v3294 = vpack.c.b16 %v3024, %v3015
    %v3295 = vpack.c.b16 %v3025, %v3016
    %v3296 = vpack.c.b16 %v3026, %v3017
    %v3297 = vpack.c.b16 %v3027, %v3018
    %v3298 = vpack.c.b16 %v3028, %v3019
    %v3299 = vpack.c.b16 %v3029, %v3020
    %v3300 = vpack.c.b16 %v3030, %v3021
    %v3301 = vpack.c.b16 %v3031, %v3022
    %v3302 = vpack.c.b16 %v3041, %v3032
    %v3303 = vpack.c.b16 %v3042, %v3033
    %v3304 = vpack.c.b16 %v3043, %v3034
    %v3305 = vpack.c.b16 %v3044, %v3035
    %v3306 = vpack.c.b16 %v3045, %v3036
    %v3307 = vpack.c.b16 %v3046, %v3037
    %v3308 = vpack.c.b16 %v3047, %v3038
    %v3309 = vpack.c.b16 %v3048, %v3039
    %v3310 = vpack.c.b16 %v3049, %v3040
    %v3311 = vpack.c.b16 %v3059, %v3050
    %v3312 = vpack.c.b16 %v3060, %v3051
    %v3313 = vpack.c.b16 %v3061, %v3052
    %v3314 = vpack.c.b16 %v3062, %v3053
    %v3315 = vpack.c.b16 %v3063, %v3054
    %v3316 = vpack.c.b16 %v3064, %v3055
    %v3317 = vpack.c.b16 %v3065, %v3056
    %v3318 = vpack.c.b16 %v3066, %v3057
    %v3319 = vpack.c.b16 %v3067, %v3058
    %v3320 = vpack.c.b16 %v3077, %v3068
    %v3321 = vpack.c.b16 %v3078, %v3069
    %v3322 = vpack.c.b16 %v3079, %v3070
    %v3323 = vpack.c.b16 %v3080, %v3071
    %v3324 = vpack.c.b16 %v3081, %v3072
    %v3325 = vpack.c.b16 %v3082, %v3073
    %v3326 = vpack.c.b16 %v3083, %v3074
    %v3327 = vpack.c.b16 %v3084, %v3075
    %v3328 = vpack.c.b16 %v3085, %v3076
    %v3329 = vpack.c.b16 %v3095, %v3086
    %v3330 = vpack.c.b16 %v3096, %v3087
    %v3331 = vpack.c.b16 %v3097, %v3088
    %v3332 = vpack.c.b16 %v3098, %v3089
    %v3333 = vpack.c.b16 %v3099, %v3090
    %v3334 = vpack.c.b16 %v3100, %v3091
    %v3335 = vpack.c.b16 %v3101, %v3092
    %v3336 = vpack.c.b16 %v3102, %v3093
    %v3337 = vpack.c.b16 %v3103, %v3094
    %v3338 = vpack.c.b16 %v3113, %v3104
    %v3339 = vpack.c.b16 %v3114, %v3105
    %v3340 = vpack.c.b16 %v3115, %v3106
    %v3341 = vpack.c.b16 %v3116, %v3107
    %v3342 = vpack.c.b16 %v3117, %v3108
    %v3343 = vpack.c.b16 %v3118, %v3109
    %v3344 = vpack.c.b16 %v3119, %v3110
    %v3345 = vpack.c.b16 %v3120, %v3111
    %v3346 = vpack.c.b16 %v3121, %v3112
    %v3347 = vpack.c.b16 %v3131, %v3122
    %v3348 = vpack.c.b16 %v3132, %v3123
    %v3349 = vpack.c.b16 %v3133, %v3124
    %v3350 = vpack.c.b16 %v3134, %v3125
    %v3351 = vpack.c.b16 %v3135, %v3126
    %v3352 = vpack.c.b16 %v3136, %v3127
    %v3353 = vpack.c.b16 %v3137, %v3128
    %v3354 = vpack.c.b16 %v3138, %v3129
    %v3355 = vpack.c.b16 %v3139, %v3130
    %v3356 = vpack.c.b16 %v3149, %v3140
    %v3357 = vpack.c.b16 %v3150, %v3141
    %v3358 = vpack.c.b16 %v3151, %v3142
    %v3359 = vpack.c.b16 %v3152, %v3143
    %v3360 = vpack.c.b16 %v3153, %v3144
    %v3361 = vpack.c.b16 %v3154, %v3145
    %v3362 = vpack.c.b16 %v3155, %v3146
    %v3363 = vpack.c.b16 %v3156, %v3147
    %v3364 = vpack.c.b16 %v3157, %v3148
    %v3365 = vpack.c.b16 %v3167, %v3158
    %v3366 = vpack.c.b16 %v3168, %v3159
    %v3367 = vpack.c.b16 %v3169, %v3160
    %v3368 = vpack.c.b16 %v3170, %v3161
    %v3369 = vpack.c.b16 %v3171, %v3162
    %v3370 = vpack.c.b16 %v3172, %v3163
    %v3371 = vpack.c.b16 %v3173, %v3164
    %v3372 = vpack.c.b16 %v3174, %v3165
    %v3373 = vpack.c.b16 %v3175, %v3166
    %v3374 = vpack.c.b16 %v3185, %v3176
    %v3375 = vpack.c.b16 %v3186, %v3177
    %v3376 = vpack.c.b16 %v3187, %v3178
    %v3377 = vpack.c.b16 %v3188, %v3179
    %v3378 = vpack.c.b16 %v3189, %v3180
    %v3379 = vpack.c.b16 %v3190, %v3181
    %v3380 = vpack.c.b16 %v3191, %v3182
    %v3381 = vpack.c.b16 %v3192, %v3183
    %v3382 = vpack.c.b16 %v3193, %v3184
    %v3383 = vpack.c.b16 %v3203, %v3194
    %v3384 = vpack.c.b16 %v3204, %v3195
    %v3385 = vpack.c.b16 %v3205, %v3196
    %v3386 = vpack.c.b16 %v3206, %v3197
    %v3387 = vpack.c.b16 %v3207, %v3198
    %v3388 = vpack.c.b16 %v3208, %v3199
    %v3389 = vpack.c.b16 %v3209, %v3200
    %v3390 = vpack.c.b16 %v3210, %v3201
    %v3391 = vpack.c.b16 %v3211, %v3202
    %v3392 = vpack.c.b16 %v3221, %v3212
    %v3393 = vpack.c.b16 %v3222, %v3213
    %v3394 = vpack.c.b16 %v3223, %v3214
    %v3395 = vpack.c.b16 %v3224, %v3215
    %v3396 = vpack.c.b16 %v3225, %v3216
    %v3397 = vpack.c.b16 %v3226, %v3217
    %v3398 = vpack.c.b16 %v3227, %v3218
    %v3399 = vpack.c.b16 %v3228, %v3219
    %v3400 = vpack.c.b16 %v3229, %v3220
    %v3401 = vpack.c.b16 %v3239, %v3230
    %v3402 = vpack.c.b16 %v3240, %v3231
    %v3403 = vpack.c.b16 %v3241, %v3232
    %v3404 = vpack.c.b16 %v3242, %v3233
    %v3405 = vpack.c.b16 %v3243, %v3234
    %v3406 = vpack.c.b16 %v3244, %v3235
    %v3407 = vpack.c.b16 %v3245, %v3236
    %v3408 = vpack.c.b16 %v3246, %v3237
    %v3409 = vpack.c.b16 %v3247, %v3238
    %v3410 = vpack.c.b16 %v3257, %v3248
    %v3411 = vpack.c.b16 %v3258, %v3249
    %v3412 = vpack.c.b16 %v3259, %v3250
    %v3413 = vpack.c.b16 %v3260, %v3251
    %v3414 = vpack.c.b16 %v3261, %v3252
    %v3415 = vpack.c.b16 %v3262, %v3253
    %v3416 = vpack.c.b16 %v3263, %v3254
    %v3417 = vpack.c.b16 %v3264, %v3255
    %v3418 = vpack.c.b16 %v3265, %v3256
    %v3419 = vpack.c.b16 %v3275, %v3266
    %v3420 = vpack.c.b16 %v3276, %v3267
    %v3421 = vpack.c.b16 %v3277, %v3268
    %v3422 = vpack.c.b16 %v3278, %v3269
    %v3423 = vpack.c.b16 %v3279, %v3270
    %v3424 = vpack.c.b16 %v3280, %v3271
    %v3425 = vpack.c.b16 %v3281, %v3272
    %v3426 = vpack.c.b16 %v3282, %v3273
    %v3427 = vpack.c.b16 %v3283, %v3274
    %v3716 = vunpack.c.l.b16 %v2692
    %v3717 = vunpack.c.l.b16 %v2693
    %v3718 = vunpack.c.l.b16 %v2694
    %v3719 = vunpack.c.l.b16 %v2695
    %v3720 = vunpack.c.l.b16 %v2696
    %v3721 = vunpack.c.l.b16 %v2697
    %v3722 = vunpack.c.l.b16 %v2698
    %v3723 = vunpack.c.l.b16 %v2699
    %v3724 = vunpack.c.l.b16 %v2700
    %v3725 = vunpack.c.l.b16 %v2701
    %v3726 = vunpack.c.l.b16 %v2702
    %v3727 = vunpack.c.l.b16 %v2703
    %v3728 = vunpack.c.l.b16 %v2704
    %v3729 = vunpack.c.l.b16 %v2705
    %v3730 = vunpack.c.l.b16 %v2706
    %v3731 = vunpack.c.l.b16 %v2707
    %v3732 = vunpack.c.l.b16 %v2708
    %v3733 = vunpack.c.l.b16 %v2709
    %v3734 = vunpack.c.l.b16 %v2710
    %v3735 = vunpack.c.l.b16 %v2711
    %v3736 = vunpack.c.l.b16 %v2712
    %v3737 = vunpack.c.l.b16 %v2713
    %v3738 = vunpack.c.l.b16 %v2714
    %v3739 = vunpack.c.l.b16 %v2715
    %v3740 = vunpack.c.l.b16 %v2716
    %v3741 = vunpack.c.l.b16 %v2717
    %v3742 = vunpack.c.l.b16 %v2718
    %v3743 = vunpack.c.l.b16 %v2719
    %v3744 = vunpack.c.l.b16 %v2720
    %v3745 = vunpack.c.l.b16 %v2721
    %v3746 = vunpack.c.l.b16 %v2722
    %v3747 = vunpack.c.l.b16 %v2723
    %v3748 = vunpack.c.l.b16 %v2724
    %v3749 = vunpack.c.l.b16 %v2725
    %v3750 = vunpack.c.l.b16 %v2726
    %v3751 = vunpack.c.l.b16 %v2727
    %v3752 = vunpack.c.l.b16 %v2728
    %v3753 = vunpack.c.l.b16 %v2729
    %v3754 = vunpack.c.l.b16 %v2730
    %v3755 = vunpack.c.l.b16 %v2731
    %v3756 = vunpack.c.l.b16 %v2732
    %v3757 = vunpack.c.l.b16 %v2733
    %v3758 = vunpack.c.l.b16 %v2734
    %v3759 = vunpack.c.l.b16 %v2735
    %v3760 = vunpack.c.l.b16 %v2736
    %v3761 = vunpack.c.l.b16 %v2737
    %v3762 = vunpack.c.l.b16 %v2738
    %v3763 = vunpack.c.l.b16 %v2739
    %v3764 = vunpack.c.l.b16 %v2740
    %v3765 = vunpack.c.l.b16 %v2741
    %v3766 = vunpack.c.l.b16 %v2742
    %v3767 = vunpack.c.l.b16 %v2743
    %v3768 = vunpack.c.l.b16 %v2744
    %v3769 = vunpack.c.l.b16 %v2745
    %v3770 = vunpack.c.l.b16 %v2746
    %v3771 = vunpack.c.l.b16 %v2747
    %v3772 = vunpack.c.l.b16 %v2748
    %v3773 = vunpack.c.l.b16 %v2749
    %v3774 = vunpack.c.l.b16 %v2750
    %v3775 = vunpack.c.l.b16 %v2751
    %v3776 = vunpack.c.l.b16 %v2752
    %v3777 = vunpack.c.l.b16 %v2753
    %v3778 = vunpack.c.l.b16 %v2754
    %v3779 = vunpack.c.l.b16 %v2755
    %v3780 = vunpack.c.l.b16 %v2756
    %v3781 = vunpack.c.l.b16 %v2757
    %v3782 = vunpack.c.l.b16 %v2758
    %v3783 = vunpack.c.l.b16 %v2759
    %v3784 = vunpack.c.l.b16 %v2760
    %v3785 = vunpack.c.l.b16 %v2761
    %v3786 = vunpack.c.l.b16 %v2762
    %v3787 = vunpack.c.l.b16 %v2763
    %v3788 = vunpack.c.l.b16 %v2764
    %v3789 = vunpack.c.l.b16 %v2765
    %v3790 = vunpack.c.l.b16 %v2766
    %v3791 = vunpack.c.l.b16 %v2767
    %v3792 = vunpack.c.l.b16 %v2768
    %v3793 = vunpack.c.l.b16 %v2769
    %v3794 = vunpack.c.l.b16 %v2770
    %v3795 = vunpack.c.l.b16 %v2771
    %v3796 = vunpack.c.l.b16 %v2772
    %v3797 = vunpack.c.l.b16 %v2773
    %v3798 = vunpack.c.l.b16 %v2774
    %v3799 = vunpack.c.l.b16 %v2775
    %v3800 = vunpack.c.l.b16 %v2776
    %v3801 = vunpack.c.l.b16 %v2777
    %v3802 = vunpack.c.l.b16 %v2778
    %v3803 = vunpack.c.l.b16 %v2779
    %v3804 = vunpack.c.l.b16 %v2780
    %v3805 = vunpack.c.l.b16 %v2781
    %v3806 = vunpack.c.l.b16 %v2782
    %v3807 = vunpack.c.l.b16 %v2783
    %v3808 = vunpack.c.l.b16 %v2784
    %v3809 = vunpack.c.l.b16 %v2785
    %v3810 = vunpack.c.l.b16 %v2786
    %v3811 = vunpack.c.l.b16 %v2787
    %v3812 = vunpack.c.l.b16 %v2788
    %v3813 = vunpack.c.l.b16 %v2789
    %v3814 = vunpack.c.l.b16 %v2790
    %v3815 = vunpack.c.l.b16 %v2791
    %v3816 = vunpack.c.l.b16 %v2792
    %v3817 = vunpack.c.l.b16 %v2793
    %v3818 = vunpack.c.l.b16 %v2794
    %v3819 = vunpack.c.l.b16 %v2795
    %v3820 = vunpack.c.l.b16 %v2796
    %v3821 = vunpack.c.l.b16 %v2797
    %v3822 = vunpack.c.l.b16 %v2798
    %v3823 = vunpack.c.l.b16 %v2799
    %v3824 = vunpack.c.l.b16 %v2800
    %v3825 = vunpack.c.l.b16 %v2801
    %v3826 = vunpack.c.l.b16 %v2802
    %v3827 = vunpack.c.l.b16 %v2803
    %v3828 = vunpack.c.l.b16 %v2804
    %v3829 = vunpack.c.l.b16 %v2805
    %v3830 = vunpack.c.l.b16 %v2806
    %v3831 = vunpack.c.l.b16 %v2807
    %v3832 = vunpack.c.l.b16 %v2808
    %v3833 = vunpack.c.l.b16 %v2809
    %v3834 = vunpack.c.l.b16 %v2810
    %v3835 = vunpack.c.l.b16 %v2811
    %v3836 = vunpack.c.l.b16 %v2812
    %v3837 = vunpack.c.l.b16 %v2813
    %v3838 = vunpack.c.l.b16 %v2814
    %v3839 = vunpack.c.l.b16 %v2815
    %v3840 = vunpack.c.l.b16 %v2816
    %v3841 = vunpack.c.l.b16 %v2817
    %v3842 = vunpack.c.l.b16 %v2818
    %v3843 = vunpack.c.l.b16 %v2819
    %v3844 = vunpack.c.l.b16 %v2820
    %v3845 = vunpack.c.l.b16 %v2821
    %v3846 = vunpack.c.l.b16 %v2822
    %v3847 = vunpack.c.l.b16 %v2823
    %v3848 = vunpack.c.l.b16 %v2824
    %v3849 = vunpack.c.l.b16 %v2825
    %v3850 = vunpack.c.l.b16 %v2826
    %v3851 = vunpack.c.l.b16 %v2827
    %v3852 = vunpack.c.l.b16 %v2828
    %v3853 = vunpack.c.l.b16 %v2829
    %v3854 = vunpack.c.l.b16 %v2830
    %v3855 = vunpack.c.l.b16 %v2831
    %v3856 = vunpack.c.l.b16 %v2832
    %v3857 = vunpack.c.l.b16 %v2833
    %v3858 = vunpack.c.l.b16 %v2834
    %v3859 = vunpack.c.l.b16 %v2835
    %v3860 = vpack.c.b16 %v3717, %v3716
    %v3861 = vpack.c.b16 %v3719, %v3718
    %v3862 = vpack.c.b16 %v3721, %v3720
    %v3863 = vpack.c.b16 %v3723, %v3722
    %v3864 = vpack.c.b16 %v3725, %v3724
    %v3865 = vpack.c.b16 %v3727, %v3726
    %v3866 = vpack.c.b16 %v3729, %v3728
    %v3867 = vpack.c.b16 %v3731, %v3730
    %v3868 = vpack.c.b16 %v3733, %v3732
    %v3869 = vpack.c.b16 %v3735, %v3734
    %v3870 = vpack.c.b16 %v3737, %v3736
    %v3871 = vpack.c.b16 %v3739, %v3738
    %v3872 = vpack.c.b16 %v3741, %v3740
    %v3873 = vpack.c.b16 %v3743, %v3742
    %v3874 = vpack.c.b16 %v3745, %v3744
    %v3875 = vpack.c.b16 %v3747, %v3746
    %v3876 = vpack.c.b16 %v3749, %v3748
    %v3877 = vpack.c.b16 %v3751, %v3750
    %v3878 = vpack.c.b16 %v3753, %v3752
    %v3879 = vpack.c.b16 %v3755, %v3754
    %v3880 = vpack.c.b16 %v3757, %v3756
    %v3881 = vpack.c.b16 %v3759, %v3758
    %v3882 = vpack.c.b16 %v3761, %v3760
    %v3883 = vpack.c.b16 %v3763, %v3762
    %v3884 = vpack.c.b16 %v3765, %v3764
    %v3885 = vpack.c.b16 %v3767, %v3766
    %v3886 = vpack.c.b16 %v3769, %v3768
    %v3887 = vpack.c.b16 %v3771, %v3770
    %v3888 = vpack.c.b16 %v3773, %v3772
    %v3889 = vpack.c.b16 %v3775, %v3774
    %v3890 = vpack.c.b16 %v3777, %v3776
    %v3891 = vpack.c.b16 %v3779, %v3778
    %v3892 = vpack.c.b16 %v3781, %v3780
    %v3893 = vpack.c.b16 %v3783, %v3782
    %v3894 = vpack.c.b16 %v3785, %v3784
    %v3895 = vpack.c.b16 %v3787, %v3786
    %v3896 = vpack.c.b16 %v3789, %v3788
    %v3897 = vpack.c.b16 %v3791, %v3790
    %v3898 = vpack.c.b16 %v3793, %v3792
    %v3899 = vpack.c.b16 %v3795, %v3794
    %v3900 = vpack.c.b16 %v3797, %v3796
    %v3901 = vpack.c.b16 %v3799, %v3798
    %v3902 = vpack.c.b16 %v3801, %v3800
    %v3903 = vpack.c.b16 %v3803, %v3802
    %v3904 = vpack.c.b16 %v3805, %v3804
    %v3905 = vpack.c.b16 %v3807, %v3806
    %v3906 = vpack.c.b16 %v3809, %v3808
    %v3907 = vpack.c.b16 %v3811, %v3810
    %v3908 = vpack.c.b16 %v3813, %v3812
    %v3909 = vpack.c.b16 %v3815, %v3814
    %v3910 = vpack.c.b16 %v3817, %v3816
    %v3911 = vpack.c.b16 %v3819, %v3818
    %v3912 = vpack.c.b16 %v3821, %v3820
    %v3913 = vpack.c.b16 %v3823, %v3822
    %v3914 = vpack.c.b16 %v3825, %v3824
    %v3915 = vpack.c.b16 %v3827, %v3826
    %v3916 = vpack.c.b16 %v3829, %v3828
    %v3917 = vpack.c.b16 %v3831, %v3830
    %v3918 = vpack.c.b16 %v3833, %v3832
    %v3919 = vpack.c.b16 %v3835, %v3834
    %v3920 = vpack.c.b16 %v3837, %v3836
    %v3921 = vpack.c.b16 %v3839, %v3838
    %v3922 = vpack.c.b16 %v3841, %v3840
    %v3923 = vpack.c.b16 %v3843, %v3842
    %v3924 = vpack.c.b16 %v3845, %v3844
    %v3925 = vpack.c.b16 %v3847, %v3846
    %v3926 = vpack.c.b16 %v3849, %v3848
    %v3927 = vpack.c.b16 %v3851, %v3850
    %v3928 = vpack.c.b16 %v3853, %v3852
    %v3929 = vpack.c.b16 %v3855, %v3854
    %v3930 = vpack.c.b16 %v3857, %v3856
    %v3931 = vpack.c.b16 %v3859, %v3858
    %4004 = vmatprep.subr.bf16.mxu0 0
    %4005 = vmatpush1.bf16.msra.mxu0 %v3867
    %4006 = vmatprep.subr.bf16.mxu0 0
    %4007 = vmatpush1.bf16.msra.mxu0 %v3866
    %4008 = vmatprep.subr.bf16.mxu0 0
    %4009 = vmatpush1.bf16.msra.mxu0 %v3865
    %4010 = vmatprep.subr.bf16.mxu0 0
    %4011 = vmatpush1.bf16.msra.mxu0 %v3864
    %4012 = vmatprep.subr.bf16.mxu0 0
    %4013 = vmatpush1.bf16.msra.mxu0 %v3863
    %4014 = vmatprep.subr.bf16.mxu0 0
    %4015 = vmatpush1.bf16.msra.mxu0 %v3862
    %4016 = vmatprep.subr.bf16.mxu0 0
    %4017 = vmatpush1.bf16.msra.mxu0 %v3861
    %4018 = vmatprep.subr.bf16.mxu0 0
    %4019 = vmatpush1.bf16.msra.mxu0 %v3860
    %4020 = vmatprep.subr.bf16.mxu0 0
    %4021 = vmatpush2.bf16.msra.mxu0 %v3875
    %4022 = vmatprep.subr.bf16.mxu0 0
    %4023 = vmatpush2.bf16.msra.mxu0 %v3874
    %4024 = vmatprep.subr.bf16.mxu0 0
    %4025 = vmatpush2.bf16.msra.mxu0 %v3873
    %4026 = vmatprep.subr.bf16.mxu0 0
    %4027 = vmatpush2.bf16.msra.mxu0 %v3872
    %4028 = vmatprep.subr.bf16.mxu0 0
    %4029 = vmatpush2.bf16.msra.mxu0 %v3871
    %4030 = vmatprep.subr.bf16.mxu0 0
    %4031 = vmatpush2.bf16.msra.mxu0 %v3870
    %4032 = vmatprep.subr.bf16.mxu0 0
    %4033 = vmatpush2.bf16.msra.mxu0 %v3869
    %4034 = vmatprep.subr.bf16.mxu0 0
    %4035 = vmatpush2.bf16.msra.mxu0 %v3868
    %4036 = vmatprep.mubr.bf16.mxu0 %v3285
    %4037 = vmatmul.mubr.bf16.gmra.mxu0 %v3284
    %v4038 = vpop.f32.mrf.mxu0
    %v4039 = vadd.f32 0.0, %v4038
    %v4040 = vpop.f32.mrf.mxu0
    %v4041 = vpop.f32.mrf.mxu0
    %v4042 = vadd.f32 0.0, %v4041
    %v4043 = vpop.f32.mrf.mxu0
    %4044 = vmatprep.mubr.bf16.mxu0 %v3294
    %4045 = vmatmul.mubr.bf16.gmra.mxu0 %v3293
    %v4046 = vpop.f32.mrf.mxu0
    %v4047 = vadd.f32 0.0, %v4046
    %v4048 = vpop.f32.mrf.mxu0
    %v4049 = vpop.f32.mrf.mxu0
    %v4050 = vadd.f32 0.0, %v4049
    %v4051 = vpop.f32.mrf.mxu0
    %4052 = vmatprep.mubr.bf16.mxu0 %v3303
    %4053 = vmatmul.mubr.bf16.gmra.mxu0 %v3302
    %v4054 = vpop.f32.mrf.mxu0
    %v4055 = vadd.f32 0.0, %v4054
    %v4056 = vpop.f32.mrf.mxu0
    %v4057 = vpop.f32.mrf.mxu0
    %v4058 = vadd.f32 0.0, %v4057
    %v4059 = vpop.f32.mrf.mxu0
    %4060 = vmatprep.mubr.bf16.mxu0 %v3312
    %4061 = vmatmul.mubr.bf16.gmra.mxu0 %v3311
    %v4062 = vpop.f32.mrf.mxu0
    %v4063 = vadd.f32 0.0, %v4062
    %v4064 = vpop.f32.mrf.mxu0
    %v4065 = vpop.f32.mrf.mxu0
    %v4066 = vadd.f32 0.0, %v4065
    %v4067 = vpop.f32.mrf.mxu0
    %4068 = vmatprep.mubr.bf16.mxu0 %v3321
    %4069 = vmatmul.mubr.bf16.gmra.mxu0 %v3320
    %v4070 = vpop.f32.mrf.mxu0
    %v4071 = vadd.f32 0.0, %v4070
    %v4072 = vpop.f32.mrf.mxu0
    %v4073 = vpop.f32.mrf.mxu0
    %v4074 = vadd.f32 0.0, %v4073
    %v4075 = vpop.f32.mrf.mxu0
    %4076 = vmatprep.mubr.bf16.mxu0 %v3330
    %4077 = vmatmul.mubr.bf16.gmra.mxu0 %v3329
    %v4078 = vpop.f32.mrf.mxu0
    %v4079 = vadd.f32 0.0, %v4078
    %v4080 = vpop.f32.mrf.mxu0
    %v4081 = vpop.f32.mrf.mxu0
    %v4082 = vadd.f32 0.0, %v4081
    %v4083 = vpop.f32.mrf.mxu0
    %4084 = vmatprep.mubr.bf16.mxu0 %v3339
    %4085 = vmatmul.mubr.bf16.gmra.mxu0 %v3338
    %v4086 = vpop.f32.mrf.mxu0
    %v4087 = vadd.f32 0.0, %v4086
    %v4088 = vpop.f32.mrf.mxu0
    %v4089 = vpop.f32.mrf.mxu0
    %v4090 = vadd.f32 0.0, %v4089
    %v4091 = vpop.f32.mrf.mxu0
    %4092 = vmatprep.mubr.bf16.mxu0 %v3348
    %4093 = vmatmul.mubr.bf16.gmra.mxu0 %v3347
    %v4094 = vpop.f32.mrf.mxu0
    %v4095 = vadd.f32 0.0, %v4094
    %v4096 = vpop.f32.mrf.mxu0
    %v4097 = vpop.f32.mrf.mxu0
    %v4098 = vadd.f32 0.0, %v4097
    %v4099 = vpop.f32.mrf.mxu0
    %4100 = vmatprep.mubr.bf16.mxu0 %v3357
    %4101 = vmatmul.mubr.bf16.gmra.mxu0 %v3356
    %v4102 = vpop.f32.mrf.mxu0
    %v4103 = vadd.f32 0.0, %v4102
    %v4104 = vpop.f32.mrf.mxu0
    %v4105 = vpop.f32.mrf.mxu0
    %v4106 = vadd.f32 0.0, %v4105
    %v4107 = vpop.f32.mrf.mxu0
    %4108 = vmatprep.mubr.bf16.mxu0 %v3366
    %4109 = vmatmul.mubr.bf16.gmra.mxu0 %v3365
    %v4110 = vpop.f32.mrf.mxu0
    %v4111 = vadd.f32 0.0, %v4110
    %v4112 = vpop.f32.mrf.mxu0
    %v4113 = vpop.f32.mrf.mxu0
    %v4114 = vadd.f32 0.0, %v4113
    %v4115 = vpop.f32.mrf.mxu0
    %4116 = vmatprep.mubr.bf16.mxu0 %v3375
    %4117 = vmatmul.mubr.bf16.gmra.mxu0 %v3374
    %v4118 = vpop.f32.mrf.mxu0
    %v4119 = vadd.f32 0.0, %v4118
    %v4120 = vpop.f32.mrf.mxu0
    %v4121 = vpop.f32.mrf.mxu0
    %v4122 = vadd.f32 0.0, %v4121
    %v4123 = vpop.f32.mrf.mxu0
    %4124 = vmatprep.mubr.bf16.mxu0 %v3384
    %4125 = vmatmul.mubr.bf16.gmra.mxu0 %v3383
    %v4126 = vpop.f32.mrf.mxu0
    %v4127 = vadd.f32 0.0, %v4126
    %v4128 = vpop.f32.mrf.mxu0
    %v4129 = vpop.f32.mrf.mxu0
    %v4130 = vadd.f32 0.0, %v4129
    %v4131 = vpop.f32.mrf.mxu0
    %4132 = vmatprep.mubr.bf16.mxu0 %v3393
    %4133 = vmatmul.mubr.bf16.gmra.mxu0 %v3392
    %v4134 = vpop.f32.mrf.mxu0
    %v4135 = vadd.f32 0.0, %v4134
    %v4136 = vpop.f32.mrf.mxu0
    %v4137 = vpop.f32.mrf.mxu0
    %v4138 = vadd.f32 0.0, %v4137
    %v4139 = vpop.f32.mrf.mxu0
    %4140 = vmatprep.mubr.bf16.mxu0 %v3402
    %4141 = vmatmul.mubr.bf16.gmra.mxu0 %v3401
    %v4142 = vpop.f32.mrf.mxu0
    %v4143 = vadd.f32 0.0, %v4142
    %v4144 = vpop.f32.mrf.mxu0
    %v4145 = vpop.f32.mrf.mxu0
    %v4146 = vadd.f32 0.0, %v4145
    %v4147 = vpop.f32.mrf.mxu0
    %4148 = vmatprep.mubr.bf16.mxu0 %v3411
    %4149 = vmatmul.mubr.bf16.gmra.mxu0 %v3410
    %v4150 = vpop.f32.mrf.mxu0
    %v4151 = vadd.f32 0.0, %v4150
    %v4152 = vpop.f32.mrf.mxu0
    %v4153 = vpop.f32.mrf.mxu0
    %v4154 = vadd.f32 0.0, %v4153
    %v4155 = vpop.f32.mrf.mxu0
    %4156 = vmatprep.mubr.bf16.mxu0 %v3420
    %4157 = vmatmul.mubr.bf16.gmra.mxu0 %v3419
    %v4158 = vpop.f32.mrf.mxu0
    %v4159 = vadd.f32 0.0, %v4158
    %v4160 = vpop.f32.mrf.mxu0
    %v4161 = vpop.f32.mrf.mxu0
    %v4162 = vadd.f32 0.0, %v4161
    %v4163 = vpop.f32.mrf.mxu0
    %4164 = vdwg.mxu0
    %4165 = vmatprep.subr.bf16.mxu0 0
    %4166 = vmatpush1.bf16.msra.mxu0 %v3883
    %4167 = vmatprep.subr.bf16.mxu0 0
    %4168 = vmatpush1.bf16.msra.mxu0 %v3882
    %4169 = vmatprep.subr.bf16.mxu0 0
    %4170 = vmatpush1.bf16.msra.mxu0 %v3881
    %4171 = vmatprep.subr.bf16.mxu0 0
    %4172 = vmatpush1.bf16.msra.mxu0 %v3880
    %4173 = vmatprep.subr.bf16.mxu0 0
    %4174 = vmatpush1.bf16.msra.mxu0 %v3879
    %4175 = vmatprep.subr.bf16.mxu0 0
    %4176 = vmatpush1.bf16.msra.mxu0 %v3878
    %4177 = vmatprep.subr.bf16.mxu0 0
    %4178 = vmatpush1.bf16.msra.mxu0 %v3877
    %4179 = vmatprep.subr.bf16.mxu0 0
    %4180 = vmatpush1.bf16.msra.mxu0 %v3876
    %4181 = vmatprep.subr.bf16.mxu0 0
    %4182 = vmatpush2.bf16.msra.mxu0 %v3891
    %4183 = vmatprep.subr.bf16.mxu0 0
    %4184 = vmatpush2.bf16.msra.mxu0 %v3890
    %4185 = vmatprep.subr.bf16.mxu0 0
    %4186 = vmatpush2.bf16.msra.mxu0 %v3889
    %4187 = vmatprep.subr.bf16.mxu0 0
    %4188 = vmatpush2.bf16.msra.mxu0 %v3888
    %4189 = vmatprep.subr.bf16.mxu0 0
    %4190 = vmatpush2.bf16.msra.mxu0 %v3887
    %4191 = vmatprep.subr.bf16.mxu0 0
    %4192 = vmatpush2.bf16.msra.mxu0 %v3886
    %4193 = vmatprep.subr.bf16.mxu0 0
    %4194 = vmatpush2.bf16.msra.mxu0 %v3885
    %4195 = vmatprep.subr.bf16.mxu0 0
    %4196 = vmatpush2.bf16.msra.mxu0 %v3884
    %4197 = vmatprep.mubr.bf16.mxu0 %v3287
    %4198 = vmatmul.mubr.bf16.gmra.mxu0 %v3286
    %v4199 = vpop.f32.mrf.mxu0
    %v4200 = vadd.f32 %v4039, %v4199
    %v4201 = vpop.f32.mrf.mxu0
    %v4202 = vpop.f32.mrf.mxu0
    %v4203 = vadd.f32 %v4042, %v4202
    %v4204 = vpop.f32.mrf.mxu0
    %4205 = vmatprep.mubr.bf16.mxu0 %v3296
    %4206 = vmatmul.mubr.bf16.gmra.mxu0 %v3295
    %v4207 = vpop.f32.mrf.mxu0
    %v4208 = vadd.f32 %v4047, %v4207
    %v4209 = vpop.f32.mrf.mxu0
    %v4210 = vpop.f32.mrf.mxu0
    %v4211 = vadd.f32 %v4050, %v4210
    %v4212 = vpop.f32.mrf.mxu0
    %4213 = vmatprep.mubr.bf16.mxu0 %v3305
    %4214 = vmatmul.mubr.bf16.gmra.mxu0 %v3304
    %v4215 = vpop.f32.mrf.mxu0
    %v4216 = vadd.f32 %v4055, %v4215
    %v4217 = vpop.f32.mrf.mxu0
    %v4218 = vpop.f32.mrf.mxu0
    %v4219 = vadd.f32 %v4058, %v4218
    %v4220 = vpop.f32.mrf.mxu0
    %4221 = vmatprep.mubr.bf16.mxu0 %v3314
    %4222 = vmatmul.mubr.bf16.gmra.mxu0 %v3313
    %v4223 = vpop.f32.mrf.mxu0
    %v4224 = vadd.f32 %v4063, %v4223
    %v4225 = vpop.f32.mrf.mxu0
    %v4226 = vpop.f32.mrf.mxu0
    %v4227 = vadd.f32 %v4066, %v4226
    %v4228 = vpop.f32.mrf.mxu0
    %4229 = vmatprep.mubr.bf16.mxu0 %v3323
    %4230 = vmatmul.mubr.bf16.gmra.mxu0 %v3322
    %v4231 = vpop.f32.mrf.mxu0
    %v4232 = vadd.f32 %v4071, %v4231
    %v4233 = vpop.f32.mrf.mxu0
    %v4234 = vpop.f32.mrf.mxu0
    %v4235 = vadd.f32 %v4074, %v4234
    %v4236 = vpop.f32.mrf.mxu0
    %4237 = vmatprep.mubr.bf16.mxu0 %v3332
    %4238 = vmatmul.mubr.bf16.gmra.mxu0 %v3331
    %v4239 = vpop.f32.mrf.mxu0
    %v4240 = vadd.f32 %v4079, %v4239
    %v4241 = vpop.f32.mrf.mxu0
    %v4242 = vpop.f32.mrf.mxu0
    %v4243 = vadd.f32 %v4082, %v4242
    %v4244 = vpop.f32.mrf.mxu0
    %4245 = vmatprep.mubr.bf16.mxu0 %v3341
    %4246 = vmatmul.mubr.bf16.gmra.mxu0 %v3340
    %v4247 = vpop.f32.mrf.mxu0
    %v4248 = vadd.f32 %v4087, %v4247
    %v4249 = vpop.f32.mrf.mxu0
    %v4250 = vpop.f32.mrf.mxu0
    %v4251 = vadd.f32 %v4090, %v4250
    %v4252 = vpop.f32.mrf.mxu0
    %4253 = vmatprep.mubr.bf16.mxu0 %v3350
    %4254 = vmatmul.mubr.bf16.gmra.mxu0 %v3349
    %v4255 = vpop.f32.mrf.mxu0
    %v4256 = vadd.f32 %v4095, %v4255
    %v4257 = vpop.f32.mrf.mxu0
    %v4258 = vpop.f32.mrf.mxu0
    %v4259 = vadd.f32 %v4098, %v4258
    %v4260 = vpop.f32.mrf.mxu0
    %4261 = vmatprep.mubr.bf16.mxu0 %v3359
    %4262 = vmatmul.mubr.bf16.gmra.mxu0 %v3358
    %v4263 = vpop.f32.mrf.mxu0
    %v4264 = vadd.f32 %v4103, %v4263
    %v4265 = vpop.f32.mrf.mxu0
    %v4266 = vpop.f32.mrf.mxu0
    %v4267 = vadd.f32 %v4106, %v4266
    %v4268 = vpop.f32.mrf.mxu0
    %4269 = vmatprep.mubr.bf16.mxu0 %v3368
    %4270 = vmatmul.mubr.bf16.gmra.mxu0 %v3367
    %v4271 = vpop.f32.mrf.mxu0
    %v4272 = vadd.f32 %v4111, %v4271
    %v4273 = vpop.f32.mrf.mxu0
    %v4274 = vpop.f32.mrf.mxu0
    %v4275 = vadd.f32 %v4114, %v4274
    %v4276 = vpop.f32.mrf.mxu0
    %4277 = vmatprep.mubr.bf16.mxu0 %v3377
    %4278 = vmatmul.mubr.bf16.gmra.mxu0 %v3376
    %v4279 = vpop.f32.mrf.mxu0
    %v4280 = vadd.f32 %v4119, %v4279
    %v4281 = vpop.f32.mrf.mxu0
    %v4282 = vpop.f32.mrf.mxu0
    %v4283 = vadd.f32 %v4122, %v4282
    %v4284 = vpop.f32.mrf.mxu0
    %4285 = vmatprep.mubr.bf16.mxu0 %v3386
    %4286 = vmatmul.mubr.bf16.gmra.mxu0 %v3385
    %v4287 = vpop.f32.mrf.mxu0
    %v4288 = vadd.f32 %v4127, %v4287
    %v4289 = vpop.f32.mrf.mxu0
    %v4290 = vpop.f32.mrf.mxu0
    %v4291 = vadd.f32 %v4130, %v4290
    %v4292 = vpop.f32.mrf.mxu0
    %4293 = vmatprep.mubr.bf16.mxu0 %v3395
    %4294 = vmatmul.mubr.bf16.gmra.mxu0 %v3394
    %v4295 = vpop.f32.mrf.mxu0
    %v4296 = vadd.f32 %v4135, %v4295
    %v4297 = vpop.f32.mrf.mxu0
    %v4298 = vpop.f32.mrf.mxu0
    %v4299 = vadd.f32 %v4138, %v4298
    %v4300 = vpop.f32.mrf.mxu0
    %4301 = vmatprep.mubr.bf16.mxu0 %v3404
    %4302 = vmatmul.mubr.bf16.gmra.mxu0 %v3403
    %v4303 = vpop.f32.mrf.mxu0
    %v4304 = vadd.f32 %v4143, %v4303
    %v4305 = vpop.f32.mrf.mxu0
    %v4306 = vpop.f32.mrf.mxu0
    %v4307 = vadd.f32 %v4146, %v4306
    %v4308 = vpop.f32.mrf.mxu0
    %4309 = vmatprep.mubr.bf16.mxu0 %v3413
    %4310 = vmatmul.mubr.bf16.gmra.mxu0 %v3412
    %v4311 = vpop.f32.mrf.mxu0
    %v4312 = vadd.f32 %v4151, %v4311
    %v4313 = vpop.f32.mrf.mxu0
    %v4314 = vpop.f32.mrf.mxu0
    %v4315 = vadd.f32 %v4154, %v4314
    %v4316 = vpop.f32.mrf.mxu0
    %4317 = vmatprep.mubr.bf16.mxu0 %v3422
    %4318 = vmatmul.mubr.bf16.gmra.mxu0 %v3421
    %v4319 = vpop.f32.mrf.mxu0
    %v4320 = vadd.f32 %v4159, %v4319
    %v4321 = vpop.f32.mrf.mxu0
    %v4322 = vpop.f32.mrf.mxu0
    %v4323 = vadd.f32 %v4162, %v4322
    %v4324 = vpop.f32.mrf.mxu0
    %4325 = vdwg.mxu0
    %4326 = vmatprep.subr.bf16.mxu0 0
    %4327 = vmatpush1.bf16.msra.mxu0 %v3899
    %4328 = vmatprep.subr.bf16.mxu0 0
    %4329 = vmatpush1.bf16.msra.mxu0 %v3898
    %4330 = vmatprep.subr.bf16.mxu0 0
    %4331 = vmatpush1.bf16.msra.mxu0 %v3897
    %4332 = vmatprep.subr.bf16.mxu0 0
    %4333 = vmatpush1.bf16.msra.mxu0 %v3896
    %4334 = vmatprep.subr.bf16.mxu0 0
    %4335 = vmatpush1.bf16.msra.mxu0 %v3895
    %4336 = vmatprep.subr.bf16.mxu0 0
    %4337 = vmatpush1.bf16.msra.mxu0 %v3894
    %4338 = vmatprep.subr.bf16.mxu0 0
    %4339 = vmatpush1.bf16.msra.mxu0 %v3893
    %4340 = vmatprep.subr.bf16.mxu0 0
    %4341 = vmatpush1.bf16.msra.mxu0 %v3892
    %4342 = vmatprep.subr.bf16.mxu0 0
    %4343 = vmatpush2.bf16.msra.mxu0 %v3907
    %4344 = vmatprep.subr.bf16.mxu0 0
    %4345 = vmatpush2.bf16.msra.mxu0 %v3906
    %4346 = vmatprep.subr.bf16.mxu0 0
    %4347 = vmatpush2.bf16.msra.mxu0 %v3905
    %4348 = vmatprep.subr.bf16.mxu0 0
    %4349 = vmatpush2.bf16.msra.mxu0 %v3904
    %4350 = vmatprep.subr.bf16.mxu0 0
    %4351 = vmatpush2.bf16.msra.mxu0 %v3903
    %4352 = vmatprep.subr.bf16.mxu0 0
    %4353 = vmatpush2.bf16.msra.mxu0 %v3902
    %4354 = vmatprep.subr.bf16.mxu0 0
    %4355 = vmatpush2.bf16.msra.mxu0 %v3901
    %4356 = vmatprep.subr.bf16.mxu0 0
    %4357 = vmatpush2.bf16.msra.mxu0 %v3900
    %4358 = vmatprep.mubr.bf16.mxu0 %v3289
    %4359 = vmatmul.mubr.bf16.gmra.mxu0 %v3288
    %v4360 = vpop.f32.mrf.mxu0
    %v4361 = vadd.f32 %v4200, %v4360
    %v4362 = vpop.f32.mrf.mxu0
    %v4363 = vpop.f32.mrf.mxu0
    %v4364 = vadd.f32 %v4203, %v4363
    %v4365 = vpop.f32.mrf.mxu0
    %4366 = vmatprep.mubr.bf16.mxu0 %v3298
    %4367 = vmatmul.mubr.bf16.gmra.mxu0 %v3297
    %v4368 = vpop.f32.mrf.mxu0
    %v4369 = vadd.f32 %v4208, %v4368
    %v4370 = vpop.f32.mrf.mxu0
    %v4371 = vpop.f32.mrf.mxu0
    %v4372 = vadd.f32 %v4211, %v4371
    %v4373 = vpop.f32.mrf.mxu0
    %4374 = vmatprep.mubr.bf16.mxu0 %v3307
    %4375 = vmatmul.mubr.bf16.gmra.mxu0 %v3306
    %v4376 = vpop.f32.mrf.mxu0
    %v4377 = vadd.f32 %v4216, %v4376
    %v4378 = vpop.f32.mrf.mxu0
    %v4379 = vpop.f32.mrf.mxu0
    %v4380 = vadd.f32 %v4219, %v4379
    %v4381 = vpop.f32.mrf.mxu0
    %4382 = vmatprep.mubr.bf16.mxu0 %v3316
    %4383 = vmatmul.mubr.bf16.gmra.mxu0 %v3315
    %v4384 = vpop.f32.mrf.mxu0
    %v4385 = vadd.f32 %v4224, %v4384
    %v4386 = vpop.f32.mrf.mxu0
    %v4387 = vpop.f32.mrf.mxu0
    %v4388 = vadd.f32 %v4227, %v4387
    %v4389 = vpop.f32.mrf.mxu0
    %4390 = vmatprep.mubr.bf16.mxu0 %v3325
    %4391 = vmatmul.mubr.bf16.gmra.mxu0 %v3324
    %v4392 = vpop.f32.mrf.mxu0
    %v4393 = vadd.f32 %v4232, %v4392
    %v4394 = vpop.f32.mrf.mxu0
    %v4395 = vpop.f32.mrf.mxu0
    %v4396 = vadd.f32 %v4235, %v4395
    %v4397 = vpop.f32.mrf.mxu0
    %4398 = vmatprep.mubr.bf16.mxu0 %v3334
    %4399 = vmatmul.mubr.bf16.gmra.mxu0 %v3333
    %v4400 = vpop.f32.mrf.mxu0
    %v4401 = vadd.f32 %v4240, %v4400
    %v4402 = vpop.f32.mrf.mxu0
    %v4403 = vpop.f32.mrf.mxu0
    %v4404 = vadd.f32 %v4243, %v4403
    %v4405 = vpop.f32.mrf.mxu0
    %4406 = vmatprep.mubr.bf16.mxu0 %v3343
    %4407 = vmatmul.mubr.bf16.gmra.mxu0 %v3342
    %v4408 = vpop.f32.mrf.mxu0
    %v4409 = vadd.f32 %v4248, %v4408
    %v4410 = vpop.f32.mrf.mxu0
    %v4411 = vpop.f32.mrf.mxu0
    %v4412 = vadd.f32 %v4251, %v4411
    %v4413 = vpop.f32.mrf.mxu0
    %4414 = vmatprep.mubr.bf16.mxu0 %v3352
    %4415 = vmatmul.mubr.bf16.gmra.mxu0 %v3351
    %v4416 = vpop.f32.mrf.mxu0
    %v4417 = vadd.f32 %v4256, %v4416
    %v4418 = vpop.f32.mrf.mxu0
    %v4419 = vpop.f32.mrf.mxu0
    %v4420 = vadd.f32 %v4259, %v4419
    %v4421 = vpop.f32.mrf.mxu0
    %4422 = vmatprep.mubr.bf16.mxu0 %v3361
    %4423 = vmatmul.mubr.bf16.gmra.mxu0 %v3360
    %v4424 = vpop.f32.mrf.mxu0
    %v4425 = vadd.f32 %v4264, %v4424
    %v4426 = vpop.f32.mrf.mxu0
    %v4427 = vpop.f32.mrf.mxu0
    %v4428 = vadd.f32 %v4267, %v4427
    %v4429 = vpop.f32.mrf.mxu0
    %4430 = vmatprep.mubr.bf16.mxu0 %v3370
    %4431 = vmatmul.mubr.bf16.gmra.mxu0 %v3369
    %v4432 = vpop.f32.mrf.mxu0
    %v4433 = vadd.f32 %v4272, %v4432
    %v4434 = vpop.f32.mrf.mxu0
    %v4435 = vpop.f32.mrf.mxu0
    %v4436 = vadd.f32 %v4275, %v4435
    %v4437 = vpop.f32.mrf.mxu0
    %4438 = vmatprep.mubr.bf16.mxu0 %v3379
    %4439 = vmatmul.mubr.bf16.gmra.mxu0 %v3378
    %v4440 = vpop.f32.mrf.mxu0
    %v4441 = vadd.f32 %v4280, %v4440
    %v4442 = vpop.f32.mrf.mxu0
    %v4443 = vpop.f32.mrf.mxu0
    %v4444 = vadd.f32 %v4283, %v4443
    %v4445 = vpop.f32.mrf.mxu0
    %4446 = vmatprep.mubr.bf16.mxu0 %v3388
    %4447 = vmatmul.mubr.bf16.gmra.mxu0 %v3387
    %v4448 = vpop.f32.mrf.mxu0
    %v4449 = vadd.f32 %v4288, %v4448
    %v4450 = vpop.f32.mrf.mxu0
    %v4451 = vpop.f32.mrf.mxu0
    %v4452 = vadd.f32 %v4291, %v4451
    %v4453 = vpop.f32.mrf.mxu0
    %4454 = vmatprep.mubr.bf16.mxu0 %v3397
    %4455 = vmatmul.mubr.bf16.gmra.mxu0 %v3396
    %v4456 = vpop.f32.mrf.mxu0
    %v4457 = vadd.f32 %v4296, %v4456
    %v4458 = vpop.f32.mrf.mxu0
    %v4459 = vpop.f32.mrf.mxu0
    %v4460 = vadd.f32 %v4299, %v4459
    %v4461 = vpop.f32.mrf.mxu0
    %4462 = vmatprep.mubr.bf16.mxu0 %v3406
    %4463 = vmatmul.mubr.bf16.gmra.mxu0 %v3405
    %v4464 = vpop.f32.mrf.mxu0
    %v4465 = vadd.f32 %v4304, %v4464
    %v4466 = vpop.f32.mrf.mxu0
    %v4467 = vpop.f32.mrf.mxu0
    %v4468 = vadd.f32 %v4307, %v4467
    %v4469 = vpop.f32.mrf.mxu0
    %4470 = vmatprep.mubr.bf16.mxu0 %v3415
    %4471 = vmatmul.mubr.bf16.gmra.mxu0 %v3414
    %v4472 = vpop.f32.mrf.mxu0
    %v4473 = vadd.f32 %v4312, %v4472
    %v4474 = vpop.f32.mrf.mxu0
    %v4475 = vpop.f32.mrf.mxu0
    %v4476 = vadd.f32 %v4315, %v4475
    %v4477 = vpop.f32.mrf.mxu0
    %4478 = vmatprep.mubr.bf16.mxu0 %v3424
    %4479 = vmatmul.mubr.bf16.gmra.mxu0 %v3423
    %v4480 = vpop.f32.mrf.mxu0
    %v4481 = vadd.f32 %v4320, %v4480
    %v4482 = vpop.f32.mrf.mxu0
    %v4483 = vpop.f32.mrf.mxu0
    %v4484 = vadd.f32 %v4323, %v4483
    %v4485 = vpop.f32.mrf.mxu0
    %4486 = vdwg.mxu0
    %4487 = vmatprep.subr.bf16.mxu0 0
    %4488 = vmatpush1.bf16.msra.mxu0 %v3915
    %4489 = vmatprep.subr.bf16.mxu0 0
    %4490 = vmatpush1.bf16.msra.mxu0 %v3914
    %4491 = vmatprep.subr.bf16.mxu0 0
    %4492 = vmatpush1.bf16.msra.mxu0 %v3913
    %4493 = vmatprep.subr.bf16.mxu0 0
    %4494 = vmatpush1.bf16.msra.mxu0 %v3912
    %4495 = vmatprep.subr.bf16.mxu0 0
    %4496 = vmatpush1.bf16.msra.mxu0 %v3911
    %4497 = vmatprep.subr.bf16.mxu0 0
    %4498 = vmatpush1.bf16.msra.mxu0 %v3910
    %4499 = vmatprep.subr.bf16.mxu0 0
    %4500 = vmatpush1.bf16.msra.mxu0 %v3909
    %4501 = vmatprep.subr.bf16.mxu0 0
    %4502 = vmatpush1.bf16.msra.mxu0 %v3908
    %4503 = vmatprep.subr.bf16.mxu0 0
    %4504 = vmatpush2.bf16.msra.mxu0 %v3923
    %4505 = vmatprep.subr.bf16.mxu0 0
    %4506 = vmatpush2.bf16.msra.mxu0 %v3922
    %4507 = vmatprep.subr.bf16.mxu0 0
    %4508 = vmatpush2.bf16.msra.mxu0 %v3921
    %4509 = vmatprep.subr.bf16.mxu0 0
    %4510 = vmatpush2.bf16.msra.mxu0 %v3920
    %4511 = vmatprep.subr.bf16.mxu0 0
    %4512 = vmatpush2.bf16.msra.mxu0 %v3919
    %4513 = vmatprep.subr.bf16.mxu0 0
    %4514 = vmatpush2.bf16.msra.mxu0 %v3918
    %4515 = vmatprep.subr.bf16.mxu0 0
    %4516 = vmatpush2.bf16.msra.mxu0 %v3917
    %4517 = vmatprep.subr.bf16.mxu0 0
    %4518 = vmatpush2.bf16.msra.mxu0 %v3916
    %4519 = vmatprep.mubr.bf16.mxu0 %v3291
    %4520 = vmatmul.mubr.bf16.gmra.mxu0 %v3290
    %v4521 = vpop.f32.mrf.mxu0
    %v4522 = vadd.f32 %v4361, %v4521
    %v4523 = vpop.f32.mrf.mxu0
    %v4524 = vpop.f32.mrf.mxu0
    %v4525 = vadd.f32 %v4364, %v4524
    %v4526 = vpop.f32.mrf.mxu0
    %4527 = vmatprep.mubr.bf16.mxu0 %v3300
    %4528 = vmatmul.mubr.bf16.gmra.mxu0 %v3299
    %v4529 = vpop.f32.mrf.mxu0
    %v4530 = vadd.f32 %v4369, %v4529
    %v4531 = vpop.f32.mrf.mxu0
    %v4532 = vpop.f32.mrf.mxu0
    %v4533 = vadd.f32 %v4372, %v4532
    %v4534 = vpop.f32.mrf.mxu0
    %4535 = vmatprep.mubr.bf16.mxu0 %v3309
    %4536 = vmatmul.mubr.bf16.gmra.mxu0 %v3308
    %v4537 = vpop.f32.mrf.mxu0
    %v4538 = vadd.f32 %v4377, %v4537
    %v4539 = vpop.f32.mrf.mxu0
    %v4540 = vpop.f32.mrf.mxu0
    %v4541 = vadd.f32 %v4380, %v4540
    %v4542 = vpop.f32.mrf.mxu0
    %4543 = vmatprep.mubr.bf16.mxu0 %v3318
    %4544 = vmatmul.mubr.bf16.gmra.mxu0 %v3317
    %v4545 = vpop.f32.mrf.mxu0
    %v4546 = vadd.f32 %v4385, %v4545
    %v4547 = vpop.f32.mrf.mxu0
    %v4548 = vpop.f32.mrf.mxu0
    %v4549 = vadd.f32 %v4388, %v4548
    %v4550 = vpop.f32.mrf.mxu0
    %4551 = vmatprep.mubr.bf16.mxu0 %v3327
    %4552 = vmatmul.mubr.bf16.gmra.mxu0 %v3326
    %v4553 = vpop.f32.mrf.mxu0
    %v4554 = vadd.f32 %v4393, %v4553
    %v4555 = vpop.f32.mrf.mxu0
    %v4556 = vpop.f32.mrf.mxu0
    %v4557 = vadd.f32 %v4396, %v4556
    %v4558 = vpop.f32.mrf.mxu0
    %4559 = vmatprep.mubr.bf16.mxu0 %v3336
    %4560 = vmatmul.mubr.bf16.gmra.mxu0 %v3335
    %v4561 = vpop.f32.mrf.mxu0
    %v4562 = vadd.f32 %v4401, %v4561
    %v4563 = vpop.f32.mrf.mxu0
    %v4564 = vpop.f32.mrf.mxu0
    %v4565 = vadd.f32 %v4404, %v4564
    %v4566 = vpop.f32.mrf.mxu0
    %4567 = vmatprep.mubr.bf16.mxu0 %v3345
    %4568 = vmatmul.mubr.bf16.gmra.mxu0 %v3344
    %v4569 = vpop.f32.mrf.mxu0
    %v4570 = vadd.f32 %v4409, %v4569
    %v4571 = vpop.f32.mrf.mxu0
    %v4572 = vpop.f32.mrf.mxu0
    %v4573 = vadd.f32 %v4412, %v4572
    %v4574 = vpop.f32.mrf.mxu0
    %4575 = vmatprep.mubr.bf16.mxu0 %v3354
    %4576 = vmatmul.mubr.bf16.gmra.mxu0 %v3353
    %v4577 = vpop.f32.mrf.mxu0
    %v4578 = vadd.f32 %v4417, %v4577
    %v4579 = vpop.f32.mrf.mxu0
    %v4580 = vpop.f32.mrf.mxu0
    %v4581 = vadd.f32 %v4420, %v4580
    %v4582 = vpop.f32.mrf.mxu0
    %4583 = vmatprep.mubr.bf16.mxu0 %v3363
    %4584 = vmatmul.mubr.bf16.gmra.mxu0 %v3362
    %v4585 = vpop.f32.mrf.mxu0
    %v4586 = vadd.f32 %v4425, %v4585
    %v4587 = vpop.f32.mrf.mxu0
    %v4588 = vpop.f32.mrf.mxu0
    %v4589 = vadd.f32 %v4428, %v4588
    %v4590 = vpop.f32.mrf.mxu0
    %4591 = vmatprep.mubr.bf16.mxu0 %v3372
    %4592 = vmatmul.mubr.bf16.gmra.mxu0 %v3371
    %v4593 = vpop.f32.mrf.mxu0
    %v4594 = vadd.f32 %v4433, %v4593
    %v4595 = vpop.f32.mrf.mxu0
    %v4596 = vpop.f32.mrf.mxu0
    %v4597 = vadd.f32 %v4436, %v4596
    %v4598 = vpop.f32.mrf.mxu0
    %4599 = vmatprep.mubr.bf16.mxu0 %v3381
    %4600 = vmatmul.mubr.bf16.gmra.mxu0 %v3380
    %v4601 = vpop.f32.mrf.mxu0
    %v4602 = vadd.f32 %v4441, %v4601
    %v4603 = vpop.f32.mrf.mxu0
    %v4604 = vpop.f32.mrf.mxu0
    %v4605 = vadd.f32 %v4444, %v4604
    %v4606 = vpop.f32.mrf.mxu0
    %4607 = vmatprep.mubr.bf16.mxu0 %v3390
    %4608 = vmatmul.mubr.bf16.gmra.mxu0 %v3389
    %v4609 = vpop.f32.mrf.mxu0
    %v4610 = vadd.f32 %v4449, %v4609
    %v4611 = vpop.f32.mrf.mxu0
    %v4612 = vpop.f32.mrf.mxu0
    %v4613 = vadd.f32 %v4452, %v4612
    %v4614 = vpop.f32.mrf.mxu0
    %4615 = vmatprep.mubr.bf16.mxu0 %v3399
    %4616 = vmatmul.mubr.bf16.gmra.mxu0 %v3398
    %v4617 = vpop.f32.mrf.mxu0
    %v4618 = vadd.f32 %v4457, %v4617
    %v4619 = vpop.f32.mrf.mxu0
    %v4620 = vpop.f32.mrf.mxu0
    %v4621 = vadd.f32 %v4460, %v4620
    %v4622 = vpop.f32.mrf.mxu0
    %4623 = vmatprep.mubr.bf16.mxu0 %v3408
    %4624 = vmatmul.mubr.bf16.gmra.mxu0 %v3407
    %v4625 = vpop.f32.mrf.mxu0
    %v4626 = vadd.f32 %v4465, %v4625
    %v4627 = vpop.f32.mrf.mxu0
    %v4628 = vpop.f32.mrf.mxu0
    %v4629 = vadd.f32 %v4468, %v4628
    %v4630 = vpop.f32.mrf.mxu0
    %4631 = vmatprep.mubr.bf16.mxu0 %v3417
    %4632 = vmatmul.mubr.bf16.gmra.mxu0 %v3416
    %v4633 = vpop.f32.mrf.mxu0
    %v4634 = vadd.f32 %v4473, %v4633
    %v4635 = vpop.f32.mrf.mxu0
    %v4636 = vpop.f32.mrf.mxu0
    %v4637 = vadd.f32 %v4476, %v4636
    %v4638 = vpop.f32.mrf.mxu0
    %4639 = vmatprep.mubr.bf16.mxu0 %v3426
    %4640 = vmatmul.mubr.bf16.gmra.mxu0 %v3425
    %v4641 = vpop.f32.mrf.mxu0
    %v4642 = vadd.f32 %v4481, %v4641
    %v4643 = vpop.f32.mrf.mxu0
    %v4644 = vpop.f32.mrf.mxu0
    %v4645 = vadd.f32 %v4484, %v4644
    %v4646 = vpop.f32.mrf.mxu0
    %4647 = vdwg.mxu0
    %4648 = vmatprep.subr.bf16.mxu0 0
    %4649 = vmatpush1.bf16.msra.mxu0 %v3931
    %4650 = vmatprep.subr.bf16.mxu0 0
    %4651 = vmatpush1.bf16.msra.mxu0 %v3930
    %4652 = vmatprep.subr.bf16.mxu0 0
    %4653 = vmatpush1.bf16.msra.mxu0 %v3929
    %4654 = vmatprep.subr.bf16.mxu0 0
    %4655 = vmatpush1.bf16.msra.mxu0 %v3928
    %4656 = vmatprep.subr.bf16.mxu0 0
    %4657 = vmatpush1.bf16.msra.mxu0 %v3927
    %4658 = vmatprep.subr.bf16.mxu0 0
    %4659 = vmatpush1.bf16.msra.mxu0 %v3926
    %4660 = vmatprep.subr.bf16.mxu0 0
    %4661 = vmatpush1.bf16.msra.mxu0 %v3925
    %4662 = vmatprep.subr.bf16.mxu0 0
    %4663 = vmatpush1.bf16.msra.mxu0 %v3924
    %4664 = vmatprep.subr.bf16.mxu0 0
    %4665 = vmatpush2.bf16.msra.mxu0 0
    %4666 = vmatprep.subr.bf16.mxu0 0
    %4667 = vmatpush2.bf16.msra.mxu0 0
    %4668 = vmatprep.subr.bf16.mxu0 0
    %4669 = vmatpush2.bf16.msra.mxu0 0
    %4670 = vmatprep.subr.bf16.mxu0 0
    %4671 = vmatpush2.bf16.msra.mxu0 0
    %4672 = vmatprep.subr.bf16.mxu0 0
    %4673 = vmatpush2.bf16.msra.mxu0 0
    %4674 = vmatprep.subr.bf16.mxu0 0
    %4675 = vmatpush2.bf16.msra.mxu0 0
    %4676 = vmatprep.subr.bf16.mxu0 0
    %4677 = vmatpush2.bf16.msra.mxu0 0
    %4678 = vmatprep.subr.bf16.mxu0 0
    %4679 = vmatpush2.bf16.msra.mxu0 0
    %4680 = vmatprep.mubr.bf16.mxu0 0
    %4681 = vmatmul.mubr.bf16.gmra.mxu0 %v3292
    %v4682 = vpop.f32.mrf.mxu0
    %v4683 = vadd.f32 %v4522, %v4682
    %v4684 = vpop.f32.mrf.mxu0
    %v4685 = vpop.f32.mrf.mxu0
    %v4686 = vadd.f32 %v4525, %v4685
    %v4687 = vpop.f32.mrf.mxu0
    %4688 = vmatprep.mubr.bf16.mxu0 0
    %4689 = vmatmul.mubr.bf16.gmra.mxu0 %v3301
    %v4690 = vpop.f32.mrf.mxu0
    %v4691 = vadd.f32 %v4530, %v4690
    %v4692 = vpop.f32.mrf.mxu0
    %v4693 = vpop.f32.mrf.mxu0
    %v4694 = vadd.f32 %v4533, %v4693
    %v4695 = vpop.f32.mrf.mxu0
    %4696 = vmatprep.mubr.bf16.mxu0 0
    %4697 = vmatmul.mubr.bf16.gmra.mxu0 %v3310
    %v4698 = vpop.f32.mrf.mxu0
    %v4699 = vadd.f32 %v4538, %v4698
    %v4700 = vpop.f32.mrf.mxu0
    %v4701 = vpop.f32.mrf.mxu0
    %v4702 = vadd.f32 %v4541, %v4701
    %v4703 = vpop.f32.mrf.mxu0
    %4704 = vmatprep.mubr.bf16.mxu0 0
    %4705 = vmatmul.mubr.bf16.gmra.mxu0 %v3319
    %v4706 = vpop.f32.mrf.mxu0
    %v4707 = vadd.f32 %v4546, %v4706
    %v4708 = vpop.f32.mrf.mxu0
    %v4709 = vpop.f32.mrf.mxu0
    %v4710 = vadd.f32 %v4549, %v4709
    %v4711 = vpop.f32.mrf.mxu0
    %4712 = vmatprep.mubr.bf16.mxu0 0
    %4713 = vmatmul.mubr.bf16.gmra.mxu0 %v3328
    %v4714 = vpop.f32.mrf.mxu0
    %v4715 = vadd.f32 %v4554, %v4714
    %v4716 = vpop.f32.mrf.mxu0
    %v4717 = vpop.f32.mrf.mxu0
    %v4718 = vadd.f32 %v4557, %v4717
    %v4719 = vpop.f32.mrf.mxu0
    %4720 = vmatprep.mubr.bf16.mxu0 0
    %4721 = vmatmul.mubr.bf16.gmra.mxu0 %v3337
    %v4722 = vpop.f32.mrf.mxu0
    %v4723 = vadd.f32 %v4562, %v4722
    %v4724 = vpop.f32.mrf.mxu0
    %v4725 = vpop.f32.mrf.mxu0
    %v4726 = vadd.f32 %v4565, %v4725
    %v4727 = vpop.f32.mrf.mxu0
    %4728 = vmatprep.mubr.bf16.mxu0 0
    %4729 = vmatmul.mubr.bf16.gmra.mxu0 %v3346
    %v4730 = vpop.f32.mrf.mxu0
    %v4731 = vadd.f32 %v4570, %v4730
    %v4732 = vpop.f32.mrf.mxu0
    %v4733 = vpop.f32.mrf.mxu0
    %v4734 = vadd.f32 %v4573, %v4733
    %v4735 = vpop.f32.mrf.mxu0
    %4736 = vmatprep.mubr.bf16.mxu0 0
    %4737 = vmatmul.mubr.bf16.gmra.mxu0 %v3355
    %v4738 = vpop.f32.mrf.mxu0
    %v4739 = vadd.f32 %v4578, %v4738
    %v4740 = vpop.f32.mrf.mxu0
    %v4741 = vpop.f32.mrf.mxu0
    %v4742 = vadd.f32 %v4581, %v4741
    %v4743 = vpop.f32.mrf.mxu0
    %4744 = vmatprep.mubr.bf16.mxu0 0
    %4745 = vmatmul.mubr.bf16.gmra.mxu0 %v3364
    %v4746 = vpop.f32.mrf.mxu0
    %v4747 = vadd.f32 %v4586, %v4746
    %v4748 = vpop.f32.mrf.mxu0
    %v4749 = vpop.f32.mrf.mxu0
    %v4750 = vadd.f32 %v4589, %v4749
    %v4751 = vpop.f32.mrf.mxu0
    %4752 = vmatprep.mubr.bf16.mxu0 0
    %4753 = vmatmul.mubr.bf16.gmra.mxu0 %v3373
    %v4754 = vpop.f32.mrf.mxu0
    %v4755 = vadd.f32 %v4594, %v4754
    %v4756 = vpop.f32.mrf.mxu0
    %v4757 = vpop.f32.mrf.mxu0
    %v4758 = vadd.f32 %v4597, %v4757
    %v4759 = vpop.f32.mrf.mxu0
    %4760 = vmatprep.mubr.bf16.mxu0 0
    %4761 = vmatmul.mubr.bf16.gmra.mxu0 %v3382
    %v4762 = vpop.f32.mrf.mxu0
    %v4763 = vadd.f32 %v4602, %v4762
    %v4764 = vpop.f32.mrf.mxu0
    %v4765 = vpop.f32.mrf.mxu0
    %v4766 = vadd.f32 %v4605, %v4765
    %v4767 = vpop.f32.mrf.mxu0
    %4768 = vmatprep.mubr.bf16.mxu0 0
    %4769 = vmatmul.mubr.bf16.gmra.mxu0 %v3391
    %v4770 = vpop.f32.mrf.mxu0
    %v4771 = vadd.f32 %v4610, %v4770
    %v4772 = vpop.f32.mrf.mxu0
    %v4773 = vpop.f32.mrf.mxu0
    %v4774 = vadd.f32 %v4613, %v4773
    %v4775 = vpop.f32.mrf.mxu0
    %4776 = vmatprep.mubr.bf16.mxu0 0
    %4777 = vmatmul.mubr.bf16.gmra.mxu0 %v3400
    %v4778 = vpop.f32.mrf.mxu0
    %v4779 = vadd.f32 %v4618, %v4778
    %v4780 = vpop.f32.mrf.mxu0
    %v4781 = vpop.f32.mrf.mxu0
    %v4782 = vadd.f32 %v4621, %v4781
    %v4783 = vpop.f32.mrf.mxu0
    %4784 = vmatprep.mubr.bf16.mxu0 0
    %4785 = vmatmul.mubr.bf16.gmra.mxu0 %v3409
    %v4786 = vpop.f32.mrf.mxu0
    %v4787 = vadd.f32 %v4626, %v4786
    %v4788 = vpop.f32.mrf.mxu0
    %v4789 = vpop.f32.mrf.mxu0
    %v4790 = vadd.f32 %v4629, %v4789
    %v4791 = vpop.f32.mrf.mxu0
    %4792 = vmatprep.mubr.bf16.mxu0 0
    %4793 = vmatmul.mubr.bf16.gmra.mxu0 %v3418
    %v4794 = vpop.f32.mrf.mxu0
    %v4795 = vadd.f32 %v4634, %v4794
    %v4796 = vpop.f32.mrf.mxu0
    %v4797 = vpop.f32.mrf.mxu0
    %v4798 = vadd.f32 %v4637, %v4797
    %v4799 = vpop.f32.mrf.mxu0
    %4800 = vmatprep.mubr.bf16.mxu0 0
    %4801 = vmatmul.mubr.bf16.gmra.mxu0 %v3427
    %v4802 = vpop.f32.mrf.mxu0
    %v4803 = vadd.f32 %v4642, %v4802
    %v4804 = vpop.f32.mrf.mxu0
    %v4805 = vpop.f32.mrf.mxu0
    %v4806 = vadd.f32 %v4645, %v4805
    %v4807 = vpop.f32.mrf.mxu0
    %4808 = vdwg.mxu0
    %v4809 = vadd.f32 %v4683, %v4686
    %v4810 = vadd.f32 %v4809, %v4691
    %v4811 = vadd.f32 %v4810, %v4694
    %v4812 = vadd.f32 %v4811, %v4699
    %v4813 = vadd.f32 %v4812, %v4702
    %v4814 = vadd.f32 %v4813, %v4707
    %v4815 = vadd.f32 %v4814, %v4710
    %v4816 = vadd.f32 %v4815, %v4715
    %v4817 = vadd.f32 %v4816, %v4718
    %v4818 = vadd.f32 %v4817, %v4723
    %v4819 = vadd.f32 %v4818, %v4726
    %v4820 = vadd.f32 %v4819, %v4731
    %v4821 = vadd.f32 %v4820, %v4734
    %v4822 = vadd.f32 %v4821, %v4739
    %v4823 = vadd.f32 %v4822, %v4742
    %v4824 = vadd.f32 %v4823, %v4747
    %v4825 = vadd.f32 %v4824, %v4750
    %v4826 = vadd.f32 %v4825, %v4755
    %v4827 = vadd.f32 %v4826, %v4758
    %v4828 = vadd.f32 %v4827, %v4763
    %v4829 = vadd.f32 %v4828, %v4766
    %v4830 = vadd.f32 %v4829, %v4771
    %v4831 = vadd.f32 %v4830, %v4774
    %v4832 = vadd.f32 %v4831, %v4779
    %v4833 = vadd.f32 %v4832, %v4782
    %v4834 = vadd.f32 %v4833, %v4787
    %v4835 = vadd.f32 %v4834, %v4790
    %v4836 = vadd.f32 %v4835, %v4795
    %v4837 = vadd.f32 %v4836, %v4798
    %v4838 = vadd.f32 %v4837, %v4803
    %v4839 = vadd.f32 %v4838, %v4806
    %v4840 = vrot.slane %v4839, 4
    %v4841 = vadd.f32 %v4839, %v4840
    %v4842 = vrot.slane %v4841, 2
    %v4843 = vadd.f32 %v4841, %v4842
    %v4844 = vrot.slane %v4843, 1
    %v4845 = vadd.f32 %v4843, %v4844
    %v4846 = vmul.f32 %v4845, 0.00390625
    %v4847 = vmul.f32 %v4683, %v4683
    %v4848 = vmul.f32 %v4686, %v4686
    %v4849 = vmul.f32 %v4691, %v4691
    %v4850 = vmul.f32 %v4694, %v4694
    %v4851 = vmul.f32 %v4699, %v4699
    %v4852 = vmul.f32 %v4702, %v4702
    %v4853 = vmul.f32 %v4707, %v4707
    %v4854 = vmul.f32 %v4710, %v4710
    %v4855 = vmul.f32 %v4715, %v4715
    %v4856 = vmul.f32 %v4718, %v4718
    %v4857 = vmul.f32 %v4723, %v4723
    %v4858 = vmul.f32 %v4726, %v4726
    %v4859 = vmul.f32 %v4731, %v4731
    %v4860 = vmul.f32 %v4734, %v4734
    %v4861 = vmul.f32 %v4739, %v4739
    %v4862 = vmul.f32 %v4742, %v4742
    %v4863 = vmul.f32 %v4747, %v4747
    %v4864 = vmul.f32 %v4750, %v4750
    %v4865 = vmul.f32 %v4755, %v4755
    %v4866 = vmul.f32 %v4758, %v4758
    %v4867 = vmul.f32 %v4763, %v4763
    %v4868 = vmul.f32 %v4766, %v4766
    %v4869 = vmul.f32 %v4771, %v4771
    %v4870 = vmul.f32 %v4774, %v4774
    %v4871 = vmul.f32 %v4779, %v4779
    %v4872 = vmul.f32 %v4782, %v4782
    %v4873 = vmul.f32 %v4787, %v4787
    %v4874 = vmul.f32 %v4790, %v4790
    %v4875 = vmul.f32 %v4795, %v4795
    %v4876 = vmul.f32 %v4798, %v4798
    %v4877 = vmul.f32 %v4803, %v4803
    %v4878 = vmul.f32 %v4806, %v4806
    %v4879 = vadd.f32 %v4847, %v4848
    %v4880 = vadd.f32 %v4879, %v4849
    %v4881 = vadd.f32 %v4880, %v4850
    %v4882 = vadd.f32 %v4881, %v4851
    %v4883 = vadd.f32 %v4882, %v4852
    %v4884 = vadd.f32 %v4883, %v4853
    %v4885 = vadd.f32 %v4884, %v4854
    %v4886 = vadd.f32 %v4885, %v4855
    %v4887 = vadd.f32 %v4886, %v4856
    %v4888 = vadd.f32 %v4887, %v4857
    %v4889 = vadd.f32 %v4888, %v4858
    %v4890 = vadd.f32 %v4889, %v4859
    %v4891 = vadd.f32 %v4890, %v4860
    %v4892 = vadd.f32 %v4891, %v4861
    %v4893 = vadd.f32 %v4892, %v4862
    %v4894 = vadd.f32 %v4893, %v4863
    %v4895 = vadd.f32 %v4894, %v4864
    %v4896 = vadd.f32 %v4895, %v4865
    %v4897 = vadd.f32 %v4896, %v4866
    %v4898 = vadd.f32 %v4897, %v4867
    %v4899 = vadd.f32 %v4898, %v4868
    %v4900 = vadd.f32 %v4899, %v4869
    %v4901 = vadd.f32 %v4900, %v4870
    %v4902 = vadd.f32 %v4901, %v4871
    %v4903 = vadd.f32 %v4902, %v4872
    %v4904 = vadd.f32 %v4903, %v4873
    %v4905 = vadd.f32 %v4904, %v4874
    %v4906 = vadd.f32 %v4905, %v4875
    %v4907 = vadd.f32 %v4906, %v4876
    %v4908 = vadd.f32 %v4907, %v4877
    %v4909 = vadd.f32 %v4908, %v4878
    %v4910 = vrot.slane %v4909, 4
    %v4911 = vadd.f32 %v4909, %v4910
    %v4912 = vrot.slane %v4911, 2
    %v4913 = vadd.f32 %v4911, %v4912
    %v4914 = vrot.slane %v4913, 1
    %v4915 = vadd.f32 %v4913, %v4914
    %v4916 = vmul.f32 %v4915, 0.00390625
    %v4917 = vmul.f32 %v4846, %v4846
    %v4918 = vsub.f32 %v4916, %v4917
    %v4919 = vmax.f32 %v4918, 0.0
    %v4920 = vsub.f32 %v4683, %v4846
    %v4921 = vsub.f32 %v4686, %v4846
    %v4922 = vsub.f32 %v4691, %v4846
    %v4923 = vsub.f32 %v4694, %v4846
    %v4924 = vsub.f32 %v4699, %v4846
    %v4925 = vsub.f32 %v4702, %v4846
    %v4926 = vsub.f32 %v4707, %v4846
    %v4927 = vsub.f32 %v4710, %v4846
    %v4928 = vsub.f32 %v4715, %v4846
    %v4929 = vsub.f32 %v4718, %v4846
    %v4930 = vsub.f32 %v4723, %v4846
    %v4931 = vsub.f32 %v4726, %v4846
    %v4932 = vsub.f32 %v4731, %v4846
    %v4933 = vsub.f32 %v4734, %v4846
    %v4934 = vsub.f32 %v4739, %v4846
    %v4935 = vsub.f32 %v4742, %v4846
    %v4936 = vsub.f32 %v4747, %v4846
    %v4937 = vsub.f32 %v4750, %v4846
    %v4938 = vsub.f32 %v4755, %v4846
    %v4939 = vsub.f32 %v4758, %v4846
    %v4940 = vsub.f32 %v4763, %v4846
    %v4941 = vsub.f32 %v4766, %v4846
    %v4942 = vsub.f32 %v4771, %v4846
    %v4943 = vsub.f32 %v4774, %v4846
    %v4944 = vsub.f32 %v4779, %v4846
    %v4945 = vsub.f32 %v4782, %v4846
    %v4946 = vsub.f32 %v4787, %v4846
    %v4947 = vsub.f32 %v4790, %v4846
    %v4948 = vsub.f32 %v4795, %v4846
    %v4949 = vsub.f32 %v4798, %v4846
    %v4950 = vsub.f32 %v4803, %v4846
    %v4951 = vsub.f32 %v4806, %v4846
    %v4952 = vadd.f32 %v4919, 1e-05
    %v4953 = vrsqrt.pop %v4952
    %v4954 = vmul.f32 %v4920, %v4953
    %v4955 = vmul.f32 %v4921, %v4953
    %v4956 = vmul.f32 %v4922, %v4953
    %v4957 = vmul.f32 %v4923, %v4953
    %v4958 = vmul.f32 %v4924, %v4953
    %v4959 = vmul.f32 %v4925, %v4953
    %v4960 = vmul.f32 %v4926, %v4953
    %v4961 = vmul.f32 %v4927, %v4953
    %v4962 = vmul.f32 %v4928, %v4953
    %v4963 = vmul.f32 %v4929, %v4953
    %v4964 = vmul.f32 %v4930, %v4953
    %v4965 = vmul.f32 %v4931, %v4953
    %v4966 = vmul.f32 %v4932, %v4953
    %v4967 = vmul.f32 %v4933, %v4953
    %v4968 = vmul.f32 %v4934, %v4953
    %v4969 = vmul.f32 %v4935, %v4953
    %v4970 = vmul.f32 %v4936, %v4953
    %v4971 = vmul.f32 %v4937, %v4953
    %v4972 = vmul.f32 %v4938, %v4953
    %v4973 = vmul.f32 %v4939, %v4953
    %v4974 = vmul.f32 %v4940, %v4953
    %v4975 = vmul.f32 %v4941, %v4953
    %v4976 = vmul.f32 %v4942, %v4953
    %v4977 = vmul.f32 %v4943, %v4953
    %v4978 = vmul.f32 %v4944, %v4953
    %v4979 = vmul.f32 %v4945, %v4953
    %v4980 = vmul.f32 %v4946, %v4953
    %v4981 = vmul.f32 %v4947, %v4953
    %v4982 = vmul.f32 %v4948, %v4953
    %v4983 = vmul.f32 %v4949, %v4953
    %v4984 = vmul.f32 %v4950, %v4953
    %v4985 = vmul.f32 %v4951, %v4953
    %v4986 = vld [vmem:[%s3] sm:$0x1]
    %v4988 = vlaneseq
    %v4989 = vshrl.u32 %v4988, 7
    %v4990 = vsub.s32 0, %v4989
    %v4991 = vrot.slane %v4986, %v4990
    %v4993 = vmul.f32 %v4954, %v4991
    %v4994 = vmul.f32 %v4955, %v4991
    %v4995 = vmul.f32 %v4956, %v4991
    %v4996 = vmul.f32 %v4957, %v4991
    %v4997 = vmul.f32 %v4958, %v4991
    %v4998 = vmul.f32 %v4959, %v4991
    %v4999 = vmul.f32 %v4960, %v4991
    %v5000 = vmul.f32 %v4961, %v4991
    %v5001 = vmul.f32 %v4962, %v4991
    %v5002 = vmul.f32 %v4963, %v4991
    %v5003 = vmul.f32 %v4964, %v4991
    %v5004 = vmul.f32 %v4965, %v4991
    %v5005 = vmul.f32 %v4966, %v4991
    %v5006 = vmul.f32 %v4967, %v4991
    %v5007 = vmul.f32 %v4968, %v4991
    %v5008 = vmul.f32 %v4969, %v4991
    %v5009 = vmul.f32 %v4970, %v4991
    %v5010 = vmul.f32 %v4971, %v4991
    %v5011 = vmul.f32 %v4972, %v4991
    %v5012 = vmul.f32 %v4973, %v4991
    %v5013 = vmul.f32 %v4974, %v4991
    %v5014 = vmul.f32 %v4975, %v4991
    %v5015 = vmul.f32 %v4976, %v4991
    %v5016 = vmul.f32 %v4977, %v4991
    %v5017 = vmul.f32 %v4978, %v4991
    %v5018 = vmul.f32 %v4979, %v4991
    %v5019 = vmul.f32 %v4980, %v4991
    %v5020 = vmul.f32 %v4981, %v4991
    %v5021 = vmul.f32 %v4982, %v4991
    %v5022 = vmul.f32 %v4983, %v4991
    %v5023 = vmul.f32 %v4984, %v4991
    %v5024 = vmul.f32 %v4985, %v4991
    %v5025 = vld [vmem:[%s4] sm:$0x1]
    %v5027 = vlaneseq
    %v5028 = vshrl.u32 %v5027, 7
    %v5029 = vsub.s32 0, %v5028
    %v5030 = vrot.slane %v5025, %v5029
    %v5032 = vadd.f32 %v4993, %v5030
    %v5033 = vadd.f32 %v4994, %v5030
    %v5034 = vadd.f32 %v4995, %v5030
    %v5035 = vadd.f32 %v4996, %v5030
    %v5036 = vadd.f32 %v4997, %v5030
    %v5037 = vadd.f32 %v4998, %v5030
    %v5038 = vadd.f32 %v4999, %v5030
    %v5039 = vadd.f32 %v5000, %v5030
    %v5040 = vadd.f32 %v5001, %v5030
    %v5041 = vadd.f32 %v5002, %v5030
    %v5042 = vadd.f32 %v5003, %v5030
    %v5043 = vadd.f32 %v5004, %v5030
    %v5044 = vadd.f32 %v5005, %v5030
    %v5045 = vadd.f32 %v5006, %v5030
    %v5046 = vadd.f32 %v5007, %v5030
    %v5047 = vadd.f32 %v5008, %v5030
    %v5048 = vadd.f32 %v5009, %v5030
    %v5049 = vadd.f32 %v5010, %v5030
    %v5050 = vadd.f32 %v5011, %v5030
    %v5051 = vadd.f32 %v5012, %v5030
    %v5052 = vadd.f32 %v5013, %v5030
    %v5053 = vadd.f32 %v5014, %v5030
    %v5054 = vadd.f32 %v5015, %v5030
    %v5055 = vadd.f32 %v5016, %v5030
    %v5056 = vadd.f32 %v5017, %v5030
    %v5057 = vadd.f32 %v5018, %v5030
    %v5058 = vadd.f32 %v5019, %v5030
    %v5059 = vadd.f32 %v5020, %v5030
    %v5060 = vadd.f32 %v5021, %v5030
    %v5061 = vadd.f32 %v5022, %v5030
    %v5062 = vadd.f32 %v5023, %v5030
    %v5063 = vadd.f32 %v5024, %v5030
    %v5064 = vmax.f32 %v5032, 0.0
    %v5065 = vmax.f32 %v5033, 0.0
    %v5066 = vmax.f32 %v5034, 0.0
    %v5067 = vmax.f32 %v5035, 0.0
    %v5068 = vmax.f32 %v5036, 0.0
    %v5069 = vmax.f32 %v5037, 0.0
    %v5070 = vmax.f32 %v5038, 0.0
    %v5071 = vmax.f32 %v5039, 0.0
    %v5072 = vmax.f32 %v5040, 0.0
    %v5073 = vmax.f32 %v5041, 0.0
    %v5074 = vmax.f32 %v5042, 0.0
    %v5075 = vmax.f32 %v5043, 0.0
    %v5076 = vmax.f32 %v5044, 0.0
    %v5077 = vmax.f32 %v5045, 0.0
    %v5078 = vmax.f32 %v5046, 0.0
    %v5079 = vmax.f32 %v5047, 0.0
    %v5080 = vmax.f32 %v5048, 0.0
    %v5081 = vmax.f32 %v5049, 0.0
    %v5082 = vmax.f32 %v5050, 0.0
    %v5083 = vmax.f32 %v5051, 0.0
    %v5084 = vmax.f32 %v5052, 0.0
    %v5085 = vmax.f32 %v5053, 0.0
    %v5086 = vmax.f32 %v5054, 0.0
    %v5087 = vmax.f32 %v5055, 0.0
    %v5088 = vmax.f32 %v5056, 0.0
    %v5089 = vmax.f32 %v5057, 0.0
    %v5090 = vmax.f32 %v5058, 0.0
    %v5091 = vmax.f32 %v5059, 0.0
    %v5092 = vmax.f32 %v5060, 0.0
    %v5093 = vmax.f32 %v5061, 0.0
    %v5094 = vmax.f32 %v5062, 0.0
    %v5095 = vmax.f32 %v5063, 0.0
    %v5096 = vpack.c.bf16 %v5065, %v5064
    %v5097 = vpack.c.bf16 %v5067, %v5066
    %v5098 = vpack.c.bf16 %v5069, %v5068
    %v5099 = vpack.c.bf16 %v5071, %v5070
    %v5100 = vpack.c.bf16 %v5073, %v5072
    %v5101 = vpack.c.bf16 %v5075, %v5074
    %v5102 = vpack.c.bf16 %v5077, %v5076
    %v5103 = vpack.c.bf16 %v5079, %v5078
    %v5104 = vpack.c.bf16 %v5081, %v5080
    %v5105 = vpack.c.bf16 %v5083, %v5082
    %v5106 = vpack.c.bf16 %v5085, %v5084
    %v5107 = vpack.c.bf16 %v5087, %v5086
    %v5108 = vpack.c.bf16 %v5089, %v5088
    %v5109 = vpack.c.bf16 %v5091, %v5090
    %v5110 = vpack.c.bf16 %v5093, %v5092
    %v5111 = vpack.c.bf16 %v5095, %v5094
    %v5112 = vld [vmem:[%s2] sm:$0xff]
    %v5113 = vld [vmem:[%s2 + $0x8] sm:$0xff]
    %v5114 = vld [vmem:[%s2 + $0x10] sm:$0xff]
    %v5115 = vld [vmem:[%s2 + $0x18] sm:$0xff]
    %v5116 = vld [vmem:[%s2 + $0x20] sm:$0xff]
    %v5117 = vld [vmem:[%s2 + $0x28] sm:$0xff]
    %v5118 = vld [vmem:[%s2 + $0x30] sm:$0xff]
    %v5119 = vld [vmem:[%s2 + $0x38] sm:$0xff]
    %v5120 = vld [vmem:[%s2 + $0x40] sm:$0xff]
    %v5121 = vld [vmem:[%s2 + $0x48] sm:$0xff]
    %v5122 = vld [vmem:[%s2 + $0x50] sm:$0xff]
    %v5123 = vld [vmem:[%s2 + $0x58] sm:$0xff]
    %v5124 = vld [vmem:[%s2 + $0x60] sm:$0xff]
    %v5125 = vld [vmem:[%s2 + $0x68] sm:$0xff]
    %v5126 = vld [vmem:[%s2 + $0x70] sm:$0xff]
    %v5127 = vld [vmem:[%s2 + $0x78] sm:$0xff]
    %s5128 = scalar_lea.vmem %s0, 216
    %v5129 = vld [vmem:[%s5128] sm:$0xf]
    %v5130 = vld [vmem:[%s5128 + $0x4] sm:$0xf]
    %v5131 = vld [vmem:[%s5128 + $0xc] sm:$0xf]
    %v5132 = vld [vmem:[%s5128 + $0x10] sm:$0xf]
    %v5133 = vld [vmem:[%s5128 + $0x18] sm:$0xf]
    %v5134 = vld [vmem:[%s5128 + $0x1c] sm:$0xf]
    %v5135 = vld [vmem:[%s5128 + $0x24] sm:$0xf]
    %v5136 = vld [vmem:[%s5128 + $0x28] sm:$0xf]
    %v5137 = vld [vmem:[%s5128 + $0x30] sm:$0xf]
    %v5138 = vld [vmem:[%s5128 + $0x34] sm:$0xf]
    %v5139 = vld [vmem:[%s5128 + $0x3c] sm:$0xf]
    %v5140 = vld [vmem:[%s5128 + $0x40] sm:$0xf]
    %v5141 = vld [vmem:[%s5128 + $0x48] sm:$0xf]
    %v5142 = vld [vmem:[%s5128 + $0x4c] sm:$0xf]
    %v5143 = vld [vmem:[%s5128 + $0x54] sm:$0xf]
    %v5144 = vld [vmem:[%s5128 + $0x58] sm:$0xf]
    %v5145 = vld [vmem:[%s5128 + $0x60] sm:$0xf]
    %v5146 = vld [vmem:[%s5128 + $0x64] sm:$0xf]
    %v5147 = vld [vmem:[%s5128 + $0x6c] sm:$0xf]
    %v5148 = vld [vmem:[%s5128 + $0x70] sm:$0xf]
    %v5149 = vld [vmem:[%s5128 + $0x78] sm:$0xf]
    %v5150 = vld [vmem:[%s5128 + $0x7c] sm:$0xf]
    %v5151 = vld [vmem:[%s5128 + $0x84] sm:$0xf]
    %v5152 = vld [vmem:[%s5128 + $0x88] sm:$0xf]
    %v5153 = vld [vmem:[%s5128 + $0x90] sm:$0xf]
    %v5154 = vld [vmem:[%s5128 + $0x94] sm:$0xf]
    %v5155 = vld [vmem:[%s5128 + $0x9c] sm:$0xf]
    %v5156 = vld [vmem:[%s5128 + $0xa0] sm:$0xf]
    %v5157 = vld [vmem:[%s5128 + $0xa8] sm:$0xf]
    %v5158 = vld [vmem:[%s5128 + $0xac] sm:$0xf]
    %v5159 = vld [vmem:[%s5128 + $0xb4] sm:$0xf]
    %v5160 = vld [vmem:[%s5128 + $0xb8] sm:$0xf]
    %5161 = vst [vmem:[#allocation2] sm:$0xf] %v5129
    %5162 = vst [vmem:[#allocation2 + $0x24] sm:$0xf] %v5130
    %5163 = vst [vmem:[#allocation2 + $0x48] sm:$0xf] %v5131
    %5164 = vst [vmem:[#allocation2 + $0x6c] sm:$0xf] %v5132
    %5165 = vst [vmem:[#allocation2 + $0x90] sm:$0xf] %v5133
    %5166 = vst [vmem:[#allocation2 + $0xb4] sm:$0xf] %v5134
    %5167 = vst [vmem:[#allocation2 + $0xd8] sm:$0xf] %v5135
    %5168 = vst [vmem:[#allocation2 + $0xfc] sm:$0xf] %v5136
    %5169 = vst [vmem:[#allocation2 + $0x120] sm:$0xf] %v5137
    %5170 = vst [vmem:[#allocation2 + $0x144] sm:$0xf] %v5138
    %5171 = vst [vmem:[#allocation2 + $0x168] sm:$0xf] %v5139
    %5172 = vst [vmem:[#allocation2 + $0x18c] sm:$0xf] %v5140
    %5173 = vst [vmem:[#allocation2 + $0x1b0] sm:$0xf] %v5141
    %5174 = vst [vmem:[#allocation2 + $0x1d4] sm:$0xf] %v5142
    %5175 = vst [vmem:[#allocation2 + $0x1f8] sm:$0xf] %v5143
    %5176 = vst [vmem:[#allocation2 + $0x21c] sm:$0xf] %v5144
    %5177 = vst [vmem:[#allocation2 + $0x240] sm:$0xf] %v5145
    %5178 = vst [vmem:[#allocation2 + $0x264] sm:$0xf] %v5146
    %5179 = vst [vmem:[#allocation2 + $0x288] sm:$0xf] %v5147
    %5180 = vst [vmem:[#allocation2 + $0x2ac] sm:$0xf] %v5148
    %5181 = vst [vmem:[#allocation2 + $0x2d0] sm:$0xf] %v5149
    %5182 = vst [vmem:[#allocation2 + $0x2f4] sm:$0xf] %v5150
    %5183 = vst [vmem:[#allocation2 + $0x318] sm:$0xf] %v5151
    %5184 = vst [vmem:[#allocation2 + $0x33c] sm:$0xf] %v5152
    %5185 = vst [vmem:[#allocation2 + $0x360] sm:$0xf] %v5153
    %5186 = vst [vmem:[#allocation2 + $0x384] sm:$0xf] %v5154
    %5187 = vst [vmem:[#allocation2 + $0x3a8] sm:$0xf] %v5155
    %5188 = vst [vmem:[#allocation2 + $0x3cc] sm:$0xf] %v5156
    %5189 = vst [vmem:[#allocation2 + $0x3f0] sm:$0xf] %v5157
    %5190 = vst [vmem:[#allocation2 + $0x414] sm:$0xf] %v5158
    %5191 = vst [vmem:[#allocation2 + $0x438] sm:$0xf] %v5159
    %5192 = vst [vmem:[#allocation2 + $0x45c] sm:$0xf] %v5160
    %v5193 = vld [vmem:[%s5128] sm:$0xf]
    %v5194 = vld [vmem:[%s5128 + $0x4] sm:$0xf]
    %v5195 = vld [vmem:[%s5128 + $0x8] sm:$0x1]
    %v5196 = vld [vmem:[%s5128 + $0xc] sm:$0xf]
    %v5197 = vld [vmem:[%s5128 + $0x10] sm:$0xf]
    %v5198 = vld [vmem:[%s5128 + $0x14] sm:$0x1]
    %v5199 = vld [vmem:[%s5128 + $0x18] sm:$0xf]
    %v5200 = vld [vmem:[%s5128 + $0x1c] sm:$0xf]
    %v5201 = vld [vmem:[%s5128 + $0x20] sm:$0x1]
    %v5202 = vld [vmem:[%s5128 + $0x24] sm:$0xf]
    %v5203 = vld [vmem:[%s5128 + $0x28] sm:$0xf]
    %v5204 = vld [vmem:[%s5128 + $0x2c] sm:$0x1]
    %v5205 = vld [vmem:[%s5128 + $0x30] sm:$0xf]
    %v5206 = vld [vmem:[%s5128 + $0x34] sm:$0xf]
    %v5207 = vld [vmem:[%s5128 + $0x38] sm:$0x1]
    %v5208 = vld [vmem:[%s5128 + $0x3c] sm:$0xf]
    %v5209 = vld [vmem:[%s5128 + $0x40] sm:$0xf]
    %v5210 = vld [vmem:[%s5128 + $0x44] sm:$0x1]
    %v5211 = vld [vmem:[%s5128 + $0x48] sm:$0xf]
    %v5212 = vld [vmem:[%s5128 + $0x4c] sm:$0xf]
    %v5213 = vld [vmem:[%s5128 + $0x50] sm:$0x1]
    %v5214 = vld [vmem:[%s5128 + $0x54] sm:$0xf]
    %v5215 = vld [vmem:[%s5128 + $0x58] sm:$0xf]
    %v5216 = vld [vmem:[%s5128 + $0x5c] sm:$0x1]
    %v5217 = vld [vmem:[%s5128 + $0x60] sm:$0xf]
    %v5218 = vld [vmem:[%s5128 + $0x64] sm:$0xf]
    %v5219 = vld [vmem:[%s5128 + $0x68] sm:$0x1]
    %v5220 = vld [vmem:[%s5128 + $0x6c] sm:$0xf]
    %v5221 = vld [vmem:[%s5128 + $0x70] sm:$0xf]
    %v5222 = vld [vmem:[%s5128 + $0x74] sm:$0x1]
    %v5223 = vld [vmem:[%s5128 + $0x78] sm:$0xf]
    %v5224 = vld [vmem:[%s5128 + $0x7c] sm:$0xf]
    %v5225 = vld [vmem:[%s5128 + $0x80] sm:$0x1]
    %v5226 = vld [vmem:[%s5128 + $0x84] sm:$0xf]
    %v5227 = vld [vmem:[%s5128 + $0x88] sm:$0xf]
    %v5228 = vld [vmem:[%s5128 + $0x8c] sm:$0x1]
    %v5229 = vld [vmem:[%s5128 + $0x90] sm:$0xf]
    %v5230 = vld [vmem:[%s5128 + $0x94] sm:$0xf]
    %v5231 = vld [vmem:[%s5128 + $0x98] sm:$0x1]
    %v5232 = vld [vmem:[%s5128 + $0x9c] sm:$0xf]
    %v5233 = vld [vmem:[%s5128 + $0xa0] sm:$0xf]
    %v5234 = vld [vmem:[%s5128 + $0xa4] sm:$0x1]
    %v5235 = vld [vmem:[%s5128 + $0xa8] sm:$0xf]
    %v5236 = vld [vmem:[%s5128 + $0xac] sm:$0xf]
    %v5237 = vld [vmem:[%s5128 + $0xb0] sm:$0x1]
    %v5238 = vld [vmem:[%s5128 + $0xb4] sm:$0xf]
    %v5239 = vld [vmem:[%s5128 + $0xb8] sm:$0xf]
    %v5240 = vld [vmem:[%s5128 + $0xbc] sm:$0x1]
    %v5242 = vshrl.u32 %v5193, 16
    %v5244 = vrot.slane %v5242, 4
    %v5245 = vshll.u32 %v5193, 16
    %v5247 = vrot.slane %v5245, 5
    %v5248 = vor.u32 %v5244, %v5247
    %v5249 = vrot.slane %v5248, 4
    %v5251 = vshll.u32 %v5194, 16
    %v5253 = vrot.slane %v5251, 5
    %v5254 = vsel %vm142, %v5249, %v5253
    %v5255 = vshrl.u32 %v5194, 16
    %v5257 = vrot.slane %v5255, 4
    %v5258 = vor.u32 %v5257, %v5253
    %v5259 = vrot.slane %v5258, 4
    %v5261 = vshll.u32 %v5195, 16
    %v5263 = vrot.slane %v5261, 5
    %v5264 = vsel %vm142, %v5259, %v5263
    %v5266 = vshrl.u32 %v5196, 16
    %v5268 = vrot.slane %v5266, 4
    %v5269 = vshll.u32 %v5196, 16
    %v5271 = vrot.slane %v5269, 5
    %v5272 = vor.u32 %v5268, %v5271
    %v5273 = vrot.slane %v5272, 4
    %v5275 = vshll.u32 %v5197, 16
    %v5277 = vrot.slane %v5275, 5
    %v5278 = vsel %vm142, %v5273, %v5277
    %v5279 = vshrl.u32 %v5197, 16
    %v5281 = vrot.slane %v5279, 4
    %v5282 = vor.u32 %v5281, %v5277
    %v5283 = vrot.slane %v5282, 4
    %v5285 = vshll.u32 %v5198, 16
    %v5287 = vrot.slane %v5285, 5
    %v5288 = vsel %vm142, %v5283, %v5287
    %v5290 = vshrl.u32 %v5199, 16
    %v5292 = vrot.slane %v5290, 4
    %v5293 = vshll.u32 %v5199, 16
    %v5295 = vrot.slane %v5293, 5
    %v5296 = vor.u32 %v5292, %v5295
    %v5297 = vrot.slane %v5296, 4
    %v5299 = vshll.u32 %v5200, 16
    %v5301 = vrot.slane %v5299, 5
    %v5302 = vsel %vm142, %v5297, %v5301
    %v5303 = vshrl.u32 %v5200, 16
    %v5305 = vrot.slane %v5303, 4
    %v5306 = vor.u32 %v5305, %v5301
    %v5307 = vrot.slane %v5306, 4
    %v5309 = vshll.u32 %v5201, 16
    %v5311 = vrot.slane %v5309, 5
    %v5312 = vsel %vm142, %v5307, %v5311
    %v5314 = vshrl.u32 %v5202, 16
    %v5316 = vrot.slane %v5314, 4
    %v5317 = vshll.u32 %v5202, 16
    %v5319 = vrot.slane %v5317, 5
    %v5320 = vor.u32 %v5316, %v5319
    %v5321 = vrot.slane %v5320, 4
    %v5323 = vshll.u32 %v5203, 16
    %v5325 = vrot.slane %v5323, 5
    %v5326 = vsel %vm142, %v5321, %v5325
    %v5327 = vshrl.u32 %v5203, 16
    %v5329 = vrot.slane %v5327, 4
    %v5330 = vor.u32 %v5329, %v5325
    %v5331 = vrot.slane %v5330, 4
    %v5333 = vshll.u32 %v5204, 16
    %v5335 = vrot.slane %v5333, 5
    %v5336 = vsel %vm142, %v5331, %v5335
    %v5338 = vshrl.u32 %v5205, 16
    %v5340 = vrot.slane %v5338, 4
    %v5341 = vshll.u32 %v5205, 16
    %v5343 = vrot.slane %v5341, 5
    %v5344 = vor.u32 %v5340, %v5343
    %v5345 = vrot.slane %v5344, 4
    %v5347 = vshll.u32 %v5206, 16
    %v5349 = vrot.slane %v5347, 5
    %v5350 = vsel %vm142, %v5345, %v5349
    %v5351 = vshrl.u32 %v5206, 16
    %v5353 = vrot.slane %v5351, 4
    %v5354 = vor.u32 %v5353, %v5349
    %v5355 = vrot.slane %v5354, 4
    %v5357 = vshll.u32 %v5207, 16
    %v5359 = vrot.slane %v5357, 5
    %v5360 = vsel %vm142, %v5355, %v5359
    %v5362 = vshrl.u32 %v5208, 16
    %v5364 = vrot.slane %v5362, 4
    %v5365 = vshll.u32 %v5208, 16
    %v5367 = vrot.slane %v5365, 5
    %v5368 = vor.u32 %v5364, %v5367
    %v5369 = vrot.slane %v5368, 4
    %v5371 = vshll.u32 %v5209, 16
    %v5373 = vrot.slane %v5371, 5
    %v5374 = vsel %vm142, %v5369, %v5373
    %v5375 = vshrl.u32 %v5209, 16
    %v5377 = vrot.slane %v5375, 4
    %v5378 = vor.u32 %v5377, %v5373
    %v5379 = vrot.slane %v5378, 4
    %v5381 = vshll.u32 %v5210, 16
    %v5383 = vrot.slane %v5381, 5
    %v5384 = vsel %vm142, %v5379, %v5383
    %v5386 = vshrl.u32 %v5211, 16
    %v5388 = vrot.slane %v5386, 4
    %v5389 = vshll.u32 %v5211, 16
    %v5391 = vrot.slane %v5389, 5
    %v5392 = vor.u32 %v5388, %v5391
    %v5393 = vrot.slane %v5392, 4
    %v5395 = vshll.u32 %v5212, 16
    %v5397 = vrot.slane %v5395, 5
    %v5398 = vsel %vm142, %v5393, %v5397
    %v5399 = vshrl.u32 %v5212, 16
    %v5401 = vrot.slane %v5399, 4
    %v5402 = vor.u32 %v5401, %v5397
    %v5403 = vrot.slane %v5402, 4
    %v5405 = vshll.u32 %v5213, 16
    %v5407 = vrot.slane %v5405, 5
    %v5408 = vsel %vm142, %v5403, %v5407
    %v5410 = vshrl.u32 %v5214, 16
    %v5412 = vrot.slane %v5410, 4
    %v5413 = vshll.u32 %v5214, 16
    %v5415 = vrot.slane %v5413, 5
    %v5416 = vor.u32 %v5412, %v5415
    %v5417 = vrot.slane %v5416, 4
    %v5419 = vshll.u32 %v5215, 16
    %v5421 = vrot.slane %v5419, 5
    %v5422 = vsel %vm142, %v5417, %v5421
    %v5423 = vshrl.u32 %v5215, 16
    %v5425 = vrot.slane %v5423, 4
    %v5426 = vor.u32 %v5425, %v5421
    %v5427 = vrot.slane %v5426, 4
    %v5429 = vshll.u32 %v5216, 16
    %v5431 = vrot.slane %v5429, 5
    %v5432 = vsel %vm142, %v5427, %v5431
    %v5434 = vshrl.u32 %v5217, 16
    %v5436 = vrot.slane %v5434, 4
    %v5437 = vshll.u32 %v5217, 16
    %v5439 = vrot.slane %v5437, 5
    %v5440 = vor.u32 %v5436, %v5439
    %v5441 = vrot.slane %v5440, 4
    %v5443 = vshll.u32 %v5218, 16
    %v5445 = vrot.slane %v5443, 5
    %v5446 = vsel %vm142, %v5441, %v5445
    %v5447 = vshrl.u32 %v5218, 16
    %v5449 = vrot.slane %v5447, 4
    %v5450 = vor.u32 %v5449, %v5445
    %v5451 = vrot.slane %v5450, 4
    %v5453 = vshll.u32 %v5219, 16
    %v5455 = vrot.slane %v5453, 5
    %v5456 = vsel %vm142, %v5451, %v5455
    %v5458 = vshrl.u32 %v5220, 16
    %v5460 = vrot.slane %v5458, 4
    %v5461 = vshll.u32 %v5220, 16
    %v5463 = vrot.slane %v5461, 5
    %v5464 = vor.u32 %v5460, %v5463
    %v5465 = vrot.slane %v5464, 4
    %v5467 = vshll.u32 %v5221, 16
    %v5469 = vrot.slane %v5467, 5
    %v5470 = vsel %vm142, %v5465, %v5469
    %v5471 = vshrl.u32 %v5221, 16
    %v5473 = vrot.slane %v5471, 4
    %v5474 = vor.u32 %v5473, %v5469
    %v5475 = vrot.slane %v5474, 4
    %v5477 = vshll.u32 %v5222, 16
    %v5479 = vrot.slane %v5477, 5
    %v5480 = vsel %vm142, %v5475, %v5479
    %v5482 = vshrl.u32 %v5223, 16
    %v5484 = vrot.slane %v5482, 4
    %v5485 = vshll.u32 %v5223, 16
    %v5487 = vrot.slane %v5485, 5
    %v5488 = vor.u32 %v5484, %v5487
    %v5489 = vrot.slane %v5488, 4
    %v5491 = vshll.u32 %v5224, 16
    %v5493 = vrot.slane %v5491, 5
    %v5494 = vsel %vm142, %v5489, %v5493
    %v5495 = vshrl.u32 %v5224, 16
    %v5497 = vrot.slane %v5495, 4
    %v5498 = vor.u32 %v5497, %v5493
    %v5499 = vrot.slane %v5498, 4
    %v5501 = vshll.u32 %v5225, 16
    %v5503 = vrot.slane %v5501, 5
    %v5504 = vsel %vm142, %v5499, %v5503
    %v5506 = vshrl.u32 %v5226, 16
    %v5508 = vrot.slane %v5506, 4
    %v5509 = vshll.u32 %v5226, 16
    %v5511 = vrot.slane %v5509, 5
    %v5512 = vor.u32 %v5508, %v5511
    %v5513 = vrot.slane %v5512, 4
    %v5515 = vshll.u32 %v5227, 16
    %v5517 = vrot.slane %v5515, 5
    %v5518 = vsel %vm142, %v5513, %v5517
    %v5519 = vshrl.u32 %v5227, 16
    %v5521 = vrot.slane %v5519, 4
    %v5522 = vor.u32 %v5521, %v5517
    %v5523 = vrot.slane %v5522, 4
    %v5525 = vshll.u32 %v5228, 16
    %v5527 = vrot.slane %v5525, 5
    %v5528 = vsel %vm142, %v5523, %v5527
    %v5530 = vshrl.u32 %v5229, 16
    %v5532 = vrot.slane %v5530, 4
    %v5533 = vshll.u32 %v5229, 16
    %v5535 = vrot.slane %v5533, 5
    %v5536 = vor.u32 %v5532, %v5535
    %v5537 = vrot.slane %v5536, 4
    %v5539 = vshll.u32 %v5230, 16
    %v5541 = vrot.slane %v5539, 5
    %v5542 = vsel %vm142, %v5537, %v5541
    %v5543 = vshrl.u32 %v5230, 16
    %v5545 = vrot.slane %v5543, 4
    %v5546 = vor.u32 %v5545, %v5541
    %v5547 = vrot.slane %v5546, 4
    %v5549 = vshll.u32 %v5231, 16
    %v5551 = vrot.slane %v5549, 5
    %v5552 = vsel %vm142, %v5547, %v5551
    %v5554 = vshrl.u32 %v5232, 16
    %v5556 = vrot.slane %v5554, 4
    %v5557 = vshll.u32 %v5232, 16
    %v5559 = vrot.slane %v5557, 5
    %v5560 = vor.u32 %v5556, %v5559
    %v5561 = vrot.slane %v5560, 4
    %v5563 = vshll.u32 %v5233, 16
    %v5565 = vrot.slane %v5563, 5
    %v5566 = vsel %vm142, %v5561, %v5565
    %v5567 = vshrl.u32 %v5233, 16
    %v5569 = vrot.slane %v5567, 4
    %v5570 = vor.u32 %v5569, %v5565
    %v5571 = vrot.slane %v5570, 4
    %v5573 = vshll.u32 %v5234, 16
    %v5575 = vrot.slane %v5573, 5
    %v5576 = vsel %vm142, %v5571, %v5575
    %v5578 = vshrl.u32 %v5235, 16
    %v5580 = vrot.slane %v5578, 4
    %v5581 = vshll.u32 %v5235, 16
    %v5583 = vrot.slane %v5581, 5
    %v5584 = vor.u32 %v5580, %v5583
    %v5585 = vrot.slane %v5584, 4
    %v5587 = vshll.u32 %v5236, 16
    %v5589 = vrot.slane %v5587, 5
    %v5590 = vsel %vm142, %v5585, %v5589
    %v5591 = vshrl.u32 %v5236, 16
    %v5593 = vrot.slane %v5591, 4
    %v5594 = vor.u32 %v5593, %v5589
    %v5595 = vrot.slane %v5594, 4
    %v5597 = vshll.u32 %v5237, 16
    %v5599 = vrot.slane %v5597, 5
    %v5600 = vsel %vm142, %v5595, %v5599
    %v5602 = vshrl.u32 %v5238, 16
    %v5604 = vrot.slane %v5602, 4
    %v5605 = vshll.u32 %v5238, 16
    %v5607 = vrot.slane %v5605, 5
    %v5608 = vor.u32 %v5604, %v5607
    %v5609 = vrot.slane %v5608, 4
    %v5611 = vshll.u32 %v5239, 16
    %v5613 = vrot.slane %v5611, 5
    %v5614 = vsel %vm142, %v5609, %v5613
    %v5615 = vshrl.u32 %v5239, 16
    %v5617 = vrot.slane %v5615, 4
    %v5618 = vor.u32 %v5617, %v5613
    %v5619 = vrot.slane %v5618, 4
    %v5621 = vshll.u32 %v5240, 16
    %v5623 = vrot.slane %v5621, 5
    %v5624 = vsel %vm142, %v5619, %v5623
    %5657 = vst [vmem:[#allocation2 + $0x4] sm:$0xf] %v5254
    %5658 = vst [vmem:[#allocation2 + $0x28] sm:$0xf] %v5264
    %5659 = vst [vmem:[#allocation2 + $0x4c] sm:$0xf] %v5278
    %5660 = vst [vmem:[#allocation2 + $0x70] sm:$0xf] %v5288
    %5661 = vst [vmem:[#allocation2 + $0x94] sm:$0xf] %v5302
    %5662 = vst [vmem:[#allocation2 + $0xb8] sm:$0xf] %v5312
    %5663 = vst [vmem:[#allocation2 + $0xdc] sm:$0xf] %v5326
    %5664 = vst [vmem:[#allocation2 + $0x100] sm:$0xf] %v5336
    %5665 = vst [vmem:[#allocation2 + $0x124] sm:$0xf] %v5350
    %5666 = vst [vmem:[#allocation2 + $0x148] sm:$0xf] %v5360
    %5667 = vst [vmem:[#allocation2 + $0x16c] sm:$0xf] %v5374
    %5668 = vst [vmem:[#allocation2 + $0x190] sm:$0xf] %v5384
    %5669 = vst [vmem:[#allocation2 + $0x1b4] sm:$0xf] %v5398
    %5670 = vst [vmem:[#allocation2 + $0x1d8] sm:$0xf] %v5408
    %5671 = vst [vmem:[#allocation2 + $0x1fc] sm:$0xf] %v5422
    %5672 = vst [vmem:[#allocation2 + $0x220] sm:$0xf] %v5432
    %5673 = vst [vmem:[#allocation2 + $0x244] sm:$0xf] %v5446
    %5674 = vst [vmem:[#allocation2 + $0x268] sm:$0xf] %v5456
    %5675 = vst [vmem:[#allocation2 + $0x28c] sm:$0xf] %v5470
    %5676 = vst [vmem:[#allocation2 + $0x2b0] sm:$0xf] %v5480
    %5677 = vst [vmem:[#allocation2 + $0x2d4] sm:$0xf] %v5494
    %5678 = vst [vmem:[#allocation2 + $0x2f8] sm:$0xf] %v5504
    %5679 = vst [vmem:[#allocation2 + $0x31c] sm:$0xf] %v5518
    %5680 = vst [vmem:[#allocation2 + $0x340] sm:$0xf] %v5528
    %5681 = vst [vmem:[#allocation2 + $0x364] sm:$0xf] %v5542
    %5682 = vst [vmem:[#allocation2 + $0x388] sm:$0xf] %v5552
    %5683 = vst [vmem:[#allocation2 + $0x3ac] sm:$0xf] %v5566
    %5684 = vst [vmem:[#allocation2 + $0x3d0] sm:$0xf] %v5576
    %5685 = vst [vmem:[#allocation2 + $0x3f4] sm:$0xf] %v5590
    %5686 = vst [vmem:[#allocation2 + $0x418] sm:$0xf] %v5600
    %5687 = vst [vmem:[#allocation2 + $0x43c] sm:$0xf] %v5614
    %5688 = vst [vmem:[#allocation2 + $0x460] sm:$0xf] %v5624
    %v5689 = vld [vmem:[%s5128] sm:$0xe]
    %v5690 = vld [vmem:[%s5128 + $0x4] sm:$0xf]
    %v5691 = vld [vmem:[%s5128 + $0x8] sm:$0x1]
    %v5692 = vld [vmem:[%s5128 + $0xc] sm:$0xe]
    %v5693 = vld [vmem:[%s5128 + $0x10] sm:$0xf]
    %v5694 = vld [vmem:[%s5128 + $0x14] sm:$0x1]
    %v5695 = vld [vmem:[%s5128 + $0x18] sm:$0xe]
    %v5696 = vld [vmem:[%s5128 + $0x1c] sm:$0xf]
    %v5697 = vld [vmem:[%s5128 + $0x20] sm:$0x1]
    %v5698 = vld [vmem:[%s5128 + $0x24] sm:$0xe]
    %v5699 = vld [vmem:[%s5128 + $0x28] sm:$0xf]
    %v5700 = vld [vmem:[%s5128 + $0x2c] sm:$0x1]
    %v5701 = vld [vmem:[%s5128 + $0x30] sm:$0xe]
    %v5702 = vld [vmem:[%s5128 + $0x34] sm:$0xf]
    %v5703 = vld [vmem:[%s5128 + $0x38] sm:$0x1]
    %v5704 = vld [vmem:[%s5128 + $0x3c] sm:$0xe]
    %v5705 = vld [vmem:[%s5128 + $0x40] sm:$0xf]
    %v5706 = vld [vmem:[%s5128 + $0x44] sm:$0x1]
    %v5707 = vld [vmem:[%s5128 + $0x48] sm:$0xe]
    %v5708 = vld [vmem:[%s5128 + $0x4c] sm:$0xf]
    %v5709 = vld [vmem:[%s5128 + $0x50] sm:$0x1]
    %v5710 = vld [vmem:[%s5128 + $0x54] sm:$0xe]
    %v5711 = vld [vmem:[%s5128 + $0x58] sm:$0xf]
    %v5712 = vld [vmem:[%s5128 + $0x5c] sm:$0x1]
    %v5713 = vld [vmem:[%s5128 + $0x60] sm:$0xe]
    %v5714 = vld [vmem:[%s5128 + $0x64] sm:$0xf]
    %v5715 = vld [vmem:[%s5128 + $0x68] sm:$0x1]
    %v5716 = vld [vmem:[%s5128 + $0x6c] sm:$0xe]
    %v5717 = vld [vmem:[%s5128 + $0x70] sm:$0xf]
    %v5718 = vld [vmem:[%s5128 + $0x74] sm:$0x1]
    %v5719 = vld [vmem:[%s5128 + $0x78] sm:$0xe]
    %v5720 = vld [vmem:[%s5128 + $0x7c] sm:$0xf]
    %v5721 = vld [vmem:[%s5128 + $0x80] sm:$0x1]
    %v5722 = vld [vmem:[%s5128 + $0x84] sm:$0xe]
    %v5723 = vld [vmem:[%s5128 + $0x88] sm:$0xf]
    %v5724 = vld [vmem:[%s5128 + $0x8c] sm:$0x1]
    %v5725 = vld [vmem:[%s5128 + $0x90] sm:$0xe]
    %v5726 = vld [vmem:[%s5128 + $0x94] sm:$0xf]
    %v5727 = vld [vmem:[%s5128 + $0x98] sm:$0x1]
    %v5728 = vld [vmem:[%s5128 + $0x9c] sm:$0xe]
    %v5729 = vld [vmem:[%s5128 + $0xa0] sm:$0xf]
    %v5730 = vld [vmem:[%s5128 + $0xa4] sm:$0x1]
    %v5731 = vld [vmem:[%s5128 + $0xa8] sm:$0xe]
    %v5732 = vld [vmem:[%s5128 + $0xac] sm:$0xf]
    %v5733 = vld [vmem:[%s5128 + $0xb0] sm:$0x1]
    %v5734 = vld [vmem:[%s5128 + $0xb4] sm:$0xe]
    %v5735 = vld [vmem:[%s5128 + $0xb8] sm:$0xf]
    %v5736 = vld [vmem:[%s5128 + $0xbc] sm:$0x1]
    %v5785 = vrot.slane %v5689, 5
    %v5786 = vrot.slane %v5785, 4
    %v5787 = vrot.slane %v5690, 5
    %v5788 = vsel %vm689, %v5786, %v5787
    %v5789 = vrot.slane %v5787, 4
    %v5790 = vrot.slane %v5691, 5
    %v5791 = vsel %vm689, %v5789, %v5790
    %v5792 = vrot.slane %v5692, 5
    %v5793 = vrot.slane %v5792, 4
    %v5794 = vrot.slane %v5693, 5
    %v5795 = vsel %vm689, %v5793, %v5794
    %v5796 = vrot.slane %v5794, 4
    %v5797 = vrot.slane %v5694, 5
    %v5798 = vsel %vm689, %v5796, %v5797
    %v5799 = vrot.slane %v5695, 5
    %v5800 = vrot.slane %v5799, 4
    %v5801 = vrot.slane %v5696, 5
    %v5802 = vsel %vm689, %v5800, %v5801
    %v5803 = vrot.slane %v5801, 4
    %v5804 = vrot.slane %v5697, 5
    %v5805 = vsel %vm689, %v5803, %v5804
    %v5806 = vrot.slane %v5698, 5
    %v5807 = vrot.slane %v5806, 4
    %v5808 = vrot.slane %v5699, 5
    %v5809 = vsel %vm689, %v5807, %v5808
    %v5810 = vrot.slane %v5808, 4
    %v5811 = vrot.slane %v5700, 5
    %v5812 = vsel %vm689, %v5810, %v5811
    %v5813 = vrot.slane %v5701, 5
    %v5814 = vrot.slane %v5813, 4
    %v5815 = vrot.slane %v5702, 5
    %v5816 = vsel %vm689, %v5814, %v5815
    %v5817 = vrot.slane %v5815, 4
    %v5818 = vrot.slane %v5703, 5
    %v5819 = vsel %vm689, %v5817, %v5818
    %v5820 = vrot.slane %v5704, 5
    %v5821 = vrot.slane %v5820, 4
    %v5822 = vrot.slane %v5705, 5
    %v5823 = vsel %vm689, %v5821, %v5822
    %v5824 = vrot.slane %v5822, 4
    %v5825 = vrot.slane %v5706, 5
    %v5826 = vsel %vm689, %v5824, %v5825
    %v5827 = vrot.slane %v5707, 5
    %v5828 = vrot.slane %v5827, 4
    %v5829 = vrot.slane %v5708, 5
    %v5830 = vsel %vm689, %v5828, %v5829
    %v5831 = vrot.slane %v5829, 4
    %v5832 = vrot.slane %v5709, 5
    %v5833 = vsel %vm689, %v5831, %v5832
    %v5834 = vrot.slane %v5710, 5
    %v5835 = vrot.slane %v5834, 4
    %v5836 = vrot.slane %v5711, 5
    %v5837 = vsel %vm689, %v5835, %v5836
    %v5838 = vrot.slane %v5836, 4
    %v5839 = vrot.slane %v5712, 5
    %v5840 = vsel %vm689, %v5838, %v5839
    %v5841 = vrot.slane %v5713, 5
    %v5842 = vrot.slane %v5841, 4
    %v5843 = vrot.slane %v5714, 5
    %v5844 = vsel %vm689, %v5842, %v5843
    %v5845 = vrot.slane %v5843, 4
    %v5846 = vrot.slane %v5715, 5
    %v5847 = vsel %vm689, %v5845, %v5846
    %v5848 = vrot.slane %v5716, 5
    %v5849 = vrot.slane %v5848, 4
    %v5850 = vrot.slane %v5717, 5
    %v5851 = vsel %vm689, %v5849, %v5850
    %v5852 = vrot.slane %v5850, 4
    %v5853 = vrot.slane %v5718, 5
    %v5854 = vsel %vm689, %v5852, %v5853
    %v5855 = vrot.slane %v5719, 5
    %v5856 = vrot.slane %v5855, 4
    %v5857 = vrot.slane %v5720, 5
    %v5858 = vsel %vm689, %v5856, %v5857
    %v5859 = vrot.slane %v5857, 4
    %v5860 = vrot.slane %v5721, 5
    %v5861 = vsel %vm689, %v5859, %v5860
    %v5862 = vrot.slane %v5722, 5
    %v5863 = vrot.slane %v5862, 4
    %v5864 = vrot.slane %v5723, 5
    %v5865 = vsel %vm689, %v5863, %v5864
    %v5866 = vrot.slane %v5864, 4
    %v5867 = vrot.slane %v5724, 5
    %v5868 = vsel %vm689, %v5866, %v5867
    %v5869 = vrot.slane %v5725, 5
    %v5870 = vrot.slane %v5869, 4
    %v5871 = vrot.slane %v5726, 5
    %v5872 = vsel %vm689, %v5870, %v5871
    %v5873 = vrot.slane %v5871, 4
    %v5874 = vrot.slane %v5727, 5
    %v5875 = vsel %vm689, %v5873, %v5874
    %v5876 = vrot.slane %v5728, 5
    %v5877 = vrot.slane %v5876, 4
    %v5878 = vrot.slane %v5729, 5
    %v5879 = vsel %vm689, %v5877, %v5878
    %v5880 = vrot.slane %v5878, 4
    %v5881 = vrot.slane %v5730, 5
    %v5882 = vsel %vm689, %v5880, %v5881
    %v5883 = vrot.slane %v5731, 5
    %v5884 = vrot.slane %v5883, 4
    %v5885 = vrot.slane %v5732, 5
    %v5886 = vsel %vm689, %v5884, %v5885
    %v5887 = vrot.slane %v5885, 4
    %v5888 = vrot.slane %v5733, 5
    %v5889 = vsel %vm689, %v5887, %v5888
    %v5890 = vrot.slane %v5734, 5
    %v5891 = vrot.slane %v5890, 4
    %v5892 = vrot.slane %v5735, 5
    %v5893 = vsel %vm689, %v5891, %v5892
    %v5894 = vrot.slane %v5892, 4
    %v5895 = vrot.slane %v5736, 5
    %v5896 = vsel %vm689, %v5894, %v5895
    %5929 = vst [vmem:[#allocation2 + $0x8] sm:$0xf] %v5788
    %5930 = vst [vmem:[#allocation2 + $0x2c] sm:$0xf] %v5791
    %5931 = vst [vmem:[#allocation2 + $0x50] sm:$0xf] %v5795
    %5932 = vst [vmem:[#allocation2 + $0x74] sm:$0xf] %v5798
    %5933 = vst [vmem:[#allocation2 + $0x98] sm:$0xf] %v5802
    %5934 = vst [vmem:[#allocation2 + $0xbc] sm:$0xf] %v5805
    %5935 = vst [vmem:[#allocation2 + $0xe0] sm:$0xf] %v5809
    %5936 = vst [vmem:[#allocation2 + $0x104] sm:$0xf] %v5812
    %5937 = vst [vmem:[#allocation2 + $0x128] sm:$0xf] %v5816
    %5938 = vst [vmem:[#allocation2 + $0x14c] sm:$0xf] %v5819
    %5939 = vst [vmem:[#allocation2 + $0x170] sm:$0xf] %v5823
    %5940 = vst [vmem:[#allocation2 + $0x194] sm:$0xf] %v5826
    %5941 = vst [vmem:[#allocation2 + $0x1b8] sm:$0xf] %v5830
    %5942 = vst [vmem:[#allocation2 + $0x1dc] sm:$0xf] %v5833
    %5943 = vst [vmem:[#allocation2 + $0x200] sm:$0xf] %v5837
    %5944 = vst [vmem:[#allocation2 + $0x224] sm:$0xf] %v5840
    %5945 = vst [vmem:[#allocation2 + $0x248] sm:$0xf] %v5844
    %5946 = vst [vmem:[#allocation2 + $0x26c] sm:$0xf] %v5847
    %5947 = vst [vmem:[#allocation2 + $0x290] sm:$0xf] %v5851
    %5948 = vst [vmem:[#allocation2 + $0x2b4] sm:$0xf] %v5854
    %5949 = vst [vmem:[#allocation2 + $0x2d8] sm:$0xf] %v5858
    %5950 = vst [vmem:[#allocation2 + $0x2fc] sm:$0xf] %v5861
    %5951 = vst [vmem:[#allocation2 + $0x320] sm:$0xf] %v5865
    %5952 = vst [vmem:[#allocation2 + $0x344] sm:$0xf] %v5868
    %5953 = vst [vmem:[#allocation2 + $0x368] sm:$0xf] %v5872
    %5954 = vst [vmem:[#allocation2 + $0x38c] sm:$0xf] %v5875
    %5955 = vst [vmem:[#allocation2 + $0x3b0] sm:$0xf] %v5879
    %5956 = vst [vmem:[#allocation2 + $0x3d4] sm:$0xf] %v5882
    %5957 = vst [vmem:[#allocation2 + $0x3f8] sm:$0xf] %v5886
    %5958 = vst [vmem:[#allocation2 + $0x41c] sm:$0xf] %v5889
    %5959 = vst [vmem:[#allocation2 + $0x440] sm:$0xf] %v5893
    %5960 = vst [vmem:[#allocation2 + $0x464] sm:$0xf] %v5896
    %s5961 = scalar_lea.vmem %s0, 228
    %v5962 = vld [vmem:[%s5961] sm:$0xf]
    %v5963 = vld [vmem:[%s5961 + $0x4] sm:$0xf]
    %v5964 = vld [vmem:[%s5961 + $0xc] sm:$0xf]
    %v5965 = vld [vmem:[%s5961 + $0x10] sm:$0xf]
    %v5966 = vld [vmem:[%s5961 + $0x18] sm:$0xf]
    %v5967 = vld [vmem:[%s5961 + $0x1c] sm:$0xf]
    %v5968 = vld [vmem:[%s5961 + $0x24] sm:$0xf]
    %v5969 = vld [vmem:[%s5961 + $0x28] sm:$0xf]
    %v5970 = vld [vmem:[%s5961 + $0x30] sm:$0xf]
    %v5971 = vld [vmem:[%s5961 + $0x34] sm:$0xf]
    %v5972 = vld [vmem:[%s5961 + $0x3c] sm:$0xf]
    %v5973 = vld [vmem:[%s5961 + $0x40] sm:$0xf]
    %v5974 = vld [vmem:[%s5961 + $0x48] sm:$0xf]
    %v5975 = vld [vmem:[%s5961 + $0x4c] sm:$0xf]
    %v5976 = vld [vmem:[%s5961 + $0x54] sm:$0xf]
    %v5977 = vld [vmem:[%s5961 + $0x58] sm:$0xf]
    %v5978 = vld [vmem:[%s5961 + $0x60] sm:$0xf]
    %v5979 = vld [vmem:[%s5961 + $0x64] sm:$0xf]
    %v5980 = vld [vmem:[%s5961 + $0x6c] sm:$0xf]
    %v5981 = vld [vmem:[%s5961 + $0x70] sm:$0xf]
    %v5982 = vld [vmem:[%s5961 + $0x78] sm:$0xf]
    %v5983 = vld [vmem:[%s5961 + $0x7c] sm:$0xf]
    %v5984 = vld [vmem:[%s5961 + $0x84] sm:$0xf]
    %v5985 = vld [vmem:[%s5961 + $0x88] sm:$0xf]
    %v5986 = vld [vmem:[%s5961 + $0x90] sm:$0xf]
    %v5987 = vld [vmem:[%s5961 + $0x94] sm:$0xf]
    %v5988 = vld [vmem:[%s5961 + $0x9c] sm:$0xf]
    %v5989 = vld [vmem:[%s5961 + $0xa0] sm:$0xf]
    %v5990 = vld [vmem:[%s5961 + $0xa8] sm:$0xf]
    %v5991 = vld [vmem:[%s5961 + $0xac] sm:$0xf]
    %v5992 = vld [vmem:[%s5961 + $0xb4] sm:$0xf]
    %v5993 = vld [vmem:[%s5961 + $0xb8] sm:$0xf]
    %5994 = vst [vmem:[#allocation2 + $0xc] sm:$0xf] %v5962
    %5995 = vst [vmem:[#allocation2 + $0x30] sm:$0xf] %v5963
    %5996 = vst [vmem:[#allocation2 + $0x54] sm:$0xf] %v5964
    %5997 = vst [vmem:[#allocation2 + $0x78] sm:$0xf] %v5965
    %5998 = vst [vmem:[#allocation2 + $0x9c] sm:$0xf] %v5966
    %5999 = vst [vmem:[#allocation2 + $0xc0] sm:$0xf] %v5967
    %6000 = vst [vmem:[#allocation2 + $0xe4] sm:$0xf] %v5968
    %6001 = vst [vmem:[#allocation2 + $0x108] sm:$0xf] %v5969
    %6002 = vst [vmem:[#allocation2 + $0x12c] sm:$0xf] %v5970
    %6003 = vst [vmem:[#allocation2 + $0x150] sm:$0xf] %v5971
    %6004 = vst [vmem:[#allocation2 + $0x174] sm:$0xf] %v5972
    %6005 = vst [vmem:[#allocation2 + $0x198] sm:$0xf] %v5973
    %6006 = vst [vmem:[#allocation2 + $0x1bc] sm:$0xf] %v5974
    %6007 = vst [vmem:[#allocation2 + $0x1e0] sm:$0xf] %v5975
    %6008 = vst [vmem:[#allocation2 + $0x204] sm:$0xf] %v5976
    %6009 = vst [vmem:[#allocation2 + $0x228] sm:$0xf] %v5977
    %6010 = vst [vmem:[#allocation2 + $0x24c] sm:$0xf] %v5978
    %6011 = vst [vmem:[#allocation2 + $0x270] sm:$0xf] %v5979
    %6012 = vst [vmem:[#allocation2 + $0x294] sm:$0xf] %v5980
    %6013 = vst [vmem:[#allocation2 + $0x2b8] sm:$0xf] %v5981
    %6014 = vst [vmem:[#allocation2 + $0x2dc] sm:$0xf] %v5982
    %6015 = vst [vmem:[#allocation2 + $0x300] sm:$0xf] %v5983
    %6016 = vst [vmem:[#allocation2 + $0x324] sm:$0xf] %v5984
    %6017 = vst [vmem:[#allocation2 + $0x348] sm:$0xf] %v5985
    %6018 = vst [vmem:[#allocation2 + $0x36c] sm:$0xf] %v5986
    %6019 = vst [vmem:[#allocation2 + $0x390] sm:$0xf] %v5987
    %6020 = vst [vmem:[#allocation2 + $0x3b4] sm:$0xf] %v5988
    %6021 = vst [vmem:[#allocation2 + $0x3d8] sm:$0xf] %v5989
    %6022 = vst [vmem:[#allocation2 + $0x3fc] sm:$0xf] %v5990
    %6023 = vst [vmem:[#allocation2 + $0x420] sm:$0xf] %v5991
    %6024 = vst [vmem:[#allocation2 + $0x444] sm:$0xf] %v5992
    %6025 = vst [vmem:[#allocation2 + $0x468] sm:$0xf] %v5993
    %v6026 = vld [vmem:[%s5961] sm:$0xf]
    %v6027 = vld [vmem:[%s5961 + $0x4] sm:$0xf]
    %v6028 = vld [vmem:[%s5961 + $0x8] sm:$0x1]
    %v6029 = vld [vmem:[%s5961 + $0xc] sm:$0xf]
    %v6030 = vld [vmem:[%s5961 + $0x10] sm:$0xf]
    %v6031 = vld [vmem:[%s5961 + $0x14] sm:$0x1]
    %v6032 = vld [vmem:[%s5961 + $0x18] sm:$0xf]
    %v6033 = vld [vmem:[%s5961 + $0x1c] sm:$0xf]
    %v6034 = vld [vmem:[%s5961 + $0x20] sm:$0x1]
    %v6035 = vld [vmem:[%s5961 + $0x24] sm:$0xf]
    %v6036 = vld [vmem:[%s5961 + $0x28] sm:$0xf]
    %v6037 = vld [vmem:[%s5961 + $0x2c] sm:$0x1]
    %v6038 = vld [vmem:[%s5961 + $0x30] sm:$0xf]
    %v6039 = vld [vmem:[%s5961 + $0x34] sm:$0xf]
    %v6040 = vld [vmem:[%s5961 + $0x38] sm:$0x1]
    %v6041 = vld [vmem:[%s5961 + $0x3c] sm:$0xf]
    %v6042 = vld [vmem:[%s5961 + $0x40] sm:$0xf]
    %v6043 = vld [vmem:[%s5961 + $0x44] sm:$0x1]
    %v6044 = vld [vmem:[%s5961 + $0x48] sm:$0xf]
    %v6045 = vld [vmem:[%s5961 + $0x4c] sm:$0xf]
    %v6046 = vld [vmem:[%s5961 + $0x50] sm:$0x1]
    %v6047 = vld [vmem:[%s5961 + $0x54] sm:$0xf]
    %v6048 = vld [vmem:[%s5961 + $0x58] sm:$0xf]
    %v6049 = vld [vmem:[%s5961 + $0x5c] sm:$0x1]
    %v6050 = vld [vmem:[%s5961 + $0x60] sm:$0xf]
    %v6051 = vld [vmem:[%s5961 + $0x64] sm:$0xf]
    %v6052 = vld [vmem:[%s5961 + $0x68] sm:$0x1]
    %v6053 = vld [vmem:[%s5961 + $0x6c] sm:$0xf]
    %v6054 = vld [vmem:[%s5961 + $0x70] sm:$0xf]
    %v6055 = vld [vmem:[%s5961 + $0x74] sm:$0x1]
    %v6056 = vld [vmem:[%s5961 + $0x78] sm:$0xf]
    %v6057 = vld [vmem:[%s5961 + $0x7c] sm:$0xf]
    %v6058 = vld [vmem:[%s5961 + $0x80] sm:$0x1]
    %v6059 = vld [vmem:[%s5961 + $0x84] sm:$0xf]
    %v6060 = vld [vmem:[%s5961 + $0x88] sm:$0xf]
    %v6061 = vld [vmem:[%s5961 + $0x8c] sm:$0x1]
    %v6062 = vld [vmem:[%s5961 + $0x90] sm:$0xf]
    %v6063 = vld [vmem:[%s5961 + $0x94] sm:$0xf]
    %v6064 = vld [vmem:[%s5961 + $0x98] sm:$0x1]
    %v6065 = vld [vmem:[%s5961 + $0x9c] sm:$0xf]
    %v6066 = vld [vmem:[%s5961 + $0xa0] sm:$0xf]
    %v6067 = vld [vmem:[%s5961 + $0xa4] sm:$0x1]
    %v6068 = vld [vmem:[%s5961 + $0xa8] sm:$0xf]
    %v6069 = vld [vmem:[%s5961 + $0xac] sm:$0xf]
    %v6070 = vld [vmem:[%s5961 + $0xb0] sm:$0x1]
    %v6071 = vld [vmem:[%s5961 + $0xb4] sm:$0xf]
    %v6072 = vld [vmem:[%s5961 + $0xb8] sm:$0xf]
    %v6073 = vld [vmem:[%s5961 + $0xbc] sm:$0x1]
    %v6075 = vshrl.u32 %v6026, 16
    %v6077 = vrot.slane %v6075, 4
    %v6078 = vshll.u32 %v6026, 16
    %v6080 = vrot.slane %v6078, 5
    %v6081 = vor.u32 %v6077, %v6080
    %v6082 = vrot.slane %v6081, 4
    %v6084 = vshll.u32 %v6027, 16
    %v6086 = vrot.slane %v6084, 5
    %v6087 = vsel %vm142, %v6082, %v6086
    %v6088 = vshrl.u32 %v6027, 16
    %v6090 = vrot.slane %v6088, 4
    %v6091 = vor.u32 %v6090, %v6086
    %v6092 = vrot.slane %v6091, 4
    %v6094 = vshll.u32 %v6028, 16
    %v6096 = vrot.slane %v6094, 5
    %v6097 = vsel %vm142, %v6092, %v6096
    %v6099 = vshrl.u32 %v6029, 16
    %v6101 = vrot.slane %v6099, 4
    %v6102 = vshll.u32 %v6029, 16
    %v6104 = vrot.slane %v6102, 5
    %v6105 = vor.u32 %v6101, %v6104
    %v6106 = vrot.slane %v6105, 4
    %v6108 = vshll.u32 %v6030, 16
    %v6110 = vrot.slane %v6108, 5
    %v6111 = vsel %vm142, %v6106, %v6110
    %v6112 = vshrl.u32 %v6030, 16
    %v6114 = vrot.slane %v6112, 4
    %v6115 = vor.u32 %v6114, %v6110
    %v6116 = vrot.slane %v6115, 4
    %v6118 = vshll.u32 %v6031, 16
    %v6120 = vrot.slane %v6118, 5
    %v6121 = vsel %vm142, %v6116, %v6120
    %v6123 = vshrl.u32 %v6032, 16
    %v6125 = vrot.slane %v6123, 4
    %v6126 = vshll.u32 %v6032, 16
    %v6128 = vrot.slane %v6126, 5
    %v6129 = vor.u32 %v6125, %v6128
    %v6130 = vrot.slane %v6129, 4
    %v6132 = vshll.u32 %v6033, 16
    %v6134 = vrot.slane %v6132, 5
    %v6135 = vsel %vm142, %v6130, %v6134
    %v6136 = vshrl.u32 %v6033, 16
    %v6138 = vrot.slane %v6136, 4
    %v6139 = vor.u32 %v6138, %v6134
    %v6140 = vrot.slane %v6139, 4
    %v6142 = vshll.u32 %v6034, 16
    %v6144 = vrot.slane %v6142, 5
    %v6145 = vsel %vm142, %v6140, %v6144
    %v6147 = vshrl.u32 %v6035, 16
    %v6149 = vrot.slane %v6147, 4
    %v6150 = vshll.u32 %v6035, 16
    %v6152 = vrot.slane %v6150, 5
    %v6153 = vor.u32 %v6149, %v6152
    %v6154 = vrot.slane %v6153, 4
    %v6156 = vshll.u32 %v6036, 16
    %v6158 = vrot.slane %v6156, 5
    %v6159 = vsel %vm142, %v6154, %v6158
    %v6160 = vshrl.u32 %v6036, 16
    %v6162 = vrot.slane %v6160, 4
    %v6163 = vor.u32 %v6162, %v6158
    %v6164 = vrot.slane %v6163, 4
    %v6166 = vshll.u32 %v6037, 16
    %v6168 = vrot.slane %v6166, 5
    %v6169 = vsel %vm142, %v6164, %v6168
    %v6171 = vshrl.u32 %v6038, 16
    %v6173 = vrot.slane %v6171, 4
    %v6174 = vshll.u32 %v6038, 16
    %v6176 = vrot.slane %v6174, 5
    %v6177 = vor.u32 %v6173, %v6176
    %v6178 = vrot.slane %v6177, 4
    %v6180 = vshll.u32 %v6039, 16
    %v6182 = vrot.slane %v6180, 5
    %v6183 = vsel %vm142, %v6178, %v6182
    %v6184 = vshrl.u32 %v6039, 16
    %v6186 = vrot.slane %v6184, 4
    %v6187 = vor.u32 %v6186, %v6182
    %v6188 = vrot.slane %v6187, 4
    %v6190 = vshll.u32 %v6040, 16
    %v6192 = vrot.slane %v6190, 5
    %v6193 = vsel %vm142, %v6188, %v6192
    %v6195 = vshrl.u32 %v6041, 16
    %v6197 = vrot.slane %v6195, 4
    %v6198 = vshll.u32 %v6041, 16
    %v6200 = vrot.slane %v6198, 5
    %v6201 = vor.u32 %v6197, %v6200
    %v6202 = vrot.slane %v6201, 4
    %v6204 = vshll.u32 %v6042, 16
    %v6206 = vrot.slane %v6204, 5
    %v6207 = vsel %vm142, %v6202, %v6206
    %v6208 = vshrl.u32 %v6042, 16
    %v6210 = vrot.slane %v6208, 4
    %v6211 = vor.u32 %v6210, %v6206
    %v6212 = vrot.slane %v6211, 4
    %v6214 = vshll.u32 %v6043, 16
    %v6216 = vrot.slane %v6214, 5
    %v6217 = vsel %vm142, %v6212, %v6216
    %v6219 = vshrl.u32 %v6044, 16
    %v6221 = vrot.slane %v6219, 4
    %v6222 = vshll.u32 %v6044, 16
    %v6224 = vrot.slane %v6222, 5
    %v6225 = vor.u32 %v6221, %v6224
    %v6226 = vrot.slane %v6225, 4
    %v6228 = vshll.u32 %v6045, 16
    %v6230 = vrot.slane %v6228, 5
    %v6231 = vsel %vm142, %v6226, %v6230
    %v6232 = vshrl.u32 %v6045, 16
    %v6234 = vrot.slane %v6232, 4
    %v6235 = vor.u32 %v6234, %v6230
    %v6236 = vrot.slane %v6235, 4
    %v6238 = vshll.u32 %v6046, 16
    %v6240 = vrot.slane %v6238, 5
    %v6241 = vsel %vm142, %v6236, %v6240
    %v6243 = vshrl.u32 %v6047, 16
    %v6245 = vrot.slane %v6243, 4
    %v6246 = vshll.u32 %v6047, 16
    %v6248 = vrot.slane %v6246, 5
    %v6249 = vor.u32 %v6245, %v6248
    %v6250 = vrot.slane %v6249, 4
    %v6252 = vshll.u32 %v6048, 16
    %v6254 = vrot.slane %v6252, 5
    %v6255 = vsel %vm142, %v6250, %v6254
    %v6256 = vshrl.u32 %v6048, 16
    %v6258 = vrot.slane %v6256, 4
    %v6259 = vor.u32 %v6258, %v6254
    %v6260 = vrot.slane %v6259, 4
    %v6262 = vshll.u32 %v6049, 16
    %v6264 = vrot.slane %v6262, 5
    %v6265 = vsel %vm142, %v6260, %v6264
    %v6267 = vshrl.u32 %v6050, 16
    %v6269 = vrot.slane %v6267, 4
    %v6270 = vshll.u32 %v6050, 16
    %v6272 = vrot.slane %v6270, 5
    %v6273 = vor.u32 %v6269, %v6272
    %v6274 = vrot.slane %v6273, 4
    %v6276 = vshll.u32 %v6051, 16
    %v6278 = vrot.slane %v6276, 5
    %v6279 = vsel %vm142, %v6274, %v6278
    %v6280 = vshrl.u32 %v6051, 16
    %v6282 = vrot.slane %v6280, 4
    %v6283 = vor.u32 %v6282, %v6278
    %v6284 = vrot.slane %v6283, 4
    %v6286 = vshll.u32 %v6052, 16
    %v6288 = vrot.slane %v6286, 5
    %v6289 = vsel %vm142, %v6284, %v6288
    %v6291 = vshrl.u32 %v6053, 16
    %v6293 = vrot.slane %v6291, 4
    %v6294 = vshll.u32 %v6053, 16
    %v6296 = vrot.slane %v6294, 5
    %v6297 = vor.u32 %v6293, %v6296
    %v6298 = vrot.slane %v6297, 4
    %v6300 = vshll.u32 %v6054, 16
    %v6302 = vrot.slane %v6300, 5
    %v6303 = vsel %vm142, %v6298, %v6302
    %v6304 = vshrl.u32 %v6054, 16
    %v6306 = vrot.slane %v6304, 4
    %v6307 = vor.u32 %v6306, %v6302
    %v6308 = vrot.slane %v6307, 4
    %v6310 = vshll.u32 %v6055, 16
    %v6312 = vrot.slane %v6310, 5
    %v6313 = vsel %vm142, %v6308, %v6312
    %v6315 = vshrl.u32 %v6056, 16
    %v6317 = vrot.slane %v6315, 4
    %v6318 = vshll.u32 %v6056, 16
    %v6320 = vrot.slane %v6318, 5
    %v6321 = vor.u32 %v6317, %v6320
    %v6322 = vrot.slane %v6321, 4
    %v6324 = vshll.u32 %v6057, 16
    %v6326 = vrot.slane %v6324, 5
    %v6327 = vsel %vm142, %v6322, %v6326
    %v6328 = vshrl.u32 %v6057, 16
    %v6330 = vrot.slane %v6328, 4
    %v6331 = vor.u32 %v6330, %v6326
    %v6332 = vrot.slane %v6331, 4
    %v6334 = vshll.u32 %v6058, 16
    %v6336 = vrot.slane %v6334, 5
    %v6337 = vsel %vm142, %v6332, %v6336
    %v6339 = vshrl.u32 %v6059, 16
    %v6341 = vrot.slane %v6339, 4
    %v6342 = vshll.u32 %v6059, 16
    %v6344 = vrot.slane %v6342, 5
    %v6345 = vor.u32 %v6341, %v6344
    %v6346 = vrot.slane %v6345, 4
    %v6348 = vshll.u32 %v6060, 16
    %v6350 = vrot.slane %v6348, 5
    %v6351 = vsel %vm142, %v6346, %v6350
    %v6352 = vshrl.u32 %v6060, 16
    %v6354 = vrot.slane %v6352, 4
    %v6355 = vor.u32 %v6354, %v6350
    %v6356 = vrot.slane %v6355, 4
    %v6358 = vshll.u32 %v6061, 16
    %v6360 = vrot.slane %v6358, 5
    %v6361 = vsel %vm142, %v6356, %v6360
    %v6363 = vshrl.u32 %v6062, 16
    %v6365 = vrot.slane %v6363, 4
    %v6366 = vshll.u32 %v6062, 16
    %v6368 = vrot.slane %v6366, 5
    %v6369 = vor.u32 %v6365, %v6368
    %v6370 = vrot.slane %v6369, 4
    %v6372 = vshll.u32 %v6063, 16
    %v6374 = vrot.slane %v6372, 5
    %v6375 = vsel %vm142, %v6370, %v6374
    %v6376 = vshrl.u32 %v6063, 16
    %v6378 = vrot.slane %v6376, 4
    %v6379 = vor.u32 %v6378, %v6374
    %v6380 = vrot.slane %v6379, 4
    %v6382 = vshll.u32 %v6064, 16
    %v6384 = vrot.slane %v6382, 5
    %v6385 = vsel %vm142, %v6380, %v6384
    %v6387 = vshrl.u32 %v6065, 16
    %v6389 = vrot.slane %v6387, 4
    %v6390 = vshll.u32 %v6065, 16
    %v6392 = vrot.slane %v6390, 5
    %v6393 = vor.u32 %v6389, %v6392
    %v6394 = vrot.slane %v6393, 4
    %v6396 = vshll.u32 %v6066, 16
    %v6398 = vrot.slane %v6396, 5
    %v6399 = vsel %vm142, %v6394, %v6398
    %v6400 = vshrl.u32 %v6066, 16
    %v6402 = vrot.slane %v6400, 4
    %v6403 = vor.u32 %v6402, %v6398
    %v6404 = vrot.slane %v6403, 4
    %v6406 = vshll.u32 %v6067, 16
    %v6408 = vrot.slane %v6406, 5
    %v6409 = vsel %vm142, %v6404, %v6408
    %v6411 = vshrl.u32 %v6068, 16
    %v6413 = vrot.slane %v6411, 4
    %v6414 = vshll.u32 %v6068, 16
    %v6416 = vrot.slane %v6414, 5
    %v6417 = vor.u32 %v6413, %v6416
    %v6418 = vrot.slane %v6417, 4
    %v6420 = vshll.u32 %v6069, 16
    %v6422 = vrot.slane %v6420, 5
    %v6423 = vsel %vm142, %v6418, %v6422
    %v6424 = vshrl.u32 %v6069, 16
    %v6426 = vrot.slane %v6424, 4
    %v6427 = vor.u32 %v6426, %v6422
    %v6428 = vrot.slane %v6427, 4
    %v6430 = vshll.u32 %v6070, 16
    %v6432 = vrot.slane %v6430, 5
    %v6433 = vsel %vm142, %v6428, %v6432
    %v6435 = vshrl.u32 %v6071, 16
    %v6437 = vrot.slane %v6435, 4
    %v6438 = vshll.u32 %v6071, 16
    %v6440 = vrot.slane %v6438, 5
    %v6441 = vor.u32 %v6437, %v6440
    %v6442 = vrot.slane %v6441, 4
    %v6444 = vshll.u32 %v6072, 16
    %v6446 = vrot.slane %v6444, 5
    %v6447 = vsel %vm142, %v6442, %v6446
    %v6448 = vshrl.u32 %v6072, 16
    %v6450 = vrot.slane %v6448, 4
    %v6451 = vor.u32 %v6450, %v6446
    %v6452 = vrot.slane %v6451, 4
    %v6454 = vshll.u32 %v6073, 16
    %v6456 = vrot.slane %v6454, 5
    %v6457 = vsel %vm142, %v6452, %v6456
    %6490 = vst [vmem:[#allocation2 + $0x10] sm:$0xf] %v6087
    %6491 = vst [vmem:[#allocation2 + $0x34] sm:$0xf] %v6097
    %6492 = vst [vmem:[#allocation2 + $0x58] sm:$0xf] %v6111
    %6493 = vst [vmem:[#allocation2 + $0x7c] sm:$0xf] %v6121
    %6494 = vst [vmem:[#allocation2 + $0xa0] sm:$0xf] %v6135
    %6495 = vst [vmem:[#allocation2 + $0xc4] sm:$0xf] %v6145
    %6496 = vst [vmem:[#allocation2 + $0xe8] sm:$0xf] %v6159
    %6497 = vst [vmem:[#allocation2 + $0x10c] sm:$0xf] %v6169
    %6498 = vst [vmem:[#allocation2 + $0x130] sm:$0xf] %v6183
    %6499 = vst [vmem:[#allocation2 + $0x154] sm:$0xf] %v6193
    %6500 = vst [vmem:[#allocation2 + $0x178] sm:$0xf] %v6207
    %6501 = vst [vmem:[#allocation2 + $0x19c] sm:$0xf] %v6217
    %6502 = vst [vmem:[#allocation2 + $0x1c0] sm:$0xf] %v6231
    %6503 = vst [vmem:[#allocation2 + $0x1e4] sm:$0xf] %v6241
    %6504 = vst [vmem:[#allocation2 + $0x208] sm:$0xf] %v6255
    %6505 = vst [vmem:[#allocation2 + $0x22c] sm:$0xf] %v6265
    %6506 = vst [vmem:[#allocation2 + $0x250] sm:$0xf] %v6279
    %6507 = vst [vmem:[#allocation2 + $0x274] sm:$0xf] %v6289
    %6508 = vst [vmem:[#allocation2 + $0x298] sm:$0xf] %v6303
    %6509 = vst [vmem:[#allocation2 + $0x2bc] sm:$0xf] %v6313
    %6510 = vst [vmem:[#allocation2 + $0x2e0] sm:$0xf] %v6327
    %6511 = vst [vmem:[#allocation2 + $0x304] sm:$0xf] %v6337
    %6512 = vst [vmem:[#allocation2 + $0x328] sm:$0xf] %v6351
    %6513 = vst [vmem:[#allocation2 + $0x34c] sm:$0xf] %v6361
    %6514 = vst [vmem:[#allocation2 + $0x370] sm:$0xf] %v6375
    %6515 = vst [vmem:[#allocation2 + $0x394] sm:$0xf] %v6385
    %6516 = vst [vmem:[#allocation2 + $0x3b8] sm:$0xf] %v6399
    %6517 = vst [vmem:[#allocation2 + $0x3dc] sm:$0xf] %v6409
    %6518 = vst [vmem:[#allocation2 + $0x400] sm:$0xf] %v6423
    %6519 = vst [vmem:[#allocation2 + $0x424] sm:$0xf] %v6433
    %6520 = vst [vmem:[#allocation2 + $0x448] sm:$0xf] %v6447
    %6521 = vst [vmem:[#allocation2 + $0x46c] sm:$0xf] %v6457
    %v6522 = vld [vmem:[%s5961] sm:$0xe]
    %v6523 = vld [vmem:[%s5961 + $0x4] sm:$0xf]
    %v6524 = vld [vmem:[%s5961 + $0x8] sm:$0x1]
    %v6525 = vld [vmem:[%s5961 + $0xc] sm:$0xe]
    %v6526 = vld [vmem:[%s5961 + $0x10] sm:$0xf]
    %v6527 = vld [vmem:[%s5961 + $0x14] sm:$0x1]
    %v6528 = vld [vmem:[%s5961 + $0x18] sm:$0xe]
    %v6529 = vld [vmem:[%s5961 + $0x1c] sm:$0xf]
    %v6530 = vld [vmem:[%s5961 + $0x20] sm:$0x1]
    %v6531 = vld [vmem:[%s5961 + $0x24] sm:$0xe]
    %v6532 = vld [vmem:[%s5961 + $0x28] sm:$0xf]
    %v6533 = vld [vmem:[%s5961 + $0x2c] sm:$0x1]
    %v6534 = vld [vmem:[%s5961 + $0x30] sm:$0xe]
    %v6535 = vld [vmem:[%s5961 + $0x34] sm:$0xf]
    %v6536 = vld [vmem:[%s5961 + $0x38] sm:$0x1]
    %v6537 = vld [vmem:[%s5961 + $0x3c] sm:$0xe]
    %v6538 = vld [vmem:[%s5961 + $0x40] sm:$0xf]
    %v6539 = vld [vmem:[%s5961 + $0x44] sm:$0x1]
    %v6540 = vld [vmem:[%s5961 + $0x48] sm:$0xe]
    %v6541 = vld [vmem:[%s5961 + $0x4c] sm:$0xf]
    %v6542 = vld [vmem:[%s5961 + $0x50] sm:$0x1]
    %v6543 = vld [vmem:[%s5961 + $0x54] sm:$0xe]
    %v6544 = vld [vmem:[%s5961 + $0x58] sm:$0xf]
    %v6545 = vld [vmem:[%s5961 + $0x5c] sm:$0x1]
    %v6546 = vld [vmem:[%s5961 + $0x60] sm:$0xe]
    %v6547 = vld [vmem:[%s5961 + $0x64] sm:$0xf]
    %v6548 = vld [vmem:[%s5961 + $0x68] sm:$0x1]
    %v6549 = vld [vmem:[%s5961 + $0x6c] sm:$0xe]
    %v6550 = vld [vmem:[%s5961 + $0x70] sm:$0xf]
    %v6551 = vld [vmem:[%s5961 + $0x74] sm:$0x1]
    %v6552 = vld [vmem:[%s5961 + $0x78] sm:$0xe]
    %v6553 = vld [vmem:[%s5961 + $0x7c] sm:$0xf]
    %v6554 = vld [vmem:[%s5961 + $0x80] sm:$0x1]
    %v6555 = vld [vmem:[%s5961 + $0x84] sm:$0xe]
    %v6556 = vld [vmem:[%s5961 + $0x88] sm:$0xf]
    %v6557 = vld [vmem:[%s5961 + $0x8c] sm:$0x1]
    %v6558 = vld [vmem:[%s5961 + $0x90] sm:$0xe]
    %v6559 = vld [vmem:[%s5961 + $0x94] sm:$0xf]
    %v6560 = vld [vmem:[%s5961 + $0x98] sm:$0x1]
    %v6561 = vld [vmem:[%s5961 + $0x9c] sm:$0xe]
    %v6562 = vld [vmem:[%s5961 + $0xa0] sm:$0xf]
    %v6563 = vld [vmem:[%s5961 + $0xa4] sm:$0x1]
    %v6564 = vld [vmem:[%s5961 + $0xa8] sm:$0xe]
    %v6565 = vld [vmem:[%s5961 + $0xac] sm:$0xf]
    %v6566 = vld [vmem:[%s5961 + $0xb0] sm:$0x1]
    %v6567 = vld [vmem:[%s5961 + $0xb4] sm:$0xe]
    %v6568 = vld [vmem:[%s5961 + $0xb8] sm:$0xf]
    %v6569 = vld [vmem:[%s5961 + $0xbc] sm:$0x1]
    %v6618 = vrot.slane %v6522, 5
    %v6619 = vrot.slane %v6618, 4
    %v6620 = vrot.slane %v6523, 5
    %v6621 = vsel %vm689, %v6619, %v6620
    %v6622 = vrot.slane %v6620, 4
    %v6623 = vrot.slane %v6524, 5
    %v6624 = vsel %vm689, %v6622, %v6623
    %v6625 = vrot.slane %v6525, 5
    %v6626 = vrot.slane %v6625, 4
    %v6627 = vrot.slane %v6526, 5
    %v6628 = vsel %vm689, %v6626, %v6627
    %v6629 = vrot.slane %v6627, 4
    %v6630 = vrot.slane %v6527, 5
    %v6631 = vsel %vm689, %v6629, %v6630
    %v6632 = vrot.slane %v6528, 5
    %v6633 = vrot.slane %v6632, 4
    %v6634 = vrot.slane %v6529, 5
    %v6635 = vsel %vm689, %v6633, %v6634
    %v6636 = vrot.slane %v6634, 4
    %v6637 = vrot.slane %v6530, 5
    %v6638 = vsel %vm689, %v6636, %v6637
    %v6639 = vrot.slane %v6531, 5
    %v6640 = vrot.slane %v6639, 4
    %v6641 = vrot.slane %v6532, 5
    %v6642 = vsel %vm689, %v6640, %v6641
    %v6643 = vrot.slane %v6641, 4
    %v6644 = vrot.slane %v6533, 5
    %v6645 = vsel %vm689, %v6643, %v6644
    %v6646 = vrot.slane %v6534, 5
    %v6647 = vrot.slane %v6646, 4
    %v6648 = vrot.slane %v6535, 5
    %v6649 = vsel %vm689, %v6647, %v6648
    %v6650 = vrot.slane %v6648, 4
    %v6651 = vrot.slane %v6536, 5
    %v6652 = vsel %vm689, %v6650, %v6651
    %v6653 = vrot.slane %v6537, 5
    %v6654 = vrot.slane %v6653, 4
    %v6655 = vrot.slane %v6538, 5
    %v6656 = vsel %vm689, %v6654, %v6655
    %v6657 = vrot.slane %v6655, 4
    %v6658 = vrot.slane %v6539, 5
    %v6659 = vsel %vm689, %v6657, %v6658
    %v6660 = vrot.slane %v6540, 5
    %v6661 = vrot.slane %v6660, 4
    %v6662 = vrot.slane %v6541, 5
    %v6663 = vsel %vm689, %v6661, %v6662
    %v6664 = vrot.slane %v6662, 4
    %v6665 = vrot.slane %v6542, 5
    %v6666 = vsel %vm689, %v6664, %v6665
    %v6667 = vrot.slane %v6543, 5
    %v6668 = vrot.slane %v6667, 4
    %v6669 = vrot.slane %v6544, 5
    %v6670 = vsel %vm689, %v6668, %v6669
    %v6671 = vrot.slane %v6669, 4
    %v6672 = vrot.slane %v6545, 5
    %v6673 = vsel %vm689, %v6671, %v6672
    %v6674 = vrot.slane %v6546, 5
    %v6675 = vrot.slane %v6674, 4
    %v6676 = vrot.slane %v6547, 5
    %v6677 = vsel %vm689, %v6675, %v6676
    %v6678 = vrot.slane %v6676, 4
    %v6679 = vrot.slane %v6548, 5
    %v6680 = vsel %vm689, %v6678, %v6679
    %v6681 = vrot.slane %v6549, 5
    %v6682 = vrot.slane %v6681, 4
    %v6683 = vrot.slane %v6550, 5
    %v6684 = vsel %vm689, %v6682, %v6683
    %v6685 = vrot.slane %v6683, 4
    %v6686 = vrot.slane %v6551, 5
    %v6687 = vsel %vm689, %v6685, %v6686
    %v6688 = vrot.slane %v6552, 5
    %v6689 = vrot.slane %v6688, 4
    %v6690 = vrot.slane %v6553, 5
    %v6691 = vsel %vm689, %v6689, %v6690
    %v6692 = vrot.slane %v6690, 4
    %v6693 = vrot.slane %v6554, 5
    %v6694 = vsel %vm689, %v6692, %v6693
    %v6695 = vrot.slane %v6555, 5
    %v6696 = vrot.slane %v6695, 4
    %v6697 = vrot.slane %v6556, 5
    %v6698 = vsel %vm689, %v6696, %v6697
    %v6699 = vrot.slane %v6697, 4
    %v6700 = vrot.slane %v6557, 5
    %v6701 = vsel %vm689, %v6699, %v6700
    %v6702 = vrot.slane %v6558, 5
    %v6703 = vrot.slane %v6702, 4
    %v6704 = vrot.slane %v6559, 5
    %v6705 = vsel %vm689, %v6703, %v6704
    %v6706 = vrot.slane %v6704, 4
    %v6707 = vrot.slane %v6560, 5
    %v6708 = vsel %vm689, %v6706, %v6707
    %v6709 = vrot.slane %v6561, 5
    %v6710 = vrot.slane %v6709, 4
    %v6711 = vrot.slane %v6562, 5
    %v6712 = vsel %vm689, %v6710, %v6711
    %v6713 = vrot.slane %v6711, 4
    %v6714 = vrot.slane %v6563, 5
    %v6715 = vsel %vm689, %v6713, %v6714
    %v6716 = vrot.slane %v6564, 5
    %v6717 = vrot.slane %v6716, 4
    %v6718 = vrot.slane %v6565, 5
    %v6719 = vsel %vm689, %v6717, %v6718
    %v6720 = vrot.slane %v6718, 4
    %v6721 = vrot.slane %v6566, 5
    %v6722 = vsel %vm689, %v6720, %v6721
    %v6723 = vrot.slane %v6567, 5
    %v6724 = vrot.slane %v6723, 4
    %v6725 = vrot.slane %v6568, 5
    %v6726 = vsel %vm689, %v6724, %v6725
    %v6727 = vrot.slane %v6725, 4
    %v6728 = vrot.slane %v6569, 5
    %v6729 = vsel %vm689, %v6727, %v6728
    %6762 = vst [vmem:[#allocation2 + $0x14] sm:$0xf] %v6621
    %6763 = vst [vmem:[#allocation2 + $0x38] sm:$0xf] %v6624
    %6764 = vst [vmem:[#allocation2 + $0x5c] sm:$0xf] %v6628
    %6765 = vst [vmem:[#allocation2 + $0x80] sm:$0xf] %v6631
    %6766 = vst [vmem:[#allocation2 + $0xa4] sm:$0xf] %v6635
    %6767 = vst [vmem:[#allocation2 + $0xc8] sm:$0xf] %v6638
    %6768 = vst [vmem:[#allocation2 + $0xec] sm:$0xf] %v6642
    %6769 = vst [vmem:[#allocation2 + $0x110] sm:$0xf] %v6645
    %6770 = vst [vmem:[#allocation2 + $0x134] sm:$0xf] %v6649
    %6771 = vst [vmem:[#allocation2 + $0x158] sm:$0xf] %v6652
    %6772 = vst [vmem:[#allocation2 + $0x17c] sm:$0xf] %v6656
    %6773 = vst [vmem:[#allocation2 + $0x1a0] sm:$0xf] %v6659
    %6774 = vst [vmem:[#allocation2 + $0x1c4] sm:$0xf] %v6663
    %6775 = vst [vmem:[#allocation2 + $0x1e8] sm:$0xf] %v6666
    %6776 = vst [vmem:[#allocation2 + $0x20c] sm:$0xf] %v6670
    %6777 = vst [vmem:[#allocation2 + $0x230] sm:$0xf] %v6673
    %6778 = vst [vmem:[#allocation2 + $0x254] sm:$0xf] %v6677
    %6779 = vst [vmem:[#allocation2 + $0x278] sm:$0xf] %v6680
    %6780 = vst [vmem:[#allocation2 + $0x29c] sm:$0xf] %v6684
    %6781 = vst [vmem:[#allocation2 + $0x2c0] sm:$0xf] %v6687
    %6782 = vst [vmem:[#allocation2 + $0x2e4] sm:$0xf] %v6691
    %6783 = vst [vmem:[#allocation2 + $0x308] sm:$0xf] %v6694
    %6784 = vst [vmem:[#allocation2 + $0x32c] sm:$0xf] %v6698
    %6785 = vst [vmem:[#allocation2 + $0x350] sm:$0xf] %v6701
    %6786 = vst [vmem:[#allocation2 + $0x374] sm:$0xf] %v6705
    %6787 = vst [vmem:[#allocation2 + $0x398] sm:$0xf] %v6708
    %6788 = vst [vmem:[#allocation2 + $0x3bc] sm:$0xf] %v6712
    %6789 = vst [vmem:[#allocation2 + $0x3e0] sm:$0xf] %v6715
    %6790 = vst [vmem:[#allocation2 + $0x404] sm:$0xf] %v6719
    %6791 = vst [vmem:[#allocation2 + $0x428] sm:$0xf] %v6722
    %6792 = vst [vmem:[#allocation2 + $0x44c] sm:$0xf] %v6726
    %6793 = vst [vmem:[#allocation2 + $0x470] sm:$0xf] %v6729
    %s6794 = scalar_lea.vmem %s0, 240
    %v6795 = vld [vmem:[%s6794] sm:$0xf]
    %v6796 = vld [vmem:[%s6794 + $0x4] sm:$0xf]
    %v6797 = vld [vmem:[%s6794 + $0xc] sm:$0xf]
    %v6798 = vld [vmem:[%s6794 + $0x10] sm:$0xf]
    %v6799 = vld [vmem:[%s6794 + $0x18] sm:$0xf]
    %v6800 = vld [vmem:[%s6794 + $0x1c] sm:$0xf]
    %v6801 = vld [vmem:[%s6794 + $0x24] sm:$0xf]
    %v6802 = vld [vmem:[%s6794 + $0x28] sm:$0xf]
    %v6803 = vld [vmem:[%s6794 + $0x30] sm:$0xf]
    %v6804 = vld [vmem:[%s6794 + $0x34] sm:$0xf]
    %v6805 = vld [vmem:[%s6794 + $0x3c] sm:$0xf]
    %v6806 = vld [vmem:[%s6794 + $0x40] sm:$0xf]
    %v6807 = vld [vmem:[%s6794 + $0x48] sm:$0xf]
    %v6808 = vld [vmem:[%s6794 + $0x4c] sm:$0xf]
    %v6809 = vld [vmem:[%s6794 + $0x54] sm:$0xf]
    %v6810 = vld [vmem:[%s6794 + $0x58] sm:$0xf]
    %v6811 = vld [vmem:[%s6794 + $0x60] sm:$0xf]
    %v6812 = vld [vmem:[%s6794 + $0x64] sm:$0xf]
    %v6813 = vld [vmem:[%s6794 + $0x6c] sm:$0xf]
    %v6814 = vld [vmem:[%s6794 + $0x70] sm:$0xf]
    %v6815 = vld [vmem:[%s6794 + $0x78] sm:$0xf]
    %v6816 = vld [vmem:[%s6794 + $0x7c] sm:$0xf]
    %v6817 = vld [vmem:[%s6794 + $0x84] sm:$0xf]
    %v6818 = vld [vmem:[%s6794 + $0x88] sm:$0xf]
    %v6819 = vld [vmem:[%s6794 + $0x90] sm:$0xf]
    %v6820 = vld [vmem:[%s6794 + $0x94] sm:$0xf]
    %v6821 = vld [vmem:[%s6794 + $0x9c] sm:$0xf]
    %v6822 = vld [vmem:[%s6794 + $0xa0] sm:$0xf]
    %v6823 = vld [vmem:[%s6794 + $0xa8] sm:$0xf]
    %v6824 = vld [vmem:[%s6794 + $0xac] sm:$0xf]
    %v6825 = vld [vmem:[%s6794 + $0xb4] sm:$0xf]
    %v6826 = vld [vmem:[%s6794 + $0xb8] sm:$0xf]
    %6827 = vst [vmem:[#allocation2 + $0x18] sm:$0xf] %v6795
    %6828 = vst [vmem:[#allocation2 + $0x3c] sm:$0xf] %v6796
    %6829 = vst [vmem:[#allocation2 + $0x60] sm:$0xf] %v6797
    %6830 = vst [vmem:[#allocation2 + $0x84] sm:$0xf] %v6798
    %6831 = vst [vmem:[#allocation2 + $0xa8] sm:$0xf] %v6799
    %6832 = vst [vmem:[#allocation2 + $0xcc] sm:$0xf] %v6800
    %6833 = vst [vmem:[#allocation2 + $0xf0] sm:$0xf] %v6801
    %6834 = vst [vmem:[#allocation2 + $0x114] sm:$0xf] %v6802
    %6835 = vst [vmem:[#allocation2 + $0x138] sm:$0xf] %v6803
    %6836 = vst [vmem:[#allocation2 + $0x15c] sm:$0xf] %v6804
    %6837 = vst [vmem:[#allocation2 + $0x180] sm:$0xf] %v6805
    %6838 = vst [vmem:[#allocation2 + $0x1a4] sm:$0xf] %v6806
    %6839 = vst [vmem:[#allocation2 + $0x1c8] sm:$0xf] %v6807
    %6840 = vst [vmem:[#allocation2 + $0x1ec] sm:$0xf] %v6808
    %6841 = vst [vmem:[#allocation2 + $0x210] sm:$0xf] %v6809
    %6842 = vst [vmem:[#allocation2 + $0x234] sm:$0xf] %v6810
    %6843 = vst [vmem:[#allocation2 + $0x258] sm:$0xf] %v6811
    %6844 = vst [vmem:[#allocation2 + $0x27c] sm:$0xf] %v6812
    %6845 = vst [vmem:[#allocation2 + $0x2a0] sm:$0xf] %v6813
    %6846 = vst [vmem:[#allocation2 + $0x2c4] sm:$0xf] %v6814
    %6847 = vst [vmem:[#allocation2 + $0x2e8] sm:$0xf] %v6815
    %6848 = vst [vmem:[#allocation2 + $0x30c] sm:$0xf] %v6816
    %6849 = vst [vmem:[#allocation2 + $0x330] sm:$0xf] %v6817
    %6850 = vst [vmem:[#allocation2 + $0x354] sm:$0xf] %v6818
    %6851 = vst [vmem:[#allocation2 + $0x378] sm:$0xf] %v6819
    %6852 = vst [vmem:[#allocation2 + $0x39c] sm:$0xf] %v6820
    %6853 = vst [vmem:[#allocation2 + $0x3c0] sm:$0xf] %v6821
    %6854 = vst [vmem:[#allocation2 + $0x3e4] sm:$0xf] %v6822
    %6855 = vst [vmem:[#allocation2 + $0x408] sm:$0xf] %v6823
    %6856 = vst [vmem:[#allocation2 + $0x42c] sm:$0xf] %v6824
    %6857 = vst [vmem:[#allocation2 + $0x450] sm:$0xf] %v6825
    %6858 = vst [vmem:[#allocation2 + $0x474] sm:$0xf] %v6826
    %v6859 = vld [vmem:[%s6794] sm:$0xf]
    %v6860 = vld [vmem:[%s6794 + $0x4] sm:$0xf]
    %v6861 = vld [vmem:[%s6794 + $0x8] sm:$0x1]
    %v6862 = vld [vmem:[%s6794 + $0xc] sm:$0xf]
    %v6863 = vld [vmem:[%s6794 + $0x10] sm:$0xf]
    %v6864 = vld [vmem:[%s6794 + $0x14] sm:$0x1]
    %v6865 = vld [vmem:[%s6794 + $0x18] sm:$0xf]
    %v6866 = vld [vmem:[%s6794 + $0x1c] sm:$0xf]
    %v6867 = vld [vmem:[%s6794 + $0x20] sm:$0x1]
    %v6868 = vld [vmem:[%s6794 + $0x24] sm:$0xf]
    %v6869 = vld [vmem:[%s6794 + $0x28] sm:$0xf]
    %v6870 = vld [vmem:[%s6794 + $0x2c] sm:$0x1]
    %v6871 = vld [vmem:[%s6794 + $0x30] sm:$0xf]
    %v6872 = vld [vmem:[%s6794 + $0x34] sm:$0xf]
    %v6873 = vld [vmem:[%s6794 + $0x38] sm:$0x1]
    %v6874 = vld [vmem:[%s6794 + $0x3c] sm:$0xf]
    %v6875 = vld [vmem:[%s6794 + $0x40] sm:$0xf]
    %v6876 = vld [vmem:[%s6794 + $0x44] sm:$0x1]
    %v6877 = vld [vmem:[%s6794 + $0x48] sm:$0xf]
    %v6878 = vld [vmem:[%s6794 + $0x4c] sm:$0xf]
    %v6879 = vld [vmem:[%s6794 + $0x50] sm:$0x1]
    %v6880 = vld [vmem:[%s6794 + $0x54] sm:$0xf]
    %v6881 = vld [vmem:[%s6794 + $0x58] sm:$0xf]
    %v6882 = vld [vmem:[%s6794 + $0x5c] sm:$0x1]
    %v6883 = vld [vmem:[%s6794 + $0x60] sm:$0xf]
    %v6884 = vld [vmem:[%s6794 + $0x64] sm:$0xf]
    %v6885 = vld [vmem:[%s6794 + $0x68] sm:$0x1]
    %v6886 = vld [vmem:[%s6794 + $0x6c] sm:$0xf]
    %v6887 = vld [vmem:[%s6794 + $0x70] sm:$0xf]
    %v6888 = vld [vmem:[%s6794 + $0x74] sm:$0x1]
    %v6889 = vld [vmem:[%s6794 + $0x78] sm:$0xf]
    %v6890 = vld [vmem:[%s6794 + $0x7c] sm:$0xf]
    %v6891 = vld [vmem:[%s6794 + $0x80] sm:$0x1]
    %v6892 = vld [vmem:[%s6794 + $0x84] sm:$0xf]
    %v6893 = vld [vmem:[%s6794 + $0x88] sm:$0xf]
    %v6894 = vld [vmem:[%s6794 + $0x8c] sm:$0x1]
    %v6895 = vld [vmem:[%s6794 + $0x90] sm:$0xf]
    %v6896 = vld [vmem:[%s6794 + $0x94] sm:$0xf]
    %v6897 = vld [vmem:[%s6794 + $0x98] sm:$0x1]
    %v6898 = vld [vmem:[%s6794 + $0x9c] sm:$0xf]
    %v6899 = vld [vmem:[%s6794 + $0xa0] sm:$0xf]
    %v6900 = vld [vmem:[%s6794 + $0xa4] sm:$0x1]
    %v6901 = vld [vmem:[%s6794 + $0xa8] sm:$0xf]
    %v6902 = vld [vmem:[%s6794 + $0xac] sm:$0xf]
    %v6903 = vld [vmem:[%s6794 + $0xb0] sm:$0x1]
    %v6904 = vld [vmem:[%s6794 + $0xb4] sm:$0xf]
    %v6905 = vld [vmem:[%s6794 + $0xb8] sm:$0xf]
    %v6906 = vld [vmem:[%s6794 + $0xbc] sm:$0x1]
    %v6908 = vshrl.u32 %v6859, 16
    %v6910 = vrot.slane %v6908, 4
    %v6911 = vshll.u32 %v6859, 16
    %v6913 = vrot.slane %v6911, 5
    %v6914 = vor.u32 %v6910, %v6913
    %v6915 = vrot.slane %v6914, 4
    %v6917 = vshll.u32 %v6860, 16
    %v6919 = vrot.slane %v6917, 5
    %v6920 = vsel %vm142, %v6915, %v6919
    %v6921 = vshrl.u32 %v6860, 16
    %v6923 = vrot.slane %v6921, 4
    %v6924 = vor.u32 %v6923, %v6919
    %v6925 = vrot.slane %v6924, 4
    %v6927 = vshll.u32 %v6861, 16
    %v6929 = vrot.slane %v6927, 5
    %v6930 = vsel %vm142, %v6925, %v6929
    %v6932 = vshrl.u32 %v6862, 16
    %v6934 = vrot.slane %v6932, 4
    %v6935 = vshll.u32 %v6862, 16
    %v6937 = vrot.slane %v6935, 5
    %v6938 = vor.u32 %v6934, %v6937
    %v6939 = vrot.slane %v6938, 4
    %v6941 = vshll.u32 %v6863, 16
    %v6943 = vrot.slane %v6941, 5
    %v6944 = vsel %vm142, %v6939, %v6943
    %v6945 = vshrl.u32 %v6863, 16
    %v6947 = vrot.slane %v6945, 4
    %v6948 = vor.u32 %v6947, %v6943
    %v6949 = vrot.slane %v6948, 4
    %v6951 = vshll.u32 %v6864, 16
    %v6953 = vrot.slane %v6951, 5
    %v6954 = vsel %vm142, %v6949, %v6953
    %v6956 = vshrl.u32 %v6865, 16
    %v6958 = vrot.slane %v6956, 4
    %v6959 = vshll.u32 %v6865, 16
    %v6961 = vrot.slane %v6959, 5
    %v6962 = vor.u32 %v6958, %v6961
    %v6963 = vrot.slane %v6962, 4
    %v6965 = vshll.u32 %v6866, 16
    %v6967 = vrot.slane %v6965, 5
    %v6968 = vsel %vm142, %v6963, %v6967
    %v6969 = vshrl.u32 %v6866, 16
    %v6971 = vrot.slane %v6969, 4
    %v6972 = vor.u32 %v6971, %v6967
    %v6973 = vrot.slane %v6972, 4
    %v6975 = vshll.u32 %v6867, 16
    %v6977 = vrot.slane %v6975, 5
    %v6978 = vsel %vm142, %v6973, %v6977
    %v6980 = vshrl.u32 %v6868, 16
    %v6982 = vrot.slane %v6980, 4
    %v6983 = vshll.u32 %v6868, 16
    %v6985 = vrot.slane %v6983, 5
    %v6986 = vor.u32 %v6982, %v6985
    %v6987 = vrot.slane %v6986, 4
    %v6989 = vshll.u32 %v6869, 16
    %v6991 = vrot.slane %v6989, 5
    %v6992 = vsel %vm142, %v6987, %v6991
    %v6993 = vshrl.u32 %v6869, 16
    %v6995 = vrot.slane %v6993, 4
    %v6996 = vor.u32 %v6995, %v6991
    %v6997 = vrot.slane %v6996, 4
    %v6999 = vshll.u32 %v6870, 16
    %v7001 = vrot.slane %v6999, 5
    %v7002 = vsel %vm142, %v6997, %v7001
    %v7004 = vshrl.u32 %v6871, 16
    %v7006 = vrot.slane %v7004, 4
    %v7007 = vshll.u32 %v6871, 16
    %v7009 = vrot.slane %v7007, 5
    %v7010 = vor.u32 %v7006, %v7009
    %v7011 = vrot.slane %v7010, 4
    %v7013 = vshll.u32 %v6872, 16
    %v7015 = vrot.slane %v7013, 5
    %v7016 = vsel %vm142, %v7011, %v7015
    %v7017 = vshrl.u32 %v6872, 16
    %v7019 = vrot.slane %v7017, 4
    %v7020 = vor.u32 %v7019, %v7015
    %v7021 = vrot.slane %v7020, 4
    %v7023 = vshll.u32 %v6873, 16
    %v7025 = vrot.slane %v7023, 5
    %v7026 = vsel %vm142, %v7021, %v7025
    %v7028 = vshrl.u32 %v6874, 16
    %v7030 = vrot.slane %v7028, 4
    %v7031 = vshll.u32 %v6874, 16
    %v7033 = vrot.slane %v7031, 5
    %v7034 = vor.u32 %v7030, %v7033
    %v7035 = vrot.slane %v7034, 4
    %v7037 = vshll.u32 %v6875, 16
    %v7039 = vrot.slane %v7037, 5
    %v7040 = vsel %vm142, %v7035, %v7039
    %v7041 = vshrl.u32 %v6875, 16
    %v7043 = vrot.slane %v7041, 4
    %v7044 = vor.u32 %v7043, %v7039
    %v7045 = vrot.slane %v7044, 4
    %v7047 = vshll.u32 %v6876, 16
    %v7049 = vrot.slane %v7047, 5
    %v7050 = vsel %vm142, %v7045, %v7049
    %v7052 = vshrl.u32 %v6877, 16
    %v7054 = vrot.slane %v7052, 4
    %v7055 = vshll.u32 %v6877, 16
    %v7057 = vrot.slane %v7055, 5
    %v7058 = vor.u32 %v7054, %v7057
    %v7059 = vrot.slane %v7058, 4
    %v7061 = vshll.u32 %v6878, 16
    %v7063 = vrot.slane %v7061, 5
    %v7064 = vsel %vm142, %v7059, %v7063
    %v7065 = vshrl.u32 %v6878, 16
    %v7067 = vrot.slane %v7065, 4
    %v7068 = vor.u32 %v7067, %v7063
    %v7069 = vrot.slane %v7068, 4
    %v7071 = vshll.u32 %v6879, 16
    %v7073 = vrot.slane %v7071, 5
    %v7074 = vsel %vm142, %v7069, %v7073
    %v7076 = vshrl.u32 %v6880, 16
    %v7078 = vrot.slane %v7076, 4
    %v7079 = vshll.u32 %v6880, 16
    %v7081 = vrot.slane %v7079, 5
    %v7082 = vor.u32 %v7078, %v7081
    %v7083 = vrot.slane %v7082, 4
    %v7085 = vshll.u32 %v6881, 16
    %v7087 = vrot.slane %v7085, 5
    %v7088 = vsel %vm142, %v7083, %v7087
    %v7089 = vshrl.u32 %v6881, 16
    %v7091 = vrot.slane %v7089, 4
    %v7092 = vor.u32 %v7091, %v7087
    %v7093 = vrot.slane %v7092, 4
    %v7095 = vshll.u32 %v6882, 16
    %v7097 = vrot.slane %v7095, 5
    %v7098 = vsel %vm142, %v7093, %v7097
    %v7100 = vshrl.u32 %v6883, 16
    %v7102 = vrot.slane %v7100, 4
    %v7103 = vshll.u32 %v6883, 16
    %v7105 = vrot.slane %v7103, 5
    %v7106 = vor.u32 %v7102, %v7105
    %v7107 = vrot.slane %v7106, 4
    %v7109 = vshll.u32 %v6884, 16
    %v7111 = vrot.slane %v7109, 5
    %v7112 = vsel %vm142, %v7107, %v7111
    %v7113 = vshrl.u32 %v6884, 16
    %v7115 = vrot.slane %v7113, 4
    %v7116 = vor.u32 %v7115, %v7111
    %v7117 = vrot.slane %v7116, 4
    %v7119 = vshll.u32 %v6885, 16
    %v7121 = vrot.slane %v7119, 5
    %v7122 = vsel %vm142, %v7117, %v7121
    %v7124 = vshrl.u32 %v6886, 16
    %v7126 = vrot.slane %v7124, 4
    %v7127 = vshll.u32 %v6886, 16
    %v7129 = vrot.slane %v7127, 5
    %v7130 = vor.u32 %v7126, %v7129
    %v7131 = vrot.slane %v7130, 4
    %v7133 = vshll.u32 %v6887, 16
    %v7135 = vrot.slane %v7133, 5
    %v7136 = vsel %vm142, %v7131, %v7135
    %v7137 = vshrl.u32 %v6887, 16
    %v7139 = vrot.slane %v7137, 4
    %v7140 = vor.u32 %v7139, %v7135
    %v7141 = vrot.slane %v7140, 4
    %v7143 = vshll.u32 %v6888, 16
    %v7145 = vrot.slane %v7143, 5
    %v7146 = vsel %vm142, %v7141, %v7145
    %v7148 = vshrl.u32 %v6889, 16
    %v7150 = vrot.slane %v7148, 4
    %v7151 = vshll.u32 %v6889, 16
    %v7153 = vrot.slane %v7151, 5
    %v7154 = vor.u32 %v7150, %v7153
    %v7155 = vrot.slane %v7154, 4
    %v7157 = vshll.u32 %v6890, 16
    %v7159 = vrot.slane %v7157, 5
    %v7160 = vsel %vm142, %v7155, %v7159
    %v7161 = vshrl.u32 %v6890, 16
    %v7163 = vrot.slane %v7161, 4
    %v7164 = vor.u32 %v7163, %v7159
    %v7165 = vrot.slane %v7164, 4
    %v7167 = vshll.u32 %v6891, 16
    %v7169 = vrot.slane %v7167, 5
    %v7170 = vsel %vm142, %v7165, %v7169
    %v7172 = vshrl.u32 %v6892, 16
    %v7174 = vrot.slane %v7172, 4
    %v7175 = vshll.u32 %v6892, 16
    %v7177 = vrot.slane %v7175, 5
    %v7178 = vor.u32 %v7174, %v7177
    %v7179 = vrot.slane %v7178, 4
    %v7181 = vshll.u32 %v6893, 16
    %v7183 = vrot.slane %v7181, 5
    %v7184 = vsel %vm142, %v7179, %v7183
    %v7185 = vshrl.u32 %v6893, 16
    %v7187 = vrot.slane %v7185, 4
    %v7188 = vor.u32 %v7187, %v7183
    %v7189 = vrot.slane %v7188, 4
    %v7191 = vshll.u32 %v6894, 16
    %v7193 = vrot.slane %v7191, 5
    %v7194 = vsel %vm142, %v7189, %v7193
    %v7196 = vshrl.u32 %v6895, 16
    %v7198 = vrot.slane %v7196, 4
    %v7199 = vshll.u32 %v6895, 16
    %v7201 = vrot.slane %v7199, 5
    %v7202 = vor.u32 %v7198, %v7201
    %v7203 = vrot.slane %v7202, 4
    %v7205 = vshll.u32 %v6896, 16
    %v7207 = vrot.slane %v7205, 5
    %v7208 = vsel %vm142, %v7203, %v7207
    %v7209 = vshrl.u32 %v6896, 16
    %v7211 = vrot.slane %v7209, 4
    %v7212 = vor.u32 %v7211, %v7207
    %v7213 = vrot.slane %v7212, 4
    %v7215 = vshll.u32 %v6897, 16
    %v7217 = vrot.slane %v7215, 5
    %v7218 = vsel %vm142, %v7213, %v7217
    %v7220 = vshrl.u32 %v6898, 16
    %v7222 = vrot.slane %v7220, 4
    %v7223 = vshll.u32 %v6898, 16
    %v7225 = vrot.slane %v7223, 5
    %v7226 = vor.u32 %v7222, %v7225
    %v7227 = vrot.slane %v7226, 4
    %v7229 = vshll.u32 %v6899, 16
    %v7231 = vrot.slane %v7229, 5
    %v7232 = vsel %vm142, %v7227, %v7231
    %v7233 = vshrl.u32 %v6899, 16
    %v7235 = vrot.slane %v7233, 4
    %v7236 = vor.u32 %v7235, %v7231
    %v7237 = vrot.slane %v7236, 4
    %v7239 = vshll.u32 %v6900, 16
    %v7241 = vrot.slane %v7239, 5
    %v7242 = vsel %vm142, %v7237, %v7241
    %v7244 = vshrl.u32 %v6901, 16
    %v7246 = vrot.slane %v7244, 4
    %v7247 = vshll.u32 %v6901, 16
    %v7249 = vrot.slane %v7247, 5
    %v7250 = vor.u32 %v7246, %v7249
    %v7251 = vrot.slane %v7250, 4
    %v7253 = vshll.u32 %v6902, 16
    %v7255 = vrot.slane %v7253, 5
    %v7256 = vsel %vm142, %v7251, %v7255
    %v7257 = vshrl.u32 %v6902, 16
    %v7259 = vrot.slane %v7257, 4
    %v7260 = vor.u32 %v7259, %v7255
    %v7261 = vrot.slane %v7260, 4
    %v7263 = vshll.u32 %v6903, 16
    %v7265 = vrot.slane %v7263, 5
    %v7266 = vsel %vm142, %v7261, %v7265
    %v7268 = vshrl.u32 %v6904, 16
    %v7270 = vrot.slane %v7268, 4
    %v7271 = vshll.u32 %v6904, 16
    %v7273 = vrot.slane %v7271, 5
    %v7274 = vor.u32 %v7270, %v7273
    %v7275 = vrot.slane %v7274, 4
    %v7277 = vshll.u32 %v6905, 16
    %v7279 = vrot.slane %v7277, 5
    %v7280 = vsel %vm142, %v7275, %v7279
    %v7281 = vshrl.u32 %v6905, 16
    %v7283 = vrot.slane %v7281, 4
    %v7284 = vor.u32 %v7283, %v7279
    %v7285 = vrot.slane %v7284, 4
    %v7287 = vshll.u32 %v6906, 16
    %v7289 = vrot.slane %v7287, 5
    %v7290 = vsel %vm142, %v7285, %v7289
    %7323 = vst [vmem:[#allocation2 + $0x1c] sm:$0xf] %v6920
    %7324 = vst [vmem:[#allocation2 + $0x40] sm:$0xf] %v6930
    %7325 = vst [vmem:[#allocation2 + $0x64] sm:$0xf] %v6944
    %7326 = vst [vmem:[#allocation2 + $0x88] sm:$0xf] %v6954
    %7327 = vst [vmem:[#allocation2 + $0xac] sm:$0xf] %v6968
    %7328 = vst [vmem:[#allocation2 + $0xd0] sm:$0xf] %v6978
    %7329 = vst [vmem:[#allocation2 + $0xf4] sm:$0xf] %v6992
    %7330 = vst [vmem:[#allocation2 + $0x118] sm:$0xf] %v7002
    %7331 = vst [vmem:[#allocation2 + $0x13c] sm:$0xf] %v7016
    %7332 = vst [vmem:[#allocation2 + $0x160] sm:$0xf] %v7026
    %7333 = vst [vmem:[#allocation2 + $0x184] sm:$0xf] %v7040
    %7334 = vst [vmem:[#allocation2 + $0x1a8] sm:$0xf] %v7050
    %7335 = vst [vmem:[#allocation2 + $0x1cc] sm:$0xf] %v7064
    %7336 = vst [vmem:[#allocation2 + $0x1f0] sm:$0xf] %v7074
    %7337 = vst [vmem:[#allocation2 + $0x214] sm:$0xf] %v7088
    %7338 = vst [vmem:[#allocation2 + $0x238] sm:$0xf] %v7098
    %7339 = vst [vmem:[#allocation2 + $0x25c] sm:$0xf] %v7112
    %7340 = vst [vmem:[#allocation2 + $0x280] sm:$0xf] %v7122
    %7341 = vst [vmem:[#allocation2 + $0x2a4] sm:$0xf] %v7136
    %7342 = vst [vmem:[#allocation2 + $0x2c8] sm:$0xf] %v7146
    %7343 = vst [vmem:[#allocation2 + $0x2ec] sm:$0xf] %v7160
    %7344 = vst [vmem:[#allocation2 + $0x310] sm:$0xf] %v7170
    %7345 = vst [vmem:[#allocation2 + $0x334] sm:$0xf] %v7184
    %7346 = vst [vmem:[#allocation2 + $0x358] sm:$0xf] %v7194
    %7347 = vst [vmem:[#allocation2 + $0x37c] sm:$0xf] %v7208
    %7348 = vst [vmem:[#allocation2 + $0x3a0] sm:$0xf] %v7218
    %7349 = vst [vmem:[#allocation2 + $0x3c4] sm:$0xf] %v7232
    %7350 = vst [vmem:[#allocation2 + $0x3e8] sm:$0xf] %v7242
    %7351 = vst [vmem:[#allocation2 + $0x40c] sm:$0xf] %v7256
    %7352 = vst [vmem:[#allocation2 + $0x430] sm:$0xf] %v7266
    %7353 = vst [vmem:[#allocation2 + $0x454] sm:$0xf] %v7280
    %7354 = vst [vmem:[#allocation2 + $0x478] sm:$0xf] %v7290
    %v7355 = vld [vmem:[%s6794] sm:$0xe]
    %v7356 = vld [vmem:[%s6794 + $0x4] sm:$0xf]
    %v7357 = vld [vmem:[%s6794 + $0x8] sm:$0x1]
    %v7358 = vld [vmem:[%s6794 + $0xc] sm:$0xe]
    %v7359 = vld [vmem:[%s6794 + $0x10] sm:$0xf]
    %v7360 = vld [vmem:[%s6794 + $0x14] sm:$0x1]
    %v7361 = vld [vmem:[%s6794 + $0x18] sm:$0xe]
    %v7362 = vld [vmem:[%s6794 + $0x1c] sm:$0xf]
    %v7363 = vld [vmem:[%s6794 + $0x20] sm:$0x1]
    %v7364 = vld [vmem:[%s6794 + $0x24] sm:$0xe]
    %v7365 = vld [vmem:[%s6794 + $0x28] sm:$0xf]
    %v7366 = vld [vmem:[%s6794 + $0x2c] sm:$0x1]
    %v7367 = vld [vmem:[%s6794 + $0x30] sm:$0xe]
    %v7368 = vld [vmem:[%s6794 + $0x34] sm:$0xf]
    %v7369 = vld [vmem:[%s6794 + $0x38] sm:$0x1]
    %v7370 = vld [vmem:[%s6794 + $0x3c] sm:$0xe]
    %v7371 = vld [vmem:[%s6794 + $0x40] sm:$0xf]
    %v7372 = vld [vmem:[%s6794 + $0x44] sm:$0x1]
    %v7373 = vld [vmem:[%s6794 + $0x48] sm:$0xe]
    %v7374 = vld [vmem:[%s6794 + $0x4c] sm:$0xf]
    %v7375 = vld [vmem:[%s6794 + $0x50] sm:$0x1]
    %v7376 = vld [vmem:[%s6794 + $0x54] sm:$0xe]
    %v7377 = vld [vmem:[%s6794 + $0x58] sm:$0xf]
    %v7378 = vld [vmem:[%s6794 + $0x5c] sm:$0x1]
    %v7379 = vld [vmem:[%s6794 + $0x60] sm:$0xe]
    %v7380 = vld [vmem:[%s6794 + $0x64] sm:$0xf]
    %v7381 = vld [vmem:[%s6794 + $0x68] sm:$0x1]
    %v7382 = vld [vmem:[%s6794 + $0x6c] sm:$0xe]
    %v7383 = vld [vmem:[%s6794 + $0x70] sm:$0xf]
    %v7384 = vld [vmem:[%s6794 + $0x74] sm:$0x1]
    %v7385 = vld [vmem:[%s6794 + $0x78] sm:$0xe]
    %v7386 = vld [vmem:[%s6794 + $0x7c] sm:$0xf]
    %v7387 = vld [vmem:[%s6794 + $0x80] sm:$0x1]
    %v7388 = vld [vmem:[%s6794 + $0x84] sm:$0xe]
    %v7389 = vld [vmem:[%s6794 + $0x88] sm:$0xf]
    %v7390 = vld [vmem:[%s6794 + $0x8c] sm:$0x1]
    %v7391 = vld [vmem:[%s6794 + $0x90] sm:$0xe]
    %v7392 = vld [vmem:[%s6794 + $0x94] sm:$0xf]
    %v7393 = vld [vmem:[%s6794 + $0x98] sm:$0x1]
    %v7394 = vld [vmem:[%s6794 + $0x9c] sm:$0xe]
    %v7395 = vld [vmem:[%s6794 + $0xa0] sm:$0xf]
    %v7396 = vld [vmem:[%s6794 + $0xa4] sm:$0x1]
    %v7397 = vld [vmem:[%s6794 + $0xa8] sm:$0xe]
    %v7398 = vld [vmem:[%s6794 + $0xac] sm:$0xf]
    %v7399 = vld [vmem:[%s6794 + $0xb0] sm:$0x1]
    %v7400 = vld [vmem:[%s6794 + $0xb4] sm:$0xe]
    %v7401 = vld [vmem:[%s6794 + $0xb8] sm:$0xf]
    %v7402 = vld [vmem:[%s6794 + $0xbc] sm:$0x1]
    %v7451 = vrot.slane %v7355, 5
    %v7452 = vrot.slane %v7451, 4
    %v7453 = vrot.slane %v7356, 5
    %v7454 = vsel %vm689, %v7452, %v7453
    %v7455 = vrot.slane %v7453, 4
    %v7456 = vrot.slane %v7357, 5
    %v7457 = vsel %vm689, %v7455, %v7456
    %v7458 = vrot.slane %v7358, 5
    %v7459 = vrot.slane %v7458, 4
    %v7460 = vrot.slane %v7359, 5
    %v7461 = vsel %vm689, %v7459, %v7460
    %v7462 = vrot.slane %v7460, 4
    %v7463 = vrot.slane %v7360, 5
    %v7464 = vsel %vm689, %v7462, %v7463
    %v7465 = vrot.slane %v7361, 5
    %v7466 = vrot.slane %v7465, 4
    %v7467 = vrot.slane %v7362, 5
    %v7468 = vsel %vm689, %v7466, %v7467
    %v7469 = vrot.slane %v7467, 4
    %v7470 = vrot.slane %v7363, 5
    %v7471 = vsel %vm689, %v7469, %v7470
    %v7472 = vrot.slane %v7364, 5
    %v7473 = vrot.slane %v7472, 4
    %v7474 = vrot.slane %v7365, 5
    %v7475 = vsel %vm689, %v7473, %v7474
    %v7476 = vrot.slane %v7474, 4
    %v7477 = vrot.slane %v7366, 5
    %v7478 = vsel %vm689, %v7476, %v7477
    %v7479 = vrot.slane %v7367, 5
    %v7480 = vrot.slane %v7479, 4
    %v7481 = vrot.slane %v7368, 5
    %v7482 = vsel %vm689, %v7480, %v7481
    %v7483 = vrot.slane %v7481, 4
    %v7484 = vrot.slane %v7369, 5
    %v7485 = vsel %vm689, %v7483, %v7484
    %v7486 = vrot.slane %v7370, 5
    %v7487 = vrot.slane %v7486, 4
    %v7488 = vrot.slane %v7371, 5
    %v7489 = vsel %vm689, %v7487, %v7488
    %v7490 = vrot.slane %v7488, 4
    %v7491 = vrot.slane %v7372, 5
    %v7492 = vsel %vm689, %v7490, %v7491
    %v7493 = vrot.slane %v7373, 5
    %v7494 = vrot.slane %v7493, 4
    %v7495 = vrot.slane %v7374, 5
    %v7496 = vsel %vm689, %v7494, %v7495
    %v7497 = vrot.slane %v7495, 4
    %v7498 = vrot.slane %v7375, 5
    %v7499 = vsel %vm689, %v7497, %v7498
    %v7500 = vrot.slane %v7376, 5
    %v7501 = vrot.slane %v7500, 4
    %v7502 = vrot.slane %v7377, 5
    %v7503 = vsel %vm689, %v7501, %v7502
    %v7504 = vrot.slane %v7502, 4
    %v7505 = vrot.slane %v7378, 5
    %v7506 = vsel %vm689, %v7504, %v7505
    %v7507 = vrot.slane %v7379, 5
    %v7508 = vrot.slane %v7507, 4
    %v7509 = vrot.slane %v7380, 5
    %v7510 = vsel %vm689, %v7508, %v7509
    %v7511 = vrot.slane %v7509, 4
    %v7512 = vrot.slane %v7381, 5
    %v7513 = vsel %vm689, %v7511, %v7512
    %v7514 = vrot.slane %v7382, 5
    %v7515 = vrot.slane %v7514, 4
    %v7516 = vrot.slane %v7383, 5
    %v7517 = vsel %vm689, %v7515, %v7516
    %v7518 = vrot.slane %v7516, 4
    %v7519 = vrot.slane %v7384, 5
    %v7520 = vsel %vm689, %v7518, %v7519
    %v7521 = vrot.slane %v7385, 5
    %v7522 = vrot.slane %v7521, 4
    %v7523 = vrot.slane %v7386, 5
    %v7524 = vsel %vm689, %v7522, %v7523
    %v7525 = vrot.slane %v7523, 4
    %v7526 = vrot.slane %v7387, 5
    %v7527 = vsel %vm689, %v7525, %v7526
    %v7528 = vrot.slane %v7388, 5
    %v7529 = vrot.slane %v7528, 4
    %v7530 = vrot.slane %v7389, 5
    %v7531 = vsel %vm689, %v7529, %v7530
    %v7532 = vrot.slane %v7530, 4
    %v7533 = vrot.slane %v7390, 5
    %v7534 = vsel %vm689, %v7532, %v7533
    %v7535 = vrot.slane %v7391, 5
    %v7536 = vrot.slane %v7535, 4
    %v7537 = vrot.slane %v7392, 5
    %v7538 = vsel %vm689, %v7536, %v7537
    %v7539 = vrot.slane %v7537, 4
    %v7540 = vrot.slane %v7393, 5
    %v7541 = vsel %vm689, %v7539, %v7540
    %v7542 = vrot.slane %v7394, 5
    %v7543 = vrot.slane %v7542, 4
    %v7544 = vrot.slane %v7395, 5
    %v7545 = vsel %vm689, %v7543, %v7544
    %v7546 = vrot.slane %v7544, 4
    %v7547 = vrot.slane %v7396, 5
    %v7548 = vsel %vm689, %v7546, %v7547
    %v7549 = vrot.slane %v7397, 5
    %v7550 = vrot.slane %v7549, 4
    %v7551 = vrot.slane %v7398, 5
    %v7552 = vsel %vm689, %v7550, %v7551
    %v7553 = vrot.slane %v7551, 4
    %v7554 = vrot.slane %v7399, 5
    %v7555 = vsel %vm689, %v7553, %v7554
    %v7556 = vrot.slane %v7400, 5
    %v7557 = vrot.slane %v7556, 4
    %v7558 = vrot.slane %v7401, 5
    %v7559 = vsel %vm689, %v7557, %v7558
    %v7560 = vrot.slane %v7558, 4
    %v7561 = vrot.slane %v7402, 5
    %v7562 = vsel %vm689, %v7560, %v7561
    %7595 = vst [vmem:[#allocation2 + $0x20] sm:$0xf] %v7454
    %7596 = vst [vmem:[#allocation2 + $0x44] sm:$0xf] %v7457
    %7597 = vst [vmem:[#allocation2 + $0x68] sm:$0xf] %v7461
    %7598 = vst [vmem:[#allocation2 + $0x8c] sm:$0xf] %v7464
    %7599 = vst [vmem:[#allocation2 + $0xb0] sm:$0xf] %v7468
    %7600 = vst [vmem:[#allocation2 + $0xd4] sm:$0xf] %v7471
    %7601 = vst [vmem:[#allocation2 + $0xf8] sm:$0xf] %v7475
    %7602 = vst [vmem:[#allocation2 + $0x11c] sm:$0xf] %v7478
    %7603 = vst [vmem:[#allocation2 + $0x140] sm:$0xf] %v7482
    %7604 = vst [vmem:[#allocation2 + $0x164] sm:$0xf] %v7485
    %7605 = vst [vmem:[#allocation2 + $0x188] sm:$0xf] %v7489
    %7606 = vst [vmem:[#allocation2 + $0x1ac] sm:$0xf] %v7492
    %7607 = vst [vmem:[#allocation2 + $0x1d0] sm:$0xf] %v7496
    %7608 = vst [vmem:[#allocation2 + $0x1f4] sm:$0xf] %v7499
    %7609 = vst [vmem:[#allocation2 + $0x218] sm:$0xf] %v7503
    %7610 = vst [vmem:[#allocation2 + $0x23c] sm:$0xf] %v7506
    %7611 = vst [vmem:[#allocation2 + $0x260] sm:$0xf] %v7510
    %7612 = vst [vmem:[#allocation2 + $0x284] sm:$0xf] %v7513
    %7613 = vst [vmem:[#allocation2 + $0x2a8] sm:$0xf] %v7517
    %7614 = vst [vmem:[#allocation2 + $0x2cc] sm:$0xf] %v7520
    %7615 = vst [vmem:[#allocation2 + $0x2f0] sm:$0xf] %v7524
    %7616 = vst [vmem:[#allocation2 + $0x314] sm:$0xf] %v7527
    %7617 = vst [vmem:[#allocation2 + $0x338] sm:$0xf] %v7531
    %7618 = vst [vmem:[#allocation2 + $0x35c] sm:$0xf] %v7534
    %7619 = vst [vmem:[#allocation2 + $0x380] sm:$0xf] %v7538
    %7620 = vst [vmem:[#allocation2 + $0x3a4] sm:$0xf] %v7541
    %7621 = vst [vmem:[#allocation2 + $0x3c8] sm:$0xf] %v7545
    %7622 = vst [vmem:[#allocation2 + $0x3ec] sm:$0xf] %v7548
    %7623 = vst [vmem:[#allocation2 + $0x410] sm:$0xf] %v7552
    %7624 = vst [vmem:[#allocation2 + $0x434] sm:$0xf] %v7555
    %7625 = vst [vmem:[#allocation2 + $0x458] sm:$0xf] %v7559
    %7626 = vst [vmem:[#allocation2 + $0x47c] sm:$0xf] %v7562
    %v7627 = vld [vmem:[#allocation2] sm:$0xff]
    %v7628 = vld [vmem:[#allocation2 + $0x8] sm:$0xff]
    %v7629 = vld [vmem:[#allocation2 + $0x10] sm:$0xff]
    %v7630 = vld [vmem:[#allocation2 + $0x18] sm:$0xff]
    %v7631 = vld [vmem:[#allocation2 + $0x20] sm:$0xf]
    %v7632 = vld [vmem:[#allocation2 + $0x24] sm:$0xff]
    %v7633 = vld [vmem:[#allocation2 + $0x2c] sm:$0xff]
    %v7634 = vld [vmem:[#allocation2 + $0x34] sm:$0xff]
    %v7635 = vld [vmem:[#allocation2 + $0x3c] sm:$0xff]
    %v7636 = vld [vmem:[#allocation2 + $0x44] sm:$0xf]
    %v7637 = vld [vmem:[#allocation2 + $0x48] sm:$0xff]
    %v7638 = vld [vmem:[#allocation2 + $0x50] sm:$0xff]
    %v7639 = vld [vmem:[#allocation2 + $0x58] sm:$0xff]
    %v7640 = vld [vmem:[#allocation2 + $0x60] sm:$0xff]
    %v7641 = vld [vmem:[#allocation2 + $0x68] sm:$0xf]
    %v7642 = vld [vmem:[#allocation2 + $0x6c] sm:$0xff]
    %v7643 = vld [vmem:[#allocation2 + $0x74] sm:$0xff]
    %v7644 = vld [vmem:[#allocation2 + $0x7c] sm:$0xff]
    %v7645 = vld [vmem:[#allocation2 + $0x84] sm:$0xff]
    %v7646 = vld [vmem:[#allocation2 + $0x8c] sm:$0xf]
    %v7647 = vld [vmem:[#allocation2 + $0x90] sm:$0xff]
    %v7648 = vld [vmem:[#allocation2 + $0x98] sm:$0xff]
    %v7649 = vld [vmem:[#allocation2 + $0xa0] sm:$0xff]
    %v7650 = vld [vmem:[#allocation2 + $0xa8] sm:$0xff]
    %v7651 = vld [vmem:[#allocation2 + $0xb0] sm:$0xf]
    %v7652 = vld [vmem:[#allocation2 + $0xb4] sm:$0xff]
    %v7653 = vld [vmem:[#allocation2 + $0xbc] sm:$0xff]
    %v7654 = vld [vmem:[#allocation2 + $0xc4] sm:$0xff]
    %v7655 = vld [vmem:[#allocation2 + $0xcc] sm:$0xff]
    %v7656 = vld [vmem:[#allocation2 + $0xd4] sm:$0xf]
    %v7657 = vld [vmem:[#allocation2 + $0xd8] sm:$0xff]
    %v7658 = vld [vmem:[#allocation2 + $0xe0] sm:$0xff]
    %v7659 = vld [vmem:[#allocation2 + $0xe8] sm:$0xff]
    %v7660 = vld [vmem:[#allocation2 + $0xf0] sm:$0xff]
    %v7661 = vld [vmem:[#allocation2 + $0xf8] sm:$0xf]
    %v7662 = vld [vmem:[#allocation2 + $0xfc] sm:$0xff]
    %v7663 = vld [vmem:[#allocation2 + $0x104] sm:$0xff]
    %v7664 = vld [vmem:[#allocation2 + $0x10c] sm:$0xff]
    %v7665 = vld [vmem:[#allocation2 + $0x114] sm:$0xff]
    %v7666 = vld [vmem:[#allocation2 + $0x11c] sm:$0xf]
    %v7667 = vld [vmem:[#allocation2 + $0x120] sm:$0xff]
    %v7668 = vld [vmem:[#allocation2 + $0x128] sm:$0xff]
    %v7669 = vld [vmem:[#allocation2 + $0x130] sm:$0xff]
    %v7670 = vld [vmem:[#allocation2 + $0x138] sm:$0xff]
    %v7671 = vld [vmem:[#allocation2 + $0x140] sm:$0xf]
    %v7672 = vld [vmem:[#allocation2 + $0x144] sm:$0xff]
    %v7673 = vld [vmem:[#allocation2 + $0x14c] sm:$0xff]
    %v7674 = vld [vmem:[#allocation2 + $0x154] sm:$0xff]
    %v7675 = vld [vmem:[#allocation2 + $0x15c] sm:$0xff]
    %v7676 = vld [vmem:[#allocation2 + $0x164] sm:$0xf]
    %v7677 = vld [vmem:[#allocation2 + $0x168] sm:$0xff]
    %v7678 = vld [vmem:[#allocation2 + $0x170] sm:$0xff]
    %v7679 = vld [vmem:[#allocation2 + $0x178] sm:$0xff]
    %v7680 = vld [vmem:[#allocation2 + $0x180] sm:$0xff]
    %v7681 = vld [vmem:[#allocation2 + $0x188] sm:$0xf]
    %v7682 = vld [vmem:[#allocation2 + $0x18c] sm:$0xff]
    %v7683 = vld [vmem:[#allocation2 + $0x194] sm:$0xff]
    %v7684 = vld [vmem:[#allocation2 + $0x19c] sm:$0xff]
    %v7685 = vld [vmem:[#allocation2 + $0x1a4] sm:$0xff]
    %v7686 = vld [vmem:[#allocation2 + $0x1ac] sm:$0xf]
    %v7687 = vld [vmem:[#allocation2 + $0x1b0] sm:$0xff]
    %v7688 = vld [vmem:[#allocation2 + $0x1b8] sm:$0xff]
    %v7689 = vld [vmem:[#allocation2 + $0x1c0] sm:$0xff]
    %v7690 = vld [vmem:[#allocation2 + $0x1c8] sm:$0xff]
    %v7691 = vld [vmem:[#allocation2 + $0x1d0] sm:$0xf]
    %v7692 = vld [vmem:[#allocation2 + $0x1d4] sm:$0xff]
    %v7693 = vld [vmem:[#allocation2 + $0x1dc] sm:$0xff]
    %v7694 = vld [vmem:[#allocation2 + $0x1e4] sm:$0xff]
    %v7695 = vld [vmem:[#allocation2 + $0x1ec] sm:$0xff]
    %v7696 = vld [vmem:[#allocation2 + $0x1f4] sm:$0xf]
    %v7697 = vld [vmem:[#allocation2 + $0x1f8] sm:$0xff]
    %v7698 = vld [vmem:[#allocation2 + $0x200] sm:$0xff]
    %v7699 = vld [vmem:[#allocation2 + $0x208] sm:$0xff]
    %v7700 = vld [vmem:[#allocation2 + $0x210] sm:$0xff]
    %v7701 = vld [vmem:[#allocation2 + $0x218] sm:$0xf]
    %v7702 = vld [vmem:[#allocation2 + $0x21c] sm:$0xff]
    %v7703 = vld [vmem:[#allocation2 + $0x224] sm:$0xff]
    %v7704 = vld [vmem:[#allocation2 + $0x22c] sm:$0xff]
    %v7705 = vld [vmem:[#allocation2 + $0x234] sm:$0xff]
    %v7706 = vld [vmem:[#allocation2 + $0x23c] sm:$0xf]
    %v7707 = vld [vmem:[#allocation2 + $0x240] sm:$0xff]
    %v7708 = vld [vmem:[#allocation2 + $0x248] sm:$0xff]
    %v7709 = vld [vmem:[#allocation2 + $0x250] sm:$0xff]
    %v7710 = vld [vmem:[#allocation2 + $0x258] sm:$0xff]
    %v7711 = vld [vmem:[#allocation2 + $0x260] sm:$0xf]
    %v7712 = vld [vmem:[#allocation2 + $0x264] sm:$0xff]
    %v7713 = vld [vmem:[#allocation2 + $0x26c] sm:$0xff]
    %v7714 = vld [vmem:[#allocation2 + $0x274] sm:$0xff]
    %v7715 = vld [vmem:[#allocation2 + $0x27c] sm:$0xff]
    %v7716 = vld [vmem:[#allocation2 + $0x284] sm:$0xf]
    %v7717 = vld [vmem:[#allocation2 + $0x288] sm:$0xff]
    %v7718 = vld [vmem:[#allocation2 + $0x290] sm:$0xff]
    %v7719 = vld [vmem:[#allocation2 + $0x298] sm:$0xff]
    %v7720 = vld [vmem:[#allocation2 + $0x2a0] sm:$0xff]
    %v7721 = vld [vmem:[#allocation2 + $0x2a8] sm:$0xf]
    %v7722 = vld [vmem:[#allocation2 + $0x2ac] sm:$0xff]
    %v7723 = vld [vmem:[#allocation2 + $0x2b4] sm:$0xff]
    %v7724 = vld [vmem:[#allocation2 + $0x2bc] sm:$0xff]
    %v7725 = vld [vmem:[#allocation2 + $0x2c4] sm:$0xff]
    %v7726 = vld [vmem:[#allocation2 + $0x2cc] sm:$0xf]
    %v7727 = vld [vmem:[#allocation2 + $0x2d0] sm:$0xff]
    %v7728 = vld [vmem:[#allocation2 + $0x2d8] sm:$0xff]
    %v7729 = vld [vmem:[#allocation2 + $0x2e0] sm:$0xff]
    %v7730 = vld [vmem:[#allocation2 + $0x2e8] sm:$0xff]
    %v7731 = vld [vmem:[#allocation2 + $0x2f0] sm:$0xf]
    %v7732 = vld [vmem:[#allocation2 + $0x2f4] sm:$0xff]
    %v7733 = vld [vmem:[#allocation2 + $0x2fc] sm:$0xff]
    %v7734 = vld [vmem:[#allocation2 + $0x304] sm:$0xff]
    %v7735 = vld [vmem:[#allocation2 + $0x30c] sm:$0xff]
    %v7736 = vld [vmem:[#allocation2 + $0x314] sm:$0xf]
    %v7737 = vld [vmem:[#allocation2 + $0x318] sm:$0xff]
    %v7738 = vld [vmem:[#allocation2 + $0x320] sm:$0xff]
    %v7739 = vld [vmem:[#allocation2 + $0x328] sm:$0xff]
    %v7740 = vld [vmem:[#allocation2 + $0x330] sm:$0xff]
    %v7741 = vld [vmem:[#allocation2 + $0x338] sm:$0xf]
    %v7742 = vld [vmem:[#allocation2 + $0x33c] sm:$0xff]
    %v7743 = vld [vmem:[#allocation2 + $0x344] sm:$0xff]
    %v7744 = vld [vmem:[#allocation2 + $0x34c] sm:$0xff]
    %v7745 = vld [vmem:[#allocation2 + $0x354] sm:$0xff]
    %v7746 = vld [vmem:[#allocation2 + $0x35c] sm:$0xf]
    %v7747 = vld [vmem:[#allocation2 + $0x360] sm:$0xff]
    %v7748 = vld [vmem:[#allocation2 + $0x368] sm:$0xff]
    %v7749 = vld [vmem:[#allocation2 + $0x370] sm:$0xff]
    %v7750 = vld [vmem:[#allocation2 + $0x378] sm:$0xff]
    %v7751 = vld [vmem:[#allocation2 + $0x380] sm:$0xf]
    %v7752 = vld [vmem:[#allocation2 + $0x384] sm:$0xff]
    %v7753 = vld [vmem:[#allocation2 + $0x38c] sm:$0xff]
    %v7754 = vld [vmem:[#allocation2 + $0x394] sm:$0xff]
    %v7755 = vld [vmem:[#allocation2 + $0x39c] sm:$0xff]
    %v7756 = vld [vmem:[#allocation2 + $0x3a4] sm:$0xf]
    %v7757 = vld [vmem:[#allocation2 + $0x3a8] sm:$0xff]
    %v7758 = vld [vmem:[#allocation2 + $0x3b0] sm:$0xff]
    %v7759 = vld [vmem:[#allocation2 + $0x3b8] sm:$0xff]
    %v7760 = vld [vmem:[#allocation2 + $0x3c0] sm:$0xff]
    %v7761 = vld [vmem:[#allocation2 + $0x3c8] sm:$0xf]
    %v7762 = vld [vmem:[#allocation2 + $0x3cc] sm:$0xff]
    %v7763 = vld [vmem:[#allocation2 + $0x3d4] sm:$0xff]
    %v7764 = vld [vmem:[#allocation2 + $0x3dc] sm:$0xff]
    %v7765 = vld [vmem:[#allocation2 + $0x3e4] sm:$0xff]
    %v7766 = vld [vmem:[#allocation2 + $0x3ec] sm:$0xf]
    %v7767 = vld [vmem:[#allocation2 + $0x3f0] sm:$0xff]
    %v7768 = vld [vmem:[#allocation2 + $0x3f8] sm:$0xff]
    %v7769 = vld [vmem:[#allocation2 + $0x400] sm:$0xff]
    %v7770 = vld [vmem:[#allocation2 + $0x408] sm:$0xff]
    %v7771 = vld [vmem:[#allocation2 + $0x410] sm:$0xf]
    %v7772 = vld [vmem:[#allocation2 + $0x414] sm:$0xff]
    %v7773 = vld [vmem:[#allocation2 + $0x41c] sm:$0xff]
    %v7774 = vld [vmem:[#allocation2 + $0x424] sm:$0xff]
    %v7775 = vld [vmem:[#allocation2 + $0x42c] sm:$0xff]
    %v7776 = vld [vmem:[#allocation2 + $0x434] sm:$0xf]
    %v7777 = vld [vmem:[#allocation2 + $0x438] sm:$0xff]
    %v7778 = vld [vmem:[#allocation2 + $0x440] sm:$0xff]
    %v7779 = vld [vmem:[#allocation2 + $0x448] sm:$0xff]
    %v7780 = vld [vmem:[#allocation2 + $0x450] sm:$0xff]
    %v7781 = vld [vmem:[#allocation2 + $0x458] sm:$0xf]
    %v7782 = vld [vmem:[#allocation2 + $0x45c] sm:$0xff]
    %v7783 = vld [vmem:[#allocation2 + $0x464] sm:$0xff]
    %v7784 = vld [vmem:[#allocation2 + $0x46c] sm:$0xff]
    %v7785 = vld [vmem:[#allocation2 + $0x474] sm:$0xff]
    %v7786 = vld [vmem:[#allocation2 + $0x47c] sm:$0xf]
    %s7787 = scalar_lea.vmem %s1, 576
    %v7788 = vld [vmem:[%s7787] sm:$0xf]
    %v7789 = vld [vmem:[%s7787 + $0x4] sm:$0xf]
    %v7790 = vld [vmem:[%s7787 + $0x8] sm:$0xf]
    %v7791 = vld [vmem:[%s7787 + $0xc] sm:$0xf]
    %v7792 = vld [vmem:[%s7787 + $0x10] sm:$0xf]
    %v7793 = vld [vmem:[%s7787 + $0x14] sm:$0xf]
    %v7794 = vld [vmem:[%s7787 + $0x18] sm:$0xf]
    %v7795 = vld [vmem:[%s7787 + $0x1c] sm:$0xf]
    %v7796 = vld [vmem:[%s7787 + $0x20] sm:$0xf]
    %v7797 = vld [vmem:[%s7787 + $0x24] sm:$0xf]
    %v7798 = vld [vmem:[%s7787 + $0x28] sm:$0xf]
    %v7799 = vld [vmem:[%s7787 + $0x2c] sm:$0xf]
    %v7800 = vld [vmem:[%s7787 + $0x30] sm:$0xf]
    %v7801 = vld [vmem:[%s7787 + $0x34] sm:$0xf]
    %v7802 = vld [vmem:[%s7787 + $0x38] sm:$0xf]
    %v7803 = vld [vmem:[%s7787 + $0x3c] sm:$0xf]
    %v7804 = vld [vmem:[%s7787 + $0x40] sm:$0xf]
    %v7805 = vld [vmem:[%s7787 + $0x44] sm:$0xf]
    %v7806 = vld [vmem:[%s7787 + $0x48] sm:$0xf]
    %v7807 = vld [vmem:[%s7787 + $0x4c] sm:$0xf]
    %v7808 = vld [vmem:[%s7787 + $0x50] sm:$0xf]
    %v7809 = vld [vmem:[%s7787 + $0x54] sm:$0xf]
    %v7810 = vld [vmem:[%s7787 + $0x58] sm:$0xf]
    %v7811 = vld [vmem:[%s7787 + $0x5c] sm:$0xf]
    %v7812 = vld [vmem:[%s7787 + $0x60] sm:$0xf]
    %v7813 = vld [vmem:[%s7787 + $0x64] sm:$0xf]
    %v7814 = vld [vmem:[%s7787 + $0x68] sm:$0xf]
    %v7815 = vld [vmem:[%s7787 + $0x6c] sm:$0xf]
    %v7816 = vld [vmem:[%s7787 + $0x70] sm:$0xf]
    %v7817 = vld [vmem:[%s7787 + $0x74] sm:$0xf]
    %v7818 = vld [vmem:[%s7787 + $0x78] sm:$0xf]
    %v7819 = vld [vmem:[%s7787 + $0x7c] sm:$0xf]
    %v7820 = vld [vmem:[%s7787 + $0x80] sm:$0xf]
    %v7821 = vld [vmem:[%s7787 + $0x84] sm:$0xf]
    %v7822 = vld [vmem:[%s7787 + $0x88] sm:$0xf]
    %v7823 = vld [vmem:[%s7787 + $0x8c] sm:$0xf]
    %v7824 = vld [vmem:[%s7787 + $0x90] sm:$0xf]
    %v7825 = vld [vmem:[%s7787 + $0x94] sm:$0xf]
    %v7826 = vld [vmem:[%s7787 + $0x98] sm:$0xf]
    %v7827 = vld [vmem:[%s7787 + $0x9c] sm:$0xf]
    %v7828 = vld [vmem:[%s7787 + $0xa0] sm:$0xf]
    %v7829 = vld [vmem:[%s7787 + $0xa4] sm:$0xf]
    %v7830 = vld [vmem:[%s7787 + $0xa8] sm:$0xf]
    %v7831 = vld [vmem:[%s7787 + $0xac] sm:$0xf]
    %v7832 = vld [vmem:[%s7787 + $0xb0] sm:$0xf]
    %v7833 = vld [vmem:[%s7787 + $0xb4] sm:$0xf]
    %v7834 = vld [vmem:[%s7787 + $0xb8] sm:$0xf]
    %v7835 = vld [vmem:[%s7787 + $0xbc] sm:$0xf]
    %v7836 = vld [vmem:[%s7787 + $0xc0] sm:$0xf]
    %v7837 = vld [vmem:[%s7787 + $0xc4] sm:$0xf]
    %v7838 = vld [vmem:[%s7787 + $0xc8] sm:$0xf]
    %v7839 = vld [vmem:[%s7787 + $0xcc] sm:$0xf]
    %v7840 = vld [vmem:[%s7787 + $0xd0] sm:$0xf]
    %v7841 = vld [vmem:[%s7787 + $0xd4] sm:$0xf]
    %v7842 = vld [vmem:[%s7787 + $0xd8] sm:$0xf]
    %v7843 = vld [vmem:[%s7787 + $0xdc] sm:$0xf]
    %v7844 = vld [vmem:[%s7787 + $0xe0] sm:$0xf]
    %v7845 = vld [vmem:[%s7787 + $0xe4] sm:$0xf]
    %v7846 = vld [vmem:[%s7787 + $0xe8] sm:$0xf]
    %v7847 = vld [vmem:[%s7787 + $0xec] sm:$0xf]
    %v7848 = vld [vmem:[%s7787 + $0xf0] sm:$0xf]
    %v7849 = vld [vmem:[%s7787 + $0xf4] sm:$0xf]
    %v7850 = vld [vmem:[%s7787 + $0xf8] sm:$0xf]
    %v7851 = vld [vmem:[%s7787 + $0xfc] sm:$0xf]
    %v7852 = vld [vmem:[%s7787 + $0x100] sm:$0xf]
    %v7853 = vld [vmem:[%s7787 + $0x104] sm:$0xf]
    %v7854 = vld [vmem:[%s7787 + $0x108] sm:$0xf]
    %v7855 = vld [vmem:[%s7787 + $0x10c] sm:$0xf]
    %v7856 = vld [vmem:[%s7787 + $0x110] sm:$0xf]
    %v7857 = vld [vmem:[%s7787 + $0x114] sm:$0xf]
    %v7858 = vld [vmem:[%s7787 + $0x118] sm:$0xf]
    %v7859 = vld [vmem:[%s7787 + $0x11c] sm:$0xf]
    %v7860 = vld [vmem:[%s7787 + $0x120] sm:$0xf]
    %v7861 = vld [vmem:[%s7787 + $0x124] sm:$0xf]
    %v7862 = vld [vmem:[%s7787 + $0x128] sm:$0xf]
    %v7863 = vld [vmem:[%s7787 + $0x12c] sm:$0xf]
    %v7864 = vld [vmem:[%s7787 + $0x130] sm:$0xf]
    %v7865 = vld [vmem:[%s7787 + $0x134] sm:$0xf]
    %v7866 = vld [vmem:[%s7787 + $0x138] sm:$0xf]
    %v7867 = vld [vmem:[%s7787 + $0x13c] sm:$0xf]
    %v7868 = vld [vmem:[%s7787 + $0x140] sm:$0xf]
    %v7869 = vld [vmem:[%s7787 + $0x144] sm:$0xf]
    %v7870 = vld [vmem:[%s7787 + $0x148] sm:$0xf]
    %v7871 = vld [vmem:[%s7787 + $0x14c] sm:$0xf]
    %v7872 = vld [vmem:[%s7787 + $0x150] sm:$0xf]
    %v7873 = vld [vmem:[%s7787 + $0x154] sm:$0xf]
    %v7874 = vld [vmem:[%s7787 + $0x158] sm:$0xf]
    %v7875 = vld [vmem:[%s7787 + $0x15c] sm:$0xf]
    %v7876 = vld [vmem:[%s7787 + $0x160] sm:$0xf]
    %v7877 = vld [vmem:[%s7787 + $0x164] sm:$0xf]
    %v7878 = vld [vmem:[%s7787 + $0x168] sm:$0xf]
    %v7879 = vld [vmem:[%s7787 + $0x16c] sm:$0xf]
    %v7880 = vld [vmem:[%s7787 + $0x170] sm:$0xf]
    %v7881 = vld [vmem:[%s7787 + $0x174] sm:$0xf]
    %v7882 = vld [vmem:[%s7787 + $0x178] sm:$0xf]
    %v7883 = vld [vmem:[%s7787 + $0x17c] sm:$0xf]
    %v7884 = vld [vmem:[%s7787 + $0x180] sm:$0xf]
    %v7885 = vld [vmem:[%s7787 + $0x184] sm:$0xf]
    %v7886 = vld [vmem:[%s7787 + $0x188] sm:$0xf]
    %v7887 = vld [vmem:[%s7787 + $0x18c] sm:$0xf]
    %v7888 = vld [vmem:[%s7787 + $0x190] sm:$0xf]
    %v7889 = vld [vmem:[%s7787 + $0x194] sm:$0xf]
    %v7890 = vld [vmem:[%s7787 + $0x198] sm:$0xf]
    %v7891 = vld [vmem:[%s7787 + $0x19c] sm:$0xf]
    %v7892 = vld [vmem:[%s7787 + $0x1a0] sm:$0xf]
    %v7893 = vld [vmem:[%s7787 + $0x1a4] sm:$0xf]
    %v7894 = vld [vmem:[%s7787 + $0x1a8] sm:$0xf]
    %v7895 = vld [vmem:[%s7787 + $0x1ac] sm:$0xf]
    %v7896 = vld [vmem:[%s7787 + $0x1b0] sm:$0xf]
    %v7897 = vld [vmem:[%s7787 + $0x1b4] sm:$0xf]
    %v7898 = vld [vmem:[%s7787 + $0x1b8] sm:$0xf]
    %v7899 = vld [vmem:[%s7787 + $0x1bc] sm:$0xf]
    %v7900 = vld [vmem:[%s7787 + $0x1c0] sm:$0xf]
    %v7901 = vld [vmem:[%s7787 + $0x1c4] sm:$0xf]
    %v7902 = vld [vmem:[%s7787 + $0x1c8] sm:$0xf]
    %v7903 = vld [vmem:[%s7787 + $0x1cc] sm:$0xf]
    %v7904 = vld [vmem:[%s7787 + $0x1d0] sm:$0xf]
    %v7905 = vld [vmem:[%s7787 + $0x1d4] sm:$0xf]
    %v7906 = vld [vmem:[%s7787 + $0x1d8] sm:$0xf]
    %v7907 = vld [vmem:[%s7787 + $0x1dc] sm:$0xf]
    %v7908 = vld [vmem:[%s7787 + $0x1e0] sm:$0xf]
    %v7909 = vld [vmem:[%s7787 + $0x1e4] sm:$0xf]
    %v7910 = vld [vmem:[%s7787 + $0x1e8] sm:$0xf]
    %v7911 = vld [vmem:[%s7787 + $0x1ec] sm:$0xf]
    %v7912 = vld [vmem:[%s7787 + $0x1f0] sm:$0xf]
    %v7913 = vld [vmem:[%s7787 + $0x1f4] sm:$0xf]
    %v7914 = vld [vmem:[%s7787 + $0x1f8] sm:$0xf]
    %v7915 = vld [vmem:[%s7787 + $0x1fc] sm:$0xf]
    %v7916 = vld [vmem:[%s7787 + $0x200] sm:$0xf]
    %v7917 = vld [vmem:[%s7787 + $0x204] sm:$0xf]
    %v7918 = vld [vmem:[%s7787 + $0x208] sm:$0xf]
    %v7919 = vld [vmem:[%s7787 + $0x20c] sm:$0xf]
    %v7920 = vld [vmem:[%s7787 + $0x210] sm:$0xf]
    %v7921 = vld [vmem:[%s7787 + $0x214] sm:$0xf]
    %v7922 = vld [vmem:[%s7787 + $0x218] sm:$0xf]
    %v7923 = vld [vmem:[%s7787 + $0x21c] sm:$0xf]
    %v7924 = vld [vmem:[%s7787 + $0x220] sm:$0xf]
    %v7925 = vld [vmem:[%s7787 + $0x224] sm:$0xf]
    %v7926 = vld [vmem:[%s7787 + $0x228] sm:$0xf]
    %v7927 = vld [vmem:[%s7787 + $0x22c] sm:$0xf]
    %v7928 = vld [vmem:[%s7787 + $0x230] sm:$0xf]
    %v7929 = vld [vmem:[%s7787 + $0x234] sm:$0xf]
    %v7930 = vld [vmem:[%s7787 + $0x238] sm:$0xf]
    %v7931 = vld [vmem:[%s7787 + $0x23c] sm:$0xf]
    %v8092 = vunpack.c.l.b16 %v7627
    %v8093 = vunpack.c.h.b16 %v7627
    %v8094 = vunpack.c.l.b16 %v7628
    %v8095 = vunpack.c.h.b16 %v7628
    %v8096 = vunpack.c.l.b16 %v7629
    %v8097 = vunpack.c.h.b16 %v7629
    %v8098 = vunpack.c.l.b16 %v7630
    %v8099 = vunpack.c.h.b16 %v7630
    %v8100 = vunpack.c.l.b16 %v7631
    %v8101 = vunpack.c.l.b16 %v7632
    %v8102 = vunpack.c.h.b16 %v7632
    %v8103 = vunpack.c.l.b16 %v7633
    %v8104 = vunpack.c.h.b16 %v7633
    %v8105 = vunpack.c.l.b16 %v7634
    %v8106 = vunpack.c.h.b16 %v7634
    %v8107 = vunpack.c.l.b16 %v7635
    %v8108 = vunpack.c.h.b16 %v7635
    %v8109 = vunpack.c.l.b16 %v7636
    %v8110 = vunpack.c.l.b16 %v7637
    %v8111 = vunpack.c.h.b16 %v7637
    %v8112 = vunpack.c.l.b16 %v7638
    %v8113 = vunpack.c.h.b16 %v7638
    %v8114 = vunpack.c.l.b16 %v7639
    %v8115 = vunpack.c.h.b16 %v7639
    %v8116 = vunpack.c.l.b16 %v7640
    %v8117 = vunpack.c.h.b16 %v7640
    %v8118 = vunpack.c.l.b16 %v7641
    %v8119 = vunpack.c.l.b16 %v7642
    %v8120 = vunpack.c.h.b16 %v7642
    %v8121 = vunpack.c.l.b16 %v7643
    %v8122 = vunpack.c.h.b16 %v7643
    %v8123 = vunpack.c.l.b16 %v7644
    %v8124 = vunpack.c.h.b16 %v7644
    %v8125 = vunpack.c.l.b16 %v7645
    %v8126 = vunpack.c.h.b16 %v7645
    %v8127 = vunpack.c.l.b16 %v7646
    %v8128 = vunpack.c.l.b16 %v7647
    %v8129 = vunpack.c.h.b16 %v7647
    %v8130 = vunpack.c.l.b16 %v7648
    %v8131 = vunpack.c.h.b16 %v7648
    %v8132 = vunpack.c.l.b16 %v7649
    %v8133 = vunpack.c.h.b16 %v7649
    %v8134 = vunpack.c.l.b16 %v7650
    %v8135 = vunpack.c.h.b16 %v7650
    %v8136 = vunpack.c.l.b16 %v7651
    %v8137 = vunpack.c.l.b16 %v7652
    %v8138 = vunpack.c.h.b16 %v7652
    %v8139 = vunpack.c.l.b16 %v7653
    %v8140 = vunpack.c.h.b16 %v7653
    %v8141 = vunpack.c.l.b16 %v7654
    %v8142 = vunpack.c.h.b16 %v7654
    %v8143 = vunpack.c.l.b16 %v7655
    %v8144 = vunpack.c.h.b16 %v7655
    %v8145 = vunpack.c.l.b16 %v7656
    %v8146 = vunpack.c.l.b16 %v7657
    %v8147 = vunpack.c.h.b16 %v7657
    %v8148 = vunpack.c.l.b16 %v7658
    %v8149 = vunpack.c.h.b16 %v7658
    %v8150 = vunpack.c.l.b16 %v7659
    %v8151 = vunpack.c.h.b16 %v7659
    %v8152 = vunpack.c.l.b16 %v7660
    %v8153 = vunpack.c.h.b16 %v7660
    %v8154 = vunpack.c.l.b16 %v7661
    %v8155 = vunpack.c.l.b16 %v7662
    %v8156 = vunpack.c.h.b16 %v7662
    %v8157 = vunpack.c.l.b16 %v7663
    %v8158 = vunpack.c.h.b16 %v7663
    %v8159 = vunpack.c.l.b16 %v7664
    %v8160 = vunpack.c.h.b16 %v7664
    %v8161 = vunpack.c.l.b16 %v7665
    %v8162 = vunpack.c.h.b16 %v7665
    %v8163 = vunpack.c.l.b16 %v7666
    %v8164 = vunpack.c.l.b16 %v7667
    %v8165 = vunpack.c.h.b16 %v7667
    %v8166 = vunpack.c.l.b16 %v7668
    %v8167 = vunpack.c.h.b16 %v7668
    %v8168 = vunpack.c.l.b16 %v7669
    %v8169 = vunpack.c.h.b16 %v7669
    %v8170 = vunpack.c.l.b16 %v7670
    %v8171 = vunpack.c.h.b16 %v7670
    %v8172 = vunpack.c.l.b16 %v7671
    %v8173 = vunpack.c.l.b16 %v7672
    %v8174 = vunpack.c.h.b16 %v7672
    %v8175 = vunpack.c.l.b16 %v7673
    %v8176 = vunpack.c.h.b16 %v7673
    %v8177 = vunpack.c.l.b16 %v7674
    %v8178 = vunpack.c.h.b16 %v7674
    %v8179 = vunpack.c.l.b16 %v7675
    %v8180 = vunpack.c.h.b16 %v7675
    %v8181 = vunpack.c.l.b16 %v7676
    %v8182 = vunpack.c.l.b16 %v7677
    %v8183 = vunpack.c.h.b16 %v7677
    %v8184 = vunpack.c.l.b16 %v7678
    %v8185 = vunpack.c.h.b16 %v7678
    %v8186 = vunpack.c.l.b16 %v7679
    %v8187 = vunpack.c.h.b16 %v7679
    %v8188 = vunpack.c.l.b16 %v7680
    %v8189 = vunpack.c.h.b16 %v7680
    %v8190 = vunpack.c.l.b16 %v7681
    %v8191 = vunpack.c.l.b16 %v7682
    %v8192 = vunpack.c.h.b16 %v7682
    %v8193 = vunpack.c.l.b16 %v7683
    %v8194 = vunpack.c.h.b16 %v7683
    %v8195 = vunpack.c.l.b16 %v7684
    %v8196 = vunpack.c.h.b16 %v7684
    %v8197 = vunpack.c.l.b16 %v7685
    %v8198 = vunpack.c.h.b16 %v7685
    %v8199 = vunpack.c.l.b16 %v7686
    %v8200 = vunpack.c.l.b16 %v7687
    %v8201 = vunpack.c.h.b16 %v7687
    %v8202 = vunpack.c.l.b16 %v7688
    %v8203 = vunpack.c.h.b16 %v7688
    %v8204 = vunpack.c.l.b16 %v7689
    %v8205 = vunpack.c.h.b16 %v7689
    %v8206 = vunpack.c.l.b16 %v7690
    %v8207 = vunpack.c.h.b16 %v7690
    %v8208 = vunpack.c.l.b16 %v7691
    %v8209 = vunpack.c.l.b16 %v7692
    %v8210 = vunpack.c.h.b16 %v7692
    %v8211 = vunpack.c.l.b16 %v7693
    %v8212 = vunpack.c.h.b16 %v7693
    %v8213 = vunpack.c.l.b16 %v7694
    %v8214 = vunpack.c.h.b16 %v7694
    %v8215 = vunpack.c.l.b16 %v7695
    %v8216 = vunpack.c.h.b16 %v7695
    %v8217 = vunpack.c.l.b16 %v7696
    %v8218 = vunpack.c.l.b16 %v7697
    %v8219 = vunpack.c.h.b16 %v7697
    %v8220 = vunpack.c.l.b16 %v7698
    %v8221 = vunpack.c.h.b16 %v7698
    %v8222 = vunpack.c.l.b16 %v7699
    %v8223 = vunpack.c.h.b16 %v7699
    %v8224 = vunpack.c.l.b16 %v7700
    %v8225 = vunpack.c.h.b16 %v7700
    %v8226 = vunpack.c.l.b16 %v7701
    %v8227 = vunpack.c.l.b16 %v7702
    %v8228 = vunpack.c.h.b16 %v7702
    %v8229 = vunpack.c.l.b16 %v7703
    %v8230 = vunpack.c.h.b16 %v7703
    %v8231 = vunpack.c.l.b16 %v7704
    %v8232 = vunpack.c.h.b16 %v7704
    %v8233 = vunpack.c.l.b16 %v7705
    %v8234 = vunpack.c.h.b16 %v7705
    %v8235 = vunpack.c.l.b16 %v7706
    %v8236 = vunpack.c.l.b16 %v7707
    %v8237 = vunpack.c.h.b16 %v7707
    %v8238 = vunpack.c.l.b16 %v7708
    %v8239 = vunpack.c.h.b16 %v7708
    %v8240 = vunpack.c.l.b16 %v7709
    %v8241 = vunpack.c.h.b16 %v7709
    %v8242 = vunpack.c.l.b16 %v7710
    %v8243 = vunpack.c.h.b16 %v7710
    %v8244 = vunpack.c.l.b16 %v7711
    %v8245 = vunpack.c.l.b16 %v7712
    %v8246 = vunpack.c.h.b16 %v7712
    %v8247 = vunpack.c.l.b16 %v7713
    %v8248 = vunpack.c.h.b16 %v7713
    %v8249 = vunpack.c.l.b16 %v7714
    %v8250 = vunpack.c.h.b16 %v7714
    %v8251 = vunpack.c.l.b16 %v7715
    %v8252 = vunpack.c.h.b16 %v7715
    %v8253 = vunpack.c.l.b16 %v7716
    %v8254 = vunpack.c.l.b16 %v7717
    %v8255 = vunpack.c.h.b16 %v7717
    %v8256 = vunpack.c.l.b16 %v7718
    %v8257 = vunpack.c.h.b16 %v7718
    %v8258 = vunpack.c.l.b16 %v7719
    %v8259 = vunpack.c.h.b16 %v7719
    %v8260 = vunpack.c.l.b16 %v7720
    %v8261 = vunpack.c.h.b16 %v7720
    %v8262 = vunpack.c.l.b16 %v7721
    %v8263 = vunpack.c.l.b16 %v7722
    %v8264 = vunpack.c.h.b16 %v7722
    %v8265 = vunpack.c.l.b16 %v7723
    %v8266 = vunpack.c.h.b16 %v7723
    %v8267 = vunpack.c.l.b16 %v7724
    %v8268 = vunpack.c.h.b16 %v7724
    %v8269 = vunpack.c.l.b16 %v7725
    %v8270 = vunpack.c.h.b16 %v7725
    %v8271 = vunpack.c.l.b16 %v7726
    %v8272 = vunpack.c.l.b16 %v7727
    %v8273 = vunpack.c.h.b16 %v7727
    %v8274 = vunpack.c.l.b16 %v7728
    %v8275 = vunpack.c.h.b16 %v7728
    %v8276 = vunpack.c.l.b16 %v7729
    %v8277 = vunpack.c.h.b16 %v7729
    %v8278 = vunpack.c.l.b16 %v7730
    %v8279 = vunpack.c.h.b16 %v7730
    %v8280 = vunpack.c.l.b16 %v7731
    %v8281 = vunpack.c.l.b16 %v7732
    %v8282 = vunpack.c.h.b16 %v7732
    %v8283 = vunpack.c.l.b16 %v7733
    %v8284 = vunpack.c.h.b16 %v7733
    %v8285 = vunpack.c.l.b16 %v7734
    %v8286 = vunpack.c.h.b16 %v7734
    %v8287 = vunpack.c.l.b16 %v7735
    %v8288 = vunpack.c.h.b16 %v7735
    %v8289 = vunpack.c.l.b16 %v7736
    %v8290 = vunpack.c.l.b16 %v7737
    %v8291 = vunpack.c.h.b16 %v7737
    %v8292 = vunpack.c.l.b16 %v7738
    %v8293 = vunpack.c.h.b16 %v7738
    %v8294 = vunpack.c.l.b16 %v7739
    %v8295 = vunpack.c.h.b16 %v7739
    %v8296 = vunpack.c.l.b16 %v7740
    %v8297 = vunpack.c.h.b16 %v7740
    %v8298 = vunpack.c.l.b16 %v7741
    %v8299 = vunpack.c.l.b16 %v7742
    %v8300 = vunpack.c.h.b16 %v7742
    %v8301 = vunpack.c.l.b16 %v7743
    %v8302 = vunpack.c.h.b16 %v7743
    %v8303 = vunpack.c.l.b16 %v7744
    %v8304 = vunpack.c.h.b16 %v7744
    %v8305 = vunpack.c.l.b16 %v7745
    %v8306 = vunpack.c.h.b16 %v7745
    %v8307 = vunpack.c.l.b16 %v7746
    %v8308 = vunpack.c.l.b16 %v7747
    %v8309 = vunpack.c.h.b16 %v7747
    %v8310 = vunpack.c.l.b16 %v7748
    %v8311 = vunpack.c.h.b16 %v7748
    %v8312 = vunpack.c.l.b16 %v7749
    %v8313 = vunpack.c.h.b16 %v7749
    %v8314 = vunpack.c.l.b16 %v7750
    %v8315 = vunpack.c.h.b16 %v7750
    %v8316 = vunpack.c.l.b16 %v7751
    %v8317 = vunpack.c.l.b16 %v7752
    %v8318 = vunpack.c.h.b16 %v7752
    %v8319 = vunpack.c.l.b16 %v7753
    %v8320 = vunpack.c.h.b16 %v7753
    %v8321 = vunpack.c.l.b16 %v7754
    %v8322 = vunpack.c.h.b16 %v7754
    %v8323 = vunpack.c.l.b16 %v7755
    %v8324 = vunpack.c.h.b16 %v7755
    %v8325 = vunpack.c.l.b16 %v7756
    %v8326 = vunpack.c.l.b16 %v7757
    %v8327 = vunpack.c.h.b16 %v7757
    %v8328 = vunpack.c.l.b16 %v7758
    %v8329 = vunpack.c.h.b16 %v7758
    %v8330 = vunpack.c.l.b16 %v7759
    %v8331 = vunpack.c.h.b16 %v7759
    %v8332 = vunpack.c.l.b16 %v7760
    %v8333 = vunpack.c.h.b16 %v7760
    %v8334 = vunpack.c.l.b16 %v7761
    %v8335 = vunpack.c.l.b16 %v7762
    %v8336 = vunpack.c.h.b16 %v7762
    %v8337 = vunpack.c.l.b16 %v7763
    %v8338 = vunpack.c.h.b16 %v7763
    %v8339 = vunpack.c.l.b16 %v7764
    %v8340 = vunpack.c.h.b16 %v7764
    %v8341 = vunpack.c.l.b16 %v7765
    %v8342 = vunpack.c.h.b16 %v7765
    %v8343 = vunpack.c.l.b16 %v7766
    %v8344 = vunpack.c.l.b16 %v7767
    %v8345 = vunpack.c.h.b16 %v7767
    %v8346 = vunpack.c.l.b16 %v7768
    %v8347 = vunpack.c.h.b16 %v7768
    %v8348 = vunpack.c.l.b16 %v7769
    %v8349 = vunpack.c.h.b16 %v7769
    %v8350 = vunpack.c.l.b16 %v7770
    %v8351 = vunpack.c.h.b16 %v7770
    %v8352 = vunpack.c.l.b16 %v7771
    %v8353 = vunpack.c.l.b16 %v7772
    %v8354 = vunpack.c.h.b16 %v7772
    %v8355 = vunpack.c.l.b16 %v7773
    %v8356 = vunpack.c.h.b16 %v7773
    %v8357 = vunpack.c.l.b16 %v7774
    %v8358 = vunpack.c.h.b16 %v7774
    %v8359 = vunpack.c.l.b16 %v7775
    %v8360 = vunpack.c.h.b16 %v7775
    %v8361 = vunpack.c.l.b16 %v7776
    %v8362 = vunpack.c.l.b16 %v7777
    %v8363 = vunpack.c.h.b16 %v7777
    %v8364 = vunpack.c.l.b16 %v7778
    %v8365 = vunpack.c.h.b16 %v7778
    %v8366 = vunpack.c.l.b16 %v7779
    %v8367 = vunpack.c.h.b16 %v7779
    %v8368 = vunpack.c.l.b16 %v7780
    %v8369 = vunpack.c.h.b16 %v7780
    %v8370 = vunpack.c.l.b16 %v7781
    %v8371 = vunpack.c.l.b16 %v7782
    %v8372 = vunpack.c.h.b16 %v7782
    %v8373 = vunpack.c.l.b16 %v7783
    %v8374 = vunpack.c.h.b16 %v7783
    %v8375 = vunpack.c.l.b16 %v7784
    %v8376 = vunpack.c.h.b16 %v7784
    %v8377 = vunpack.c.l.b16 %v7785
    %v8378 = vunpack.c.h.b16 %v7785
    %v8379 = vunpack.c.l.b16 %v7786
    %v8380 = vpack.c.b16 %v8101, %v8092
    %v8381 = vpack.c.b16 %v8102, %v8093
    %v8382 = vpack.c.b16 %v8103, %v8094
    %v8383 = vpack.c.b16 %v8104, %v8095
    %v8384 = vpack.c.b16 %v8105, %v8096
    %v8385 = vpack.c.b16 %v8106, %v8097
    %v8386 = vpack.c.b16 %v8107, %v8098
    %v8387 = vpack.c.b16 %v8108, %v8099
    %v8388 = vpack.c.b16 %v8109, %v8100
    %v8389 = vpack.c.b16 %v8119, %v8110
    %v8390 = vpack.c.b16 %v8120, %v8111
    %v8391 = vpack.c.b16 %v8121, %v8112
    %v8392 = vpack.c.b16 %v8122, %v8113
    %v8393 = vpack.c.b16 %v8123, %v8114
    %v8394 = vpack.c.b16 %v8124, %v8115
    %v8395 = vpack.c.b16 %v8125, %v8116
    %v8396 = vpack.c.b16 %v8126, %v8117
    %v8397 = vpack.c.b16 %v8127, %v8118
    %v8398 = vpack.c.b16 %v8137, %v8128
    %v8399 = vpack.c.b16 %v8138, %v8129
    %v8400 = vpack.c.b16 %v8139, %v8130
    %v8401 = vpack.c.b16 %v8140, %v8131
    %v8402 = vpack.c.b16 %v8141, %v8132
    %v8403 = vpack.c.b16 %v8142, %v8133
    %v8404 = vpack.c.b16 %v8143, %v8134
    %v8405 = vpack.c.b16 %v8144, %v8135
    %v8406 = vpack.c.b16 %v8145, %v8136
    %v8407 = vpack.c.b16 %v8155, %v8146
    %v8408 = vpack.c.b16 %v8156, %v8147
    %v8409 = vpack.c.b16 %v8157, %v8148
    %v8410 = vpack.c.b16 %v8158, %v8149
    %v8411 = vpack.c.b16 %v8159, %v8150
    %v8412 = vpack.c.b16 %v8160, %v8151
    %v8413 = vpack.c.b16 %v8161, %v8152
    %v8414 = vpack.c.b16 %v8162, %v8153
    %v8415 = vpack.c.b16 %v8163, %v8154
    %v8416 = vpack.c.b16 %v8173, %v8164
    %v8417 = vpack.c.b16 %v8174, %v8165
    %v8418 = vpack.c.b16 %v8175, %v8166
    %v8419 = vpack.c.b16 %v8176, %v8167
    %v8420 = vpack.c.b16 %v8177, %v8168
    %v8421 = vpack.c.b16 %v8178, %v8169
    %v8422 = vpack.c.b16 %v8179, %v8170
    %v8423 = vpack.c.b16 %v8180, %v8171
    %v8424 = vpack.c.b16 %v8181, %v8172
    %v8425 = vpack.c.b16 %v8191, %v8182
    %v8426 = vpack.c.b16 %v8192, %v8183
    %v8427 = vpack.c.b16 %v8193, %v8184
    %v8428 = vpack.c.b16 %v8194, %v8185
    %v8429 = vpack.c.b16 %v8195, %v8186
    %v8430 = vpack.c.b16 %v8196, %v8187
    %v8431 = vpack.c.b16 %v8197, %v8188
    %v8432 = vpack.c.b16 %v8198, %v8189
    %v8433 = vpack.c.b16 %v8199, %v8190
    %v8434 = vpack.c.b16 %v8209, %v8200
    %v8435 = vpack.c.b16 %v8210, %v8201
    %v8436 = vpack.c.b16 %v8211, %v8202
    %v8437 = vpack.c.b16 %v8212, %v8203
    %v8438 = vpack.c.b16 %v8213, %v8204
    %v8439 = vpack.c.b16 %v8214, %v8205
    %v8440 = vpack.c.b16 %v8215, %v8206
    %v8441 = vpack.c.b16 %v8216, %v8207
    %v8442 = vpack.c.b16 %v8217, %v8208
    %v8443 = vpack.c.b16 %v8227, %v8218
    %v8444 = vpack.c.b16 %v8228, %v8219
    %v8445 = vpack.c.b16 %v8229, %v8220
    %v8446 = vpack.c.b16 %v8230, %v8221
    %v8447 = vpack.c.b16 %v8231, %v8222
    %v8448 = vpack.c.b16 %v8232, %v8223
    %v8449 = vpack.c.b16 %v8233, %v8224
    %v8450 = vpack.c.b16 %v8234, %v8225
    %v8451 = vpack.c.b16 %v8235, %v8226
    %v8452 = vpack.c.b16 %v8245, %v8236
    %v8453 = vpack.c.b16 %v8246, %v8237
    %v8454 = vpack.c.b16 %v8247, %v8238
    %v8455 = vpack.c.b16 %v8248, %v8239
    %v8456 = vpack.c.b16 %v8249, %v8240
    %v8457 = vpack.c.b16 %v8250, %v8241
    %v8458 = vpack.c.b16 %v8251, %v8242
    %v8459 = vpack.c.b16 %v8252, %v8243
    %v8460 = vpack.c.b16 %v8253, %v8244
    %v8461 = vpack.c.b16 %v8263, %v8254
    %v8462 = vpack.c.b16 %v8264, %v8255
    %v8463 = vpack.c.b16 %v8265, %v8256
    %v8464 = vpack.c.b16 %v8266, %v8257
    %v8465 = vpack.c.b16 %v8267, %v8258
    %v8466 = vpack.c.b16 %v8268, %v8259
    %v8467 = vpack.c.b16 %v8269, %v8260
    %v8468 = vpack.c.b16 %v8270, %v8261
    %v8469 = vpack.c.b16 %v8271, %v8262
    %v8470 = vpack.c.b16 %v8281, %v8272
    %v8471 = vpack.c.b16 %v8282, %v8273
    %v8472 = vpack.c.b16 %v8283, %v8274
    %v8473 = vpack.c.b16 %v8284, %v8275
    %v8474 = vpack.c.b16 %v8285, %v8276
    %v8475 = vpack.c.b16 %v8286, %v8277
    %v8476 = vpack.c.b16 %v8287, %v8278
    %v8477 = vpack.c.b16 %v8288, %v8279
    %v8478 = vpack.c.b16 %v8289, %v8280
    %v8479 = vpack.c.b16 %v8299, %v8290
    %v8480 = vpack.c.b16 %v8300, %v8291
    %v8481 = vpack.c.b16 %v8301, %v8292
    %v8482 = vpack.c.b16 %v8302, %v8293
    %v8483 = vpack.c.b16 %v8303, %v8294
    %v8484 = vpack.c.b16 %v8304, %v8295
    %v8485 = vpack.c.b16 %v8305, %v8296
    %v8486 = vpack.c.b16 %v8306, %v8297
    %v8487 = vpack.c.b16 %v8307, %v8298
    %v8488 = vpack.c.b16 %v8317, %v8308
    %v8489 = vpack.c.b16 %v8318, %v8309
    %v8490 = vpack.c.b16 %v8319, %v8310
    %v8491 = vpack.c.b16 %v8320, %v8311
    %v8492 = vpack.c.b16 %v8321, %v8312
    %v8493 = vpack.c.b16 %v8322, %v8313
    %v8494 = vpack.c.b16 %v8323, %v8314
    %v8495 = vpack.c.b16 %v8324, %v8315
    %v8496 = vpack.c.b16 %v8325, %v8316
    %v8497 = vpack.c.b16 %v8335, %v8326
    %v8498 = vpack.c.b16 %v8336, %v8327
    %v8499 = vpack.c.b16 %v8337, %v8328
    %v8500 = vpack.c.b16 %v8338, %v8329
    %v8501 = vpack.c.b16 %v8339, %v8330
    %v8502 = vpack.c.b16 %v8340, %v8331
    %v8503 = vpack.c.b16 %v8341, %v8332
    %v8504 = vpack.c.b16 %v8342, %v8333
    %v8505 = vpack.c.b16 %v8343, %v8334
    %v8506 = vpack.c.b16 %v8353, %v8344
    %v8507 = vpack.c.b16 %v8354, %v8345
    %v8508 = vpack.c.b16 %v8355, %v8346
    %v8509 = vpack.c.b16 %v8356, %v8347
    %v8510 = vpack.c.b16 %v8357, %v8348
    %v8511 = vpack.c.b16 %v8358, %v8349
    %v8512 = vpack.c.b16 %v8359, %v8350
    %v8513 = vpack.c.b16 %v8360, %v8351
    %v8514 = vpack.c.b16 %v8361, %v8352
    %v8515 = vpack.c.b16 %v8371, %v8362
    %v8516 = vpack.c.b16 %v8372, %v8363
    %v8517 = vpack.c.b16 %v8373, %v8364
    %v8518 = vpack.c.b16 %v8374, %v8365
    %v8519 = vpack.c.b16 %v8375, %v8366
    %v8520 = vpack.c.b16 %v8376, %v8367
    %v8521 = vpack.c.b16 %v8377, %v8368
    %v8522 = vpack.c.b16 %v8378, %v8369
    %v8523 = vpack.c.b16 %v8379, %v8370
    %v8812 = vunpack.c.l.b16 %v7788
    %v8813 = vunpack.c.l.b16 %v7789
    %v8814 = vunpack.c.l.b16 %v7790
    %v8815 = vunpack.c.l.b16 %v7791
    %v8816 = vunpack.c.l.b16 %v7792
    %v8817 = vunpack.c.l.b16 %v7793
    %v8818 = vunpack.c.l.b16 %v7794
    %v8819 = vunpack.c.l.b16 %v7795
    %v8820 = vunpack.c.l.b16 %v7796
    %v8821 = vunpack.c.l.b16 %v7797
    %v8822 = vunpack.c.l.b16 %v7798
    %v8823 = vunpack.c.l.b16 %v7799
    %v8824 = vunpack.c.l.b16 %v7800
    %v8825 = vunpack.c.l.b16 %v7801
    %v8826 = vunpack.c.l.b16 %v7802
    %v8827 = vunpack.c.l.b16 %v7803
    %v8828 = vunpack.c.l.b16 %v7804
    %v8829 = vunpack.c.l.b16 %v7805
    %v8830 = vunpack.c.l.b16 %v7806
    %v8831 = vunpack.c.l.b16 %v7807
    %v8832 = vunpack.c.l.b16 %v7808
    %v8833 = vunpack.c.l.b16 %v7809
    %v8834 = vunpack.c.l.b16 %v7810
    %v8835 = vunpack.c.l.b16 %v7811
    %v8836 = vunpack.c.l.b16 %v7812
    %v8837 = vunpack.c.l.b16 %v7813
    %v8838 = vunpack.c.l.b16 %v7814
    %v8839 = vunpack.c.l.b16 %v7815
    %v8840 = vunpack.c.l.b16 %v7816
    %v8841 = vunpack.c.l.b16 %v7817
    %v8842 = vunpack.c.l.b16 %v7818
    %v8843 = vunpack.c.l.b16 %v7819
    %v8844 = vunpack.c.l.b16 %v7820
    %v8845 = vunpack.c.l.b16 %v7821
    %v8846 = vunpack.c.l.b16 %v7822
    %v8847 = vunpack.c.l.b16 %v7823
    %v8848 = vunpack.c.l.b16 %v7824
    %v8849 = vunpack.c.l.b16 %v7825
    %v8850 = vunpack.c.l.b16 %v7826
    %v8851 = vunpack.c.l.b16 %v7827
    %v8852 = vunpack.c.l.b16 %v7828
    %v8853 = vunpack.c.l.b16 %v7829
    %v8854 = vunpack.c.l.b16 %v7830
    %v8855 = vunpack.c.l.b16 %v7831
    %v8856 = vunpack.c.l.b16 %v7832
    %v8857 = vunpack.c.l.b16 %v7833
    %v8858 = vunpack.c.l.b16 %v7834
    %v8859 = vunpack.c.l.b16 %v7835
    %v8860 = vunpack.c.l.b16 %v7836
    %v8861 = vunpack.c.l.b16 %v7837
    %v8862 = vunpack.c.l.b16 %v7838
    %v8863 = vunpack.c.l.b16 %v7839
    %v8864 = vunpack.c.l.b16 %v7840
    %v8865 = vunpack.c.l.b16 %v7841
    %v8866 = vunpack.c.l.b16 %v7842
    %v8867 = vunpack.c.l.b16 %v7843
    %v8868 = vunpack.c.l.b16 %v7844
    %v8869 = vunpack.c.l.b16 %v7845
    %v8870 = vunpack.c.l.b16 %v7846
    %v8871 = vunpack.c.l.b16 %v7847
    %v8872 = vunpack.c.l.b16 %v7848
    %v8873 = vunpack.c.l.b16 %v7849
    %v8874 = vunpack.c.l.b16 %v7850
    %v8875 = vunpack.c.l.b16 %v7851
    %v8876 = vunpack.c.l.b16 %v7852
    %v8877 = vunpack.c.l.b16 %v7853
    %v8878 = vunpack.c.l.b16 %v7854
    %v8879 = vunpack.c.l.b16 %v7855
    %v8880 = vunpack.c.l.b16 %v7856
    %v8881 = vunpack.c.l.b16 %v7857
    %v8882 = vunpack.c.l.b16 %v7858
    %v8883 = vunpack.c.l.b16 %v7859
    %v8884 = vunpack.c.l.b16 %v7860
    %v8885 = vunpack.c.l.b16 %v7861
    %v8886 = vunpack.c.l.b16 %v7862
    %v8887 = vunpack.c.l.b16 %v7863
    %v8888 = vunpack.c.l.b16 %v7864
    %v8889 = vunpack.c.l.b16 %v7865
    %v8890 = vunpack.c.l.b16 %v7866
    %v8891 = vunpack.c.l.b16 %v7867
    %v8892 = vunpack.c.l.b16 %v7868
    %v8893 = vunpack.c.l.b16 %v7869
    %v8894 = vunpack.c.l.b16 %v7870
    %v8895 = vunpack.c.l.b16 %v7871
    %v8896 = vunpack.c.l.b16 %v7872
    %v8897 = vunpack.c.l.b16 %v7873
    %v8898 = vunpack.c.l.b16 %v7874
    %v8899 = vunpack.c.l.b16 %v7875
    %v8900 = vunpack.c.l.b16 %v7876
    %v8901 = vunpack.c.l.b16 %v7877
    %v8902 = vunpack.c.l.b16 %v7878
    %v8903 = vunpack.c.l.b16 %v7879
    %v8904 = vunpack.c.l.b16 %v7880
    %v8905 = vunpack.c.l.b16 %v7881
    %v8906 = vunpack.c.l.b16 %v7882
    %v8907 = vunpack.c.l.b16 %v7883
    %v8908 = vunpack.c.l.b16 %v7884
    %v8909 = vunpack.c.l.b16 %v7885
    %v8910 = vunpack.c.l.b16 %v7886
    %v8911 = vunpack.c.l.b16 %v7887
    %v8912 = vunpack.c.l.b16 %v7888
    %v8913 = vunpack.c.l.b16 %v7889
    %v8914 = vunpack.c.l.b16 %v7890
    %v8915 = vunpack.c.l.b16 %v7891
    %v8916 = vunpack.c.l.b16 %v7892
    %v8917 = vunpack.c.l.b16 %v7893
    %v8918 = vunpack.c.l.b16 %v7894
    %v8919 = vunpack.c.l.b16 %v7895
    %v8920 = vunpack.c.l.b16 %v7896
    %v8921 = vunpack.c.l.b16 %v7897
    %v8922 = vunpack.c.l.b16 %v7898
    %v8923 = vunpack.c.l.b16 %v7899
    %v8924 = vunpack.c.l.b16 %v7900
    %v8925 = vunpack.c.l.b16 %v7901
    %v8926 = vunpack.c.l.b16 %v7902
    %v8927 = vunpack.c.l.b16 %v7903
    %v8928 = vunpack.c.l.b16 %v7904
    %v8929 = vunpack.c.l.b16 %v7905
    %v8930 = vunpack.c.l.b16 %v7906
    %v8931 = vunpack.c.l.b16 %v7907
    %v8932 = vunpack.c.l.b16 %v7908
    %v8933 = vunpack.c.l.b16 %v7909
    %v8934 = vunpack.c.l.b16 %v7910
    %v8935 = vunpack.c.l.b16 %v7911
    %v8936 = vunpack.c.l.b16 %v7912
    %v8937 = vunpack.c.l.b16 %v7913
    %v8938 = vunpack.c.l.b16 %v7914
    %v8939 = vunpack.c.l.b16 %v7915
    %v8940 = vunpack.c.l.b16 %v7916
    %v8941 = vunpack.c.l.b16 %v7917
    %v8942 = vunpack.c.l.b16 %v7918
    %v8943 = vunpack.c.l.b16 %v7919
    %v8944 = vunpack.c.l.b16 %v7920
    %v8945 = vunpack.c.l.b16 %v7921
    %v8946 = vunpack.c.l.b16 %v7922
    %v8947 = vunpack.c.l.b16 %v7923
    %v8948 = vunpack.c.l.b16 %v7924
    %v8949 = vunpack.c.l.b16 %v7925
    %v8950 = vunpack.c.l.b16 %v7926
    %v8951 = vunpack.c.l.b16 %v7927
    %v8952 = vunpack.c.l.b16 %v7928
    %v8953 = vunpack.c.l.b16 %v7929
    %v8954 = vunpack.c.l.b16 %v7930
    %v8955 = vunpack.c.l.b16 %v7931
    %v8956 = vpack.c.b16 %v8813, %v8812
    %v8957 = vpack.c.b16 %v8815, %v8814
    %v8958 = vpack.c.b16 %v8817, %v8816
    %v8959 = vpack.c.b16 %v8819, %v8818
    %v8960 = vpack.c.b16 %v8821, %v8820
    %v8961 = vpack.c.b16 %v8823, %v8822
    %v8962 = vpack.c.b16 %v8825, %v8824
    %v8963 = vpack.c.b16 %v8827, %v8826
    %v8964 = vpack.c.b16 %v8829, %v8828
    %v8965 = vpack.c.b16 %v8831, %v8830
    %v8966 = vpack.c.b16 %v8833, %v8832
    %v8967 = vpack.c.b16 %v8835, %v8834
    %v8968 = vpack.c.b16 %v8837, %v8836
    %v8969 = vpack.c.b16 %v8839, %v8838
    %v8970 = vpack.c.b16 %v8841, %v8840
    %v8971 = vpack.c.b16 %v8843, %v8842
    %v8972 = vpack.c.b16 %v8845, %v8844
    %v8973 = vpack.c.b16 %v8847, %v8846
    %v8974 = vpack.c.b16 %v8849, %v8848
    %v8975 = vpack.c.b16 %v8851, %v8850
    %v8976 = vpack.c.b16 %v8853, %v8852
    %v8977 = vpack.c.b16 %v8855, %v8854
    %v8978 = vpack.c.b16 %v8857, %v8856
    %v8979 = vpack.c.b16 %v8859, %v8858
    %v8980 = vpack.c.b16 %v8861, %v8860
    %v8981 = vpack.c.b16 %v8863, %v8862
    %v8982 = vpack.c.b16 %v8865, %v8864
    %v8983 = vpack.c.b16 %v8867, %v8866
    %v8984 = vpack.c.b16 %v8869, %v8868
    %v8985 = vpack.c.b16 %v8871, %v8870
    %v8986 = vpack.c.b16 %v8873, %v8872
    %v8987 = vpack.c.b16 %v8875, %v8874
    %v8988 = vpack.c.b16 %v8877, %v8876
    %v8989 = vpack.c.b16 %v8879, %v8878
    %v8990 = vpack.c.b16 %v8881, %v8880
    %v8991 = vpack.c.b16 %v8883, %v8882
    %v8992 = vpack.c.b16 %v8885, %v8884
    %v8993 = vpack.c.b16 %v8887, %v8886
    %v8994 = vpack.c.b16 %v8889, %v8888
    %v8995 = vpack.c.b16 %v8891, %v8890
    %v8996 = vpack.c.b16 %v8893, %v8892
    %v8997 = vpack.c.b16 %v8895, %v8894
    %v8998 = vpack.c.b16 %v8897, %v8896
    %v8999 = vpack.c.b16 %v8899, %v8898
    %v9000 = vpack.c.b16 %v8901, %v8900
    %v9001 = vpack.c.b16 %v8903, %v8902
    %v9002 = vpack.c.b16 %v8905, %v8904
    %v9003 = vpack.c.b16 %v8907, %v8906
    %v9004 = vpack.c.b16 %v8909, %v8908
    %v9005 = vpack.c.b16 %v8911, %v8910
    %v9006 = vpack.c.b16 %v8913, %v8912
    %v9007 = vpack.c.b16 %v8915, %v8914
    %v9008 = vpack.c.b16 %v8917, %v8916
    %v9009 = vpack.c.b16 %v8919, %v8918
    %v9010 = vpack.c.b16 %v8921, %v8920
    %v9011 = vpack.c.b16 %v8923, %v8922
    %v9012 = vpack.c.b16 %v8925, %v8924
    %v9013 = vpack.c.b16 %v8927, %v8926
    %v9014 = vpack.c.b16 %v8929, %v8928
    %v9015 = vpack.c.b16 %v8931, %v8930
    %v9016 = vpack.c.b16 %v8933, %v8932
    %v9017 = vpack.c.b16 %v8935, %v8934
    %v9018 = vpack.c.b16 %v8937, %v8936
    %v9019 = vpack.c.b16 %v8939, %v8938
    %v9020 = vpack.c.b16 %v8941, %v8940
    %v9021 = vpack.c.b16 %v8943, %v8942
    %v9022 = vpack.c.b16 %v8945, %v8944
    %v9023 = vpack.c.b16 %v8947, %v8946
    %v9024 = vpack.c.b16 %v8949, %v8948
    %v9025 = vpack.c.b16 %v8951, %v8950
    %v9026 = vpack.c.b16 %v8953, %v8952
    %v9027 = vpack.c.b16 %v8955, %v8954
    %9100 = vmatprep.subr.bf16.mxu0 0
    %9101 = vmatpush1.bf16.msra.mxu0 %v8963
    %9102 = vmatprep.subr.bf16.mxu0 0
    %9103 = vmatpush1.bf16.msra.mxu0 %v8962
    %9104 = vmatprep.subr.bf16.mxu0 0
    %9105 = vmatpush1.bf16.msra.mxu0 %v8961
    %9106 = vmatprep.subr.bf16.mxu0 0
    %9107 = vmatpush1.bf16.msra.mxu0 %v8960
    %9108 = vmatprep.subr.bf16.mxu0 0
    %9109 = vmatpush1.bf16.msra.mxu0 %v8959
    %9110 = vmatprep.subr.bf16.mxu0 0
    %9111 = vmatpush1.bf16.msra.mxu0 %v8958
    %9112 = vmatprep.subr.bf16.mxu0 0
    %9113 = vmatpush1.bf16.msra.mxu0 %v8957
    %9114 = vmatprep.subr.bf16.mxu0 0
    %9115 = vmatpush1.bf16.msra.mxu0 %v8956
    %9116 = vmatprep.subr.bf16.mxu0 0
    %9117 = vmatpush2.bf16.msra.mxu0 %v8971
    %9118 = vmatprep.subr.bf16.mxu0 0
    %9119 = vmatpush2.bf16.msra.mxu0 %v8970
    %9120 = vmatprep.subr.bf16.mxu0 0
    %9121 = vmatpush2.bf16.msra.mxu0 %v8969
    %9122 = vmatprep.subr.bf16.mxu0 0
    %9123 = vmatpush2.bf16.msra.mxu0 %v8968
    %9124 = vmatprep.subr.bf16.mxu0 0
    %9125 = vmatpush2.bf16.msra.mxu0 %v8967
    %9126 = vmatprep.subr.bf16.mxu0 0
    %9127 = vmatpush2.bf16.msra.mxu0 %v8966
    %9128 = vmatprep.subr.bf16.mxu0 0
    %9129 = vmatpush2.bf16.msra.mxu0 %v8965
    %9130 = vmatprep.subr.bf16.mxu0 0
    %9131 = vmatpush2.bf16.msra.mxu0 %v8964
    %9132 = vmatprep.mubr.bf16.mxu0 %v8381
    %9133 = vmatmul.mubr.bf16.gmra.mxu0 %v8380
    %v9134 = vpop.f32.mrf.mxu0
    %v9135 = vadd.f32 0.0, %v9134
    %v9136 = vpop.f32.mrf.mxu0
    %v9137 = vpop.f32.mrf.mxu0
    %v9138 = vadd.f32 0.0, %v9137
    %v9139 = vpop.f32.mrf.mxu0
    %9140 = vmatprep.mubr.bf16.mxu0 %v8390
    %9141 = vmatmul.mubr.bf16.gmra.mxu0 %v8389
    %v9142 = vpop.f32.mrf.mxu0
    %v9143 = vadd.f32 0.0, %v9142
    %v9144 = vpop.f32.mrf.mxu0
    %v9145 = vpop.f32.mrf.mxu0
    %v9146 = vadd.f32 0.0, %v9145
    %v9147 = vpop.f32.mrf.mxu0
    %9148 = vmatprep.mubr.bf16.mxu0 %v8399
    %9149 = vmatmul.mubr.bf16.gmra.mxu0 %v8398
    %v9150 = vpop.f32.mrf.mxu0
    %v9151 = vadd.f32 0.0, %v9150
    %v9152 = vpop.f32.mrf.mxu0
    %v9153 = vpop.f32.mrf.mxu0
    %v9154 = vadd.f32 0.0, %v9153
    %v9155 = vpop.f32.mrf.mxu0
    %9156 = vmatprep.mubr.bf16.mxu0 %v8408
    %9157 = vmatmul.mubr.bf16.gmra.mxu0 %v8407
    %v9158 = vpop.f32.mrf.mxu0
    %v9159 = vadd.f32 0.0, %v9158
    %v9160 = vpop.f32.mrf.mxu0
    %v9161 = vpop.f32.mrf.mxu0
    %v9162 = vadd.f32 0.0, %v9161
    %v9163 = vpop.f32.mrf.mxu0
    %9164 = vmatprep.mubr.bf16.mxu0 %v8417
    %9165 = vmatmul.mubr.bf16.gmra.mxu0 %v8416
    %v9166 = vpop.f32.mrf.mxu0
    %v9167 = vadd.f32 0.0, %v9166
    %v9168 = vpop.f32.mrf.mxu0
    %v9169 = vpop.f32.mrf.mxu0
    %v9170 = vadd.f32 0.0, %v9169
    %v9171 = vpop.f32.mrf.mxu0
    %9172 = vmatprep.mubr.bf16.mxu0 %v8426
    %9173 = vmatmul.mubr.bf16.gmra.mxu0 %v8425
    %v9174 = vpop.f32.mrf.mxu0
    %v9175 = vadd.f32 0.0, %v9174
    %v9176 = vpop.f32.mrf.mxu0
    %v9177 = vpop.f32.mrf.mxu0
    %v9178 = vadd.f32 0.0, %v9177
    %v9179 = vpop.f32.mrf.mxu0
    %9180 = vmatprep.mubr.bf16.mxu0 %v8435
    %9181 = vmatmul.mubr.bf16.gmra.mxu0 %v8434
    %v9182 = vpop.f32.mrf.mxu0
    %v9183 = vadd.f32 0.0, %v9182
    %v9184 = vpop.f32.mrf.mxu0
    %v9185 = vpop.f32.mrf.mxu0
    %v9186 = vadd.f32 0.0, %v9185
    %v9187 = vpop.f32.mrf.mxu0
    %9188 = vmatprep.mubr.bf16.mxu0 %v8444
    %9189 = vmatmul.mubr.bf16.gmra.mxu0 %v8443
    %v9190 = vpop.f32.mrf.mxu0
    %v9191 = vadd.f32 0.0, %v9190
    %v9192 = vpop.f32.mrf.mxu0
    %v9193 = vpop.f32.mrf.mxu0
    %v9194 = vadd.f32 0.0, %v9193
    %v9195 = vpop.f32.mrf.mxu0
    %9196 = vmatprep.mubr.bf16.mxu0 %v8453
    %9197 = vmatmul.mubr.bf16.gmra.mxu0 %v8452
    %v9198 = vpop.f32.mrf.mxu0
    %v9199 = vadd.f32 0.0, %v9198
    %v9200 = vpop.f32.mrf.mxu0
    %v9201 = vpop.f32.mrf.mxu0
    %v9202 = vadd.f32 0.0, %v9201
    %v9203 = vpop.f32.mrf.mxu0
    %9204 = vmatprep.mubr.bf16.mxu0 %v8462
    %9205 = vmatmul.mubr.bf16.gmra.mxu0 %v8461
    %v9206 = vpop.f32.mrf.mxu0
    %v9207 = vadd.f32 0.0, %v9206
    %v9208 = vpop.f32.mrf.mxu0
    %v9209 = vpop.f32.mrf.mxu0
    %v9210 = vadd.f32 0.0, %v9209
    %v9211 = vpop.f32.mrf.mxu0
    %9212 = vmatprep.mubr.bf16.mxu0 %v8471
    %9213 = vmatmul.mubr.bf16.gmra.mxu0 %v8470
    %v9214 = vpop.f32.mrf.mxu0
    %v9215 = vadd.f32 0.0, %v9214
    %v9216 = vpop.f32.mrf.mxu0
    %v9217 = vpop.f32.mrf.mxu0
    %v9218 = vadd.f32 0.0, %v9217
    %v9219 = vpop.f32.mrf.mxu0
    %9220 = vmatprep.mubr.bf16.mxu0 %v8480
    %9221 = vmatmul.mubr.bf16.gmra.mxu0 %v8479
    %v9222 = vpop.f32.mrf.mxu0
    %v9223 = vadd.f32 0.0, %v9222
    %v9224 = vpop.f32.mrf.mxu0
    %v9225 = vpop.f32.mrf.mxu0
    %v9226 = vadd.f32 0.0, %v9225
    %v9227 = vpop.f32.mrf.mxu0
    %9228 = vmatprep.mubr.bf16.mxu0 %v8489
    %9229 = vmatmul.mubr.bf16.gmra.mxu0 %v8488
    %v9230 = vpop.f32.mrf.mxu0
    %v9231 = vadd.f32 0.0, %v9230
    %v9232 = vpop.f32.mrf.mxu0
    %v9233 = vpop.f32.mrf.mxu0
    %v9234 = vadd.f32 0.0, %v9233
    %v9235 = vpop.f32.mrf.mxu0
    %9236 = vmatprep.mubr.bf16.mxu0 %v8498
    %9237 = vmatmul.mubr.bf16.gmra.mxu0 %v8497
    %v9238 = vpop.f32.mrf.mxu0
    %v9239 = vadd.f32 0.0, %v9238
    %v9240 = vpop.f32.mrf.mxu0
    %v9241 = vpop.f32.mrf.mxu0
    %v9242 = vadd.f32 0.0, %v9241
    %v9243 = vpop.f32.mrf.mxu0
    %9244 = vmatprep.mubr.bf16.mxu0 %v8507
    %9245 = vmatmul.mubr.bf16.gmra.mxu0 %v8506
    %v9246 = vpop.f32.mrf.mxu0
    %v9247 = vadd.f32 0.0, %v9246
    %v9248 = vpop.f32.mrf.mxu0
    %v9249 = vpop.f32.mrf.mxu0
    %v9250 = vadd.f32 0.0, %v9249
    %v9251 = vpop.f32.mrf.mxu0
    %9252 = vmatprep.mubr.bf16.mxu0 %v8516
    %9253 = vmatmul.mubr.bf16.gmra.mxu0 %v8515
    %v9254 = vpop.f32.mrf.mxu0
    %v9255 = vadd.f32 0.0, %v9254
    %v9256 = vpop.f32.mrf.mxu0
    %v9257 = vpop.f32.mrf.mxu0
    %v9258 = vadd.f32 0.0, %v9257
    %v9259 = vpop.f32.mrf.mxu0
    %9260 = vdwg.mxu0
    %9261 = vmatprep.subr.bf16.mxu0 0
    %9262 = vmatpush1.bf16.msra.mxu0 %v8979
    %9263 = vmatprep.subr.bf16.mxu0 0
    %9264 = vmatpush1.bf16.msra.mxu0 %v8978
    %9265 = vmatprep.subr.bf16.mxu0 0
    %9266 = vmatpush1.bf16.msra.mxu0 %v8977
    %9267 = vmatprep.subr.bf16.mxu0 0
    %9268 = vmatpush1.bf16.msra.mxu0 %v8976
    %9269 = vmatprep.subr.bf16.mxu0 0
    %9270 = vmatpush1.bf16.msra.mxu0 %v8975
    %9271 = vmatprep.subr.bf16.mxu0 0
    %9272 = vmatpush1.bf16.msra.mxu0 %v8974
    %9273 = vmatprep.subr.bf16.mxu0 0
    %9274 = vmatpush1.bf16.msra.mxu0 %v8973
    %9275 = vmatprep.subr.bf16.mxu0 0
    %9276 = vmatpush1.bf16.msra.mxu0 %v8972
    %9277 = vmatprep.subr.bf16.mxu0 0
    %9278 = vmatpush2.bf16.msra.mxu0 %v8987
    %9279 = vmatprep.subr.bf16.mxu0 0
    %9280 = vmatpush2.bf16.msra.mxu0 %v8986
    %9281 = vmatprep.subr.bf16.mxu0 0
    %9282 = vmatpush2.bf16.msra.mxu0 %v8985
    %9283 = vmatprep.subr.bf16.mxu0 0
    %9284 = vmatpush2.bf16.msra.mxu0 %v8984
    %9285 = vmatprep.subr.bf16.mxu0 0
    %9286 = vmatpush2.bf16.msra.mxu0 %v8983
    %9287 = vmatprep.subr.bf16.mxu0 0
    %9288 = vmatpush2.bf16.msra.mxu0 %v8982
    %9289 = vmatprep.subr.bf16.mxu0 0
    %9290 = vmatpush2.bf16.msra.mxu0 %v8981
    %9291 = vmatprep.subr.bf16.mxu0 0
    %9292 = vmatpush2.bf16.msra.mxu0 %v8980
    %9293 = vmatprep.mubr.bf16.mxu0 %v8383
    %9294 = vmatmul.mubr.bf16.gmra.mxu0 %v8382
    %v9295 = vpop.f32.mrf.mxu0
    %v9296 = vadd.f32 %v9135, %v9295
    %v9297 = vpop.f32.mrf.mxu0
    %v9298 = vpop.f32.mrf.mxu0
    %v9299 = vadd.f32 %v9138, %v9298
    %v9300 = vpop.f32.mrf.mxu0
    %9301 = vmatprep.mubr.bf16.mxu0 %v8392
    %9302 = vmatmul.mubr.bf16.gmra.mxu0 %v8391
    %v9303 = vpop.f32.mrf.mxu0
    %v9304 = vadd.f32 %v9143, %v9303
    %v9305 = vpop.f32.mrf.mxu0
    %v9306 = vpop.f32.mrf.mxu0
    %v9307 = vadd.f32 %v9146, %v9306
    %v9308 = vpop.f32.mrf.mxu0
    %9309 = vmatprep.mubr.bf16.mxu0 %v8401
    %9310 = vmatmul.mubr.bf16.gmra.mxu0 %v8400
    %v9311 = vpop.f32.mrf.mxu0
    %v9312 = vadd.f32 %v9151, %v9311
    %v9313 = vpop.f32.mrf.mxu0
    %v9314 = vpop.f32.mrf.mxu0
    %v9315 = vadd.f32 %v9154, %v9314
    %v9316 = vpop.f32.mrf.mxu0
    %9317 = vmatprep.mubr.bf16.mxu0 %v8410
    %9318 = vmatmul.mubr.bf16.gmra.mxu0 %v8409
    %v9319 = vpop.f32.mrf.mxu0
    %v9320 = vadd.f32 %v9159, %v9319
    %v9321 = vpop.f32.mrf.mxu0
    %v9322 = vpop.f32.mrf.mxu0
    %v9323 = vadd.f32 %v9162, %v9322
    %v9324 = vpop.f32.mrf.mxu0
    %9325 = vmatprep.mubr.bf16.mxu0 %v8419
    %9326 = vmatmul.mubr.bf16.gmra.mxu0 %v8418
    %v9327 = vpop.f32.mrf.mxu0
    %v9328 = vadd.f32 %v9167, %v9327
    %v9329 = vpop.f32.mrf.mxu0
    %v9330 = vpop.f32.mrf.mxu0
    %v9331 = vadd.f32 %v9170, %v9330
    %v9332 = vpop.f32.mrf.mxu0
    %9333 = vmatprep.mubr.bf16.mxu0 %v8428
    %9334 = vmatmul.mubr.bf16.gmra.mxu0 %v8427
    %v9335 = vpop.f32.mrf.mxu0
    %v9336 = vadd.f32 %v9175, %v9335
    %v9337 = vpop.f32.mrf.mxu0
    %v9338 = vpop.f32.mrf.mxu0
    %v9339 = vadd.f32 %v9178, %v9338
    %v9340 = vpop.f32.mrf.mxu0
    %9341 = vmatprep.mubr.bf16.mxu0 %v8437
    %9342 = vmatmul.mubr.bf16.gmra.mxu0 %v8436
    %v9343 = vpop.f32.mrf.mxu0
    %v9344 = vadd.f32 %v9183, %v9343
    %v9345 = vpop.f32.mrf.mxu0
    %v9346 = vpop.f32.mrf.mxu0
    %v9347 = vadd.f32 %v9186, %v9346
    %v9348 = vpop.f32.mrf.mxu0
    %9349 = vmatprep.mubr.bf16.mxu0 %v8446
    %9350 = vmatmul.mubr.bf16.gmra.mxu0 %v8445
    %v9351 = vpop.f32.mrf.mxu0
    %v9352 = vadd.f32 %v9191, %v9351
    %v9353 = vpop.f32.mrf.mxu0
    %v9354 = vpop.f32.mrf.mxu0
    %v9355 = vadd.f32 %v9194, %v9354
    %v9356 = vpop.f32.mrf.mxu0
    %9357 = vmatprep.mubr.bf16.mxu0 %v8455
    %9358 = vmatmul.mubr.bf16.gmra.mxu0 %v8454
    %v9359 = vpop.f32.mrf.mxu0
    %v9360 = vadd.f32 %v9199, %v9359
    %v9361 = vpop.f32.mrf.mxu0
    %v9362 = vpop.f32.mrf.mxu0
    %v9363 = vadd.f32 %v9202, %v9362
    %v9364 = vpop.f32.mrf.mxu0
    %9365 = vmatprep.mubr.bf16.mxu0 %v8464
    %9366 = vmatmul.mubr.bf16.gmra.mxu0 %v8463
    %v9367 = vpop.f32.mrf.mxu0
    %v9368 = vadd.f32 %v9207, %v9367
    %v9369 = vpop.f32.mrf.mxu0
    %v9370 = vpop.f32.mrf.mxu0
    %v9371 = vadd.f32 %v9210, %v9370
    %v9372 = vpop.f32.mrf.mxu0
    %9373 = vmatprep.mubr.bf16.mxu0 %v8473
    %9374 = vmatmul.mubr.bf16.gmra.mxu0 %v8472
    %v9375 = vpop.f32.mrf.mxu0
    %v9376 = vadd.f32 %v9215, %v9375
    %v9377 = vpop.f32.mrf.mxu0
    %v9378 = vpop.f32.mrf.mxu0
    %v9379 = vadd.f32 %v9218, %v9378
    %v9380 = vpop.f32.mrf.mxu0
    %9381 = vmatprep.mubr.bf16.mxu0 %v8482
    %9382 = vmatmul.mubr.bf16.gmra.mxu0 %v8481
    %v9383 = vpop.f32.mrf.mxu0
    %v9384 = vadd.f32 %v9223, %v9383
    %v9385 = vpop.f32.mrf.mxu0
    %v9386 = vpop.f32.mrf.mxu0
    %v9387 = vadd.f32 %v9226, %v9386
    %v9388 = vpop.f32.mrf.mxu0
    %9389 = vmatprep.mubr.bf16.mxu0 %v8491
    %9390 = vmatmul.mubr.bf16.gmra.mxu0 %v8490
    %v9391 = vpop.f32.mrf.mxu0
    %v9392 = vadd.f32 %v9231, %v9391
    %v9393 = vpop.f32.mrf.mxu0
    %v9394 = vpop.f32.mrf.mxu0
    %v9395 = vadd.f32 %v9234, %v9394
    %v9396 = vpop.f32.mrf.mxu0
    %9397 = vmatprep.mubr.bf16.mxu0 %v8500
    %9398 = vmatmul.mubr.bf16.gmra.mxu0 %v8499
    %v9399 = vpop.f32.mrf.mxu0
    %v9400 = vadd.f32 %v9239, %v9399
    %v9401 = vpop.f32.mrf.mxu0
    %v9402 = vpop.f32.mrf.mxu0
    %v9403 = vadd.f32 %v9242, %v9402
    %v9404 = vpop.f32.mrf.mxu0
    %9405 = vmatprep.mubr.bf16.mxu0 %v8509
    %9406 = vmatmul.mubr.bf16.gmra.mxu0 %v8508
    %v9407 = vpop.f32.mrf.mxu0
    %v9408 = vadd.f32 %v9247, %v9407
    %v9409 = vpop.f32.mrf.mxu0
    %v9410 = vpop.f32.mrf.mxu0
    %v9411 = vadd.f32 %v9250, %v9410
    %v9412 = vpop.f32.mrf.mxu0
    %9413 = vmatprep.mubr.bf16.mxu0 %v8518
    %9414 = vmatmul.mubr.bf16.gmra.mxu0 %v8517
    %v9415 = vpop.f32.mrf.mxu0
    %v9416 = vadd.f32 %v9255, %v9415
    %v9417 = vpop.f32.mrf.mxu0
    %v9418 = vpop.f32.mrf.mxu0
    %v9419 = vadd.f32 %v9258, %v9418
    %v9420 = vpop.f32.mrf.mxu0
    %9421 = vdwg.mxu0
    %9422 = vmatprep.subr.bf16.mxu0 0
    %9423 = vmatpush1.bf16.msra.mxu0 %v8995
    %9424 = vmatprep.subr.bf16.mxu0 0
    %9425 = vmatpush1.bf16.msra.mxu0 %v8994
    %9426 = vmatprep.subr.bf16.mxu0 0
    %9427 = vmatpush1.bf16.msra.mxu0 %v8993
    %9428 = vmatprep.subr.bf16.mxu0 0
    %9429 = vmatpush1.bf16.msra.mxu0 %v8992
    %9430 = vmatprep.subr.bf16.mxu0 0
    %9431 = vmatpush1.bf16.msra.mxu0 %v8991
    %9432 = vmatprep.subr.bf16.mxu0 0
    %9433 = vmatpush1.bf16.msra.mxu0 %v8990
    %9434 = vmatprep.subr.bf16.mxu0 0
    %9435 = vmatpush1.bf16.msra.mxu0 %v8989
    %9436 = vmatprep.subr.bf16.mxu0 0
    %9437 = vmatpush1.bf16.msra.mxu0 %v8988
    %9438 = vmatprep.subr.bf16.mxu0 0
    %9439 = vmatpush2.bf16.msra.mxu0 %v9003
    %9440 = vmatprep.subr.bf16.mxu0 0
    %9441 = vmatpush2.bf16.msra.mxu0 %v9002
    %9442 = vmatprep.subr.bf16.mxu0 0
    %9443 = vmatpush2.bf16.msra.mxu0 %v9001
    %9444 = vmatprep.subr.bf16.mxu0 0
    %9445 = vmatpush2.bf16.msra.mxu0 %v9000
    %9446 = vmatprep.subr.bf16.mxu0 0
    %9447 = vmatpush2.bf16.msra.mxu0 %v8999
    %9448 = vmatprep.subr.bf16.mxu0 0
    %9449 = vmatpush2.bf16.msra.mxu0 %v8998
    %9450 = vmatprep.subr.bf16.mxu0 0
    %9451 = vmatpush2.bf16.msra.mxu0 %v8997
    %9452 = vmatprep.subr.bf16.mxu0 0
    %9453 = vmatpush2.bf16.msra.mxu0 %v8996
    %9454 = vmatprep.mubr.bf16.mxu0 %v8385
    %9455 = vmatmul.mubr.bf16.gmra.mxu0 %v8384
    %v9456 = vpop.f32.mrf.mxu0
    %v9457 = vadd.f32 %v9296, %v9456
    %v9458 = vpop.f32.mrf.mxu0
    %v9459 = vpop.f32.mrf.mxu0
    %v9460 = vadd.f32 %v9299, %v9459
    %v9461 = vpop.f32.mrf.mxu0
    %9462 = vmatprep.mubr.bf16.mxu0 %v8394
    %9463 = vmatmul.mubr.bf16.gmra.mxu0 %v8393
    %v9464 = vpop.f32.mrf.mxu0
    %v9465 = vadd.f32 %v9304, %v9464
    %v9466 = vpop.f32.mrf.mxu0
    %v9467 = vpop.f32.mrf.mxu0
    %v9468 = vadd.f32 %v9307, %v9467
    %v9469 = vpop.f32.mrf.mxu0
    %9470 = vmatprep.mubr.bf16.mxu0 %v8403
    %9471 = vmatmul.mubr.bf16.gmra.mxu0 %v8402
    %v9472 = vpop.f32.mrf.mxu0
    %v9473 = vadd.f32 %v9312, %v9472
    %v9474 = vpop.f32.mrf.mxu0
    %v9475 = vpop.f32.mrf.mxu0
    %v9476 = vadd.f32 %v9315, %v9475
    %v9477 = vpop.f32.mrf.mxu0
    %9478 = vmatprep.mubr.bf16.mxu0 %v8412
    %9479 = vmatmul.mubr.bf16.gmra.mxu0 %v8411
    %v9480 = vpop.f32.mrf.mxu0
    %v9481 = vadd.f32 %v9320, %v9480
    %v9482 = vpop.f32.mrf.mxu0
    %v9483 = vpop.f32.mrf.mxu0
    %v9484 = vadd.f32 %v9323, %v9483
    %v9485 = vpop.f32.mrf.mxu0
    %9486 = vmatprep.mubr.bf16.mxu0 %v8421
    %9487 = vmatmul.mubr.bf16.gmra.mxu0 %v8420
    %v9488 = vpop.f32.mrf.mxu0
    %v9489 = vadd.f32 %v9328, %v9488
    %v9490 = vpop.f32.mrf.mxu0
    %v9491 = vpop.f32.mrf.mxu0
    %v9492 = vadd.f32 %v9331, %v9491
    %v9493 = vpop.f32.mrf.mxu0
    %9494 = vmatprep.mubr.bf16.mxu0 %v8430
    %9495 = vmatmul.mubr.bf16.gmra.mxu0 %v8429
    %v9496 = vpop.f32.mrf.mxu0
    %v9497 = vadd.f32 %v9336, %v9496
    %v9498 = vpop.f32.mrf.mxu0
    %v9499 = vpop.f32.mrf.mxu0
    %v9500 = vadd.f32 %v9339, %v9499
    %v9501 = vpop.f32.mrf.mxu0
    %9502 = vmatprep.mubr.bf16.mxu0 %v8439
    %9503 = vmatmul.mubr.bf16.gmra.mxu0 %v8438
    %v9504 = vpop.f32.mrf.mxu0
    %v9505 = vadd.f32 %v9344, %v9504
    %v9506 = vpop.f32.mrf.mxu0
    %v9507 = vpop.f32.mrf.mxu0
    %v9508 = vadd.f32 %v9347, %v9507
    %v9509 = vpop.f32.mrf.mxu0
    %9510 = vmatprep.mubr.bf16.mxu0 %v8448
    %9511 = vmatmul.mubr.bf16.gmra.mxu0 %v8447
    %v9512 = vpop.f32.mrf.mxu0
    %v9513 = vadd.f32 %v9352, %v9512
    %v9514 = vpop.f32.mrf.mxu0
    %v9515 = vpop.f32.mrf.mxu0
    %v9516 = vadd.f32 %v9355, %v9515
    %v9517 = vpop.f32.mrf.mxu0
    %9518 = vmatprep.mubr.bf16.mxu0 %v8457
    %9519 = vmatmul.mubr.bf16.gmra.mxu0 %v8456
    %v9520 = vpop.f32.mrf.mxu0
    %v9521 = vadd.f32 %v9360, %v9520
    %v9522 = vpop.f32.mrf.mxu0
    %v9523 = vpop.f32.mrf.mxu0
    %v9524 = vadd.f32 %v9363, %v9523
    %v9525 = vpop.f32.mrf.mxu0
    %9526 = vmatprep.mubr.bf16.mxu0 %v8466
    %9527 = vmatmul.mubr.bf16.gmra.mxu0 %v8465
    %v9528 = vpop.f32.mrf.mxu0
    %v9529 = vadd.f32 %v9368, %v9528
    %v9530 = vpop.f32.mrf.mxu0
    %v9531 = vpop.f32.mrf.mxu0
    %v9532 = vadd.f32 %v9371, %v9531
    %v9533 = vpop.f32.mrf.mxu0
    %9534 = vmatprep.mubr.bf16.mxu0 %v8475
    %9535 = vmatmul.mubr.bf16.gmra.mxu0 %v8474
    %v9536 = vpop.f32.mrf.mxu0
    %v9537 = vadd.f32 %v9376, %v9536
    %v9538 = vpop.f32.mrf.mxu0
    %v9539 = vpop.f32.mrf.mxu0
    %v9540 = vadd.f32 %v9379, %v9539
    %v9541 = vpop.f32.mrf.mxu0
    %9542 = vmatprep.mubr.bf16.mxu0 %v8484
    %9543 = vmatmul.mubr.bf16.gmra.mxu0 %v8483
    %v9544 = vpop.f32.mrf.mxu0
    %v9545 = vadd.f32 %v9384, %v9544
    %v9546 = vpop.f32.mrf.mxu0
    %v9547 = vpop.f32.mrf.mxu0
    %v9548 = vadd.f32 %v9387, %v9547
    %v9549 = vpop.f32.mrf.mxu0
    %9550 = vmatprep.mubr.bf16.mxu0 %v8493
    %9551 = vmatmul.mubr.bf16.gmra.mxu0 %v8492
    %v9552 = vpop.f32.mrf.mxu0
    %v9553 = vadd.f32 %v9392, %v9552
    %v9554 = vpop.f32.mrf.mxu0
    %v9555 = vpop.f32.mrf.mxu0
    %v9556 = vadd.f32 %v9395, %v9555
    %v9557 = vpop.f32.mrf.mxu0
    %9558 = vmatprep.mubr.bf16.mxu0 %v8502
    %9559 = vmatmul.mubr.bf16.gmra.mxu0 %v8501
    %v9560 = vpop.f32.mrf.mxu0
    %v9561 = vadd.f32 %v9400, %v9560
    %v9562 = vpop.f32.mrf.mxu0
    %v9563 = vpop.f32.mrf.mxu0
    %v9564 = vadd.f32 %v9403, %v9563
    %v9565 = vpop.f32.mrf.mxu0
    %9566 = vmatprep.mubr.bf16.mxu0 %v8511
    %9567 = vmatmul.mubr.bf16.gmra.mxu0 %v8510
    %v9568 = vpop.f32.mrf.mxu0
    %v9569 = vadd.f32 %v9408, %v9568
    %v9570 = vpop.f32.mrf.mxu0
    %v9571 = vpop.f32.mrf.mxu0
    %v9572 = vadd.f32 %v9411, %v9571
    %v9573 = vpop.f32.mrf.mxu0
    %9574 = vmatprep.mubr.bf16.mxu0 %v8520
    %9575 = vmatmul.mubr.bf16.gmra.mxu0 %v8519
    %v9576 = vpop.f32.mrf.mxu0
    %v9577 = vadd.f32 %v9416, %v9576
    %v9578 = vpop.f32.mrf.mxu0
    %v9579 = vpop.f32.mrf.mxu0
    %v9580 = vadd.f32 %v9419, %v9579
    %v9581 = vpop.f32.mrf.mxu0
    %9582 = vdwg.mxu0
    %9583 = vmatprep.subr.bf16.mxu0 0
    %9584 = vmatpush1.bf16.msra.mxu0 %v9011
    %9585 = vmatprep.subr.bf16.mxu0 0
    %9586 = vmatpush1.bf16.msra.mxu0 %v9010
    %9587 = vmatprep.subr.bf16.mxu0 0
    %9588 = vmatpush1.bf16.msra.mxu0 %v9009
    %9589 = vmatprep.subr.bf16.mxu0 0
    %9590 = vmatpush1.bf16.msra.mxu0 %v9008
    %9591 = vmatprep.subr.bf16.mxu0 0
    %9592 = vmatpush1.bf16.msra.mxu0 %v9007
    %9593 = vmatprep.subr.bf16.mxu0 0
    %9594 = vmatpush1.bf16.msra.mxu0 %v9006
    %9595 = vmatprep.subr.bf16.mxu0 0
    %9596 = vmatpush1.bf16.msra.mxu0 %v9005
    %9597 = vmatprep.subr.bf16.mxu0 0
    %9598 = vmatpush1.bf16.msra.mxu0 %v9004
    %9599 = vmatprep.subr.bf16.mxu0 0
    %9600 = vmatpush2.bf16.msra.mxu0 %v9019
    %9601 = vmatprep.subr.bf16.mxu0 0
    %9602 = vmatpush2.bf16.msra.mxu0 %v9018
    %9603 = vmatprep.subr.bf16.mxu0 0
    %9604 = vmatpush2.bf16.msra.mxu0 %v9017
    %9605 = vmatprep.subr.bf16.mxu0 0
    %9606 = vmatpush2.bf16.msra.mxu0 %v9016
    %9607 = vmatprep.subr.bf16.mxu0 0
    %9608 = vmatpush2.bf16.msra.mxu0 %v9015
    %9609 = vmatprep.subr.bf16.mxu0 0
    %9610 = vmatpush2.bf16.msra.mxu0 %v9014
    %9611 = vmatprep.subr.bf16.mxu0 0
    %9612 = vmatpush2.bf16.msra.mxu0 %v9013
    %9613 = vmatprep.subr.bf16.mxu0 0
    %9614 = vmatpush2.bf16.msra.mxu0 %v9012
    %9615 = vmatprep.mubr.bf16.mxu0 %v8387
    %9616 = vmatmul.mubr.bf16.gmra.mxu0 %v8386
    %v9617 = vpop.f32.mrf.mxu0
    %v9618 = vadd.f32 %v9457, %v9617
    %v9619 = vpop.f32.mrf.mxu0
    %v9620 = vpop.f32.mrf.mxu0
    %v9621 = vadd.f32 %v9460, %v9620
    %v9622 = vpop.f32.mrf.mxu0
    %9623 = vmatprep.mubr.bf16.mxu0 %v8396
    %9624 = vmatmul.mubr.bf16.gmra.mxu0 %v8395
    %v9625 = vpop.f32.mrf.mxu0
    %v9626 = vadd.f32 %v9465, %v9625
    %v9627 = vpop.f32.mrf.mxu0
    %v9628 = vpop.f32.mrf.mxu0
    %v9629 = vadd.f32 %v9468, %v9628
    %v9630 = vpop.f32.mrf.mxu0
    %9631 = vmatprep.mubr.bf16.mxu0 %v8405
    %9632 = vmatmul.mubr.bf16.gmra.mxu0 %v8404
    %v9633 = vpop.f32.mrf.mxu0
    %v9634 = vadd.f32 %v9473, %v9633
    %v9635 = vpop.f32.mrf.mxu0
    %v9636 = vpop.f32.mrf.mxu0
    %v9637 = vadd.f32 %v9476, %v9636
    %v9638 = vpop.f32.mrf.mxu0
    %9639 = vmatprep.mubr.bf16.mxu0 %v8414
    %9640 = vmatmul.mubr.bf16.gmra.mxu0 %v8413
    %v9641 = vpop.f32.mrf.mxu0
    %v9642 = vadd.f32 %v9481, %v9641
    %v9643 = vpop.f32.mrf.mxu0
    %v9644 = vpop.f32.mrf.mxu0
    %v9645 = vadd.f32 %v9484, %v9644
    %v9646 = vpop.f32.mrf.mxu0
    %9647 = vmatprep.mubr.bf16.mxu0 %v8423
    %9648 = vmatmul.mubr.bf16.gmra.mxu0 %v8422
    %v9649 = vpop.f32.mrf.mxu0
    %v9650 = vadd.f32 %v9489, %v9649
    %v9651 = vpop.f32.mrf.mxu0
    %v9652 = vpop.f32.mrf.mxu0
    %v9653 = vadd.f32 %v9492, %v9652
    %v9654 = vpop.f32.mrf.mxu0
    %9655 = vmatprep.mubr.bf16.mxu0 %v8432
    %9656 = vmatmul.mubr.bf16.gmra.mxu0 %v8431
    %v9657 = vpop.f32.mrf.mxu0
    %v9658 = vadd.f32 %v9497, %v9657
    %v9659 = vpop.f32.mrf.mxu0
    %v9660 = vpop.f32.mrf.mxu0
    %v9661 = vadd.f32 %v9500, %v9660
    %v9662 = vpop.f32.mrf.mxu0
    %9663 = vmatprep.mubr.bf16.mxu0 %v8441
    %9664 = vmatmul.mubr.bf16.gmra.mxu0 %v8440
    %v9665 = vpop.f32.mrf.mxu0
    %v9666 = vadd.f32 %v9505, %v9665
    %v9667 = vpop.f32.mrf.mxu0
    %v9668 = vpop.f32.mrf.mxu0
    %v9669 = vadd.f32 %v9508, %v9668
    %v9670 = vpop.f32.mrf.mxu0
    %9671 = vmatprep.mubr.bf16.mxu0 %v8450
    %9672 = vmatmul.mubr.bf16.gmra.mxu0 %v8449
    %v9673 = vpop.f32.mrf.mxu0
    %v9674 = vadd.f32 %v9513, %v9673
    %v9675 = vpop.f32.mrf.mxu0
    %v9676 = vpop.f32.mrf.mxu0
    %v9677 = vadd.f32 %v9516, %v9676
    %v9678 = vpop.f32.mrf.mxu0
    %9679 = vmatprep.mubr.bf16.mxu0 %v8459
    %9680 = vmatmul.mubr.bf16.gmra.mxu0 %v8458
    %v9681 = vpop.f32.mrf.mxu0
    %v9682 = vadd.f32 %v9521, %v9681
    %v9683 = vpop.f32.mrf.mxu0
    %v9684 = vpop.f32.mrf.mxu0
    %v9685 = vadd.f32 %v9524, %v9684
    %v9686 = vpop.f32.mrf.mxu0
    %9687 = vmatprep.mubr.bf16.mxu0 %v8468
    %9688 = vmatmul.mubr.bf16.gmra.mxu0 %v8467
    %v9689 = vpop.f32.mrf.mxu0
    %v9690 = vadd.f32 %v9529, %v9689
    %v9691 = vpop.f32.mrf.mxu0
    %v9692 = vpop.f32.mrf.mxu0
    %v9693 = vadd.f32 %v9532, %v9692
    %v9694 = vpop.f32.mrf.mxu0
    %9695 = vmatprep.mubr.bf16.mxu0 %v8477
    %9696 = vmatmul.mubr.bf16.gmra.mxu0 %v8476
    %v9697 = vpop.f32.mrf.mxu0
    %v9698 = vadd.f32 %v9537, %v9697
    %v9699 = vpop.f32.mrf.mxu0
    %v9700 = vpop.f32.mrf.mxu0
    %v9701 = vadd.f32 %v9540, %v9700
    %v9702 = vpop.f32.mrf.mxu0
    %9703 = vmatprep.mubr.bf16.mxu0 %v8486
    %9704 = vmatmul.mubr.bf16.gmra.mxu0 %v8485
    %v9705 = vpop.f32.mrf.mxu0
    %v9706 = vadd.f32 %v9545, %v9705
    %v9707 = vpop.f32.mrf.mxu0
    %v9708 = vpop.f32.mrf.mxu0
    %v9709 = vadd.f32 %v9548, %v9708
    %v9710 = vpop.f32.mrf.mxu0
    %9711 = vmatprep.mubr.bf16.mxu0 %v8495
    %9712 = vmatmul.mubr.bf16.gmra.mxu0 %v8494
    %v9713 = vpop.f32.mrf.mxu0
    %v9714 = vadd.f32 %v9553, %v9713
    %v9715 = vpop.f32.mrf.mxu0
    %v9716 = vpop.f32.mrf.mxu0
    %v9717 = vadd.f32 %v9556, %v9716
    %v9718 = vpop.f32.mrf.mxu0
    %9719 = vmatprep.mubr.bf16.mxu0 %v8504
    %9720 = vmatmul.mubr.bf16.gmra.mxu0 %v8503
    %v9721 = vpop.f32.mrf.mxu0
    %v9722 = vadd.f32 %v9561, %v9721
    %v9723 = vpop.f32.mrf.mxu0
    %v9724 = vpop.f32.mrf.mxu0
    %v9725 = vadd.f32 %v9564, %v9724
    %v9726 = vpop.f32.mrf.mxu0
    %9727 = vmatprep.mubr.bf16.mxu0 %v8513
    %9728 = vmatmul.mubr.bf16.gmra.mxu0 %v8512
    %v9729 = vpop.f32.mrf.mxu0
    %v9730 = vadd.f32 %v9569, %v9729
    %v9731 = vpop.f32.mrf.mxu0
    %v9732 = vpop.f32.mrf.mxu0
    %v9733 = vadd.f32 %v9572, %v9732
    %v9734 = vpop.f32.mrf.mxu0
    %9735 = vmatprep.mubr.bf16.mxu0 %v8522
    %9736 = vmatmul.mubr.bf16.gmra.mxu0 %v8521
    %v9737 = vpop.f32.mrf.mxu0
    %v9738 = vadd.f32 %v9577, %v9737
    %v9739 = vpop.f32.mrf.mxu0
    %v9740 = vpop.f32.mrf.mxu0
    %v9741 = vadd.f32 %v9580, %v9740
    %v9742 = vpop.f32.mrf.mxu0
    %9743 = vdwg.mxu0
    %9744 = vmatprep.subr.bf16.mxu0 0
    %9745 = vmatpush1.bf16.msra.mxu0 %v9027
    %9746 = vmatprep.subr.bf16.mxu0 0
    %9747 = vmatpush1.bf16.msra.mxu0 %v9026
    %9748 = vmatprep.subr.bf16.mxu0 0
    %9749 = vmatpush1.bf16.msra.mxu0 %v9025
    %9750 = vmatprep.subr.bf16.mxu0 0
    %9751 = vmatpush1.bf16.msra.mxu0 %v9024
    %9752 = vmatprep.subr.bf16.mxu0 0
    %9753 = vmatpush1.bf16.msra.mxu0 %v9023
    %9754 = vmatprep.subr.bf16.mxu0 0
    %9755 = vmatpush1.bf16.msra.mxu0 %v9022
    %9756 = vmatprep.subr.bf16.mxu0 0
    %9757 = vmatpush1.bf16.msra.mxu0 %v9021
    %9758 = vmatprep.subr.bf16.mxu0 0
    %9759 = vmatpush1.bf16.msra.mxu0 %v9020
    %9760 = vmatprep.subr.bf16.mxu0 0
    %9761 = vmatpush2.bf16.msra.mxu0 0
    %9762 = vmatprep.subr.bf16.mxu0 0
    %9763 = vmatpush2.bf16.msra.mxu0 0
    %9764 = vmatprep.subr.bf16.mxu0 0
    %9765 = vmatpush2.bf16.msra.mxu0 0
    %9766 = vmatprep.subr.bf16.mxu0 0
    %9767 = vmatpush2.bf16.msra.mxu0 0
    %9768 = vmatprep.subr.bf16.mxu0 0
    %9769 = vmatpush2.bf16.msra.mxu0 0
    %9770 = vmatprep.subr.bf16.mxu0 0
    %9771 = vmatpush2.bf16.msra.mxu0 0
    %9772 = vmatprep.subr.bf16.mxu0 0
    %9773 = vmatpush2.bf16.msra.mxu0 0
    %9774 = vmatprep.subr.bf16.mxu0 0
    %9775 = vmatpush2.bf16.msra.mxu0 0
    %9776 = vmatprep.mubr.bf16.mxu0 0
    %9777 = vmatmul.mubr.bf16.gmra.mxu0 %v8388
    %v9778 = vpop.f32.mrf.mxu0
    %v9779 = vadd.f32 %v9618, %v9778
    %v9780 = vpop.f32.mrf.mxu0
    %v9781 = vpop.f32.mrf.mxu0
    %v9782 = vadd.f32 %v9621, %v9781
    %v9783 = vpop.f32.mrf.mxu0
    %9784 = vmatprep.mubr.bf16.mxu0 0
    %9785 = vmatmul.mubr.bf16.gmra.mxu0 %v8397
    %v9786 = vpop.f32.mrf.mxu0
    %v9787 = vadd.f32 %v9626, %v9786
    %v9788 = vpop.f32.mrf.mxu0
    %v9789 = vpop.f32.mrf.mxu0
    %v9790 = vadd.f32 %v9629, %v9789
    %v9791 = vpop.f32.mrf.mxu0
    %9792 = vmatprep.mubr.bf16.mxu0 0
    %9793 = vmatmul.mubr.bf16.gmra.mxu0 %v8406
    %v9794 = vpop.f32.mrf.mxu0
    %v9795 = vadd.f32 %v9634, %v9794
    %v9796 = vpop.f32.mrf.mxu0
    %v9797 = vpop.f32.mrf.mxu0
    %v9798 = vadd.f32 %v9637, %v9797
    %v9799 = vpop.f32.mrf.mxu0
    %9800 = vmatprep.mubr.bf16.mxu0 0
    %9801 = vmatmul.mubr.bf16.gmra.mxu0 %v8415
    %v9802 = vpop.f32.mrf.mxu0
    %v9803 = vadd.f32 %v9642, %v9802
    %v9804 = vpop.f32.mrf.mxu0
    %v9805 = vpop.f32.mrf.mxu0
    %v9806 = vadd.f32 %v9645, %v9805
    %v9807 = vpop.f32.mrf.mxu0
    %9808 = vmatprep.mubr.bf16.mxu0 0
    %9809 = vmatmul.mubr.bf16.gmra.mxu0 %v8424
    %v9810 = vpop.f32.mrf.mxu0
    %v9811 = vadd.f32 %v9650, %v9810
    %v9812 = vpop.f32.mrf.mxu0
    %v9813 = vpop.f32.mrf.mxu0
    %v9814 = vadd.f32 %v9653, %v9813
    %v9815 = vpop.f32.mrf.mxu0
    %9816 = vmatprep.mubr.bf16.mxu0 0
    %9817 = vmatmul.mubr.bf16.gmra.mxu0 %v8433
    %v9818 = vpop.f32.mrf.mxu0
    %v9819 = vadd.f32 %v9658, %v9818
    %v9820 = vpop.f32.mrf.mxu0
    %v9821 = vpop.f32.mrf.mxu0
    %v9822 = vadd.f32 %v9661, %v9821
    %v9823 = vpop.f32.mrf.mxu0
    %9824 = vmatprep.mubr.bf16.mxu0 0
    %9825 = vmatmul.mubr.bf16.gmra.mxu0 %v8442
    %v9826 = vpop.f32.mrf.mxu0
    %v9827 = vadd.f32 %v9666, %v9826
    %v9828 = vpop.f32.mrf.mxu0
    %v9829 = vpop.f32.mrf.mxu0
    %v9830 = vadd.f32 %v9669, %v9829
    %v9831 = vpop.f32.mrf.mxu0
    %9832 = vmatprep.mubr.bf16.mxu0 0
    %9833 = vmatmul.mubr.bf16.gmra.mxu0 %v8451
    %v9834 = vpop.f32.mrf.mxu0
    %v9835 = vadd.f32 %v9674, %v9834
    %v9836 = vpop.f32.mrf.mxu0
    %v9837 = vpop.f32.mrf.mxu0
    %v9838 = vadd.f32 %v9677, %v9837
    %v9839 = vpop.f32.mrf.mxu0
    %9840 = vmatprep.mubr.bf16.mxu0 0
    %9841 = vmatmul.mubr.bf16.gmra.mxu0 %v8460
    %v9842 = vpop.f32.mrf.mxu0
    %v9843 = vadd.f32 %v9682, %v9842
    %v9844 = vpop.f32.mrf.mxu0
    %v9845 = vpop.f32.mrf.mxu0
    %v9846 = vadd.f32 %v9685, %v9845
    %v9847 = vpop.f32.mrf.mxu0
    %9848 = vmatprep.mubr.bf16.mxu0 0
    %9849 = vmatmul.mubr.bf16.gmra.mxu0 %v8469
    %v9850 = vpop.f32.mrf.mxu0
    %v9851 = vadd.f32 %v9690, %v9850
    %v9852 = vpop.f32.mrf.mxu0
    %v9853 = vpop.f32.mrf.mxu0
    %v9854 = vadd.f32 %v9693, %v9853
    %v9855 = vpop.f32.mrf.mxu0
    %9856 = vmatprep.mubr.bf16.mxu0 0
    %9857 = vmatmul.mubr.bf16.gmra.mxu0 %v8478
    %v9858 = vpop.f32.mrf.mxu0
    %v9859 = vadd.f32 %v9698, %v9858
    %v9860 = vpop.f32.mrf.mxu0
    %v9861 = vpop.f32.mrf.mxu0
    %v9862 = vadd.f32 %v9701, %v9861
    %v9863 = vpop.f32.mrf.mxu0
    %9864 = vmatprep.mubr.bf16.mxu0 0
    %9865 = vmatmul.mubr.bf16.gmra.mxu0 %v8487
    %v9866 = vpop.f32.mrf.mxu0
    %v9867 = vadd.f32 %v9706, %v9866
    %v9868 = vpop.f32.mrf.mxu0
    %v9869 = vpop.f32.mrf.mxu0
    %v9870 = vadd.f32 %v9709, %v9869
    %v9871 = vpop.f32.mrf.mxu0
    %9872 = vmatprep.mubr.bf16.mxu0 0
    %9873 = vmatmul.mubr.bf16.gmra.mxu0 %v8496
    %v9874 = vpop.f32.mrf.mxu0
    %v9875 = vadd.f32 %v9714, %v9874
    %v9876 = vpop.f32.mrf.mxu0
    %v9877 = vpop.f32.mrf.mxu0
    %v9878 = vadd.f32 %v9717, %v9877
    %v9879 = vpop.f32.mrf.mxu0
    %9880 = vmatprep.mubr.bf16.mxu0 0
    %9881 = vmatmul.mubr.bf16.gmra.mxu0 %v8505
    %v9882 = vpop.f32.mrf.mxu0
    %v9883 = vadd.f32 %v9722, %v9882
    %v9884 = vpop.f32.mrf.mxu0
    %v9885 = vpop.f32.mrf.mxu0
    %v9886 = vadd.f32 %v9725, %v9885
    %v9887 = vpop.f32.mrf.mxu0
    %9888 = vmatprep.mubr.bf16.mxu0 0
    %9889 = vmatmul.mubr.bf16.gmra.mxu0 %v8514
    %v9890 = vpop.f32.mrf.mxu0
    %v9891 = vadd.f32 %v9730, %v9890
    %v9892 = vpop.f32.mrf.mxu0
    %v9893 = vpop.f32.mrf.mxu0
    %v9894 = vadd.f32 %v9733, %v9893
    %v9895 = vpop.f32.mrf.mxu0
    %9896 = vmatprep.mubr.bf16.mxu0 0
    %9897 = vmatmul.mubr.bf16.gmra.mxu0 %v8523
    %v9898 = vpop.f32.mrf.mxu0
    %v9899 = vadd.f32 %v9738, %v9898
    %v9900 = vpop.f32.mrf.mxu0
    %v9901 = vpop.f32.mrf.mxu0
    %v9902 = vadd.f32 %v9741, %v9901
    %v9903 = vpop.f32.mrf.mxu0
    %9904 = vdwg.mxu0
    %v9905 = vadd.f32 %v9779, %v9782
    %v9906 = vadd.f32 %v9905, %v9787
    %v9907 = vadd.f32 %v9906, %v9790
    %v9908 = vadd.f32 %v9907, %v9795
    %v9909 = vadd.f32 %v9908, %v9798
    %v9910 = vadd.f32 %v9909, %v9803
    %v9911 = vadd.f32 %v9910, %v9806
    %v9912 = vadd.f32 %v9911, %v9811
    %v9913 = vadd.f32 %v9912, %v9814
    %v9914 = vadd.f32 %v9913, %v9819
    %v9915 = vadd.f32 %v9914, %v9822
    %v9916 = vadd.f32 %v9915, %v9827
    %v9917 = vadd.f32 %v9916, %v9830
    %v9918 = vadd.f32 %v9917, %v9835
    %v9919 = vadd.f32 %v9918, %v9838
    %v9920 = vadd.f32 %v9919, %v9843
    %v9921 = vadd.f32 %v9920, %v9846
    %v9922 = vadd.f32 %v9921, %v9851
    %v9923 = vadd.f32 %v9922, %v9854
    %v9924 = vadd.f32 %v9923, %v9859
    %v9925 = vadd.f32 %v9924, %v9862
    %v9926 = vadd.f32 %v9925, %v9867
    %v9927 = vadd.f32 %v9926, %v9870
    %v9928 = vadd.f32 %v9927, %v9875
    %v9929 = vadd.f32 %v9928, %v9878
    %v9930 = vadd.f32 %v9929, %v9883
    %v9931 = vadd.f32 %v9930, %v9886
    %v9932 = vadd.f32 %v9931, %v9891
    %v9933 = vadd.f32 %v9932, %v9894
    %v9934 = vadd.f32 %v9933, %v9899
    %v9935 = vadd.f32 %v9934, %v9902
    %v9936 = vrot.slane %v9935, 4
    %v9937 = vadd.f32 %v9935, %v9936
    %v9938 = vrot.slane %v9937, 2
    %v9939 = vadd.f32 %v9937, %v9938
    %v9940 = vrot.slane %v9939, 1
    %v9941 = vadd.f32 %v9939, %v9940
    %v9942 = vmul.f32 %v9941, 0.00390625
    %v9943 = vmul.f32 %v9779, %v9779
    %v9944 = vmul.f32 %v9782, %v9782
    %v9945 = vmul.f32 %v9787, %v9787
    %v9946 = vmul.f32 %v9790, %v9790
    %v9947 = vmul.f32 %v9795, %v9795
    %v9948 = vmul.f32 %v9798, %v9798
    %v9949 = vmul.f32 %v9803, %v9803
    %v9950 = vmul.f32 %v9806, %v9806
    %v9951 = vmul.f32 %v9811, %v9811
    %v9952 = vmul.f32 %v9814, %v9814
    %v9953 = vmul.f32 %v9819, %v9819
    %v9954 = vmul.f32 %v9822, %v9822
    %v9955 = vmul.f32 %v9827, %v9827
    %v9956 = vmul.f32 %v9830, %v9830
    %v9957 = vmul.f32 %v9835, %v9835
    %v9958 = vmul.f32 %v9838, %v9838
    %v9959 = vmul.f32 %v9843, %v9843
    %v9960 = vmul.f32 %v9846, %v9846
    %v9961 = vmul.f32 %v9851, %v9851
    %v9962 = vmul.f32 %v9854, %v9854
    %v9963 = vmul.f32 %v9859, %v9859
    %v9964 = vmul.f32 %v9862, %v9862
    %v9965 = vmul.f32 %v9867, %v9867
    %v9966 = vmul.f32 %v9870, %v9870
    %v9967 = vmul.f32 %v9875, %v9875
    %v9968 = vmul.f32 %v9878, %v9878
    %v9969 = vmul.f32 %v9883, %v9883
    %v9970 = vmul.f32 %v9886, %v9886
    %v9971 = vmul.f32 %v9891, %v9891
    %v9972 = vmul.f32 %v9894, %v9894
    %v9973 = vmul.f32 %v9899, %v9899
    %v9974 = vmul.f32 %v9902, %v9902
    %v9975 = vadd.f32 %v9943, %v9944
    %v9976 = vadd.f32 %v9975, %v9945
    %v9977 = vadd.f32 %v9976, %v9946
    %v9978 = vadd.f32 %v9977, %v9947
    %v9979 = vadd.f32 %v9978, %v9948
    %v9980 = vadd.f32 %v9979, %v9949
    %v9981 = vadd.f32 %v9980, %v9950
    %v9982 = vadd.f32 %v9981, %v9951
    %v9983 = vadd.f32 %v9982, %v9952
    %v9984 = vadd.f32 %v9983, %v9953
    %v9985 = vadd.f32 %v9984, %v9954
    %v9986 = vadd.f32 %v9985, %v9955
    %v9987 = vadd.f32 %v9986, %v9956
    %v9988 = vadd.f32 %v9987, %v9957
    %v9989 = vadd.f32 %v9988, %v9958
    %v9990 = vadd.f32 %v9989, %v9959
    %v9991 = vadd.f32 %v9990, %v9960
    %v9992 = vadd.f32 %v9991, %v9961
    %v9993 = vadd.f32 %v9992, %v9962
    %v9994 = vadd.f32 %v9993, %v9963
    %v9995 = vadd.f32 %v9994, %v9964
    %v9996 = vadd.f32 %v9995, %v9965
    %v9997 = vadd.f32 %v9996, %v9966
    %v9998 = vadd.f32 %v9997, %v9967
    %v9999 = vadd.f32 %v9998, %v9968
    %v10000 = vadd.f32 %v9999, %v9969
    %v10001 = vadd.f32 %v10000, %v9970
    %v10002 = vadd.f32 %v10001, %v9971
    %v10003 = vadd.f32 %v10002, %v9972
    %v10004 = vadd.f32 %v10003, %v9973
    %v10005 = vadd.f32 %v10004, %v9974
    %v10006 = vrot.slane %v10005, 4
    %v10007 = vadd.f32 %v10005, %v10006
    %v10008 = vrot.slane %v10007, 2
    %v10009 = vadd.f32 %v10007, %v10008
    %v10010 = vrot.slane %v10009, 1
    %v10011 = vadd.f32 %v10009, %v10010
    %v10012 = vmul.f32 %v10011, 0.00390625
    %v10013 = vmul.f32 %v9942, %v9942
    %v10014 = vsub.f32 %v10012, %v10013
    %v10015 = vmax.f32 %v10014, 0.0
    %v10016 = vsub.f32 %v9779, %v9942
    %v10017 = vsub.f32 %v9782, %v9942
    %v10018 = vsub.f32 %v9787, %v9942
    %v10019 = vsub.f32 %v9790, %v9942
    %v10020 = vsub.f32 %v9795, %v9942
    %v10021 = vsub.f32 %v9798, %v9942
    %v10022 = vsub.f32 %v9803, %v9942
    %v10023 = vsub.f32 %v9806, %v9942
    %v10024 = vsub.f32 %v9811, %v9942
    %v10025 = vsub.f32 %v9814, %v9942
    %v10026 = vsub.f32 %v9819, %v9942
    %v10027 = vsub.f32 %v9822, %v9942
    %v10028 = vsub.f32 %v9827, %v9942
    %v10029 = vsub.f32 %v9830, %v9942
    %v10030 = vsub.f32 %v9835, %v9942
    %v10031 = vsub.f32 %v9838, %v9942
    %v10032 = vsub.f32 %v9843, %v9942
    %v10033 = vsub.f32 %v9846, %v9942
    %v10034 = vsub.f32 %v9851, %v9942
    %v10035 = vsub.f32 %v9854, %v9942
    %v10036 = vsub.f32 %v9859, %v9942
    %v10037 = vsub.f32 %v9862, %v9942
    %v10038 = vsub.f32 %v9867, %v9942
    %v10039 = vsub.f32 %v9870, %v9942
    %v10040 = vsub.f32 %v9875, %v9942
    %v10041 = vsub.f32 %v9878, %v9942
    %v10042 = vsub.f32 %v9883, %v9942
    %v10043 = vsub.f32 %v9886, %v9942
    %v10044 = vsub.f32 %v9891, %v9942
    %v10045 = vsub.f32 %v9894, %v9942
    %v10046 = vsub.f32 %v9899, %v9942
    %v10047 = vsub.f32 %v9902, %v9942
    %v10048 = vadd.f32 %v10015, 1e-05
    %v10049 = vrsqrt.pop %v10048
    %v10050 = vmul.f32 %v10016, %v10049
    %v10051 = vmul.f32 %v10017, %v10049
    %v10052 = vmul.f32 %v10018, %v10049
    %v10053 = vmul.f32 %v10019, %v10049
    %v10054 = vmul.f32 %v10020, %v10049
    %v10055 = vmul.f32 %v10021, %v10049
    %v10056 = vmul.f32 %v10022, %v10049
    %v10057 = vmul.f32 %v10023, %v10049
    %v10058 = vmul.f32 %v10024, %v10049
    %v10059 = vmul.f32 %v10025, %v10049
    %v10060 = vmul.f32 %v10026, %v10049
    %v10061 = vmul.f32 %v10027, %v10049
    %v10062 = vmul.f32 %v10028, %v10049
    %v10063 = vmul.f32 %v10029, %v10049
    %v10064 = vmul.f32 %v10030, %v10049
    %v10065 = vmul.f32 %v10031, %v10049
    %v10066 = vmul.f32 %v10032, %v10049
    %v10067 = vmul.f32 %v10033, %v10049
    %v10068 = vmul.f32 %v10034, %v10049
    %v10069 = vmul.f32 %v10035, %v10049
    %v10070 = vmul.f32 %v10036, %v10049
    %v10071 = vmul.f32 %v10037, %v10049
    %v10072 = vmul.f32 %v10038, %v10049
    %v10073 = vmul.f32 %v10039, %v10049
    %v10074 = vmul.f32 %v10040, %v10049
    %v10075 = vmul.f32 %v10041, %v10049
    %v10076 = vmul.f32 %v10042, %v10049
    %v10077 = vmul.f32 %v10043, %v10049
    %v10078 = vmul.f32 %v10044, %v10049
    %v10079 = vmul.f32 %v10045, %v10049
    %v10080 = vmul.f32 %v10046, %v10049
    %v10081 = vmul.f32 %v10047, %v10049
    %s10082 = scalar_lea.vmem %s3, 1
    %v10083 = vld [vmem:[%s10082] sm:$0x1]
    %v10085 = vlaneseq
    %v10086 = vshrl.u32 %v10085, 7
    %v10087 = vsub.s32 0, %v10086
    %v10088 = vrot.slane %v10083, %v10087
    %v10090 = vmul.f32 %v10050, %v10088
    %v10091 = vmul.f32 %v10051, %v10088
    %v10092 = vmul.f32 %v10052, %v10088
    %v10093 = vmul.f32 %v10053, %v10088
    %v10094 = vmul.f32 %v10054, %v10088
    %v10095 = vmul.f32 %v10055, %v10088
    %v10096 = vmul.f32 %v10056, %v10088
    %v10097 = vmul.f32 %v10057, %v10088
    %v10098 = vmul.f32 %v10058, %v10088
    %v10099 = vmul.f32 %v10059, %v10088
    %v10100 = vmul.f32 %v10060, %v10088
    %v10101 = vmul.f32 %v10061, %v10088
    %v10102 = vmul.f32 %v10062, %v10088
    %v10103 = vmul.f32 %v10063, %v10088
    %v10104 = vmul.f32 %v10064, %v10088
    %v10105 = vmul.f32 %v10065, %v10088
    %v10106 = vmul.f32 %v10066, %v10088
    %v10107 = vmul.f32 %v10067, %v10088
    %v10108 = vmul.f32 %v10068, %v10088
    %v10109 = vmul.f32 %v10069, %v10088
    %v10110 = vmul.f32 %v10070, %v10088
    %v10111 = vmul.f32 %v10071, %v10088
    %v10112 = vmul.f32 %v10072, %v10088
    %v10113 = vmul.f32 %v10073, %v10088
    %v10114 = vmul.f32 %v10074, %v10088
    %v10115 = vmul.f32 %v10075, %v10088
    %v10116 = vmul.f32 %v10076, %v10088
    %v10117 = vmul.f32 %v10077, %v10088
    %v10118 = vmul.f32 %v10078, %v10088
    %v10119 = vmul.f32 %v10079, %v10088
    %v10120 = vmul.f32 %v10080, %v10088
    %v10121 = vmul.f32 %v10081, %v10088
    %s10122 = scalar_lea.vmem %s4, 1
    %v10123 = vld [vmem:[%s10122] sm:$0x1]
    %v10125 = vlaneseq
    %v10126 = vshrl.u32 %v10125, 7
    %v10127 = vsub.s32 0, %v10126
    %v10128 = vrot.slane %v10123, %v10127
    %v10130 = vadd.f32 %v10090, %v10128
    %v10131 = vadd.f32 %v10091, %v10128
    %v10132 = vadd.f32 %v10092, %v10128
    %v10133 = vadd.f32 %v10093, %v10128
    %v10134 = vadd.f32 %v10094, %v10128
    %v10135 = vadd.f32 %v10095, %v10128
    %v10136 = vadd.f32 %v10096, %v10128
    %v10137 = vadd.f32 %v10097, %v10128
    %v10138 = vadd.f32 %v10098, %v10128
    %v10139 = vadd.f32 %v10099, %v10128
    %v10140 = vadd.f32 %v10100, %v10128
    %v10141 = vadd.f32 %v10101, %v10128
    %v10142 = vadd.f32 %v10102, %v10128
    %v10143 = vadd.f32 %v10103, %v10128
    %v10144 = vadd.f32 %v10104, %v10128
    %v10145 = vadd.f32 %v10105, %v10128
    %v10146 = vadd.f32 %v10106, %v10128
    %v10147 = vadd.f32 %v10107, %v10128
    %v10148 = vadd.f32 %v10108, %v10128
    %v10149 = vadd.f32 %v10109, %v10128
    %v10150 = vadd.f32 %v10110, %v10128
    %v10151 = vadd.f32 %v10111, %v10128
    %v10152 = vadd.f32 %v10112, %v10128
    %v10153 = vadd.f32 %v10113, %v10128
    %v10154 = vadd.f32 %v10114, %v10128
    %v10155 = vadd.f32 %v10115, %v10128
    %v10156 = vadd.f32 %v10116, %v10128
    %v10157 = vadd.f32 %v10117, %v10128
    %v10158 = vadd.f32 %v10118, %v10128
    %v10159 = vadd.f32 %v10119, %v10128
    %v10160 = vadd.f32 %v10120, %v10128
    %v10161 = vadd.f32 %v10121, %v10128
    %v10162 = vmax.f32 %v10130, 0.0
    %v10163 = vmax.f32 %v10131, 0.0
    %v10164 = vmax.f32 %v10132, 0.0
    %v10165 = vmax.f32 %v10133, 0.0
    %v10166 = vmax.f32 %v10134, 0.0
    %v10167 = vmax.f32 %v10135, 0.0
    %v10168 = vmax.f32 %v10136, 0.0
    %v10169 = vmax.f32 %v10137, 0.0
    %v10170 = vmax.f32 %v10138, 0.0
    %v10171 = vmax.f32 %v10139, 0.0
    %v10172 = vmax.f32 %v10140, 0.0
    %v10173 = vmax.f32 %v10141, 0.0
    %v10174 = vmax.f32 %v10142, 0.0
    %v10175 = vmax.f32 %v10143, 0.0
    %v10176 = vmax.f32 %v10144, 0.0
    %v10177 = vmax.f32 %v10145, 0.0
    %v10178 = vmax.f32 %v10146, 0.0
    %v10179 = vmax.f32 %v10147, 0.0
    %v10180 = vmax.f32 %v10148, 0.0
    %v10181 = vmax.f32 %v10149, 0.0
    %v10182 = vmax.f32 %v10150, 0.0
    %v10183 = vmax.f32 %v10151, 0.0
    %v10184 = vmax.f32 %v10152, 0.0
    %v10185 = vmax.f32 %v10153, 0.0
    %v10186 = vmax.f32 %v10154, 0.0
    %v10187 = vmax.f32 %v10155, 0.0
    %v10188 = vmax.f32 %v10156, 0.0
    %v10189 = vmax.f32 %v10157, 0.0
    %v10190 = vmax.f32 %v10158, 0.0
    %v10191 = vmax.f32 %v10159, 0.0
    %v10192 = vmax.f32 %v10160, 0.0
    %v10193 = vmax.f32 %v10161, 0.0
    %v10194 = vpack.c.bf16 %v10163, %v10162
    %v10195 = vpack.c.bf16 %v10165, %v10164
    %v10196 = vpack.c.bf16 %v10167, %v10166
    %v10197 = vpack.c.bf16 %v10169, %v10168
    %v10198 = vpack.c.bf16 %v10171, %v10170
    %v10199 = vpack.c.bf16 %v10173, %v10172
    %v10200 = vpack.c.bf16 %v10175, %v10174
    %v10201 = vpack.c.bf16 %v10177, %v10176
    %v10202 = vpack.c.bf16 %v10179, %v10178
    %v10203 = vpack.c.bf16 %v10181, %v10180
    %v10204 = vpack.c.bf16 %v10183, %v10182
    %v10205 = vpack.c.bf16 %v10185, %v10184
    %v10206 = vpack.c.bf16 %v10187, %v10186
    %v10207 = vpack.c.bf16 %v10189, %v10188
    %v10208 = vpack.c.bf16 %v10191, %v10190
    %v10209 = vpack.c.bf16 %v10193, %v10192
    %s10210 = scalar_lea.vmem %s2, 128
    %v10211 = vld [vmem:[%s10210] sm:$0xff]
    %v10212 = vld [vmem:[%s10210 + $0x8] sm:$0xff]
    %v10213 = vld [vmem:[%s10210 + $0x10] sm:$0xff]
    %v10214 = vld [vmem:[%s10210 + $0x18] sm:$0xff]
    %v10215 = vld [vmem:[%s10210 + $0x20] sm:$0xff]
    %v10216 = vld [vmem:[%s10210 + $0x28] sm:$0xff]
    %v10217 = vld [vmem:[%s10210 + $0x30] sm:$0xff]
    %v10218 = vld [vmem:[%s10210 + $0x38] sm:$0xff]
    %v10219 = vld [vmem:[%s10210 + $0x40] sm:$0xff]
    %v10220 = vld [vmem:[%s10210 + $0x48] sm:$0xff]
    %v10221 = vld [vmem:[%s10210 + $0x50] sm:$0xff]
    %v10222 = vld [vmem:[%s10210 + $0x58] sm:$0xff]
    %v10223 = vld [vmem:[%s10210 + $0x60] sm:$0xff]
    %v10224 = vld [vmem:[%s10210 + $0x68] sm:$0xff]
    %v10225 = vld [vmem:[%s10210 + $0x70] sm:$0xff]
    %v10226 = vld [vmem:[%s10210 + $0x78] sm:$0xff]
    %v10243 = vunpack.c.l.b16 %v10211
    %v10244 = vunpack.c.h.b16 %v10211
    %v10245 = vunpack.c.l.b16 %v10212
    %v10246 = vunpack.c.h.b16 %v10212
    %v10247 = vunpack.c.l.b16 %v10213
    %v10248 = vunpack.c.h.b16 %v10213
    %v10249 = vunpack.c.l.b16 %v10214
    %v10250 = vunpack.c.h.b16 %v10214
    %v10251 = vunpack.c.l.b16 %v10215
    %v10252 = vunpack.c.h.b16 %v10215
    %v10253 = vunpack.c.l.b16 %v10216
    %v10254 = vunpack.c.h.b16 %v10216
    %v10255 = vunpack.c.l.b16 %v10217
    %v10256 = vunpack.c.h.b16 %v10217
    %v10257 = vunpack.c.l.b16 %v10218
    %v10258 = vunpack.c.h.b16 %v10218
    %v10259 = vunpack.c.l.b16 %v10219
    %v10260 = vunpack.c.h.b16 %v10219
    %v10261 = vunpack.c.l.b16 %v10220
    %v10262 = vunpack.c.h.b16 %v10220
    %v10263 = vunpack.c.l.b16 %v10221
    %v10264 = vunpack.c.h.b16 %v10221
    %v10265 = vunpack.c.l.b16 %v10222
    %v10266 = vunpack.c.h.b16 %v10222
    %v10267 = vunpack.c.l.b16 %v10223
    %v10268 = vunpack.c.h.b16 %v10223
    %v10269 = vunpack.c.l.b16 %v10224
    %v10270 = vunpack.c.h.b16 %v10224
    %v10271 = vunpack.c.l.b16 %v10225
    %v10272 = vunpack.c.h.b16 %v10225
    %v10273 = vunpack.c.l.b16 %v10226
    %v10274 = vunpack.c.h.b16 %v10226
    %v10275 = vpack.c.b16 %v10245, %v10243
    %v10276 = vpack.c.b16 %v10246, %v10244
    %v10277 = vpack.c.b16 %v10249, %v10247
    %v10278 = vpack.c.b16 %v10250, %v10248
    %v10279 = vpack.c.b16 %v10253, %v10251
    %v10280 = vpack.c.b16 %v10254, %v10252
    %v10281 = vpack.c.b16 %v10257, %v10255
    %v10282 = vpack.c.b16 %v10258, %v10256
    %v10283 = vpack.c.b16 %v10261, %v10259
    %v10284 = vpack.c.b16 %v10262, %v10260
    %v10285 = vpack.c.b16 %v10265, %v10263
    %v10286 = vpack.c.b16 %v10266, %v10264
    %v10287 = vpack.c.b16 %v10269, %v10267
    %v10288 = vpack.c.b16 %v10270, %v10268
    %v10289 = vpack.c.b16 %v10273, %v10271
    %v10290 = vpack.c.b16 %v10274, %v10272
    %10307 = vmatprep.subr.bf16.mxu0 %v10290
    %10308 = vmatpush1.bf16.msra.mxu0 %v10289
    %10309 = vmatprep.subr.bf16.mxu0 %v10288
    %10310 = vmatpush1.bf16.msra.mxu0 %v10287
    %10311 = vmatprep.subr.bf16.mxu0 %v10286
    %10312 = vmatpush1.bf16.msra.mxu0 %v10285
    %10313 = vmatprep.subr.bf16.mxu0 %v10284
    %10314 = vmatpush1.bf16.msra.mxu0 %v10283
    %10315 = vmatprep.subr.bf16.mxu0 %v10282
    %10316 = vmatpush1.bf16.msra.mxu0 %v10281
    %10317 = vmatprep.subr.bf16.mxu0 %v10280
    %10318 = vmatpush1.bf16.msra.mxu0 %v10279
    %10319 = vmatprep.subr.bf16.mxu0 %v10278
    %10320 = vmatpush1.bf16.msra.mxu0 %v10277
    %10321 = vmatprep.subr.bf16.mxu0 %v10276
    %10322 = vmatpush1.bf16.msra.mxu0 %v10275
    %10323 = vmatprep.subr.bf16.mxu0 0
    %10324 = vmatpush2.bf16.msra.mxu0 0
    %10325 = vmatprep.subr.bf16.mxu0 0
    %10326 = vmatpush2.bf16.msra.mxu0 0
    %10327 = vmatprep.subr.bf16.mxu0 0
    %10328 = vmatpush2.bf16.msra.mxu0 0
    %10329 = vmatprep.subr.bf16.mxu0 0
    %10330 = vmatpush2.bf16.msra.mxu0 0
    %10331 = vmatprep.subr.bf16.mxu0 0
    %10332 = vmatpush2.bf16.msra.mxu0 0
    %10333 = vmatprep.subr.bf16.mxu0 0
    %10334 = vmatpush2.bf16.msra.mxu0 0
    %10335 = vmatprep.subr.bf16.mxu0 0
    %10336 = vmatpush2.bf16.msra.mxu0 0
    %10337 = vmatprep.subr.bf16.mxu0 0
    %10338 = vmatpush2.bf16.msra.mxu0 0
    %10339 = vmatprep.mubr.bf16.mxu0 0
    %10340 = vmatmul.mubr.bf16.gmra.mxu0 %v10194
    %v10341 = vpop.f32.mrf.mxu0
    %v10342 = vadd.f32 0.0, %v10341
    %v10343 = vpop.f32.mrf.mxu0
    %v10344 = vadd.f32 0.0, %v10343
    %v10345 = vpop.f32.mrf.mxu0
    %v10346 = vadd.f32 0.0, %v10345
    %v10347 = vpop.f32.mrf.mxu0
    %v10348 = vadd.f32 0.0, %v10347
    %10349 = vmatprep.mubr.bf16.mxu0 0
    %10350 = vmatmul.mubr.bf16.gmra.mxu0 %v10195
    %v10351 = vpop.f32.mrf.mxu0
    %v10352 = vadd.f32 0.0, %v10351
    %v10353 = vpop.f32.mrf.mxu0
    %v10354 = vadd.f32 0.0, %v10353
    %v10355 = vpop.f32.mrf.mxu0
    %v10356 = vadd.f32 0.0, %v10355
    %v10357 = vpop.f32.mrf.mxu0
    %v10358 = vadd.f32 0.0, %v10357
    %10359 = vmatprep.mubr.bf16.mxu0 0
    %10360 = vmatmul.mubr.bf16.gmra.mxu0 %v10196
    %v10361 = vpop.f32.mrf.mxu0
    %v10362 = vadd.f32 0.0, %v10361
    %v10363 = vpop.f32.mrf.mxu0
    %v10364 = vadd.f32 0.0, %v10363
    %v10365 = vpop.f32.mrf.mxu0
    %v10366 = vadd.f32 0.0, %v10365
    %v10367 = vpop.f32.mrf.mxu0
    %v10368 = vadd.f32 0.0, %v10367
    %10369 = vmatprep.mubr.bf16.mxu0 0
    %10370 = vmatmul.mubr.bf16.gmra.mxu0 %v10197
    %v10371 = vpop.f32.mrf.mxu0
    %v10372 = vadd.f32 0.0, %v10371
    %v10373 = vpop.f32.mrf.mxu0
    %v10374 = vadd.f32 0.0, %v10373
    %v10375 = vpop.f32.mrf.mxu0
    %v10376 = vadd.f32 0.0, %v10375
    %v10377 = vpop.f32.mrf.mxu0
    %v10378 = vadd.f32 0.0, %v10377
    %10379 = vmatprep.mubr.bf16.mxu0 0
    %10380 = vmatmul.mubr.bf16.gmra.mxu0 %v10198
    %v10381 = vpop.f32.mrf.mxu0
    %v10382 = vadd.f32 0.0, %v10381
    %v10383 = vpop.f32.mrf.mxu0
    %v10384 = vadd.f32 0.0, %v10383
    %v10385 = vpop.f32.mrf.mxu0
    %v10386 = vadd.f32 0.0, %v10385
    %v10387 = vpop.f32.mrf.mxu0
    %v10388 = vadd.f32 0.0, %v10387
    %10389 = vmatprep.mubr.bf16.mxu0 0
    %10390 = vmatmul.mubr.bf16.gmra.mxu0 %v10199
    %v10391 = vpop.f32.mrf.mxu0
    %v10392 = vadd.f32 0.0, %v10391
    %v10393 = vpop.f32.mrf.mxu0
    %v10394 = vadd.f32 0.0, %v10393
    %v10395 = vpop.f32.mrf.mxu0
    %v10396 = vadd.f32 0.0, %v10395
    %v10397 = vpop.f32.mrf.mxu0
    %v10398 = vadd.f32 0.0, %v10397
    %10399 = vmatprep.mubr.bf16.mxu0 0
    %10400 = vmatmul.mubr.bf16.gmra.mxu0 %v10200
    %v10401 = vpop.f32.mrf.mxu0
    %v10402 = vadd.f32 0.0, %v10401
    %v10403 = vpop.f32.mrf.mxu0
    %v10404 = vadd.f32 0.0, %v10403
    %v10405 = vpop.f32.mrf.mxu0
    %v10406 = vadd.f32 0.0, %v10405
    %v10407 = vpop.f32.mrf.mxu0
    %v10408 = vadd.f32 0.0, %v10407
    %10409 = vmatprep.mubr.bf16.mxu0 0
    %10410 = vmatmul.mubr.bf16.gmra.mxu0 %v10201
    %v10411 = vpop.f32.mrf.mxu0
    %v10412 = vadd.f32 0.0, %v10411
    %v10413 = vpop.f32.mrf.mxu0
    %v10414 = vadd.f32 0.0, %v10413
    %v10415 = vpop.f32.mrf.mxu0
    %v10416 = vadd.f32 0.0, %v10415
    %v10417 = vpop.f32.mrf.mxu0
    %v10418 = vadd.f32 0.0, %v10417
    %10419 = vmatprep.mubr.bf16.mxu0 0
    %10420 = vmatmul.mubr.bf16.gmra.mxu0 %v10202
    %v10421 = vpop.f32.mrf.mxu0
    %v10422 = vadd.f32 0.0, %v10421
    %v10423 = vpop.f32.mrf.mxu0
    %v10424 = vadd.f32 0.0, %v10423
    %v10425 = vpop.f32.mrf.mxu0
    %v10426 = vadd.f32 0.0, %v10425
    %v10427 = vpop.f32.mrf.mxu0
    %v10428 = vadd.f32 0.0, %v10427
    %10429 = vmatprep.mubr.bf16.mxu0 0
    %10430 = vmatmul.mubr.bf16.gmra.mxu0 %v10203
    %v10431 = vpop.f32.mrf.mxu0
    %v10432 = vadd.f32 0.0, %v10431
    %v10433 = vpop.f32.mrf.mxu0
    %v10434 = vadd.f32 0.0, %v10433
    %v10435 = vpop.f32.mrf.mxu0
    %v10436 = vadd.f32 0.0, %v10435
    %v10437 = vpop.f32.mrf.mxu0
    %v10438 = vadd.f32 0.0, %v10437
    %10439 = vmatprep.mubr.bf16.mxu0 0
    %10440 = vmatmul.mubr.bf16.gmra.mxu0 %v10204
    %v10441 = vpop.f32.mrf.mxu0
    %v10442 = vadd.f32 0.0, %v10441
    %v10443 = vpop.f32.mrf.mxu0
    %v10444 = vadd.f32 0.0, %v10443
    %v10445 = vpop.f32.mrf.mxu0
    %v10446 = vadd.f32 0.0, %v10445
    %v10447 = vpop.f32.mrf.mxu0
    %v10448 = vadd.f32 0.0, %v10447
    %10449 = vmatprep.mubr.bf16.mxu0 0
    %10450 = vmatmul.mubr.bf16.gmra.mxu0 %v10205
    %v10451 = vpop.f32.mrf.mxu0
    %v10452 = vadd.f32 0.0, %v10451
    %v10453 = vpop.f32.mrf.mxu0
    %v10454 = vadd.f32 0.0, %v10453
    %v10455 = vpop.f32.mrf.mxu0
    %v10456 = vadd.f32 0.0, %v10455
    %v10457 = vpop.f32.mrf.mxu0
    %v10458 = vadd.f32 0.0, %v10457
    %10459 = vmatprep.mubr.bf16.mxu0 0
    %10460 = vmatmul.mubr.bf16.gmra.mxu0 %v10206
    %v10461 = vpop.f32.mrf.mxu0
    %v10462 = vadd.f32 0.0, %v10461
    %v10463 = vpop.f32.mrf.mxu0
    %v10464 = vadd.f32 0.0, %v10463
    %v10465 = vpop.f32.mrf.mxu0
    %v10466 = vadd.f32 0.0, %v10465
    %v10467 = vpop.f32.mrf.mxu0
    %v10468 = vadd.f32 0.0, %v10467
    %10469 = vmatprep.mubr.bf16.mxu0 0
    %10470 = vmatmul.mubr.bf16.gmra.mxu0 %v10207
    %v10471 = vpop.f32.mrf.mxu0
    %v10472 = vadd.f32 0.0, %v10471
    %v10473 = vpop.f32.mrf.mxu0
    %v10474 = vadd.f32 0.0, %v10473
    %v10475 = vpop.f32.mrf.mxu0
    %v10476 = vadd.f32 0.0, %v10475
    %v10477 = vpop.f32.mrf.mxu0
    %v10478 = vadd.f32 0.0, %v10477
    %10479 = vmatprep.mubr.bf16.mxu0 0
    %10480 = vmatmul.mubr.bf16.gmra.mxu0 %v10208
    %v10481 = vpop.f32.mrf.mxu0
    %v10482 = vadd.f32 0.0, %v10481
    %v10483 = vpop.f32.mrf.mxu0
    %v10484 = vadd.f32 0.0, %v10483
    %v10485 = vpop.f32.mrf.mxu0
    %v10486 = vadd.f32 0.0, %v10485
    %v10487 = vpop.f32.mrf.mxu0
    %v10488 = vadd.f32 0.0, %v10487
    %10489 = vmatprep.mubr.bf16.mxu0 0
    %10490 = vmatmul.mubr.bf16.gmra.mxu0 %v10209
    %v10491 = vpop.f32.mrf.mxu0
    %v10492 = vadd.f32 0.0, %v10491
    %v10493 = vpop.f32.mrf.mxu0
    %v10494 = vadd.f32 0.0, %v10493
    %v10495 = vpop.f32.mrf.mxu0
    %v10496 = vadd.f32 0.0, %v10495
    %v10497 = vpop.f32.mrf.mxu0
    %v10498 = vadd.f32 0.0, %v10497
    %10499 = vdwg.mxu0
    %v10516 = vunpack.c.l.b16 %v5112
    %v10517 = vunpack.c.h.b16 %v5112
    %v10518 = vunpack.c.l.b16 %v5113
    %v10519 = vunpack.c.h.b16 %v5113
    %v10520 = vunpack.c.l.b16 %v5114
    %v10521 = vunpack.c.h.b16 %v5114
    %v10522 = vunpack.c.l.b16 %v5115
    %v10523 = vunpack.c.h.b16 %v5115
    %v10524 = vunpack.c.l.b16 %v5116
    %v10525 = vunpack.c.h.b16 %v5116
    %v10526 = vunpack.c.l.b16 %v5117
    %v10527 = vunpack.c.h.b16 %v5117
    %v10528 = vunpack.c.l.b16 %v5118
    %v10529 = vunpack.c.h.b16 %v5118
    %v10530 = vunpack.c.l.b16 %v5119
    %v10531 = vunpack.c.h.b16 %v5119
    %v10532 = vunpack.c.l.b16 %v5120
    %v10533 = vunpack.c.h.b16 %v5120
    %v10534 = vunpack.c.l.b16 %v5121
    %v10535 = vunpack.c.h.b16 %v5121
    %v10536 = vunpack.c.l.b16 %v5122
    %v10537 = vunpack.c.h.b16 %v5122
    %v10538 = vunpack.c.l.b16 %v5123
    %v10539 = vunpack.c.h.b16 %v5123
    %v10540 = vunpack.c.l.b16 %v5124
    %v10541 = vunpack.c.h.b16 %v5124
    %v10542 = vunpack.c.l.b16 %v5125
    %v10543 = vunpack.c.h.b16 %v5125
    %v10544 = vunpack.c.l.b16 %v5126
    %v10545 = vunpack.c.h.b16 %v5126
    %v10546 = vunpack.c.l.b16 %v5127
    %v10547 = vunpack.c.h.b16 %v5127
    %v10548 = vpack.c.b16 %v10518, %v10516
    %v10549 = vpack.c.b16 %v10519, %v10517
    %v10550 = vpack.c.b16 %v10522, %v10520
    %v10551 = vpack.c.b16 %v10523, %v10521
    %v10552 = vpack.c.b16 %v10526, %v10524
    %v10553 = vpack.c.b16 %v10527, %v10525
    %v10554 = vpack.c.b16 %v10530, %v10528
    %v10555 = vpack.c.b16 %v10531, %v10529
    %v10556 = vpack.c.b16 %v10534, %v10532
    %v10557 = vpack.c.b16 %v10535, %v10533
    %v10558 = vpack.c.b16 %v10538, %v10536
    %v10559 = vpack.c.b16 %v10539, %v10537
    %v10560 = vpack.c.b16 %v10542, %v10540
    %v10561 = vpack.c.b16 %v10543, %v10541
    %v10562 = vpack.c.b16 %v10546, %v10544
    %v10563 = vpack.c.b16 %v10547, %v10545
    %10580 = vmatprep.subr.bf16.mxu0 %v10563
    %10581 = vmatpush1.bf16.msra.mxu0 %v10562
    %10582 = vmatprep.subr.bf16.mxu0 %v10561
    %10583 = vmatpush1.bf16.msra.mxu0 %v10560
    %10584 = vmatprep.subr.bf16.mxu0 %v10559
    %10585 = vmatpush1.bf16.msra.mxu0 %v10558
    %10586 = vmatprep.subr.bf16.mxu0 %v10557
    %10587 = vmatpush1.bf16.msra.mxu0 %v10556
    %10588 = vmatprep.subr.bf16.mxu0 %v10555
    %10589 = vmatpush1.bf16.msra.mxu0 %v10554
    %10590 = vmatprep.subr.bf16.mxu0 %v10553
    %10591 = vmatpush1.bf16.msra.mxu0 %v10552
    %10592 = vmatprep.subr.bf16.mxu0 %v10551
    %10593 = vmatpush1.bf16.msra.mxu0 %v10550
    %10594 = vmatprep.subr.bf16.mxu0 %v10549
    %10595 = vmatpush1.bf16.msra.mxu0 %v10548
    %10596 = vmatprep.subr.bf16.mxu0 0
    %10597 = vmatpush2.bf16.msra.mxu0 0
    %10598 = vmatprep.subr.bf16.mxu0 0
    %10599 = vmatpush2.bf16.msra.mxu0 0
    %10600 = vmatprep.subr.bf16.mxu0 0
    %10601 = vmatpush2.bf16.msra.mxu0 0
    %10602 = vmatprep.subr.bf16.mxu0 0
    %10603 = vmatpush2.bf16.msra.mxu0 0
    %10604 = vmatprep.subr.bf16.mxu0 0
    %10605 = vmatpush2.bf16.msra.mxu0 0
    %10606 = vmatprep.subr.bf16.mxu0 0
    %10607 = vmatpush2.bf16.msra.mxu0 0
    %10608 = vmatprep.subr.bf16.mxu0 0
    %10609 = vmatpush2.bf16.msra.mxu0 0
    %10610 = vmatprep.subr.bf16.mxu0 0
    %10611 = vmatpush2.bf16.msra.mxu0 0
    %10612 = vmatprep.mubr.bf16.mxu0 0
    %10613 = vmatmul.mubr.bf16.gmra.mxu0 %v5096
    %v10614 = vpop.f32.mrf.mxu0
    %v10615 = vadd.f32 %v10342, %v10614
    %v10616 = vpop.f32.mrf.mxu0
    %v10617 = vadd.f32 %v10344, %v10616
    %v10618 = vpop.f32.mrf.mxu0
    %v10619 = vadd.f32 %v10346, %v10618
    %v10620 = vpop.f32.mrf.mxu0
    %v10621 = vadd.f32 %v10348, %v10620
    %10622 = vmatprep.mubr.bf16.mxu0 0
    %10623 = vmatmul.mubr.bf16.gmra.mxu0 %v5097
    %v10624 = vpop.f32.mrf.mxu0
    %v10625 = vadd.f32 %v10352, %v10624
    %v10626 = vpop.f32.mrf.mxu0
    %v10627 = vadd.f32 %v10354, %v10626
    %v10628 = vpop.f32.mrf.mxu0
    %v10629 = vadd.f32 %v10356, %v10628
    %v10630 = vpop.f32.mrf.mxu0
    %v10631 = vadd.f32 %v10358, %v10630
    %10632 = vmatprep.mubr.bf16.mxu0 0
    %10633 = vmatmul.mubr.bf16.gmra.mxu0 %v5098
    %v10634 = vpop.f32.mrf.mxu0
    %v10635 = vadd.f32 %v10362, %v10634
    %v10636 = vpop.f32.mrf.mxu0
    %v10637 = vadd.f32 %v10364, %v10636
    %v10638 = vpop.f32.mrf.mxu0
    %v10639 = vadd.f32 %v10366, %v10638
    %v10640 = vpop.f32.mrf.mxu0
    %v10641 = vadd.f32 %v10368, %v10640
    %10642 = vmatprep.mubr.bf16.mxu0 0
    %10643 = vmatmul.mubr.bf16.gmra.mxu0 %v5099
    %v10644 = vpop.f32.mrf.mxu0
    %v10645 = vadd.f32 %v10372, %v10644
    %v10646 = vpop.f32.mrf.mxu0
    %v10647 = vadd.f32 %v10374, %v10646
    %v10648 = vpop.f32.mrf.mxu0
    %v10649 = vadd.f32 %v10376, %v10648
    %v10650 = vpop.f32.mrf.mxu0
    %v10651 = vadd.f32 %v10378, %v10650
    %10652 = vmatprep.mubr.bf16.mxu0 0
    %10653 = vmatmul.mubr.bf16.gmra.mxu0 %v5100
    %v10654 = vpop.f32.mrf.mxu0
    %v10655 = vadd.f32 %v10382, %v10654
    %v10656 = vpop.f32.mrf.mxu0
    %v10657 = vadd.f32 %v10384, %v10656
    %v10658 = vpop.f32.mrf.mxu0
    %v10659 = vadd.f32 %v10386, %v10658
    %v10660 = vpop.f32.mrf.mxu0
    %v10661 = vadd.f32 %v10388, %v10660
    %10662 = vmatprep.mubr.bf16.mxu0 0
    %10663 = vmatmul.mubr.bf16.gmra.mxu0 %v5101
    %v10664 = vpop.f32.mrf.mxu0
    %v10665 = vadd.f32 %v10392, %v10664
    %v10666 = vpop.f32.mrf.mxu0
    %v10667 = vadd.f32 %v10394, %v10666
    %v10668 = vpop.f32.mrf.mxu0
    %v10669 = vadd.f32 %v10396, %v10668
    %v10670 = vpop.f32.mrf.mxu0
    %v10671 = vadd.f32 %v10398, %v10670
    %10672 = vmatprep.mubr.bf16.mxu0 0
    %10673 = vmatmul.mubr.bf16.gmra.mxu0 %v5102
    %v10674 = vpop.f32.mrf.mxu0
    %v10675 = vadd.f32 %v10402, %v10674
    %v10676 = vpop.f32.mrf.mxu0
    %v10677 = vadd.f32 %v10404, %v10676
    %v10678 = vpop.f32.mrf.mxu0
    %v10679 = vadd.f32 %v10406, %v10678
    %v10680 = vpop.f32.mrf.mxu0
    %v10681 = vadd.f32 %v10408, %v10680
    %10682 = vmatprep.mubr.bf16.mxu0 0
    %10683 = vmatmul.mubr.bf16.gmra.mxu0 %v5103
    %v10684 = vpop.f32.mrf.mxu0
    %v10685 = vadd.f32 %v10412, %v10684
    %v10686 = vpop.f32.mrf.mxu0
    %v10687 = vadd.f32 %v10414, %v10686
    %v10688 = vpop.f32.mrf.mxu0
    %v10689 = vadd.f32 %v10416, %v10688
    %v10690 = vpop.f32.mrf.mxu0
    %v10691 = vadd.f32 %v10418, %v10690
    %10692 = vmatprep.mubr.bf16.mxu0 0
    %10693 = vmatmul.mubr.bf16.gmra.mxu0 %v5104
    %v10694 = vpop.f32.mrf.mxu0
    %v10695 = vadd.f32 %v10422, %v10694
    %v10696 = vpop.f32.mrf.mxu0
    %v10697 = vadd.f32 %v10424, %v10696
    %v10698 = vpop.f32.mrf.mxu0
    %v10699 = vadd.f32 %v10426, %v10698
    %v10700 = vpop.f32.mrf.mxu0
    %v10701 = vadd.f32 %v10428, %v10700
    %10702 = vmatprep.mubr.bf16.mxu0 0
    %10703 = vmatmul.mubr.bf16.gmra.mxu0 %v5105
    %v10704 = vpop.f32.mrf.mxu0
    %v10705 = vadd.f32 %v10432, %v10704
    %v10706 = vpop.f32.mrf.mxu0
    %v10707 = vadd.f32 %v10434, %v10706
    %v10708 = vpop.f32.mrf.mxu0
    %v10709 = vadd.f32 %v10436, %v10708
    %v10710 = vpop.f32.mrf.mxu0
    %v10711 = vadd.f32 %v10438, %v10710
    %10712 = vmatprep.mubr.bf16.mxu0 0
    %10713 = vmatmul.mubr.bf16.gmra.mxu0 %v5106
    %v10714 = vpop.f32.mrf.mxu0
    %v10715 = vadd.f32 %v10442, %v10714
    %v10716 = vpop.f32.mrf.mxu0
    %v10717 = vadd.f32 %v10444, %v10716
    %v10718 = vpop.f32.mrf.mxu0
    %v10719 = vadd.f32 %v10446, %v10718
    %v10720 = vpop.f32.mrf.mxu0
    %v10721 = vadd.f32 %v10448, %v10720
    %10722 = vmatprep.mubr.bf16.mxu0 0
    %10723 = vmatmul.mubr.bf16.gmra.mxu0 %v5107
    %v10724 = vpop.f32.mrf.mxu0
    %v10725 = vadd.f32 %v10452, %v10724
    %v10726 = vpop.f32.mrf.mxu0
    %v10727 = vadd.f32 %v10454, %v10726
    %v10728 = vpop.f32.mrf.mxu0
    %v10729 = vadd.f32 %v10456, %v10728
    %v10730 = vpop.f32.mrf.mxu0
    %v10731 = vadd.f32 %v10458, %v10730
    %10732 = vmatprep.mubr.bf16.mxu0 0
    %10733 = vmatmul.mubr.bf16.gmra.mxu0 %v5108
    %v10734 = vpop.f32.mrf.mxu0
    %v10735 = vadd.f32 %v10462, %v10734
    %v10736 = vpop.f32.mrf.mxu0
    %v10737 = vadd.f32 %v10464, %v10736
    %v10738 = vpop.f32.mrf.mxu0
    %v10739 = vadd.f32 %v10466, %v10738
    %v10740 = vpop.f32.mrf.mxu0
    %v10741 = vadd.f32 %v10468, %v10740
    %10742 = vmatprep.mubr.bf16.mxu0 0
    %10743 = vmatmul.mubr.bf16.gmra.mxu0 %v5109
    %v10744 = vpop.f32.mrf.mxu0
    %v10745 = vadd.f32 %v10472, %v10744
    %v10746 = vpop.f32.mrf.mxu0
    %v10747 = vadd.f32 %v10474, %v10746
    %v10748 = vpop.f32.mrf.mxu0
    %v10749 = vadd.f32 %v10476, %v10748
    %v10750 = vpop.f32.mrf.mxu0
    %v10751 = vadd.f32 %v10478, %v10750
    %10752 = vmatprep.mubr.bf16.mxu0 0
    %10753 = vmatmul.mubr.bf16.gmra.mxu0 %v5110
    %v10754 = vpop.f32.mrf.mxu0
    %v10755 = vadd.f32 %v10482, %v10754
    %v10756 = vpop.f32.mrf.mxu0
    %v10757 = vadd.f32 %v10484, %v10756
    %v10758 = vpop.f32.mrf.mxu0
    %v10759 = vadd.f32 %v10486, %v10758
    %v10760 = vpop.f32.mrf.mxu0
    %v10761 = vadd.f32 %v10488, %v10760
    %10762 = vmatprep.mubr.bf16.mxu0 0
    %10763 = vmatmul.mubr.bf16.gmra.mxu0 %v5111
    %v10764 = vpop.f32.mrf.mxu0
    %v10765 = vadd.f32 %v10492, %v10764
    %v10766 = vpop.f32.mrf.mxu0
    %v10767 = vadd.f32 %v10494, %v10766
    %v10768 = vpop.f32.mrf.mxu0
    %v10769 = vadd.f32 %v10496, %v10768
    %v10770 = vpop.f32.mrf.mxu0
    %v10771 = vadd.f32 %v10498, %v10770
    %10772 = vdwg.mxu0
    %v10773 = vadd.f32 %v10615, %v10619
    %v10774 = vadd.f32 %v10773, %v10625
    %v10775 = vadd.f32 %v10774, %v10629
    %v10776 = vadd.f32 %v10775, %v10635
    %v10777 = vadd.f32 %v10776, %v10639
    %v10778 = vadd.f32 %v10777, %v10645
    %v10779 = vadd.f32 %v10778, %v10649
    %v10780 = vadd.f32 %v10779, %v10655
    %v10781 = vadd.f32 %v10780, %v10659
    %v10782 = vadd.f32 %v10781, %v10665
    %v10783 = vadd.f32 %v10782, %v10669
    %v10784 = vadd.f32 %v10783, %v10675
    %v10785 = vadd.f32 %v10784, %v10679
    %v10786 = vadd.f32 %v10785, %v10685
    %v10787 = vadd.f32 %v10786, %v10689
    %v10788 = vadd.f32 %v10787, %v10695
    %v10789 = vadd.f32 %v10788, %v10699
    %v10790 = vadd.f32 %v10789, %v10705
    %v10791 = vadd.f32 %v10790, %v10709
    %v10792 = vadd.f32 %v10791, %v10715
    %v10793 = vadd.f32 %v10792, %v10719
    %v10794 = vadd.f32 %v10793, %v10725
    %v10795 = vadd.f32 %v10794, %v10729
    %v10796 = vadd.f32 %v10795, %v10735
    %v10797 = vadd.f32 %v10796, %v10739
    %v10798 = vadd.f32 %v10797, %v10745
    %v10799 = vadd.f32 %v10798, %v10749
    %v10800 = vadd.f32 %v10799, %v10755
    %v10801 = vadd.f32 %v10800, %v10759
    %v10802 = vadd.f32 %v10801, %v10765
    %v10803 = vadd.f32 %v10802, %v10769
    %v10804 = vrot.slane %v10803, 4
    %v10805 = vadd.f32 %v10803, %v10804
    %v10806 = vrot.slane %v10805, 2
    %v10807 = vadd.f32 %v10805, %v10806
    %v10808 = vrot.slane %v10807, 1
    %v10809 = vadd.f32 %v10807, %v10808
    %vm10810 = vcmask 916480
    %v10811 = vsel %vm10810, %v10617, 0.0
    %v10812 = vsel %vm10810, %v10621, 0.0
    %v10813 = vadd.f32 %v10811, %v10812
    %v10814 = vsel %vm10810, %v10627, 0.0
    %v10815 = vadd.f32 %v10813, %v10814
    %v10816 = vsel %vm10810, %v10631, 0.0
    %v10817 = vadd.f32 %v10815, %v10816
    %v10818 = vsel %vm10810, %v10637, 0.0
    %v10819 = vadd.f32 %v10817, %v10818
    %v10820 = vsel %vm10810, %v10641, 0.0
    %v10821 = vadd.f32 %v10819, %v10820
    %v10822 = vsel %vm10810, %v10647, 0.0
    %v10823 = vadd.f32 %v10821, %v10822
    %v10824 = vsel %vm10810, %v10651, 0.0
    %v10825 = vadd.f32 %v10823, %v10824
    %v10826 = vsel %vm10810, %v10657, 0.0
    %v10827 = vadd.f32 %v10825, %v10826
    %v10828 = vsel %vm10810, %v10661, 0.0
    %v10829 = vadd.f32 %v10827, %v10828
    %v10830 = vsel %vm10810, %v10667, 0.0
    %v10831 = vadd.f32 %v10829, %v10830
    %v10832 = vsel %vm10810, %v10671, 0.0
    %v10833 = vadd.f32 %v10831, %v10832
    %v10834 = vsel %vm10810, %v10677, 0.0
    %v10835 = vadd.f32 %v10833, %v10834
    %v10836 = vsel %vm10810, %v10681, 0.0
    %v10837 = vadd.f32 %v10835, %v10836
    %v10838 = vsel %vm10810, %v10687, 0.0
    %v10839 = vadd.f32 %v10837, %v10838
    %v10840 = vsel %vm10810, %v10691, 0.0
    %v10841 = vadd.f32 %v10839, %v10840
    %v10842 = vsel %vm10810, %v10697, 0.0
    %v10843 = vadd.f32 %v10841, %v10842
    %v10844 = vsel %vm10810, %v10701, 0.0
    %v10845 = vadd.f32 %v10843, %v10844
    %v10846 = vsel %vm10810, %v10707, 0.0
    %v10847 = vadd.f32 %v10845, %v10846
    %v10848 = vsel %vm10810, %v10711, 0.0
    %v10849 = vadd.f32 %v10847, %v10848
    %v10850 = vsel %vm10810, %v10717, 0.0
    %v10851 = vadd.f32 %v10849, %v10850
    %v10852 = vsel %vm10810, %v10721, 0.0
    %v10853 = vadd.f32 %v10851, %v10852
    %v10854 = vsel %vm10810, %v10727, 0.0
    %v10855 = vadd.f32 %v10853, %v10854
    %v10856 = vsel %vm10810, %v10731, 0.0
    %v10857 = vadd.f32 %v10855, %v10856
    %v10858 = vsel %vm10810, %v10737, 0.0
    %v10859 = vadd.f32 %v10857, %v10858
    %v10860 = vsel %vm10810, %v10741, 0.0
    %v10861 = vadd.f32 %v10859, %v10860
    %v10862 = vsel %vm10810, %v10747, 0.0
    %v10863 = vadd.f32 %v10861, %v10862
    %v10864 = vsel %vm10810, %v10751, 0.0
    %v10865 = vadd.f32 %v10863, %v10864
    %v10866 = vsel %vm10810, %v10757, 0.0
    %v10867 = vadd.f32 %v10865, %v10866
    %v10868 = vsel %vm10810, %v10761, 0.0
    %v10869 = vadd.f32 %v10867, %v10868
    %v10870 = vsel %vm10810, %v10767, 0.0
    %v10871 = vadd.f32 %v10869, %v10870
    %v10872 = vsel %vm10810, %v10771, 0.0
    %v10873 = vadd.f32 %v10871, %v10872
    %v10874 = vrot.slane %v10873, 4
    %v10875 = vadd.f32 %v10873, %v10874
    %v10876 = vrot.slane %v10875, 2
    %v10877 = vadd.f32 %v10875, %v10876
    %v10878 = vrot.slane %v10877, 1
    %v10879 = vadd.f32 %v10877, %v10878
    %v10880 = vmul.f32 %v10809, 0.00390625
    %v10881 = vmul.f32 %v10879, 0.00390625
    %v10882 = vmul.f32 %v10615, %v10615
    %v10883 = vmul.f32 %v10617, %v10617
    %v10884 = vmul.f32 %v10619, %v10619
    %v10885 = vmul.f32 %v10621, %v10621
    %v10886 = vmul.f32 %v10625, %v10625
    %v10887 = vmul.f32 %v10627, %v10627
    %v10888 = vmul.f32 %v10629, %v10629
    %v10889 = vmul.f32 %v10631, %v10631
    %v10890 = vmul.f32 %v10635, %v10635
    %v10891 = vmul.f32 %v10637, %v10637
    %v10892 = vmul.f32 %v10639, %v10639
    %v10893 = vmul.f32 %v10641, %v10641
    %v10894 = vmul.f32 %v10645, %v10645
    %v10895 = vmul.f32 %v10647, %v10647
    %v10896 = vmul.f32 %v10649, %v10649
    %v10897 = vmul.f32 %v10651, %v10651
    %v10898 = vmul.f32 %v10655, %v10655
    %v10899 = vmul.f32 %v10657, %v10657
    %v10900 = vmul.f32 %v10659, %v10659
    %v10901 = vmul.f32 %v10661, %v10661
    %v10902 = vmul.f32 %v10665, %v10665
    %v10903 = vmul.f32 %v10667, %v10667
    %v10904 = vmul.f32 %v10669, %v10669
    %v10905 = vmul.f32 %v10671, %v10671
    %v10906 = vmul.f32 %v10675, %v10675
    %v10907 = vmul.f32 %v10677, %v10677
    %v10908 = vmul.f32 %v10679, %v10679
    %v10909 = vmul.f32 %v10681, %v10681
    %v10910 = vmul.f32 %v10685, %v10685
    %v10911 = vmul.f32 %v10687, %v10687
    %v10912 = vmul.f32 %v10689, %v10689
    %v10913 = vmul.f32 %v10691, %v10691
    %v10914 = vmul.f32 %v10695, %v10695
    %v10915 = vmul.f32 %v10697, %v10697
    %v10916 = vmul.f32 %v10699, %v10699
    %v10917 = vmul.f32 %v10701, %v10701
    %v10918 = vmul.f32 %v10705, %v10705
    %v10919 = vmul.f32 %v10707, %v10707
    %v10920 = vmul.f32 %v10709, %v10709
    %v10921 = vmul.f32 %v10711, %v10711
    %v10922 = vmul.f32 %v10715, %v10715
    %v10923 = vmul.f32 %v10717, %v10717
    %v10924 = vmul.f32 %v10719, %v10719
    %v10925 = vmul.f32 %v10721, %v10721
    %v10926 = vmul.f32 %v10725, %v10725
    %v10927 = vmul.f32 %v10727, %v10727
    %v10928 = vmul.f32 %v10729, %v10729
    %v10929 = vmul.f32 %v10731, %v10731
    %v10930 = vmul.f32 %v10735, %v10735
    %v10931 = vmul.f32 %v10737, %v10737
    %v10932 = vmul.f32 %v10739, %v10739
    %v10933 = vmul.f32 %v10741, %v10741
    %v10934 = vmul.f32 %v10745, %v10745
    %v10935 = vmul.f32 %v10747, %v10747
    %v10936 = vmul.f32 %v10749, %v10749
    %v10937 = vmul.f32 %v10751, %v10751
    %v10938 = vmul.f32 %v10755, %v10755
    %v10939 = vmul.f32 %v10757, %v10757
    %v10940 = vmul.f32 %v10759, %v10759
    %v10941 = vmul.f32 %v10761, %v10761
    %v10942 = vmul.f32 %v10765, %v10765
    %v10943 = vmul.f32 %v10767, %v10767
    %v10944 = vmul.f32 %v10769, %v10769
    %v10945 = vmul.f32 %v10771, %v10771
    %v10946 = vadd.f32 %v10882, %v10884
    %v10947 = vadd.f32 %v10946, %v10886
    %v10948 = vadd.f32 %v10947, %v10888
    %v10949 = vadd.f32 %v10948, %v10890
    %v10950 = vadd.f32 %v10949, %v10892
    %v10951 = vadd.f32 %v10950, %v10894
    %v10952 = vadd.f32 %v10951, %v10896
    %v10953 = vadd.f32 %v10952, %v10898
    %v10954 = vadd.f32 %v10953, %v10900
    %v10955 = vadd.f32 %v10954, %v10902
    %v10956 = vadd.f32 %v10955, %v10904
    %v10957 = vadd.f32 %v10956, %v10906
    %v10958 = vadd.f32 %v10957, %v10908
    %v10959 = vadd.f32 %v10958, %v10910
    %v10960 = vadd.f32 %v10959, %v10912
    %v10961 = vadd.f32 %v10960, %v10914
    %v10962 = vadd.f32 %v10961, %v10916
    %v10963 = vadd.f32 %v10962, %v10918
    %v10964 = vadd.f32 %v10963, %v10920
    %v10965 = vadd.f32 %v10964, %v10922
    %v10966 = vadd.f32 %v10965, %v10924
    %v10967 = vadd.f32 %v10966, %v10926
    %v10968 = vadd.f32 %v10967, %v10928
    %v10969 = vadd.f32 %v10968, %v10930
    %v10970 = vadd.f32 %v10969, %v10932
    %v10971 = vadd.f32 %v10970, %v10934
    %v10972 = vadd.f32 %v10971, %v10936
    %v10973 = vadd.f32 %v10972, %v10938
    %v10974 = vadd.f32 %v10973, %v10940
    %v10975 = vadd.f32 %v10974, %v10942
    %v10976 = vadd.f32 %v10975, %v10944
    %v10977 = vrot.slane %v10976, 4
    %v10978 = vadd.f32 %v10976, %v10977
    %v10979 = vrot.slane %v10978, 2
    %v10980 = vadd.f32 %v10978, %v10979
    %v10981 = vrot.slane %v10980, 1
    %v10982 = vadd.f32 %v10980, %v10981
    %v10983 = vsel %vm10810, %v10883, 0.0
    %v10984 = vsel %vm10810, %v10885, 0.0
    %v10985 = vadd.f32 %v10983, %v10984
    %v10986 = vsel %vm10810, %v10887, 0.0
    %v10987 = vadd.f32 %v10985, %v10986
    %v10988 = vsel %vm10810, %v10889, 0.0
    %v10989 = vadd.f32 %v10987, %v10988
    %v10990 = vsel %vm10810, %v10891, 0.0
    %v10991 = vadd.f32 %v10989, %v10990
    %v10992 = vsel %vm10810, %v10893, 0.0
    %v10993 = vadd.f32 %v10991, %v10992
    %v10994 = vsel %vm10810, %v10895, 0.0
    %v10995 = vadd.f32 %v10993, %v10994
    %v10996 = vsel %vm10810, %v10897, 0.0
    %v10997 = vadd.f32 %v10995, %v10996
    %v10998 = vsel %vm10810, %v10899, 0.0
    %v10999 = vadd.f32 %v10997, %v10998
    %v11000 = vsel %vm10810, %v10901, 0.0
    %v11001 = vadd.f32 %v10999, %v11000
    %v11002 = vsel %vm10810, %v10903, 0.0
    %v11003 = vadd.f32 %v11001, %v11002
    %v11004 = vsel %vm10810, %v10905, 0.0
    %v11005 = vadd.f32 %v11003, %v11004
    %v11006 = vsel %vm10810, %v10907, 0.0
    %v11007 = vadd.f32 %v11005, %v11006
    %v11008 = vsel %vm10810, %v10909, 0.0
    %v11009 = vadd.f32 %v11007, %v11008
    %v11010 = vsel %vm10810, %v10911, 0.0
    %v11011 = vadd.f32 %v11009, %v11010
    %v11012 = vsel %vm10810, %v10913, 0.0
    %v11013 = vadd.f32 %v11011, %v11012
    %v11014 = vsel %vm10810, %v10915, 0.0
    %v11015 = vadd.f32 %v11013, %v11014
    %v11016 = vsel %vm10810, %v10917, 0.0
    %v11017 = vadd.f32 %v11015, %v11016
    %v11018 = vsel %vm10810, %v10919, 0.0
    %v11019 = vadd.f32 %v11017, %v11018
    %v11020 = vsel %vm10810, %v10921, 0.0
    %v11021 = vadd.f32 %v11019, %v11020
    %v11022 = vsel %vm10810, %v10923, 0.0
    %v11023 = vadd.f32 %v11021, %v11022
    %v11024 = vsel %vm10810, %v10925, 0.0
    %v11025 = vadd.f32 %v11023, %v11024
    %v11026 = vsel %vm10810, %v10927, 0.0
    %v11027 = vadd.f32 %v11025, %v11026
    %v11028 = vsel %vm10810, %v10929, 0.0
    %v11029 = vadd.f32 %v11027, %v11028
    %v11030 = vsel %vm10810, %v10931, 0.0
    %v11031 = vadd.f32 %v11029, %v11030
    %v11032 = vsel %vm10810, %v10933, 0.0
    %v11033 = vadd.f32 %v11031, %v11032
    %v11034 = vsel %vm10810, %v10935, 0.0
    %v11035 = vadd.f32 %v11033, %v11034
    %v11036 = vsel %vm10810, %v10937, 0.0
    %v11037 = vadd.f32 %v11035, %v11036
    %v11038 = vsel %vm10810, %v10939, 0.0
    %v11039 = vadd.f32 %v11037, %v11038
    %v11040 = vsel %vm10810, %v10941, 0.0
    %v11041 = vadd.f32 %v11039, %v11040
    %v11042 = vsel %vm10810, %v10943, 0.0
    %v11043 = vadd.f32 %v11041, %v11042
    %v11044 = vsel %vm10810, %v10945, 0.0
    %v11045 = vadd.f32 %v11043, %v11044
    %v11046 = vrot.slane %v11045, 4
    %v11047 = vadd.f32 %v11045, %v11046
    %v11048 = vrot.slane %v11047, 2
    %v11049 = vadd.f32 %v11047, %v11048
    %v11050 = vrot.slane %v11049, 1
    %v11051 = vadd.f32 %v11049, %v11050
    %v11052 = vmul.f32 %v10982, 0.00390625
    %v11053 = vmul.f32 %v11051, 0.00390625
    %v11054 = vmul.f32 %v10880, %v10880
    %v11055 = vmul.f32 %v10881, %v10881
    %v11056 = vsub.f32 %v11052, %v11054
    %v11057 = vsub.f32 %v11053, %v11055
    %v11058 = vmax.f32 %v11056, 0.0
    %v11059 = vmax.f32 %v11057, 0.0
    %v11060 = vsub.f32 %v10615, %v10880
    %v11061 = vsub.f32 %v10617, %v10881
    %v11062 = vsub.f32 %v10619, %v10880
    %v11063 = vsub.f32 %v10621, %v10881
    %v11064 = vsub.f32 %v10625, %v10880
    %v11065 = vsub.f32 %v10627, %v10881
    %v11066 = vsub.f32 %v10629, %v10880
    %v11067 = vsub.f32 %v10631, %v10881
    %v11068 = vsub.f32 %v10635, %v10880
    %v11069 = vsub.f32 %v10637, %v10881
    %v11070 = vsub.f32 %v10639, %v10880
    %v11071 = vsub.f32 %v10641, %v10881
    %v11072 = vsub.f32 %v10645, %v10880
    %v11073 = vsub.f32 %v10647, %v10881
    %v11074 = vsub.f32 %v10649, %v10880
    %v11075 = vsub.f32 %v10651, %v10881
    %v11076 = vsub.f32 %v10655, %v10880
    %v11077 = vsub.f32 %v10657, %v10881
    %v11078 = vsub.f32 %v10659, %v10880
    %v11079 = vsub.f32 %v10661, %v10881
    %v11080 = vsub.f32 %v10665, %v10880
    %v11081 = vsub.f32 %v10667, %v10881
    %v11082 = vsub.f32 %v10669, %v10880
    %v11083 = vsub.f32 %v10671, %v10881
    %v11084 = vsub.f32 %v10675, %v10880
    %v11085 = vsub.f32 %v10677, %v10881
    %v11086 = vsub.f32 %v10679, %v10880
    %v11087 = vsub.f32 %v10681, %v10881
    %v11088 = vsub.f32 %v10685, %v10880
    %v11089 = vsub.f32 %v10687, %v10881
    %v11090 = vsub.f32 %v10689, %v10880
    %v11091 = vsub.f32 %v10691, %v10881
    %v11092 = vsub.f32 %v10695, %v10880
    %v11093 = vsub.f32 %v10697, %v10881
    %v11094 = vsub.f32 %v10699, %v10880
    %v11095 = vsub.f32 %v10701, %v10881
    %v11096 = vsub.f32 %v10705, %v10880
    %v11097 = vsub.f32 %v10707, %v10881
    %v11098 = vsub.f32 %v10709, %v10880
    %v11099 = vsub.f32 %v10711, %v10881
    %v11100 = vsub.f32 %v10715, %v10880
    %v11101 = vsub.f32 %v10717, %v10881
    %v11102 = vsub.f32 %v10719, %v10880
    %v11103 = vsub.f32 %v10721, %v10881
    %v11104 = vsub.f32 %v10725, %v10880
    %v11105 = vsub.f32 %v10727, %v10881
    %v11106 = vsub.f32 %v10729, %v10880
    %v11107 = vsub.f32 %v10731, %v10881
    %v11108 = vsub.f32 %v10735, %v10880
    %v11109 = vsub.f32 %v10737, %v10881
    %v11110 = vsub.f32 %v10739, %v10880
    %v11111 = vsub.f32 %v10741, %v10881
    %v11112 = vsub.f32 %v10745, %v10880
    %v11113 = vsub.f32 %v10747, %v10881
    %v11114 = vsub.f32 %v10749, %v10880
    %v11115 = vsub.f32 %v10751, %v10881
    %v11116 = vsub.f32 %v10755, %v10880
    %v11117 = vsub.f32 %v10757, %v10881
    %v11118 = vsub.f32 %v10759, %v10880
    %v11119 = vsub.f32 %v10761, %v10881
    %v11120 = vsub.f32 %v10765, %v10880
    %v11121 = vsub.f32 %v10767, %v10881
    %v11122 = vsub.f32 %v10769, %v10880
    %v11123 = vsub.f32 %v10771, %v10881
    %v11124 = vadd.f32 %v11058, 1e-05
    %v11125 = vadd.f32 %v11059, 1e-05
    %v11126 = vrsqrt.pop %v11124
    %v11127 = vrsqrt.pop %v11125
    %v11128 = vmul.f32 %v11060, %v11126
    %v11129 = vmul.f32 %v11061, %v11127
    %v11130 = vmul.f32 %v11062, %v11126
    %v11131 = vmul.f32 %v11063, %v11127
    %v11132 = vmul.f32 %v11064, %v11126
    %v11133 = vmul.f32 %v11065, %v11127
    %v11134 = vmul.f32 %v11066, %v11126
    %v11135 = vmul.f32 %v11067, %v11127
    %v11136 = vmul.f32 %v11068, %v11126
    %v11137 = vmul.f32 %v11069, %v11127
    %v11138 = vmul.f32 %v11070, %v11126
    %v11139 = vmul.f32 %v11071, %v11127
    %v11140 = vmul.f32 %v11072, %v11126
    %v11141 = vmul.f32 %v11073, %v11127
    %v11142 = vmul.f32 %v11074, %v11126
    %v11143 = vmul.f32 %v11075, %v11127
    %v11144 = vmul.f32 %v11076, %v11126
    %v11145 = vmul.f32 %v11077, %v11127
    %v11146 = vmul.f32 %v11078, %v11126
    %v11147 = vmul.f32 %v11079, %v11127
    %v11148 = vmul.f32 %v11080, %v11126
    %v11149 = vmul.f32 %v11081, %v11127
    %v11150 = vmul.f32 %v11082, %v11126
    %v11151 = vmul.f32 %v11083, %v11127
    %v11152 = vmul.f32 %v11084, %v11126
    %v11153 = vmul.f32 %v11085, %v11127
    %v11154 = vmul.f32 %v11086, %v11126
    %v11155 = vmul.f32 %v11087, %v11127
    %v11156 = vmul.f32 %v11088, %v11126
    %v11157 = vmul.f32 %v11089, %v11127
    %v11158 = vmul.f32 %v11090, %v11126
    %v11159 = vmul.f32 %v11091, %v11127
    %v11160 = vmul.f32 %v11092, %v11126
    %v11161 = vmul.f32 %v11093, %v11127
    %v11162 = vmul.f32 %v11094, %v11126
    %v11163 = vmul.f32 %v11095, %v11127
    %v11164 = vmul.f32 %v11096, %v11126
    %v11165 = vmul.f32 %v11097, %v11127
    %v11166 = vmul.f32 %v11098, %v11126
    %v11167 = vmul.f32 %v11099, %v11127
    %v11168 = vmul.f32 %v11100, %v11126
    %v11169 = vmul.f32 %v11101, %v11127
    %v11170 = vmul.f32 %v11102, %v11126
    %v11171 = vmul.f32 %v11103, %v11127
    %v11172 = vmul.f32 %v11104, %v11126
    %v11173 = vmul.f32 %v11105, %v11127
    %v11174 = vmul.f32 %v11106, %v11126
    %v11175 = vmul.f32 %v11107, %v11127
    %v11176 = vmul.f32 %v11108, %v11126
    %v11177 = vmul.f32 %v11109, %v11127
    %v11178 = vmul.f32 %v11110, %v11126
    %v11179 = vmul.f32 %v11111, %v11127
    %v11180 = vmul.f32 %v11112, %v11126
    %v11181 = vmul.f32 %v11113, %v11127
    %v11182 = vmul.f32 %v11114, %v11126
    %v11183 = vmul.f32 %v11115, %v11127
    %v11184 = vmul.f32 %v11116, %v11126
    %v11185 = vmul.f32 %v11117, %v11127
    %v11186 = vmul.f32 %v11118, %v11126
    %v11187 = vmul.f32 %v11119, %v11127
    %v11188 = vmul.f32 %v11120, %v11126
    %v11189 = vmul.f32 %v11121, %v11127
    %v11190 = vmul.f32 %v11122, %v11126
    %v11191 = vmul.f32 %v11123, %v11127
    %v11192 = vld [vmem:[%s5] sm:$0x3]
    %v11194 = vlaneseq
    %v11195 = vshrl.u32 %v11194, 7
    %v11196 = vsub.s32 0, %v11195
    %v11197 = vrot.slane %v11192, %v11196
    %v11198 = vlaneseq
    %v11199 = vshrl.u32 %v11198, 7
    %v11200 = vsub.s32 1, %v11199
    %v11201 = vrot.slane %v11192, %v11200
    %v11204 = vmul.f32 %v11128, %v11197
    %v11205 = vmul.f32 %v11129, %v11201
    %v11206 = vmul.f32 %v11130, %v11197
    %v11207 = vmul.f32 %v11131, %v11201
    %v11208 = vmul.f32 %v11132, %v11197
    %v11209 = vmul.f32 %v11133, %v11201
    %v11210 = vmul.f32 %v11134, %v11197
    %v11211 = vmul.f32 %v11135, %v11201
    %v11212 = vmul.f32 %v11136, %v11197
    %v11213 = vmul.f32 %v11137, %v11201
    %v11214 = vmul.f32 %v11138, %v11197
    %v11215 = vmul.f32 %v11139, %v11201
    %v11216 = vmul.f32 %v11140, %v11197
    %v11217 = vmul.f32 %v11141, %v11201
    %v11218 = vmul.f32 %v11142, %v11197
    %v11219 = vmul.f32 %v11143, %v11201
    %v11220 = vmul.f32 %v11144, %v11197
    %v11221 = vmul.f32 %v11145, %v11201
    %v11222 = vmul.f32 %v11146, %v11197
    %v11223 = vmul.f32 %v11147, %v11201
    %v11224 = vmul.f32 %v11148, %v11197
    %v11225 = vmul.f32 %v11149, %v11201
    %v11226 = vmul.f32 %v11150, %v11197
    %v11227 = vmul.f32 %v11151, %v11201
    %v11228 = vmul.f32 %v11152, %v11197
    %v11229 = vmul.f32 %v11153, %v11201
    %v11230 = vmul.f32 %v11154, %v11197
    %v11231 = vmul.f32 %v11155, %v11201
    %v11232 = vmul.f32 %v11156, %v11197
    %v11233 = vmul.f32 %v11157, %v11201
    %v11234 = vmul.f32 %v11158, %v11197
    %v11235 = vmul.f32 %v11159, %v11201
    %v11236 = vmul.f32 %v11160, %v11197
    %v11237 = vmul.f32 %v11161, %v11201
    %v11238 = vmul.f32 %v11162, %v11197
    %v11239 = vmul.f32 %v11163, %v11201
    %v11240 = vmul.f32 %v11164, %v11197
    %v11241 = vmul.f32 %v11165, %v11201
    %v11242 = vmul.f32 %v11166, %v11197
    %v11243 = vmul.f32 %v11167, %v11201
    %v11244 = vmul.f32 %v11168, %v11197
    %v11245 = vmul.f32 %v11169, %v11201
    %v11246 = vmul.f32 %v11170, %v11197
    %v11247 = vmul.f32 %v11171, %v11201
    %v11248 = vmul.f32 %v11172, %v11197
    %v11249 = vmul.f32 %v11173, %v11201
    %v11250 = vmul.f32 %v11174, %v11197
    %v11251 = vmul.f32 %v11175, %v11201
    %v11252 = vmul.f32 %v11176, %v11197
    %v11253 = vmul.f32 %v11177, %v11201
    %v11254 = vmul.f32 %v11178, %v11197
    %v11255 = vmul.f32 %v11179, %v11201
    %v11256 = vmul.f32 %v11180, %v11197
    %v11257 = vmul.f32 %v11181, %v11201
    %v11258 = vmul.f32 %v11182, %v11197
    %v11259 = vmul.f32 %v11183, %v11201
    %v11260 = vmul.f32 %v11184, %v11197
    %v11261 = vmul.f32 %v11185, %v11201
    %v11262 = vmul.f32 %v11186, %v11197
    %v11263 = vmul.f32 %v11187, %v11201
    %v11264 = vmul.f32 %v11188, %v11197
    %v11265 = vmul.f32 %v11189, %v11201
    %v11266 = vmul.f32 %v11190, %v11197
    %v11267 = vmul.f32 %v11191, %v11201
    %v11268 = vld [vmem:[%s6] sm:$0x3]
    %v11270 = vlaneseq
    %v11271 = vshrl.u32 %v11270, 7
    %v11272 = vsub.s32 0, %v11271
    %v11273 = vrot.slane %v11268, %v11272
    %v11274 = vlaneseq
    %v11275 = vshrl.u32 %v11274, 7
    %v11276 = vsub.s32 1, %v11275
    %v11277 = vrot.slane %v11268, %v11276
    %v11280 = vadd.f32 %v11204, %v11273
    %v11281 = vadd.f32 %v11205, %v11277
    %v11282 = vadd.f32 %v11206, %v11273
    %v11283 = vadd.f32 %v11207, %v11277
    %v11284 = vadd.f32 %v11208, %v11273
    %v11285 = vadd.f32 %v11209, %v11277
    %v11286 = vadd.f32 %v11210, %v11273
    %v11287 = vadd.f32 %v11211, %v11277
    %v11288 = vadd.f32 %v11212, %v11273
    %v11289 = vadd.f32 %v11213, %v11277
    %v11290 = vadd.f32 %v11214, %v11273
    %v11291 = vadd.f32 %v11215, %v11277
    %v11292 = vadd.f32 %v11216, %v11273
    %v11293 = vadd.f32 %v11217, %v11277
    %v11294 = vadd.f32 %v11218, %v11273
    %v11295 = vadd.f32 %v11219, %v11277
    %v11296 = vadd.f32 %v11220, %v11273
    %v11297 = vadd.f32 %v11221, %v11277
    %v11298 = vadd.f32 %v11222, %v11273
    %v11299 = vadd.f32 %v11223, %v11277
    %v11300 = vadd.f32 %v11224, %v11273
    %v11301 = vadd.f32 %v11225, %v11277
    %v11302 = vadd.f32 %v11226, %v11273
    %v11303 = vadd.f32 %v11227, %v11277
    %v11304 = vadd.f32 %v11228, %v11273
    %v11305 = vadd.f32 %v11229, %v11277
    %v11306 = vadd.f32 %v11230, %v11273
    %v11307 = vadd.f32 %v11231, %v11277
    %v11308 = vadd.f32 %v11232, %v11273
    %v11309 = vadd.f32 %v11233, %v11277
    %v11310 = vadd.f32 %v11234, %v11273
    %v11311 = vadd.f32 %v11235, %v11277
    %v11312 = vadd.f32 %v11236, %v11273
    %v11313 = vadd.f32 %v11237, %v11277
    %v11314 = vadd.f32 %v11238, %v11273
    %v11315 = vadd.f32 %v11239, %v11277
    %v11316 = vadd.f32 %v11240, %v11273
    %v11317 = vadd.f32 %v11241, %v11277
    %v11318 = vadd.f32 %v11242, %v11273
    %v11319 = vadd.f32 %v11243, %v11277
    %v11320 = vadd.f32 %v11244, %v11273
    %v11321 = vadd.f32 %v11245, %v11277
    %v11322 = vadd.f32 %v11246, %v11273
    %v11323 = vadd.f32 %v11247, %v11277
    %v11324 = vadd.f32 %v11248, %v11273
    %v11325 = vadd.f32 %v11249, %v11277
    %v11326 = vadd.f32 %v11250, %v11273
    %v11327 = vadd.f32 %v11251, %v11277
    %v11328 = vadd.f32 %v11252, %v11273
    %v11329 = vadd.f32 %v11253, %v11277
    %v11330 = vadd.f32 %v11254, %v11273
    %v11331 = vadd.f32 %v11255, %v11277
    %v11332 = vadd.f32 %v11256, %v11273
    %v11333 = vadd.f32 %v11257, %v11277
    %v11334 = vadd.f32 %v11258, %v11273
    %v11335 = vadd.f32 %v11259, %v11277
    %v11336 = vadd.f32 %v11260, %v11273
    %v11337 = vadd.f32 %v11261, %v11277
    %v11338 = vadd.f32 %v11262, %v11273
    %v11339 = vadd.f32 %v11263, %v11277
    %v11340 = vadd.f32 %v11264, %v11273
    %v11341 = vadd.f32 %v11265, %v11277
    %v11342 = vadd.f32 %v11266, %v11273
    %v11343 = vadd.f32 %v11267, %v11277
    %11344 = vst [vmem:[#allocation3] sm:$0xff] %v11280
    %11345 = vst.msk [vmem:[#allocation3 + $0x8] sm:$0xff] %vm10810, %v11281
    %11346 = vst [vmem:[#allocation3 + $0x10] sm:$0xff] %v11282
    %11347 = vst.msk [vmem:[#allocation3 + $0x18] sm:$0xff] %vm10810, %v11283
    %11348 = vst [vmem:[#allocation3 + $0x20] sm:$0xff] %v11284
    %11349 = vst.msk [vmem:[#allocation3 + $0x28] sm:$0xff] %vm10810, %v11285
    %11350 = vst [vmem:[#allocation3 + $0x30] sm:$0xff] %v11286
    %11351 = vst.msk [vmem:[#allocation3 + $0x38] sm:$0xff] %vm10810, %v11287
    %11352 = vst [vmem:[#allocation3 + $0x40] sm:$0xff] %v11288
    %11353 = vst.msk [vmem:[#allocation3 + $0x48] sm:$0xff] %vm10810, %v11289
    %11354 = vst [vmem:[#allocation3 + $0x50] sm:$0xff] %v11290
    %11355 = vst.msk [vmem:[#allocation3 + $0x58] sm:$0xff] %vm10810, %v11291
    %11356 = vst [vmem:[#allocation3 + $0x60] sm:$0xff] %v11292
    %11357 = vst.msk [vmem:[#allocation3 + $0x68] sm:$0xff] %vm10810, %v11293
    %11358 = vst [vmem:[#allocation3 + $0x70] sm:$0xff] %v11294
    %11359 = vst.msk [vmem:[#allocation3 + $0x78] sm:$0xff] %vm10810, %v11295
    %11360 = vst [vmem:[#allocation3 + $0x80] sm:$0xff] %v11296
    %11361 = vst.msk [vmem:[#allocation3 + $0x88] sm:$0xff] %vm10810, %v11297
    %11362 = vst [vmem:[#allocation3 + $0x90] sm:$0xff] %v11298
    %11363 = vst.msk [vmem:[#allocation3 + $0x98] sm:$0xff] %vm10810, %v11299
    %11364 = vst [vmem:[#allocation3 + $0xa0] sm:$0xff] %v11300
    %11365 = vst.msk [vmem:[#allocation3 + $0xa8] sm:$0xff] %vm10810, %v11301
    %11366 = vst [vmem:[#allocation3 + $0xb0] sm:$0xff] %v11302
    %11367 = vst.msk [vmem:[#allocation3 + $0xb8] sm:$0xff] %vm10810, %v11303
    %11368 = vst [vmem:[#allocation3 + $0xc0] sm:$0xff] %v11304
    %11369 = vst.msk [vmem:[#allocation3 + $0xc8] sm:$0xff] %vm10810, %v11305
    %11370 = vst [vmem:[#allocation3 + $0xd0] sm:$0xff] %v11306
    %11371 = vst.msk [vmem:[#allocation3 + $0xd8] sm:$0xff] %vm10810, %v11307
    %11372 = vst [vmem:[#allocation3 + $0xe0] sm:$0xff] %v11308
    %11373 = vst.msk [vmem:[#allocation3 + $0xe8] sm:$0xff] %vm10810, %v11309
    %11374 = vst [vmem:[#allocation3 + $0xf0] sm:$0xff] %v11310
    %11375 = vst.msk [vmem:[#allocation3 + $0xf8] sm:$0xff] %vm10810, %v11311
    %11376 = vst [vmem:[#allocation3 + $0x100] sm:$0xff] %v11312
    %11377 = vst.msk [vmem:[#allocation3 + $0x108] sm:$0xff] %vm10810, %v11313
    %11378 = vst [vmem:[#allocation3 + $0x110] sm:$0xff] %v11314
    %11379 = vst.msk [vmem:[#allocation3 + $0x118] sm:$0xff] %vm10810, %v11315
    %11380 = vst [vmem:[#allocation3 + $0x120] sm:$0xff] %v11316
    %11381 = vst.msk [vmem:[#allocation3 + $0x128] sm:$0xff] %vm10810, %v11317
    %11382 = vst [vmem:[#allocation3 + $0x130] sm:$0xff] %v11318
    %11383 = vst.msk [vmem:[#allocation3 + $0x138] sm:$0xff] %vm10810, %v11319
    %11384 = vst [vmem:[#allocation3 + $0x140] sm:$0xff] %v11320
    %11385 = vst.msk [vmem:[#allocation3 + $0x148] sm:$0xff] %vm10810, %v11321
    %11386 = vst [vmem:[#allocation3 + $0x150] sm:$0xff] %v11322
    %11387 = vst.msk [vmem:[#allocation3 + $0x158] sm:$0xff] %vm10810, %v11323
    %11388 = vst [vmem:[#allocation3 + $0x160] sm:$0xff] %v11324
    %11389 = vst.msk [vmem:[#allocation3 + $0x168] sm:$0xff] %vm10810, %v11325
    %11390 = vst [vmem:[#allocation3 + $0x170] sm:$0xff] %v11326
    %11391 = vst.msk [vmem:[#allocation3 + $0x178] sm:$0xff] %vm10810, %v11327
    %11392 = vst [vmem:[#allocation3 + $0x180] sm:$0xff] %v11328
    %11393 = vst.msk [vmem:[#allocation3 + $0x188] sm:$0xff] %vm10810, %v11329
    %11394 = vst [vmem:[#allocation3 + $0x190] sm:$0xff] %v11330
    %11395 = vst.msk [vmem:[#allocation3 + $0x198] sm:$0xff] %vm10810, %v11331
    %11396 = vst [vmem:[#allocation3 + $0x1a0] sm:$0xff] %v11332
    %11397 = vst.msk [vmem:[#allocation3 + $0x1a8] sm:$0xff] %vm10810, %v11333
    %11398 = vst [vmem:[#allocation3 + $0x1b0] sm:$0xff] %v11334
    %11399 = vst.msk [vmem:[#allocation3 + $0x1b8] sm:$0xff] %vm10810, %v11335
    %11400 = vst [vmem:[#allocation3 + $0x1c0] sm:$0xff] %v11336
    %11401 = vst.msk [vmem:[#allocation3 + $0x1c8] sm:$0xff] %vm10810, %v11337
    %11402 = vst [vmem:[#allocation3 + $0x1d0] sm:$0xff] %v11338
    %11403 = vst.msk [vmem:[#allocation3 + $0x1d8] sm:$0xff] %vm10810, %v11339
    %11404 = vst [vmem:[#allocation3 + $0x1e0] sm:$0xff] %v11340
    %11405 = vst.msk [vmem:[#allocation3 + $0x1e8] sm:$0xff] %vm10810, %v11341
    %11406 = vst [vmem:[#allocation3 + $0x1f0] sm:$0xff] %v11342
    %11407 = vst.msk [vmem:[#allocation3 + $0x1f8] sm:$0xff] %vm10810, %v11343
    // Predicated region
    $region30: #{fused_forward.1} parent=1 // pred_check
      _
    $region31: #{fused_forward.1} parent=1 // pred_check_branch
      %11409 = sbr.rel (0) target = $region33
    $region32: #{fused_forward.1} parent=1 // pred_region
      %s11411 = ssub.s32 8192, 8192
      %11412 = vsyncadd [#allocation4], %s11411
      %s11413 = sshll.u32 [#allocation3], 4
      %s11414 = int_to_ptr.vmem [resolvable:$true] %s11413
      %11419 = dma.vmem_to_hbm [thread:$0]  %s11414, 8192, %s7, [#allocation4], 256, 256, 16
    $region33: #{fused_forward.1} parent=1 // pred_fallthru
      _
    // Predicated region
    $region34: #{fused_forward.1} parent=1 // pred_check
      _
    $region35: #{fused_forward.1} parent=1 // pred_check_branch
      %11421 = sbr.rel (0) target = $region37
    $region36: #{fused_forward.1} parent=1 // pred_region
      %11422 = dma.done [#allocation4], 8192
    $region37: #{fused_forward.1} parent=1 // pred_fallthru
      _
    %11423 = vsyncpa [#allocation4], 1

</llo_original>
